<compile_context>
chip_gen: v7x
topology: tpu7x:2x2x1
jax: 0.10.0
libtpu: 0.0.40
codegen_flags: <defaults>
</compile_context>

<pallas_src>
import jax
import jax.numpy as jnp
from jax.experimental import pallas as pl
from jax.experimental.pallas import tpu as pltpu

LANES = 128


def _round_up(x, m):
    return ((x + m - 1) // m) * m


# ---------------------------------------------------------------------------
# Pallas kernels
# ---------------------------------------------------------------------------

def _conv_pool_kernel(q0_ref, q1_ref, q2_ref, q3_ref, w_ref, b_ref, o_ref):
    """Fused conv-GEMM + bias + ReLU + 2x2 max-pool.

    q{0..3}_ref: (tp, K) bf16 im2col patches of the 4 pool partners for the
                 same tp pooled output positions.
    w_ref: (K, 128) bf16 weights (out-channels zero-padded to 128 lanes).
    b_ref: (1, 128) f32 bias (zero-padded).
    o_ref: (tp, 128) bf16 pooled activation (lane-dense store).
    """
    w = w_ref[...]
    b = b_ref[...]

    def act(q_ref):
        acc = jnp.dot(q_ref[...], w, preferred_element_type=jnp.float32)
        return jnp.maximum(acc + b, 0.0)

    pooled = jnp.maximum(jnp.maximum(act(q0_ref), act(q1_ref)),
                         jnp.maximum(act(q2_ref), act(q3_ref)))
    o_ref[...] = pooled.astype(o_ref.dtype)


def _fc_chain_kernel(x_ref, w1_ref, b1_ref, w2_ref, b2_ref, w3_ref, b3_ref,
                     o_ref):
    """fc1 + ReLU + fc2 + ReLU + fc3 in one pass (dropout = identity in eval)."""
    h = jnp.dot(x_ref[...], w1_ref[...], preferred_element_type=jnp.float32)
    h = jnp.maximum(h + b1_ref[...], 0.0)
    h = jnp.dot(h.astype(jnp.bfloat16), w2_ref[...],
                preferred_element_type=jnp.float32)
    h = jnp.maximum(h + b2_ref[...], 0.0)
    h = jnp.dot(h.astype(jnp.bfloat16), w3_ref[...],
                preferred_element_type=jnp.float32)
    o_ref[...] = h + b3_ref[...]


# ---------------------------------------------------------------------------
# Conv layer: fused conv + bias + ReLU + 2x2 max-pool
# ---------------------------------------------------------------------------

def _pool_partner_patches(x_nhwc, kh, kw, r, s):
    """Stride-2 im2col at conv-output offset (r, s).

    Rows index pooled positions (b, hp, wp); features are ordered
    (kh, kw, in_c) to match the weight reshape below.
    """
    B, H, W, C = x_nhwc.shape
    Hp, Wp = (H - kh + 1) // 2, (W - kw + 1) // 2
    sls = [x_nhwc[:, r + di: r + di + 2 * Hp: 2,
                  s + dj: s + dj + 2 * Wp: 2, :]
           for di in range(kh) for dj in range(kw)]
    q = jnp.stack(sls, axis=3)                      # (B, Hp, Wp, kh*kw, C)
    return q.reshape(B * Hp * Wp, kh * kw * C)


def conv_relu_pool(x_nhwc, w_oihw, b, *, tp=512):
    """VALID conv (stride 1) + bias + ReLU + 2x2/2 max-pool, one Pallas call.

    x_nhwc: (B, H, W, Cin); w_oihw: (Cout, Cin, kh, kw); b: (Cout,) f32.
    Returns (B, Hp, Wp, Cout) bf16 with Hp = (H-kh+1)//2, Wp = (W-kw+1)//2.
    """
    out_c, in_c, kh, kw = w_oihw.shape
    B, H, W, _ = x_nhwc.shape
    Hp, Wp = (H - kh + 1) // 2, (W - kw + 1) // 2
    K = kh * kw * in_c
    M = B * Hp * Wp

    xb = x_nhwc.astype(jnp.bfloat16)
    quarters = [_pool_partner_patches(xb, kh, kw, r, s)
                for r in (0, 1) for s in (0, 1)]

    tp = min(tp, _round_up(M, 16))
    Mp = _round_up(M, tp)
    if Mp != M:
        quarters = [jnp.pad(q, ((0, Mp - M), (0, 0))) for q in quarters]

    # (out_c, in_c, kh, kw) -> (kh, kw, in_c, out_c) -> (K, out_c), pad N -> 128
    w2d = jnp.transpose(w_oihw, (2, 3, 1, 0)).reshape(K, out_c)
    w2d = jnp.pad(w2d, ((0, 0), (0, LANES - out_c))).astype(jnp.bfloat16)
    b2d = jnp.pad(b.astype(jnp.float32), (0, LANES - out_c)).reshape(1, LANES)

    out = pl.pallas_call(
        _conv_pool_kernel,
        out_shape=jax.ShapeDtypeStruct((Mp, LANES), jnp.bfloat16),
        grid_spec=pltpu.PrefetchScalarGridSpec(
            num_scalar_prefetch=0,
            grid=(Mp // tp,),
            in_specs=[pl.BlockSpec((tp, K), lambda i: (i, 0))] * 4
                     + [pl.BlockSpec((K, LANES), lambda i: (0, 0)),
                        pl.BlockSpec((1, LANES), lambda i: (0, 0))],
            out_specs=pl.BlockSpec((tp, LANES), lambda i: (i, 0)),
        ),
        compiler_params=pltpu.CompilerParams(
            dimension_semantics=("parallel",)),
        cost_estimate=pl.CostEstimate(
            flops=2 * 4 * Mp * K * LANES,
            transcendentals=0,
            bytes_accessed=4 * Mp * K * 2 + K * LANES * 2 + Mp * LANES * 2),
    )(*quarters, w2d, b2d)
    return out[:M, :out_c].reshape(B, Hp, Wp, out_c)


# ---------------------------------------------------------------------------
# Fully-connected chain: fc1 -> ReLU -> fc2 -> ReLU -> fc3 (one Pallas call)
# ---------------------------------------------------------------------------

def fc_chain(x, w1, b1, w2, b2, w3, b3):
    """x: (B, D) ; weights stored (in, out).  Returns (B, out3) f32 logits."""
    B, D = x.shape
    H1, H2, NO = w1.shape[1], w2.shape[1], w3.shape[1]
    N = LANES
    tm = min(128, _round_up(B, 16))
    Mp = _round_up(B, tm)
    # NOTE: even at tm == 128 the full-K (D=7744) bf16 blocks stay ~8 MB when
    # double-buffered, under v5e's 16 MiB scoped-VMEM default; tile K if D grows.

    xp = x.astype(jnp.bfloat16)
    if Mp != B:
        xp = jnp.pad(xp, ((0, Mp - B), (0, 0)))
    w1p = jnp.pad(w1, ((0, 0), (0, N - H1))).astype(jnp.bfloat16)
    b1p = jnp.pad(b1, (0, N - H1)).reshape(1, N).astype(jnp.float32)
    w2p = jnp.pad(w2, ((0, N - H1), (0, N - H2))).astype(jnp.bfloat16)
    b2p = jnp.pad(b2, (0, N - H2)).reshape(1, N).astype(jnp.float32)
    w3p = jnp.pad(w3, ((0, N - H2), (0, N - NO))).astype(jnp.bfloat16)
    b3p = jnp.pad(b3, (0, N - NO)).reshape(1, N).astype(jnp.float32)

    out = pl.pallas_call(
        _fc_chain_kernel,
        out_shape=jax.ShapeDtypeStruct((Mp, N), jnp.float32),
        grid_spec=pltpu.PrefetchScalarGridSpec(
            num_scalar_prefetch=0,
            grid=(Mp // tm,),
            in_specs=[
                pl.BlockSpec((tm, D), lambda i: (i, 0)),
                pl.BlockSpec((D, N), lambda i: (0, 0)),
                pl.BlockSpec((1, N), lambda i: (0, 0)),
                pl.BlockSpec((N, N), lambda i: (0, 0)),
                pl.BlockSpec((1, N), lambda i: (0, 0)),
                pl.BlockSpec((N, N), lambda i: (0, 0)),
                pl.BlockSpec((1, N), lambda i: (0, 0)),
            ],
            out_specs=pl.BlockSpec((tm, N), lambda i: (i, 0)),
        ),
        compiler_params=pltpu.CompilerParams(
            dimension_semantics=("arbitrary",)),
        cost_estimate=pl.CostEstimate(
            flops=2 * Mp * N * (D + 2 * N),
            transcendentals=0,
            bytes_accessed=(Mp * D + D * N + 2 * N * N) * 2 + Mp * N * 4),
    )(xp, w1p, b1p, w2p, b2p, w3p, b3p)
    return out[:B, :NO]


# ---------------------------------------------------------------------------
# Parameter init (deterministic; mirrors PyTorch default U(-1/sqrt(fan_in), ..))
# ---------------------------------------------------------------------------

def init_params(key):
    def uniform(key, shape, fan_in):
        bound = 1.0 / jnp.sqrt(fan_in)
        return jax.random.uniform(key, shape, jnp.float32, -bound, bound)

    ks = jax.random.split(key, 10)
    return {
        "conv1_w": uniform(ks[0], (6, 3, 5, 5), 3 * 5 * 5),
        "conv1_b": uniform(ks[1], (6,), 3 * 5 * 5),
        "conv2_w": uniform(ks[2], (16, 6, 5, 5), 6 * 5 * 5),
        "conv2_b": uniform(ks[3], (16,), 6 * 5 * 5),
        # Linear weights stored as (in, out) for direct x @ w
        "fc1_w": uniform(ks[4], (7744, 120), 7744),
        "fc1_b": uniform(ks[5], (120,), 7744),
        "fc2_w": uniform(ks[6], (120, 84), 120),
        "fc2_b": uniform(ks[7], (84,), 120),
        "fc3_w": uniform(ks[8], (84, 9), 84),
        "fc3_b": uniform(ks[9], (9,), 84),
    }


# ---------------------------------------------------------------------------
# Forward pass
# ---------------------------------------------------------------------------

def cnn_forward(params, x_nchw):
    B = x_nchw.shape[0]
    x = jnp.transpose(x_nchw, (0, 2, 3, 1))                        # NCHW->NHWC

    x = conv_relu_pool(x, params["conv1_w"], params["conv1_b"])    # (B,48,48,6)
    x = conv_relu_pool(x, params["conv2_w"], params["conv2_b"])    # (B,22,22,16)

    # PyTorch x.view(B, -1) flattens NCHW: (B, C, H, W) -> (B, C*H*W) = (B, 7744)
    x = jnp.transpose(x, (0, 3, 1, 2)).reshape(B, -1)

    # fc1 -> ReLU -> dropout(identity) -> fc2 -> ReLU -> dropout(identity) -> fc3
    return fc_chain(x, params["fc1_w"], params["fc1_b"],
                    params["fc2_w"], params["fc2_b"],
                    params["fc3_w"], params["fc3_b"])              # (B, 9) f32


if __name__ == "__main__":
    key = jax.random.PRNGKey(0)
    k_params, k_input = jax.random.split(key)
    params = init_params(k_params)

    # fc1 expects 7744 = 16 * 22 * 22 flattened features -> input (B, 3, 100, 100)
    x = jax.random.normal(k_input, (2, 3, 100, 100), dtype=jnp.float32)

    fwd = jax.jit(cnn_forward)
    out = fwd(params, x)
    jax.block_until_ready(out)
    assert out.shape == (2, 9) and out.dtype == jnp.float32
    print("KERNEL_OK")
</pallas_src>

<mosaic_0001>
module attributes {stable_mosaic.version = 11 : i64} {
  func.func @_conv_pool_kernel(%arg0: i32, %arg1: memref<512x75xbf16, #tpu.memory_space<vmem>>, %arg2: memref<512x75xbf16, #tpu.memory_space<vmem>>, %arg3: memref<512x75xbf16, #tpu.memory_space<vmem>>, %arg4: memref<512x75xbf16, #tpu.memory_space<vmem>>, %arg5: memref<75x128xbf16, #tpu.memory_space<vmem>>, %arg6: memref<1x128xf32, #tpu.memory_space<vmem>>, %arg7: memref<512x128xbf16, #tpu.memory_space<vmem>>) attributes {dimension_semantics = [#tpu.dimension_semantics<parallel>], iteration_bounds = array<i64: 9>, scalar_prefetch = 0 : i64, scratch_operands = 0 : i64, tpu.core_type = #tpu.core_type<tc>, window_params = [{transform_indices = @transform_0, window_bounds = array<i64: 512, 75>}, {transform_indices = @transform_1, window_bounds = array<i64: 512, 75>}, {transform_indices = @transform_2, window_bounds = array<i64: 512, 75>}, {transform_indices = @transform_3, window_bounds = array<i64: 512, 75>}, {pipeline_mode = #tpu.pipeline_mode<synchronous>, transform_indices = @transform_4, window_bounds = array<i64: 75, 128>}, {pipeline_mode = #tpu.pipeline_mode<synchronous>, transform_indices = @transform_5, window_bounds = array<i64: 1, 128>}, {transform_indices = @transform_6, window_bounds = array<i64: 512, 128>}]} {
    %c0 = arith.constant 0 : index
    %c0_0 = arith.constant 0 : index
    %0 = vector.load %arg5[%c0, %c0_0] : memref<75x128xbf16, #tpu.memory_space<vmem>>, vector<75x128xbf16>
    %c0_1 = arith.constant 0 : index
    %c0_2 = arith.constant 0 : index
    %1 = vector.load %arg6[%c0_1, %c0_2] : memref<1x128xf32, #tpu.memory_space<vmem>>, vector<1x128xf32>
    %c0_3 = arith.constant 0 : index
    %c0_4 = arith.constant 0 : index
    %2 = vector.load %arg1[%c0_3, %c0_4] : memref<512x75xbf16, #tpu.memory_space<vmem>>, vector<512x75xbf16>
    %cst = arith.constant dense<0.000000e+00> : vector<512x128xf32>
    %3 = tpu.matmul %2, %0, %cst {dimension_numbers = #tpu.dot_dimension_numbers<[1], [0], [0], [1], [0, 0, 1, 1], [], []>} : vector<512x75xbf16>, vector<75x128xbf16>, vector<512x128xf32> -> vector<512x128xf32>
    %4 = vector.broadcast %1 : vector<1x128xf32> to vector<512x128xf32>
    %5 = arith.addf %3, %4 : vector<512x128xf32>
    %cst_5 = arith.constant 0.000000e+00 : f32
    %6 = vector.broadcast %cst_5 : f32 to vector<512x128xf32>
    %7 = arith.maximumf %5, %6 : vector<512x128xf32>
    %c0_6 = arith.constant 0 : index
    %c0_7 = arith.constant 0 : index
    %8 = vector.load %arg2[%c0_6, %c0_7] : memref<512x75xbf16, #tpu.memory_space<vmem>>, vector<512x75xbf16>
    %cst_8 = arith.constant dense<0.000000e+00> : vector<512x128xf32>
    %9 = tpu.matmul %8, %0, %cst_8 {dimension_numbers = #tpu.dot_dimension_numbers<[1], [0], [0], [1], [0, 0, 1, 1], [], []>} : vector<512x75xbf16>, vector<75x128xbf16>, vector<512x128xf32> -> vector<512x128xf32>
    %10 = vector.broadcast %1 : vector<1x128xf32> to vector<512x128xf32>
    %11 = arith.addf %9, %10 : vector<512x128xf32>
    %cst_9 = arith.constant 0.000000e+00 : f32
    %12 = vector.broadcast %cst_9 : f32 to vector<512x128xf32>
    %13 = arith.maximumf %11, %12 : vector<512x128xf32>
    %14 = arith.maximumf %7, %13 : vector<512x128xf32>
    %c0_10 = arith.constant 0 : index
    %c0_11 = arith.constant 0 : index
    %15 = vector.load %arg3[%c0_10, %c0_11] : memref<512x75xbf16, #tpu.memory_space<vmem>>, vector<512x75xbf16>
    %cst_12 = arith.constant dense<0.000000e+00> : vector<512x128xf32>
    %16 = tpu.matmul %15, %0, %cst_12 {dimension_numbers = #tpu.dot_dimension_numbers<[1], [0], [0], [1], [0, 0, 1, 1], [], []>} : vector<512x75xbf16>, vector<75x128xbf16>, vector<512x128xf32> -> vector<512x128xf32>
    %17 = vector.broadcast %1 : vector<1x128xf32> to vector<512x128xf32>
    %18 = arith.addf %16, %17 : vector<512x128xf32>
    %cst_13 = arith.constant 0.000000e+00 : f32
    %19 = vector.broadcast %cst_13 : f32 to vector<512x128xf32>
    %20 = arith.maximumf %18, %19 : vector<512x128xf32>
    %c0_14 = arith.constant 0 : index
    %c0_15 = arith.constant 0 : index
    %21 = vector.load %arg4[%c0_14, %c0_15] : memref<512x75xbf16, #tpu.memory_space<vmem>>, vector<512x75xbf16>
    %cst_16 = arith.constant dense<0.000000e+00> : vector<512x128xf32>
    %22 = tpu.matmul %21, %0, %cst_16 {dimension_numbers = #tpu.dot_dimension_numbers<[1], [0], [0], [1], [0, 0, 1, 1], [], []>} : vector<512x75xbf16>, vector<75x128xbf16>, vector<512x128xf32> -> vector<512x128xf32>
    %23 = vector.broadcast %1 : vector<1x128xf32> to vector<512x128xf32>
    %24 = arith.addf %22, %23 : vector<512x128xf32>
    %cst_17 = arith.constant 0.000000e+00 : f32
    %25 = vector.broadcast %cst_17 : f32 to vector<512x128xf32>
    %26 = arith.maximumf %24, %25 : vector<512x128xf32>
    %27 = arith.maximumf %20, %26 : vector<512x128xf32>
    %28 = arith.maximumf %14, %27 : vector<512x128xf32>
    %29 = arith.truncf %28 : vector<512x128xf32> to vector<512x128xbf16>
    %c0_18 = arith.constant 0 : index
    %c0_19 = arith.constant 0 : index
    %30 = vector.load %arg7[%c0_18, %c0_19] : memref<512x128xbf16, #tpu.memory_space<vmem>>, vector<512x128xbf16>
    tpu.vector_store %arg7[%c0_18, %c0_19], %29 {strides = array<i32>} : memref<512x128xbf16, #tpu.memory_space<vmem>>, vector<512x128xbf16>,
    return
  }
  func.func @transform_0(%arg0: i32) -> (i32, i32) {
    %c0_i32 = arith.constant 0 : i32
    %c0_i32_0 = arith.constant 0 : i32
    return %arg0, %c0_i32 : i32, i32
  }
  func.func @transform_1(%arg0: i32) -> (i32, i32) {
    %c0_i32 = arith.constant 0 : i32
    %c0_i32_0 = arith.constant 0 : i32
    return %arg0, %c0_i32 : i32, i32
  }
  func.func @transform_2(%arg0: i32) -> (i32, i32) {
    %c0_i32 = arith.constant 0 : i32
    %c0_i32_0 = arith.constant 0 : i32
    return %arg0, %c0_i32 : i32, i32
  }
  func.func @transform_3(%arg0: i32) -> (i32, i32) {
    %c0_i32 = arith.constant 0 : i32
    %c0_i32_0 = arith.constant 0 : i32
    return %arg0, %c0_i32 : i32, i32
  }
  func.func @transform_4(%arg0: i32) -> (i32, i32) {
    %c0_i32 = arith.constant 0 : i32
    %c0_i32_0 = arith.constant 0 : i32
    %c0_i32_1 = arith.constant 0 : i32
    return %c0_i32, %c0_i32_0 : i32, i32
  }
  func.func @transform_5(%arg0: i32) -> (i32, i32) {
    %c0_i32 = arith.constant 0 : i32
    %c0_i32_0 = arith.constant 0 : i32
    %c0_i32_1 = arith.constant 0 : i32
    return %c0_i32, %c0_i32_0 : i32, i32
  }
  func.func @transform_6(%arg0: i32) -> (i32, i32) {
    %c0_i32 = arith.constant 0 : i32
    %c0_i32_0 = arith.constant 0 : i32
    return %arg0, %c0_i32 : i32, i32
  }
}

module attributes {stable_mosaic.version = 11 : i64} {
  func.func @_conv_pool_kernel(%arg0: i32, %arg1: memref<512x150xbf16, #tpu.memory_space<vmem>>, %arg2: memref<512x150xbf16, #tpu.memory_space<vmem>>, %arg3: memref<512x150xbf16, #tpu.memory_space<vmem>>, %arg4: memref<512x150xbf16, #tpu.memory_space<vmem>>, %arg5: memref<150x128xbf16, #tpu.memory_space<vmem>>, %arg6: memref<1x128xf32, #tpu.memory_space<vmem>>, %arg7: memref<512x128xbf16, #tpu.memory_space<vmem>>) attributes {dimension_semantics = [#tpu.dimension_semantics<parallel>], iteration_bounds = array<i64: 2>, scalar_prefetch = 0 : i64, scratch_operands = 0 : i64, tpu.core_type = #tpu.core_type<tc>, window_params = [{transform_indices = @transform_0, window_bounds = array<i64: 512, 150>}, {transform_indices = @transform_1, window_bounds = array<i64: 512, 150>}, {transform_indices = @transform_2, window_bounds = array<i64: 512, 150>}, {transform_indices = @transform_3, window_bounds = array<i64: 512, 150>}, {pipeline_mode = #tpu.pipeline_mode<synchronous>, transform_indices = @transform_4, window_bounds = array<i64: 150, 128>}, {pipeline_mode = #tpu.pipeline_mode<synchronous>, transform_indices = @transform_5, window_bounds = array<i64: 1, 128>}, {transform_indices = @transform_6, window_bounds = array<i64: 512, 128>}]} {
    %c0 = arith.constant 0 : index
    %c0_0 = arith.constant 0 : index
    %0 = vector.load %arg5[%c0, %c0_0] : memref<150x128xbf16, #tpu.memory_space<vmem>>, vector<150x128xbf16>
    %c0_1 = arith.constant 0 : index
    %c0_2 = arith.constant 0 : index
    %1 = vector.load %arg6[%c0_1, %c0_2] : memref<1x128xf32, #tpu.memory_space<vmem>>, vector<1x128xf32>
    %c0_3 = arith.constant 0 : index
    %c0_4 = arith.constant 0 : index
    %2 = vector.load %arg1[%c0_3, %c0_4] : memref<512x150xbf16, #tpu.memory_space<vmem>>, vector<512x150xbf16>
    %cst = arith.constant dense<0.000000e+00> : vector<512x128xf32>
    %3 = tpu.matmul %2, %0, %cst {dimension_numbers = #tpu.dot_dimension_numbers<[1], [0], [0], [1], [0, 0, 1, 1], [], []>} : vector<512x150xbf16>, vector<150x128xbf16>, vector<512x128xf32> -> vector<512x128xf32>
    %4 = vector.broadcast %1 : vector<1x128xf32> to vector<512x128xf32>
    %5 = arith.addf %3, %4 : vector<512x128xf32>
    %cst_5 = arith.constant 0.000000e+00 : f32
    %6 = vector.broadcast %cst_5 : f32 to vector<512x128xf32>
    %7 = arith.maximumf %5, %6 : vector<512x128xf32>
    %c0_6 = arith.constant 0 : index
    %c0_7 = arith.constant 0 : index
    %8 = vector.load %arg2[%c0_6, %c0_7] : memref<512x150xbf16, #tpu.memory_space<vmem>>, vector<512x150xbf16>
    %cst_8 = arith.constant dense<0.000000e+00> : vector<512x128xf32>
    %9 = tpu.matmul %8, %0, %cst_8 {dimension_numbers = #tpu.dot_dimension_numbers<[1], [0], [0], [1], [0, 0, 1, 1], [], []>} : vector<512x150xbf16>, vector<150x128xbf16>, vector<512x128xf32> -> vector<512x128xf32>
    %10 = vector.broadcast %1 : vector<1x128xf32> to vector<512x128xf32>
    %11 = arith.addf %9, %10 : vector<512x128xf32>
    %cst_9 = arith.constant 0.000000e+00 : f32
    %12 = vector.broadcast %cst_9 : f32 to vector<512x128xf32>
    %13 = arith.maximumf %11, %12 : vector<512x128xf32>
    %14 = arith.maximumf %7, %13 : vector<512x128xf32>
    %c0_10 = arith.constant 0 : index
    %c0_11 = arith.constant 0 : index
    %15 = vector.load %arg3[%c0_10, %c0_11] : memref<512x150xbf16, #tpu.memory_space<vmem>>, vector<512x150xbf16>
    %cst_12 = arith.constant dense<0.000000e+00> : vector<512x128xf32>
    %16 = tpu.matmul %15, %0, %cst_12 {dimension_numbers = #tpu.dot_dimension_numbers<[1], [0], [0], [1], [0, 0, 1, 1], [], []>} : vector<512x150xbf16>, vector<150x128xbf16>, vector<512x128xf32> -> vector<512x128xf32>
    %17 = vector.broadcast %1 : vector<1x128xf32> to vector<512x128xf32>
    %18 = arith.addf %16, %17 : vector<512x128xf32>
    %cst_13 = arith.constant 0.000000e+00 : f32
    %19 = vector.broadcast %cst_13 : f32 to vector<512x128xf32>
    %20 = arith.maximumf %18, %19 : vector<512x128xf32>
    %c0_14 = arith.constant 0 : index
    %c0_15 = arith.constant 0 : index
    %21 = vector.load %arg4[%c0_14, %c0_15] : memref<512x150xbf16, #tpu.memory_space<vmem>>, vector<512x150xbf16>
    %cst_16 = arith.constant dense<0.000000e+00> : vector<512x128xf32>
    %22 = tpu.matmul %21, %0, %cst_16 {dimension_numbers = #tpu.dot_dimension_numbers<[1], [0], [0], [1], [0, 0, 1, 1], [], []>} : vector<512x150xbf16>, vector<150x128xbf16>, vector<512x128xf32> -> vector<512x128xf32>
    %23 = vector.broadcast %1 : vector<1x128xf32> to vector<512x128xf32>
    %24 = arith.addf %22, %23 : vector<512x128xf32>
    %cst_17 = arith.constant 0.000000e+00 : f32
    %25 = vector.broadcast %cst_17 : f32 to vector<512x128xf32>
    %26 = arith.maximumf %24, %25 : vector<512x128xf32>
    %27 = arith.maximumf %20, %26 : vector<512x128xf32>
    %28 = arith.maximumf %14, %27 : vector<512x128xf32>
    %29 = arith.truncf %28 : vector<512x128xf32> to vector<512x128xbf16>
    %c0_18 = arith.constant 0 : index
    %c0_19 = arith.constant 0 : index
    %30 = vector.load %arg7[%c0_18, %c0_19] : memref<512x128xbf16, #tpu.memory_space<vmem>>, vector<512x128xbf16>
    tpu.vector_store %arg7[%c0_18, %c0_19], %29 {strides = array<i32>} : memref<512x128xbf16, #tpu.memory_space<vmem>>, vector<512x128xbf16>,
    return
  }
  func.func @transform_0(%arg0: i32) -> (i32, i32) {
    %c0_i32 = arith.constant 0 : i32
    %c0_i32_0 = arith.constant 0 : i32
    return %arg0, %c0_i32 : i32, i32
  }
  func.func @transform_1(%arg0: i32) -> (i32, i32) {
    %c0_i32 = arith.constant 0 : i32
    %c0_i32_0 = arith.constant 0 : i32
    return %arg0, %c0_i32 : i32, i32
  }
  func.func @transform_2(%arg0: i32) -> (i32, i32) {
    %c0_i32 = arith.constant 0 : i32
    %c0_i32_0 = arith.constant 0 : i32
    return %arg0, %c0_i32 : i32, i32
  }
  func.func @transform_3(%arg0: i32) -> (i32, i32) {
    %c0_i32 = arith.constant 0 : i32
    %c0_i32_0 = arith.constant 0 : i32
    return %arg0, %c0_i32 : i32, i32
  }
  func.func @transform_4(%arg0: i32) -> (i32, i32) {
    %c0_i32 = arith.constant 0 : i32
    %c0_i32_0 = arith.constant 0 : i32
    %c0_i32_1 = arith.constant 0 : i32
    return %c0_i32, %c0_i32_0 : i32, i32
  }
  func.func @transform_5(%arg0: i32) -> (i32, i32) {
    %c0_i32 = arith.constant 0 : i32
    %c0_i32_0 = arith.constant 0 : i32
    %c0_i32_1 = arith.constant 0 : i32
    return %c0_i32, %c0_i32_0 : i32, i32
  }
  func.func @transform_6(%arg0: i32) -> (i32, i32) {
    %c0_i32 = arith.constant 0 : i32
    %c0_i32_0 = arith.constant 0 : i32
    return %arg0, %c0_i32 : i32, i32
  }
}

module attributes {stable_mosaic.version = 11 : i64} {
  func.func @_fc_chain_kernel(%arg0: i32, %arg1: memref<16x7744xbf16, #tpu.memory_space<vmem>>, %arg2: memref<7744x128xbf16, #tpu.memory_space<vmem>>, %arg3: memref<1x128xf32, #tpu.memory_space<vmem>>, %arg4: memref<128x128xbf16, #tpu.memory_space<vmem>>, %arg5: memref<1x128xf32, #tpu.memory_space<vmem>>, %arg6: memref<128x128xbf16, #tpu.memory_space<vmem>>, %arg7: memref<1x128xf32, #tpu.memory_space<vmem>>, %arg8: memref<16x128xf32, #tpu.memory_space<vmem>>) attributes {dimension_semantics = [#tpu.dimension_semantics<arbitrary>], iteration_bounds = array<i64: 1>, scalar_prefetch = 0 : i64, scratch_operands = 0 : i64, tpu.core_type = #tpu.core_type<tc>, window_params = [{transform_indices = @transform_0, window_bounds = array<i64: 16, 7744>}, {pipeline_mode = #tpu.pipeline_mode<synchronous>, transform_indices = @transform_1, window_bounds = array<i64: 7744, 128>}, {pipeline_mode = #tpu.pipeline_mode<synchronous>, transform_indices = @transform_2, window_bounds = array<i64: 1, 128>}, {pipeline_mode = #tpu.pipeline_mode<synchronous>, transform_indices = @transform_3, window_bounds = array<i64: 128, 128>}, {pipeline_mode = #tpu.pipeline_mode<synchronous>, transform_indices = @transform_4, window_bounds = array<i64: 1, 128>}, {pipeline_mode = #tpu.pipeline_mode<synchronous>, transform_indices = @transform_5, window_bounds = array<i64: 128, 128>}, {pipeline_mode = #tpu.pipeline_mode<synchronous>, transform_indices = @transform_6, window_bounds = array<i64: 1, 128>}, {transform_indices = @transform_7, window_bounds = array<i64: 16, 128>}]} {
    %c0 = arith.constant 0 : index
    %c0_0 = arith.constant 0 : index
    %0 = vector.load %arg1[%c0, %c0_0] : memref<16x7744xbf16, #tpu.memory_space<vmem>>, vector<16x7744xbf16>
    %c0_1 = arith.constant 0 : index
    %c0_2 = arith.constant 0 : index
    %1 = vector.load %arg2[%c0_1, %c0_2] : memref<7744x128xbf16, #tpu.memory_space<vmem>>, vector<7744x128xbf16>
    %cst = arith.constant dense<0.000000e+00> : vector<16x128xf32>
    %2 = tpu.matmul %0, %1, %cst {dimension_numbers = #tpu.dot_dimension_numbers<[1], [0], [0], [1], [0, 0, 1, 1], [], []>} : vector<16x7744xbf16>, vector<7744x128xbf16>, vector<16x128xf32> -> vector<16x128xf32>
    %c0_3 = arith.constant 0 : index
    %c0_4 = arith.constant 0 : index
    %3 = vector.load %arg3[%c0_3, %c0_4] : memref<1x128xf32, #tpu.memory_space<vmem>>, vector<1x128xf32>
    %4 = vector.broadcast %3 : vector<1x128xf32> to vector<16x128xf32>
    %5 = arith.addf %2, %4 : vector<16x128xf32>
    %cst_5 = arith.constant 0.000000e+00 : f32
    %6 = vector.broadcast %cst_5 : f32 to vector<16x128xf32>
    %7 = arith.maximumf %5, %6 : vector<16x128xf32>
    %8 = arith.truncf %7 : vector<16x128xf32> to vector<16x128xbf16>
    %c0_6 = arith.constant 0 : index
    %c0_7 = arith.constant 0 : index
    %9 = vector.load %arg4[%c0_6, %c0_7] : memref<128x128xbf16, #tpu.memory_space<vmem>>, vector<128x128xbf16>
    %cst_8 = arith.constant dense<0.000000e+00> : vector<16x128xf32>
    %10 = tpu.matmul %8, %9, %cst_8 {dimension_numbers = #tpu.dot_dimension_numbers<[1], [0], [0], [1], [0, 0, 1, 1], [], []>} : vector<16x128xbf16>, vector<128x128xbf16>, vector<16x128xf32> -> vector<16x128xf32>
    %c0_9 = arith.constant 0 : index
    %c0_10 = arith.constant 0 : index
    %11 = vector.load %arg5[%c0_9, %c0_10] : memref<1x128xf32, #tpu.memory_space<vmem>>, vector<1x128xf32>
    %12 = vector.broadcast %11 : vector<1x128xf32> to vector<16x128xf32>
    %13 = arith.addf %10, %12 : vector<16x128xf32>
    %cst_11 = arith.constant 0.000000e+00 : f32
    %14 = vector.broadcast %cst_11 : f32 to vector<16x128xf32>
    %15 = arith.maximumf %13, %14 : vector<16x128xf32>
    %16 = arith.truncf %15 : vector<16x128xf32> to vector<16x128xbf16>
    %c0_12 = arith.constant 0 : index
    %c0_13 = arith.constant 0 : index
    %17 = vector.load %arg6[%c0_12, %c0_13] : memref<128x128xbf16, #tpu.memory_space<vmem>>, vector<128x128xbf16>
    %cst_14 = arith.constant dense<0.000000e+00> : vector<16x128xf32>
    %18 = tpu.matmul %16, %17, %cst_14 {dimension_numbers = #tpu.dot_dimension_numbers<[1], [0], [0], [1], [0, 0, 1, 1], [], []>} : vector<16x128xbf16>, vector<128x128xbf16>, vector<16x128xf32> -> vector<16x128xf32>
    %c0_15 = arith.constant 0 : index
    %c0_16 = arith.constant 0 : index
    %19 = vector.load %arg7[%c0_15, %c0_16] : memref<1x128xf32, #tpu.memory_space<vmem>>, vector<1x128xf32>
    %20 = vector.broadcast %19 : vector<1x128xf32> to vector<16x128xf32>
    %21 = arith.addf %18, %20 : vector<16x128xf32>
    %c0_17 = arith.constant 0 : index
    %c0_18 = arith.constant 0 : index
    %22 = vector.load %arg8[%c0_17, %c0_18] : memref<16x128xf32, #tpu.memory_space<vmem>>, vector<16x128xf32>
    tpu.vector_store %arg8[%c0_17, %c0_18], %21 {strides = array<i32>} : memref<16x128xf32, #tpu.memory_space<vmem>>, vector<16x128xf32>,
    return
  }
  func.func @transform_0(%arg0: i32) -> (i32, i32) {
    %c0_i32 = arith.constant 0 : i32
    %c0_i32_0 = arith.constant 0 : i32
    return %arg0, %c0_i32 : i32, i32
  }
  func.func @transform_1(%arg0: i32) -> (i32, i32) {
    %c0_i32 = arith.constant 0 : i32
    %c0_i32_0 = arith.constant 0 : i32
    %c0_i32_1 = arith.constant 0 : i32
    return %c0_i32, %c0_i32_0 : i32, i32
  }
  func.func @transform_2(%arg0: i32) -> (i32, i32) {
    %c0_i32 = arith.constant 0 : i32
    %c0_i32_0 = arith.constant 0 : i32
    %c0_i32_1 = arith.constant 0 : i32
    return %c0_i32, %c0_i32_0 : i32, i32
  }
  func.func @transform_3(%arg0: i32) -> (i32, i32) {
    %c0_i32 = arith.constant 0 : i32
    %c0_i32_0 = arith.constant 0 : i32
    %c0_i32_1 = arith.constant 0 : i32
    return %c0_i32, %c0_i32_0 : i32, i32
  }
  func.func @transform_4(%arg0: i32) -> (i32, i32) {
    %c0_i32 = arith.constant 0 : i32
    %c0_i32_0 = arith.constant 0 : i32
    %c0_i32_1 = arith.constant 0 : i32
    return %c0_i32, %c0_i32_0 : i32, i32
  }
  func.func @transform_5(%arg0: i32) -> (i32, i32) {
    %c0_i32 = arith.constant 0 : i32
    %c0_i32_0 = arith.constant 0 : i32
    %c0_i32_1 = arith.constant 0 : i32
    return %c0_i32, %c0_i32_0 : i32, i32
  }
  func.func @transform_6(%arg0: i32) -> (i32, i32) {
    %c0_i32 = arith.constant 0 : i32
    %c0_i32_0 = arith.constant 0 : i32
    %c0_i32_1 = arith.constant 0 : i32
    return %c0_i32, %c0_i32_0 : i32, i32
  }
  func.func @transform_7(%arg0: i32) -> (i32, i32) {
    %c0_i32 = arith.constant 0 : i32
    %c0_i32_0 = arith.constant 0 : i32
    return %arg0, %c0_i32 : i32, i32
  }
}

</mosaic_0001>

<llo_original>
// kernel: cnn_forward.3
$region0: #{cnn_forward.3}
  #allocation0 [shape = 'u32[]', space=smem, size = 0x4, offset = 0x4, fixed_abs, tag = 'smem constant byte address 0x4 - core index']
  #allocation1 [shape = 'u32[144,128]{1,0:T(1,128)}', space=vmem, size = 0x12000, scoped, tag = 'internal scratch']
  %s0 = inlined_call_operand.vmem [shape: bf16[4608,75], index: 0, kind: input, shape index: {}]
  %s1 = inlined_call_operand.vmem [shape: bf16[4608,75], index: 1, kind: input, shape index: {}]
  %s2 = inlined_call_operand.vmem [shape: bf16[4608,75], index: 2, kind: input, shape index: {}]
  %s3 = inlined_call_operand.vmem [shape: bf16[4608,75], index: 3, kind: input, shape index: {}]
  %s4 = inlined_call_operand.vmem [shape: bf16[75,128], index: 4, kind: input, shape index: {}]
  %s5 = inlined_call_operand.vmem [shape: f32[1,128], index: 5, kind: input, shape index: {}]
  %s6 = inlined_call_operand.vmem [shape: bf16[4608,128], index: 6, kind: output, shape index: {}]
  %s7 = sld [smem:[#allocation0]]
  $region57: #{cnn_forward.3} parent=0
    _
  %s9 = ssub.s32 1, %s7
  %s10 = scalar_select 0, %s9, %s7
  loop: start=0, step=1, limit=11
  $region2: #{cnn_forward.3} parent=0 // loop_pre_header
    _
  $region3: #{cnn_forward.3} parent=0 // loop_header
    %s12 = sphi 0, %s16
    %p13 = scmp.ge.s32.totalorder %s12, 11
    %s22 = sphi 0, %s24
    %s25 = sphi 0, %s22
    %s26 = sphi 0, %s25
    %s42 = sphi 0, %s26
    %s48 = sphi 0, %s50
    %s51 = sphi 0, %s48
    %s52 = sphi 0, %s51
    %s68 = sphi 0, %s52
    %s74 = sphi 0, %s76
    %s77 = sphi 0, %s74
    %s78 = sphi 0, %s77
    %s94 = sphi 0, %s78
    %s100 = sphi 0, %s102
    %s103 = sphi 0, %s100
    %s104 = sphi 0, %s103
    %s120 = sphi 0, %s104
    %s124 = sphi 0, %s124
    %s126 = sphi 0, %s124
    %s127 = sphi 0, %s126
    %s141 = sphi 0, %s127
    %s145 = sphi 0, %s145
    %s147 = sphi 0, %s145
    %s148 = sphi 0, %s147
    %s162 = sphi 0, %s148
    %s168 = sphi 0, %s170
    %s171 = sphi 0, %s168
    %s172 = sphi 0, %s171
    %s188 = sphi 0, %s172
  $region4: #{cnn_forward.3} parent=0 // loop_header_branch
    %15 = sbr.rel (%p13) target = $region8
  $region5: #{cnn_forward.3} parent=0 // loop_body
    %s17 = ssub.s32 %s12, 1
    %s18 = ssub.s32 %s12, 2
    %s19 = sadd.s32 %s12, 1
    %s20 = ssub.s32 %s12, %s19
    %p21 = scmp.eq.s32.totalorder %s20, 0
    %s23 = sadd.s32 %s22, 1
    %s24 = scalar_select %p21, %s22, %s23
    %p27 = pneg %p21
    %p28 = scmp.eq.s32.totalorder %s12, 8
    %p29 = por %p27, %p28
    %p30 = scmp.ne.s32.totalorder %s22, %s25
    %p31 = scmp.eq.s32.totalorder %s12, 0
    %p32 = por %p30, %p31
    %p33 = scmp.ne.s32.totalorder %s22, %s25
    %p34 = scmp.eq.s32.totalorder %s17, 8
    %p35 = por %p33, %p34
    %p36 = scmp.ne.s32.totalorder %s25, %s26
    %p37 = scmp.eq.s32.totalorder %s17, 0
    %p38 = por %p36, %p37
    %p39 = scmp.ne.s32.totalorder %s25, %s26
    %p40 = scmp.eq.s32.totalorder %s18, 8
    %p41 = por %p39, %p40
    %p43 = scmp.ne.s32.totalorder %s26, %s42
    %p44 = scmp.eq.s32.totalorder %s18, 0
    %p45 = por %p43, %p44
    %s46 = ssub.s32 %s12, %s19
    %p47 = scmp.eq.s32.totalorder %s46, 0
    %s49 = sadd.s32 %s48, 1
    %s50 = scalar_select %p47, %s48, %s49
    %p53 = pneg %p47
    %p54 = scmp.eq.s32.totalorder %s12, 8
    %p55 = por %p53, %p54
    %p56 = scmp.ne.s32.totalorder %s48, %s51
    %p57 = scmp.eq.s32.totalorder %s12, 0
    %p58 = por %p56, %p57
    %p59 = scmp.ne.s32.totalorder %s48, %s51
    %p60 = scmp.eq.s32.totalorder %s17, 8
    %p61 = por %p59, %p60
    %p62 = scmp.ne.s32.totalorder %s51, %s52
    %p63 = scmp.eq.s32.totalorder %s17, 0
    %p64 = por %p62, %p63
    %p65 = scmp.ne.s32.totalorder %s51, %s52
    %p66 = scmp.eq.s32.totalorder %s18, 8
    %p67 = por %p65, %p66
    %p69 = scmp.ne.s32.totalorder %s52, %s68
    %p70 = scmp.eq.s32.totalorder %s18, 0
    %p71 = por %p69, %p70
    %s72 = ssub.s32 %s12, %s19
    %p73 = scmp.eq.s32.totalorder %s72, 0
    %s75 = sadd.s32 %s74, 1
    %s76 = scalar_select %p73, %s74, %s75
    %p79 = pneg %p73
    %p80 = scmp.eq.s32.totalorder %s12, 8
    %p81 = por %p79, %p80
    %p82 = scmp.ne.s32.totalorder %s74, %s77
    %p83 = scmp.eq.s32.totalorder %s12, 0
    %p84 = por %p82, %p83
    %p85 = scmp.ne.s32.totalorder %s74, %s77
    %p86 = scmp.eq.s32.totalorder %s17, 8
    %p87 = por %p85, %p86
    %p88 = scmp.ne.s32.totalorder %s77, %s78
    %p89 = scmp.eq.s32.totalorder %s17, 0
    %p90 = por %p88, %p89
    %p91 = scmp.ne.s32.totalorder %s77, %s78
    %p92 = scmp.eq.s32.totalorder %s18, 8
    %p93 = por %p91, %p92
    %p95 = scmp.ne.s32.totalorder %s78, %s94
    %p96 = scmp.eq.s32.totalorder %s18, 0
    %p97 = por %p95, %p96
    %s98 = ssub.s32 %s12, %s19
    %p99 = scmp.eq.s32.totalorder %s98, 0
    %s101 = sadd.s32 %s100, 1
    %s102 = scalar_select %p99, %s100, %s101
    %p105 = pneg %p99
    %p106 = scmp.eq.s32.totalorder %s12, 8
    %p107 = por %p105, %p106
    %p108 = scmp.ne.s32.totalorder %s100, %s103
    %p109 = scmp.eq.s32.totalorder %s12, 0
    %p110 = por %p108, %p109
    %p111 = scmp.ne.s32.totalorder %s100, %s103
    %p112 = scmp.eq.s32.totalorder %s17, 8
    %p113 = por %p111, %p112
    %p114 = scmp.ne.s32.totalorder %s103, %s104
    %p115 = scmp.eq.s32.totalorder %s17, 0
    %p116 = por %p114, %p115
    %p117 = scmp.ne.s32.totalorder %s103, %s104
    %p118 = scmp.eq.s32.totalorder %s18, 8
    %p119 = por %p117, %p118
    %p121 = scmp.ne.s32.totalorder %s104, %s120
    %p122 = scmp.eq.s32.totalorder %s18, 0
    %p123 = por %p121, %p122
    %s125 = sadd.s32 %s124, 1
    %p128 = scmp.eq.s32.totalorder %s12, 8
    %p129 = scmp.ne.s32.totalorder %s124, %s126
    %p130 = scmp.eq.s32.totalorder %s12, 0
    %p131 = por %p129, %p130
    %p132 = scmp.ne.s32.totalorder %s124, %s126
    %p133 = scmp.eq.s32.totalorder %s17, 8
    %p134 = por %p132, %p133
    %p135 = scmp.ne.s32.totalorder %s126, %s127
    %p136 = scmp.eq.s32.totalorder %s17, 0
    %p137 = por %p135, %p136
    %p138 = scmp.ne.s32.totalorder %s126, %s127
    %p139 = scmp.eq.s32.totalorder %s18, 8
    %p140 = por %p138, %p139
    %p142 = scmp.ne.s32.totalorder %s127, %s141
    %p143 = scmp.eq.s32.totalorder %s18, 0
    %p144 = por %p142, %p143
    %s146 = sadd.s32 %s145, 1
    %p149 = scmp.eq.s32.totalorder %s12, 8
    %p150 = scmp.ne.s32.totalorder %s145, %s147
    %p151 = scmp.eq.s32.totalorder %s12, 0
    %p152 = por %p150, %p151
    %p153 = scmp.ne.s32.totalorder %s145, %s147
    %p154 = scmp.eq.s32.totalorder %s17, 8
    %p155 = por %p153, %p154
    %p156 = scmp.ne.s32.totalorder %s147, %s148
    %p157 = scmp.eq.s32.totalorder %s17, 0
    %p158 = por %p156, %p157
    %p159 = scmp.ne.s32.totalorder %s147, %s148
    %p160 = scmp.eq.s32.totalorder %s18, 8
    %p161 = por %p159, %p160
    %p163 = scmp.ne.s32.totalorder %s148, %s162
    %p164 = scmp.eq.s32.totalorder %s18, 0
    %p165 = por %p163, %p164
    %s166 = ssub.s32 %s12, %s19
    %p167 = scmp.eq.s32.totalorder %s166, 0
    %s169 = sadd.s32 %s168, 1
    %s170 = scalar_select %p167, %s168, %s169
    %p173 = pneg %p167
    %p174 = scmp.eq.s32.totalorder %s12, 8
    %p175 = por %p173, %p174
    %p176 = scmp.ne.s32.totalorder %s168, %s171
    %p177 = scmp.eq.s32.totalorder %s12, 0
    %p178 = por %p176, %p177
    %p179 = scmp.ne.s32.totalorder %s168, %s171
    %p180 = scmp.eq.s32.totalorder %s17, 8
    %p181 = por %p179, %p180
    %p182 = scmp.ne.s32.totalorder %s171, %s172
    %p183 = scmp.eq.s32.totalorder %s17, 0
    %p184 = por %p182, %p183
    %p185 = scmp.ne.s32.totalorder %s171, %s172
    %p186 = scmp.eq.s32.totalorder %s18, 8
    %p187 = por %p185, %p186
    %p189 = scmp.ne.s32.totalorder %s172, %s188
    %p190 = scmp.eq.s32.totalorder %s18, 0
    %p191 = por %p189, %p190
    %p192 = scmp.le.s32.totalorder 1, %s12
    %p193 = scmp.lt.s32.totalorder %s12, 10
    %p194 = pnand %p192, %p193
    %p195 = pneg %p194
    // Predicated region
    $region9: #{cnn_forward.3} parent=5 // pred_check
      _
    $region10: #{cnn_forward.3} parent=5 // pred_check_branch
      %197 = sbr.rel (%p194) target = $region12
    $region11: #{cnn_forward.3} parent=5 // pred_region
      %s198 = ssub.s32 %s12, 1
      // Predicated region
      $region13: #{cnn_forward.3} parent=11 // pred_check
        %p199 = pneg %p137
      $region14: #{cnn_forward.3} parent=11 // pred_check_branch
        %201 = sbr.rel (%p199) target = $region16
      $region15: #{cnn_forward.3} parent=11 // pred_region
        _
      $region16: #{cnn_forward.3} parent=11 // pred_fallthru
        _
      // Predicated region
      $region17: #{cnn_forward.3} parent=11 // pred_check
        %p202 = pneg %p158
      $region18: #{cnn_forward.3} parent=11 // pred_check_branch
        %204 = sbr.rel (%p202) target = $region20
      $region19: #{cnn_forward.3} parent=11 // pred_region
        _
      $region20: #{cnn_forward.3} parent=11 // pred_fallthru
        _
    $region12: #{cnn_forward.3} parent=5 // pred_fallthru
      _
    %p205 = scmp.lt.s32.totalorder %s12, 9
    // Predicated region
    $region21: #{cnn_forward.3} parent=5 // pred_check
      %p206 = pneg %p205
    $region22: #{cnn_forward.3} parent=5 // pred_check_branch
      %208 = sbr.rel (%p206) target = $region24
    $region23: #{cnn_forward.3} parent=5 // pred_region
      // Predicated region
      $region25: #{cnn_forward.3} parent=23 // pred_check
        %p209 = pneg %p32
      $region26: #{cnn_forward.3} parent=23 // pred_check_branch
        %211 = sbr.rel (%p209) target = $region28
      $region27: #{cnn_forward.3} parent=23 // pred_region
        %s212 = smul.u32 64, %s12
        %p213 = scmp.lt.s32.totalorder %s212, 575
        %s214 = scalar_select %p213, %s212, 575
        %s215 = smul.addr %s214, 4
        %s216 = scalar_lea.vmem %s0, %s215
        %s217 = smul.u32 64, %s12
      $region28: #{cnn_forward.3} parent=23 // pred_fallthru
        _
      // Predicated region
      $region29: #{cnn_forward.3} parent=23 // pred_check
        %p218 = pneg %p58
      $region30: #{cnn_forward.3} parent=23 // pred_check_branch
        %220 = sbr.rel (%p218) target = $region32
      $region31: #{cnn_forward.3} parent=23 // pred_region
        %s221 = smul.u32 64, %s12
        %p222 = scmp.lt.s32.totalorder %s221, 575
        %s223 = scalar_select %p222, %s221, 575
        %s224 = smul.addr %s223, 4
        %s225 = scalar_lea.vmem %s1, %s224
        %s226 = smul.u32 64, %s12
      $region32: #{cnn_forward.3} parent=23 // pred_fallthru
        _
      // Predicated region
      $region33: #{cnn_forward.3} parent=23 // pred_check
        %p227 = pneg %p84
      $region34: #{cnn_forward.3} parent=23 // pred_check_branch
        %229 = sbr.rel (%p227) target = $region36
      $region35: #{cnn_forward.3} parent=23 // pred_region
        %s230 = smul.u32 64, %s12
        %p231 = scmp.lt.s32.totalorder %s230, 575
        %s232 = scalar_select %p231, %s230, 575
        %s233 = smul.addr %s232, 4
        %s234 = scalar_lea.vmem %s2, %s233
        %s235 = smul.u32 64, %s12
      $region36: #{cnn_forward.3} parent=23 // pred_fallthru
        _
      // Predicated region
      $region37: #{cnn_forward.3} parent=23 // pred_check
        %p236 = pneg %p110
      $region38: #{cnn_forward.3} parent=23 // pred_check_branch
        %238 = sbr.rel (%p236) target = $region40
      $region39: #{cnn_forward.3} parent=23 // pred_region
        %s239 = smul.u32 64, %s12
        %p240 = scmp.lt.s32.totalorder %s239, 575
        %s241 = scalar_select %p240, %s239, 575
        %s242 = smul.addr %s241, 4
        %s243 = scalar_lea.vmem %s3, %s242
        %s244 = smul.u32 64, %s12
      $region40: #{cnn_forward.3} parent=23 // pred_fallthru
        _
    $region24: #{cnn_forward.3} parent=5 // pred_fallthru
      _
    %p245 = scmp.le.s32.totalorder 1, %s12
    %p246 = scmp.lt.s32.totalorder %s12, 10
    %p247 = pnand %p245, %p246
    %p248 = pneg %p247
    // Predicated region
    $region41: #{cnn_forward.3} parent=5 // pred_check
      _
    $region42: #{cnn_forward.3} parent=5 // pred_check_branch
      %250 = sbr.rel (%p247) target = $region44
    $region43: #{cnn_forward.3} parent=5 // pred_region
      %s251 = ssub.s32 %s12, 1
      %s252 = smul.u32 64, %s17
      %p253 = scmp.lt.s32.totalorder %s252, 575
      %s254 = scalar_select %p253, %s252, 575
      %s255 = smul.addr %s254, 4
      %s256 = scalar_lea.vmem %s0, %s255
      %p257 = pneg %p38
      %p258 = pneg %p35
      %s259 = smul.u32 64, %s17
      %p260 = scmp.lt.s32.totalorder %s259, 575
      %s261 = scalar_select %p260, %s259, 575
      %s262 = smul.addr %s261, 4
      %s263 = scalar_lea.vmem %s1, %s262
      %p264 = pneg %p64
      %p265 = pneg %p61
      %s266 = smul.u32 64, %s17
      %p267 = scmp.lt.s32.totalorder %s266, 575
      %s268 = scalar_select %p267, %s266, 575
      %s269 = smul.addr %s268, 4
      %s270 = scalar_lea.vmem %s2, %s269
      %p271 = pneg %p90
      %p272 = pneg %p87
      %s273 = smul.u32 64, %s17
      %p274 = scmp.lt.s32.totalorder %s273, 575
      %s275 = scalar_select %p274, %s273, 575
      %s276 = smul.addr %s275, 4
      %s277 = scalar_lea.vmem %s3, %s276
      %p278 = pneg %p116
      %p279 = pneg %p113
      %p280 = pneg %p137
      %p281 = pneg %p134
      %p282 = pneg %p158
      %p283 = pneg %p155
      %p284 = pneg %p184
      %p285 = pneg %p181
      %s286 = smul.u32 64, %s17
      %p287 = scmp.lt.s32.totalorder %s286, 575
      %s288 = scalar_select %p287, %s286, 575
      %s289 = smul.addr %s288, 4
      %s290 = scalar_lea.vmem %s6, %s289
      %s291 = smul.u32 64, %s17
      %p292 = scmp.lt.s32.totalorder %s291, 575
      %s293 = scalar_select %p292, %s291, 575
      %s294 = smul.addr %s293, 4
      %s295 = scalar_lea.vmem %s0, %s294
      %s296 = smul.u32 64, %s17
      %s297 = smul.u32 64, %s17
      %p298 = scmp.lt.s32.totalorder %s297, 575
      %s299 = scalar_select %p298, %s297, 575
      %s300 = smul.addr %s299, 4
      %s301 = scalar_lea.vmem %s1, %s300
      %s302 = smul.u32 64, %s17
      %s303 = smul.u32 64, %s17
      %p304 = scmp.lt.s32.totalorder %s303, 575
      %s305 = scalar_select %p304, %s303, 575
      %s306 = smul.addr %s305, 4
      %s307 = scalar_lea.vmem %s2, %s306
      %s308 = smul.u32 64, %s17
      %s309 = smul.u32 64, %s17
      %p310 = scmp.lt.s32.totalorder %s309, 575
      %s311 = scalar_select %p310, %s309, 575
      %s312 = smul.addr %s311, 4
      %s313 = scalar_lea.vmem %s3, %s312
      %s314 = smul.u32 64, %s17
      %s315 = smul.u32 64, %s17
      %p316 = scmp.lt.s32.totalorder %s315, 575
      %s317 = scalar_select %p316, %s315, 575
      %s318 = smul.addr %s317, 4
      %s319 = scalar_lea.vmem %s6, %s318
      %s320 = smul.u32 64, %s17
      %v322 = vld [vmem:[%s4] sm:$0xf]
      %v323 = vld [vmem:[%s4 + $0x4] sm:$0xf]
      %v324 = vld [vmem:[%s4 + $0x8] sm:$0xf]
      %v325 = vld [vmem:[%s4 + $0xc] sm:$0xf]
      %v326 = vld [vmem:[%s4 + $0x10] sm:$0xf]
      %v327 = vld [vmem:[%s4 + $0x14] sm:$0xf]
      %v328 = vld [vmem:[%s4 + $0x18] sm:$0xf]
      %v329 = vld [vmem:[%s4 + $0x1c] sm:$0xf]
      %v330 = vld [vmem:[%s4 + $0x20] sm:$0xf]
      %v331 = vld [vmem:[%s4 + $0x24] sm:$0x3]
      %v332 = vld [vmem:[%s5] sm:$0x1]
      %v333 = vld [vmem:[%s295] sm:$0xf]
      %v334 = vld [vmem:[%s295 + $0x4] sm:$0xf]
      %v335 = vld [vmem:[%s295 + $0x8] sm:$0xf]
      %v336 = vld [vmem:[%s295 + $0xc] sm:$0xf]
      %v337 = vld [vmem:[%s295 + $0x10] sm:$0xf]
      %v338 = vld [vmem:[%s295 + $0x14] sm:$0xf]
      %v339 = vld [vmem:[%s295 + $0x18] sm:$0xf]
      %v340 = vld [vmem:[%s295 + $0x1c] sm:$0xf]
      %v341 = vld [vmem:[%s295 + $0x20] sm:$0xf]
      %v342 = vld [vmem:[%s295 + $0x24] sm:$0xf]
      %v343 = vld [vmem:[%s295 + $0x28] sm:$0xf]
      %v344 = vld [vmem:[%s295 + $0x2c] sm:$0xf]
      %v345 = vld [vmem:[%s295 + $0x30] sm:$0xf]
      %v346 = vld [vmem:[%s295 + $0x34] sm:$0xf]
      %v347 = vld [vmem:[%s295 + $0x38] sm:$0xf]
      %v348 = vld [vmem:[%s295 + $0x3c] sm:$0xf]
      %v349 = vld [vmem:[%s295 + $0x40] sm:$0xf]
      %v350 = vld [vmem:[%s295 + $0x44] sm:$0xf]
      %v351 = vld [vmem:[%s295 + $0x48] sm:$0xf]
      %v352 = vld [vmem:[%s295 + $0x4c] sm:$0xf]
      %v353 = vld [vmem:[%s295 + $0x50] sm:$0xf]
      %v354 = vld [vmem:[%s295 + $0x54] sm:$0xf]
      %v355 = vld [vmem:[%s295 + $0x58] sm:$0xf]
      %v356 = vld [vmem:[%s295 + $0x5c] sm:$0xf]
      %v357 = vld [vmem:[%s295 + $0x60] sm:$0xf]
      %v358 = vld [vmem:[%s295 + $0x64] sm:$0xf]
      %v359 = vld [vmem:[%s295 + $0x68] sm:$0xf]
      %v360 = vld [vmem:[%s295 + $0x6c] sm:$0xf]
      %v361 = vld [vmem:[%s295 + $0x70] sm:$0xf]
      %v362 = vld [vmem:[%s295 + $0x74] sm:$0xf]
      %v363 = vld [vmem:[%s295 + $0x78] sm:$0xf]
      %v364 = vld [vmem:[%s295 + $0x7c] sm:$0xf]
      %v365 = vld [vmem:[%s295 + $0x80] sm:$0xf]
      %v366 = vld [vmem:[%s295 + $0x84] sm:$0xf]
      %v367 = vld [vmem:[%s295 + $0x88] sm:$0xf]
      %v368 = vld [vmem:[%s295 + $0x8c] sm:$0xf]
      %v369 = vld [vmem:[%s295 + $0x90] sm:$0xf]
      %v370 = vld [vmem:[%s295 + $0x94] sm:$0xf]
      %v371 = vld [vmem:[%s295 + $0x98] sm:$0xf]
      %v372 = vld [vmem:[%s295 + $0x9c] sm:$0xf]
      %v373 = vld [vmem:[%s295 + $0xa0] sm:$0xf]
      %v374 = vld [vmem:[%s295 + $0xa4] sm:$0xf]
      %v375 = vld [vmem:[%s295 + $0xa8] sm:$0xf]
      %v376 = vld [vmem:[%s295 + $0xac] sm:$0xf]
      %v377 = vld [vmem:[%s295 + $0xb0] sm:$0xf]
      %v378 = vld [vmem:[%s295 + $0xb4] sm:$0xf]
      %v379 = vld [vmem:[%s295 + $0xb8] sm:$0xf]
      %v380 = vld [vmem:[%s295 + $0xbc] sm:$0xf]
      %v381 = vld [vmem:[%s295 + $0xc0] sm:$0xf]
      %v382 = vld [vmem:[%s295 + $0xc4] sm:$0xf]
      %v383 = vld [vmem:[%s295 + $0xc8] sm:$0xf]
      %v384 = vld [vmem:[%s295 + $0xcc] sm:$0xf]
      %v385 = vld [vmem:[%s295 + $0xd0] sm:$0xf]
      %v386 = vld [vmem:[%s295 + $0xd4] sm:$0xf]
      %v387 = vld [vmem:[%s295 + $0xd8] sm:$0xf]
      %v388 = vld [vmem:[%s295 + $0xdc] sm:$0xf]
      %v389 = vld [vmem:[%s295 + $0xe0] sm:$0xf]
      %v390 = vld [vmem:[%s295 + $0xe4] sm:$0xf]
      %v391 = vld [vmem:[%s295 + $0xe8] sm:$0xf]
      %v392 = vld [vmem:[%s295 + $0xec] sm:$0xf]
      %v393 = vld [vmem:[%s295 + $0xf0] sm:$0xf]
      %v394 = vld [vmem:[%s295 + $0xf4] sm:$0xf]
      %v395 = vld [vmem:[%s295 + $0xf8] sm:$0xf]
      %v396 = vld [vmem:[%s295 + $0xfc] sm:$0xf]
      %v398 = vlaneseq
      %v399 = vshrl.u32 %v398, 7
      %v400 = vsub.s32 0, %v399
      %v401 = vrot.slane %v332, %v400
      %v467 = vunpack.c.l.b16 %v333
      %v468 = vunpack.c.l.b16 %v334
      %v469 = vunpack.c.l.b16 %v335
      %v470 = vunpack.c.l.b16 %v336
      %v471 = vunpack.c.l.b16 %v337
      %v472 = vunpack.c.l.b16 %v338
      %v473 = vunpack.c.l.b16 %v339
      %v474 = vunpack.c.l.b16 %v340
      %v475 = vunpack.c.l.b16 %v341
      %v476 = vunpack.c.l.b16 %v342
      %v477 = vunpack.c.l.b16 %v343
      %v478 = vunpack.c.l.b16 %v344
      %v479 = vunpack.c.l.b16 %v345
      %v480 = vunpack.c.l.b16 %v346
      %v481 = vunpack.c.l.b16 %v347
      %v482 = vunpack.c.l.b16 %v348
      %v483 = vunpack.c.l.b16 %v349
      %v484 = vunpack.c.l.b16 %v350
      %v485 = vunpack.c.l.b16 %v351
      %v486 = vunpack.c.l.b16 %v352
      %v487 = vunpack.c.l.b16 %v353
      %v488 = vunpack.c.l.b16 %v354
      %v489 = vunpack.c.l.b16 %v355
      %v490 = vunpack.c.l.b16 %v356
      %v491 = vunpack.c.l.b16 %v357
      %v492 = vunpack.c.l.b16 %v358
      %v493 = vunpack.c.l.b16 %v359
      %v494 = vunpack.c.l.b16 %v360
      %v495 = vunpack.c.l.b16 %v361
      %v496 = vunpack.c.l.b16 %v362
      %v497 = vunpack.c.l.b16 %v363
      %v498 = vunpack.c.l.b16 %v364
      %v499 = vunpack.c.l.b16 %v365
      %v500 = vunpack.c.l.b16 %v366
      %v501 = vunpack.c.l.b16 %v367
      %v502 = vunpack.c.l.b16 %v368
      %v503 = vunpack.c.l.b16 %v369
      %v504 = vunpack.c.l.b16 %v370
      %v505 = vunpack.c.l.b16 %v371
      %v506 = vunpack.c.l.b16 %v372
      %v507 = vunpack.c.l.b16 %v373
      %v508 = vunpack.c.l.b16 %v374
      %v509 = vunpack.c.l.b16 %v375
      %v510 = vunpack.c.l.b16 %v376
      %v511 = vunpack.c.l.b16 %v377
      %v512 = vunpack.c.l.b16 %v378
      %v513 = vunpack.c.l.b16 %v379
      %v514 = vunpack.c.l.b16 %v380
      %v515 = vunpack.c.l.b16 %v381
      %v516 = vunpack.c.l.b16 %v382
      %v517 = vunpack.c.l.b16 %v383
      %v518 = vunpack.c.l.b16 %v384
      %v519 = vunpack.c.l.b16 %v385
      %v520 = vunpack.c.l.b16 %v386
      %v521 = vunpack.c.l.b16 %v387
      %v522 = vunpack.c.l.b16 %v388
      %v523 = vunpack.c.l.b16 %v389
      %v524 = vunpack.c.l.b16 %v390
      %v525 = vunpack.c.l.b16 %v391
      %v526 = vunpack.c.l.b16 %v392
      %v527 = vunpack.c.l.b16 %v393
      %v528 = vunpack.c.l.b16 %v394
      %v529 = vunpack.c.l.b16 %v395
      %v530 = vunpack.c.l.b16 %v396
      %v531 = vpack.c.b16 %v468, %v467
      %v532 = vpack.c.b16 %v470, %v469
      %v533 = vpack.c.b16 %v472, %v471
      %v534 = vpack.c.b16 %v474, %v473
      %v535 = vpack.c.b16 %v476, %v475
      %v536 = vpack.c.b16 %v478, %v477
      %v537 = vpack.c.b16 %v480, %v479
      %v538 = vpack.c.b16 %v482, %v481
      %v539 = vpack.c.b16 %v484, %v483
      %v540 = vpack.c.b16 %v486, %v485
      %v541 = vpack.c.b16 %v488, %v487
      %v542 = vpack.c.b16 %v490, %v489
      %v543 = vpack.c.b16 %v492, %v491
      %v544 = vpack.c.b16 %v494, %v493
      %v545 = vpack.c.b16 %v496, %v495
      %v546 = vpack.c.b16 %v498, %v497
      %v547 = vpack.c.b16 %v500, %v499
      %v548 = vpack.c.b16 %v502, %v501
      %v549 = vpack.c.b16 %v504, %v503
      %v550 = vpack.c.b16 %v506, %v505
      %v551 = vpack.c.b16 %v508, %v507
      %v552 = vpack.c.b16 %v510, %v509
      %v553 = vpack.c.b16 %v512, %v511
      %v554 = vpack.c.b16 %v514, %v513
      %v555 = vpack.c.b16 %v516, %v515
      %v556 = vpack.c.b16 %v518, %v517
      %v557 = vpack.c.b16 %v520, %v519
      %v558 = vpack.c.b16 %v522, %v521
      %v559 = vpack.c.b16 %v524, %v523
      %v560 = vpack.c.b16 %v526, %v525
      %v561 = vpack.c.b16 %v528, %v527
      %v562 = vpack.c.b16 %v530, %v529
      %v573 = vunpack.c.l.b16 %v322
      %v574 = vunpack.c.l.b16 %v323
      %v575 = vunpack.c.l.b16 %v324
      %v576 = vunpack.c.l.b16 %v325
      %v577 = vunpack.c.l.b16 %v326
      %v578 = vunpack.c.l.b16 %v327
      %v579 = vunpack.c.l.b16 %v328
      %v580 = vunpack.c.l.b16 %v329
      %v581 = vunpack.c.l.b16 %v330
      %v582 = vunpack.c.l.b16 %v331
      %v583 = vpack.c.b16 %v574, %v573
      %v584 = vpack.c.b16 %v576, %v575
      %v585 = vpack.c.b16 %v578, %v577
      %v586 = vpack.c.b16 %v580, %v579
      %v587 = vpack.c.b16 %v582, %v581
      %vm592 = vcmask 613376
      %v594 = vsel %vm592, %v531, 0
      %v597 = vsel %vm592, %v532, 0
      %v600 = vsel %vm592, %v533, 0
      %v603 = vsel %vm592, %v534, 0
      %v606 = vsel %vm592, %v535, 0
      %v609 = vsel %vm592, %v536, 0
      %v612 = vsel %vm592, %v537, 0
      %v615 = vsel %vm592, %v538, 0
      %v618 = vsel %vm592, %v539, 0
      %v621 = vsel %vm592, %v540, 0
      %v624 = vsel %vm592, %v541, 0
      %v627 = vsel %vm592, %v542, 0
      %v630 = vsel %vm592, %v543, 0
      %v633 = vsel %vm592, %v544, 0
      %v636 = vsel %vm592, %v545, 0
      %v639 = vsel %vm592, %v546, 0
      %v642 = vsel %vm592, %v547, 0
      %v645 = vsel %vm592, %v548, 0
      %v648 = vsel %vm592, %v549, 0
      %v651 = vsel %vm592, %v550, 0
      %v654 = vsel %vm592, %v551, 0
      %v657 = vsel %vm592, %v552, 0
      %v660 = vsel %vm592, %v553, 0
      %v663 = vsel %vm592, %v554, 0
      %v666 = vsel %vm592, %v555, 0
      %v669 = vsel %vm592, %v556, 0
      %v672 = vsel %vm592, %v557, 0
      %v675 = vsel %vm592, %v558, 0
      %v678 = vsel %vm592, %v559, 0
      %v681 = vsel %vm592, %v560, 0
      %v684 = vsel %vm592, %v561, 0
      %v687 = vsel %vm592, %v562, 0
      %vm689 = vcmask 1044480
      %vm690 = vcmask 1045504
      %v691 = vsel %vm689, 4294967295, 65535
      %v692 = vsel %vm690, %v691, 0
      %v694 = vand.u32 %v587, %v692
      %696 = vmatprep.subr.bf16.mxu0 0
      %697 = vmatpush1.bf16.msra.mxu0 %v583
      %698 = vmatprep.subr.bf16.mxu0 0
      %699 = vmatpush1.bf16.msra.mxu0 %v584
      %700 = vmatprep.subr.bf16.mxu0 0
      %701 = vmatpush1.bf16.msra.mxu0 %v585
      %702 = vmatprep.subr.bf16.mxu0 0
      %703 = vmatpush1.bf16.msra.mxu0 %v586
      %704 = vmatprep.subr.bf16.mxu0 0
      %705 = vmatpush1.bf16.msra.mxu0 %v694
      %706 = vmatprep.subr.bf16.mxu0 0
      %707 = vmatpush1.bf16.msra.mxu0 0
      %708 = vmatprep.subr.bf16.mxu0 0
      %709 = vmatpush1.bf16.msra.mxu0 0
      %710 = vmatprep.subr.bf16.mxu0 0
      %711 = vmatpush1.bf16.msra.mxu0 0
      %712 = vmatprep.subr.bf16.mxu0 0
      %713 = vmatpush1.bf16.msra.mxu0 0
      %714 = vmatprep.subr.bf16.mxu0 0
      %715 = vmatpush1.bf16.msra.mxu0 0
      %716 = vmatprep.subr.bf16.mxu0 0
      %717 = vmatpush1.bf16.msra.mxu0 0
      %718 = vmatprep.subr.bf16.mxu0 0
      %719 = vmatpush1.bf16.msra.mxu0 0
      %720 = vmatprep.subr.bf16.mxu0 0
      %721 = vmatpush1.bf16.msra.mxu0 0
      %722 = vmatprep.subr.bf16.mxu0 0
      %723 = vmatpush1.bf16.msra.mxu0 0
      %724 = vmatprep.subr.bf16.mxu0 0
      %725 = vmatpush1.bf16.msra.mxu0 0
      %726 = vmatprep.subr.bf16.mxu0 0
      %727 = vmatpush1.bf16.msra.mxu0 0
      %728 = vmatprep.mubr.bf16.mxu0 0
      %729 = vmatmul.mubr.bf16.gmra.mrb[0].mxu0 %v594
      %v730 = vpop.f32.mrb[0].mxu0
      %v731 = vadd.f32 %v401, %v730
      %v732 = vpop.f32.mrb[0].mxu0
      %v733 = vpop.f32.mrb[0].mxu0
      %v734 = vadd.f32 %v401, %v733
      %v735 = vpop.f32.mrb[0].mxu0
      %736 = vmatprep.mubr.bf16.mxu0 0
      %737 = vmatmul.mubr.bf16.gmra.mrb[0].mxu0 %v597
      %v738 = vpop.f32.mrb[0].mxu0
      %v739 = vadd.f32 %v401, %v738
      %v740 = vpop.f32.mrb[0].mxu0
      %v741 = vpop.f32.mrb[0].mxu0
      %v742 = vadd.f32 %v401, %v741
      %v743 = vpop.f32.mrb[0].mxu0
      %744 = vmatprep.mubr.bf16.mxu0 0
      %745 = vmatmul.mubr.bf16.gmra.mrb[0].mxu0 %v600
      %v746 = vpop.f32.mrb[0].mxu0
      %v747 = vadd.f32 %v401, %v746
      %v748 = vpop.f32.mrb[0].mxu0
      %v749 = vpop.f32.mrb[0].mxu0
      %v750 = vadd.f32 %v401, %v749
      %v751 = vpop.f32.mrb[0].mxu0
      %752 = vmatprep.mubr.bf16.mxu0 0
      %753 = vmatmul.mubr.bf16.gmra.mrb[0].mxu0 %v603
      %v754 = vpop.f32.mrb[0].mxu0
      %v755 = vadd.f32 %v401, %v754
      %v756 = vpop.f32.mrb[0].mxu0
      %v757 = vpop.f32.mrb[0].mxu0
      %v758 = vadd.f32 %v401, %v757
      %v759 = vpop.f32.mrb[0].mxu0
      %760 = vmatprep.mubr.bf16.mxu0 0
      %761 = vmatmul.mubr.bf16.gmra.mrb[0].mxu0 %v606
      %v762 = vpop.f32.mrb[0].mxu0
      %v763 = vadd.f32 %v401, %v762
      %v764 = vpop.f32.mrb[0].mxu0
      %v765 = vpop.f32.mrb[0].mxu0
      %v766 = vadd.f32 %v401, %v765
      %v767 = vpop.f32.mrb[0].mxu0
      %768 = vmatprep.mubr.bf16.mxu0 0
      %769 = vmatmul.mubr.bf16.gmra.mrb[0].mxu0 %v609
      %v770 = vpop.f32.mrb[0].mxu0
      %v771 = vadd.f32 %v401, %v770
      %v772 = vpop.f32.mrb[0].mxu0
      %v773 = vpop.f32.mrb[0].mxu0
      %v774 = vadd.f32 %v401, %v773
      %v775 = vpop.f32.mrb[0].mxu0
      %776 = vmatprep.mubr.bf16.mxu0 0
      %777 = vmatmul.mubr.bf16.gmra.mrb[0].mxu0 %v612
      %v778 = vpop.f32.mrb[0].mxu0
      %v779 = vadd.f32 %v401, %v778
      %v780 = vpop.f32.mrb[0].mxu0
      %v781 = vpop.f32.mrb[0].mxu0
      %v782 = vadd.f32 %v401, %v781
      %v783 = vpop.f32.mrb[0].mxu0
      %784 = vmatprep.mubr.bf16.mxu0 0
      %785 = vmatmul.mubr.bf16.gmra.mrb[0].mxu0 %v615
      %v786 = vpop.f32.mrb[0].mxu0
      %v787 = vadd.f32 %v401, %v786
      %v788 = vpop.f32.mrb[0].mxu0
      %v789 = vpop.f32.mrb[0].mxu0
      %v790 = vadd.f32 %v401, %v789
      %v791 = vpop.f32.mrb[0].mxu0
      %792 = vmatprep.mubr.bf16.mxu0 0
      %793 = vmatmul.mubr.bf16.gmra.mrb[0].mxu0 %v618
      %v794 = vpop.f32.mrb[0].mxu0
      %v795 = vadd.f32 %v401, %v794
      %v796 = vpop.f32.mrb[0].mxu0
      %v797 = vpop.f32.mrb[0].mxu0
      %v798 = vadd.f32 %v401, %v797
      %v799 = vpop.f32.mrb[0].mxu0
      %800 = vmatprep.mubr.bf16.mxu0 0
      %801 = vmatmul.mubr.bf16.gmra.mrb[0].mxu0 %v621
      %v802 = vpop.f32.mrb[0].mxu0
      %v803 = vadd.f32 %v401, %v802
      %v804 = vpop.f32.mrb[0].mxu0
      %v805 = vpop.f32.mrb[0].mxu0
      %v806 = vadd.f32 %v401, %v805
      %v807 = vpop.f32.mrb[0].mxu0
      %808 = vmatprep.mubr.bf16.mxu0 0
      %809 = vmatmul.mubr.bf16.gmra.mrb[0].mxu0 %v624
      %v810 = vpop.f32.mrb[0].mxu0
      %v811 = vadd.f32 %v401, %v810
      %v812 = vpop.f32.mrb[0].mxu0
      %v813 = vpop.f32.mrb[0].mxu0
      %v814 = vadd.f32 %v401, %v813
      %v815 = vpop.f32.mrb[0].mxu0
      %816 = vmatprep.mubr.bf16.mxu0 0
      %817 = vmatmul.mubr.bf16.gmra.mrb[0].mxu0 %v627
      %v818 = vpop.f32.mrb[0].mxu0
      %v819 = vadd.f32 %v401, %v818
      %v820 = vpop.f32.mrb[0].mxu0
      %v821 = vpop.f32.mrb[0].mxu0
      %v822 = vadd.f32 %v401, %v821
      %v823 = vpop.f32.mrb[0].mxu0
      %824 = vmatprep.mubr.bf16.mxu0 0
      %825 = vmatmul.mubr.bf16.gmra.mrb[0].mxu0 %v630
      %v826 = vpop.f32.mrb[0].mxu0
      %v827 = vadd.f32 %v401, %v826
      %v828 = vpop.f32.mrb[0].mxu0
      %v829 = vpop.f32.mrb[0].mxu0
      %v830 = vadd.f32 %v401, %v829
      %v831 = vpop.f32.mrb[0].mxu0
      %832 = vmatprep.mubr.bf16.mxu0 0
      %833 = vmatmul.mubr.bf16.gmra.mrb[0].mxu0 %v633
      %v834 = vpop.f32.mrb[0].mxu0
      %v835 = vadd.f32 %v401, %v834
      %v836 = vpop.f32.mrb[0].mxu0
      %v837 = vpop.f32.mrb[0].mxu0
      %v838 = vadd.f32 %v401, %v837
      %v839 = vpop.f32.mrb[0].mxu0
      %840 = vmatprep.mubr.bf16.mxu0 0
      %841 = vmatmul.mubr.bf16.gmra.mrb[0].mxu0 %v636
      %v842 = vpop.f32.mrb[0].mxu0
      %v843 = vadd.f32 %v401, %v842
      %v844 = vpop.f32.mrb[0].mxu0
      %v845 = vpop.f32.mrb[0].mxu0
      %v846 = vadd.f32 %v401, %v845
      %v847 = vpop.f32.mrb[0].mxu0
      %848 = vmatprep.mubr.bf16.mxu0 0
      %849 = vmatmul.mubr.bf16.gmra.mrb[0].mxu0 %v639
      %v850 = vpop.f32.mrb[0].mxu0
      %v851 = vadd.f32 %v401, %v850
      %v852 = vpop.f32.mrb[0].mxu0
      %v853 = vpop.f32.mrb[0].mxu0
      %v854 = vadd.f32 %v401, %v853
      %v855 = vpop.f32.mrb[0].mxu0
      %856 = vmatprep.mubr.bf16.mxu0 0
      %857 = vmatmul.mubr.bf16.gmra.mrb[0].mxu0 %v642
      %v858 = vpop.f32.mrb[0].mxu0
      %v859 = vadd.f32 %v401, %v858
      %v860 = vpop.f32.mrb[0].mxu0
      %v861 = vpop.f32.mrb[0].mxu0
      %v862 = vadd.f32 %v401, %v861
      %v863 = vpop.f32.mrb[0].mxu0
      %864 = vmatprep.mubr.bf16.mxu0 0
      %865 = vmatmul.mubr.bf16.gmra.mrb[0].mxu0 %v645
      %v866 = vpop.f32.mrb[0].mxu0
      %v867 = vadd.f32 %v401, %v866
      %v868 = vpop.f32.mrb[0].mxu0
      %v869 = vpop.f32.mrb[0].mxu0
      %v870 = vadd.f32 %v401, %v869
      %v871 = vpop.f32.mrb[0].mxu0
      %872 = vmatprep.mubr.bf16.mxu0 0
      %873 = vmatmul.mubr.bf16.gmra.mrb[0].mxu0 %v648
      %v874 = vpop.f32.mrb[0].mxu0
      %v875 = vadd.f32 %v401, %v874
      %v876 = vpop.f32.mrb[0].mxu0
      %v877 = vpop.f32.mrb[0].mxu0
      %v878 = vadd.f32 %v401, %v877
      %v879 = vpop.f32.mrb[0].mxu0
      %880 = vmatprep.mubr.bf16.mxu0 0
      %881 = vmatmul.mubr.bf16.gmra.mrb[0].mxu0 %v651
      %v882 = vpop.f32.mrb[0].mxu0
      %v883 = vadd.f32 %v401, %v882
      %v884 = vpop.f32.mrb[0].mxu0
      %v885 = vpop.f32.mrb[0].mxu0
      %v886 = vadd.f32 %v401, %v885
      %v887 = vpop.f32.mrb[0].mxu0
      %888 = vmatprep.mubr.bf16.mxu0 0
      %889 = vmatmul.mubr.bf16.gmra.mrb[0].mxu0 %v654
      %v890 = vpop.f32.mrb[0].mxu0
      %v891 = vadd.f32 %v401, %v890
      %v892 = vpop.f32.mrb[0].mxu0
      %v893 = vpop.f32.mrb[0].mxu0
      %v894 = vadd.f32 %v401, %v893
      %v895 = vpop.f32.mrb[0].mxu0
      %896 = vmatprep.mubr.bf16.mxu0 0
      %897 = vmatmul.mubr.bf16.gmra.mrb[0].mxu0 %v657
      %v898 = vpop.f32.mrb[0].mxu0
      %v899 = vadd.f32 %v401, %v898
      %v900 = vpop.f32.mrb[0].mxu0
      %v901 = vpop.f32.mrb[0].mxu0
      %v902 = vadd.f32 %v401, %v901
      %v903 = vpop.f32.mrb[0].mxu0
      %904 = vmatprep.mubr.bf16.mxu0 0
      %905 = vmatmul.mubr.bf16.gmra.mrb[0].mxu0 %v660
      %v906 = vpop.f32.mrb[0].mxu0
      %v907 = vadd.f32 %v401, %v906
      %v908 = vpop.f32.mrb[0].mxu0
      %v909 = vpop.f32.mrb[0].mxu0
      %v910 = vadd.f32 %v401, %v909
      %v911 = vpop.f32.mrb[0].mxu0
      %912 = vmatprep.mubr.bf16.mxu0 0
      %913 = vmatmul.mubr.bf16.gmra.mrb[0].mxu0 %v663
      %v914 = vpop.f32.mrb[0].mxu0
      %v915 = vadd.f32 %v401, %v914
      %v916 = vpop.f32.mrb[0].mxu0
      %v917 = vpop.f32.mrb[0].mxu0
      %v918 = vadd.f32 %v401, %v917
      %v919 = vpop.f32.mrb[0].mxu0
      %920 = vmatprep.mubr.bf16.mxu0 0
      %921 = vmatmul.mubr.bf16.gmra.mrb[0].mxu0 %v666
      %v922 = vpop.f32.mrb[0].mxu0
      %v923 = vadd.f32 %v401, %v922
      %v924 = vpop.f32.mrb[0].mxu0
      %v925 = vpop.f32.mrb[0].mxu0
      %v926 = vadd.f32 %v401, %v925
      %v927 = vpop.f32.mrb[0].mxu0
      %928 = vmatprep.mubr.bf16.mxu0 0
      %929 = vmatmul.mubr.bf16.gmra.mrb[0].mxu0 %v669
      %v930 = vpop.f32.mrb[0].mxu0
      %v931 = vadd.f32 %v401, %v930
      %v932 = vpop.f32.mrb[0].mxu0
      %v933 = vpop.f32.mrb[0].mxu0
      %v934 = vadd.f32 %v401, %v933
      %v935 = vpop.f32.mrb[0].mxu0
      %936 = vmatprep.mubr.bf16.mxu0 0
      %937 = vmatmul.mubr.bf16.gmra.mrb[0].mxu0 %v672
      %v938 = vpop.f32.mrb[0].mxu0
      %v939 = vadd.f32 %v401, %v938
      %v940 = vpop.f32.mrb[0].mxu0
      %v941 = vpop.f32.mrb[0].mxu0
      %v942 = vadd.f32 %v401, %v941
      %v943 = vpop.f32.mrb[0].mxu0
      %944 = vmatprep.mubr.bf16.mxu0 0
      %945 = vmatmul.mubr.bf16.gmra.mrb[0].mxu0 %v675
      %v946 = vpop.f32.mrb[0].mxu0
      %v947 = vadd.f32 %v401, %v946
      %v948 = vpop.f32.mrb[0].mxu0
      %v949 = vpop.f32.mrb[0].mxu0
      %v950 = vadd.f32 %v401, %v949
      %v951 = vpop.f32.mrb[0].mxu0
      %952 = vmatprep.mubr.bf16.mxu0 0
      %953 = vmatmul.mubr.bf16.gmra.mrb[0].mxu0 %v678
      %v954 = vpop.f32.mrb[0].mxu0
      %v955 = vadd.f32 %v401, %v954
      %v956 = vpop.f32.mrb[0].mxu0
      %v957 = vpop.f32.mrb[0].mxu0
      %v958 = vadd.f32 %v401, %v957
      %v959 = vpop.f32.mrb[0].mxu0
      %960 = vmatprep.mubr.bf16.mxu0 0
      %961 = vmatmul.mubr.bf16.gmra.mrb[0].mxu0 %v681
      %v962 = vpop.f32.mrb[0].mxu0
      %v963 = vadd.f32 %v401, %v962
      %v964 = vpop.f32.mrb[0].mxu0
      %v965 = vpop.f32.mrb[0].mxu0
      %v966 = vadd.f32 %v401, %v965
      %v967 = vpop.f32.mrb[0].mxu0
      %968 = vmatprep.mubr.bf16.mxu0 0
      %969 = vmatmul.mubr.bf16.gmra.mrb[0].mxu0 %v684
      %v970 = vpop.f32.mrb[0].mxu0
      %v971 = vadd.f32 %v401, %v970
      %v972 = vpop.f32.mrb[0].mxu0
      %v973 = vpop.f32.mrb[0].mxu0
      %v974 = vadd.f32 %v401, %v973
      %v975 = vpop.f32.mrb[0].mxu0
      %976 = vmatprep.mubr.bf16.mxu0 0
      %977 = vmatmul.mubr.bf16.gmra.mrb[0].mxu0 %v687
      %v978 = vpop.f32.mrb[0].mxu0
      %v979 = vadd.f32 %v401, %v978
      %v980 = vpop.f32.mrb[0].mxu0
      %v981 = vpop.f32.mrb[0].mxu0
      %v982 = vadd.f32 %v401, %v981
      %v983 = vpop.f32.mrb[0].mxu0
      %984 = vdwg.mxu0
      %v985 = vmax.f32 %v731, 0.0
      %v986 = vmax.f32 %v734, 0.0
      %v987 = vmax.f32 %v739, 0.0
      %v988 = vmax.f32 %v742, 0.0
      %v989 = vmax.f32 %v747, 0.0
      %v990 = vmax.f32 %v750, 0.0
      %v991 = vmax.f32 %v755, 0.0
      %v992 = vmax.f32 %v758, 0.0
      %v993 = vmax.f32 %v763, 0.0
      %v994 = vmax.f32 %v766, 0.0
      %v995 = vmax.f32 %v771, 0.0
      %v996 = vmax.f32 %v774, 0.0
      %v997 = vmax.f32 %v779, 0.0
      %v998 = vmax.f32 %v782, 0.0
      %v999 = vmax.f32 %v787, 0.0
      %v1000 = vmax.f32 %v790, 0.0
      %v1001 = vmax.f32 %v795, 0.0
      %v1002 = vmax.f32 %v798, 0.0
      %v1003 = vmax.f32 %v803, 0.0
      %v1004 = vmax.f32 %v806, 0.0
      %v1005 = vmax.f32 %v811, 0.0
      %v1006 = vmax.f32 %v814, 0.0
      %v1007 = vmax.f32 %v819, 0.0
      %v1008 = vmax.f32 %v822, 0.0
      %v1009 = vmax.f32 %v827, 0.0
      %v1010 = vmax.f32 %v830, 0.0
      %v1011 = vmax.f32 %v835, 0.0
      %v1012 = vmax.f32 %v838, 0.0
      %v1013 = vmax.f32 %v843, 0.0
      %v1014 = vmax.f32 %v846, 0.0
      %v1015 = vmax.f32 %v851, 0.0
      %v1016 = vmax.f32 %v854, 0.0
      %v1017 = vmax.f32 %v859, 0.0
      %v1018 = vmax.f32 %v862, 0.0
      %v1019 = vmax.f32 %v867, 0.0
      %v1020 = vmax.f32 %v870, 0.0
      %v1021 = vmax.f32 %v875, 0.0
      %v1022 = vmax.f32 %v878, 0.0
      %v1023 = vmax.f32 %v883, 0.0
      %v1024 = vmax.f32 %v886, 0.0
      %v1025 = vmax.f32 %v891, 0.0
      %v1026 = vmax.f32 %v894, 0.0
      %v1027 = vmax.f32 %v899, 0.0
      %v1028 = vmax.f32 %v902, 0.0
      %v1029 = vmax.f32 %v907, 0.0
      %v1030 = vmax.f32 %v910, 0.0
      %v1031 = vmax.f32 %v915, 0.0
      %v1032 = vmax.f32 %v918, 0.0
      %v1033 = vmax.f32 %v923, 0.0
      %v1034 = vmax.f32 %v926, 0.0
      %v1035 = vmax.f32 %v931, 0.0
      %v1036 = vmax.f32 %v934, 0.0
      %v1037 = vmax.f32 %v939, 0.0
      %v1038 = vmax.f32 %v942, 0.0
      %v1039 = vmax.f32 %v947, 0.0
      %v1040 = vmax.f32 %v950, 0.0
      %v1041 = vmax.f32 %v955, 0.0
      %v1042 = vmax.f32 %v958, 0.0
      %v1043 = vmax.f32 %v963, 0.0
      %v1044 = vmax.f32 %v966, 0.0
      %v1045 = vmax.f32 %v971, 0.0
      %v1046 = vmax.f32 %v974, 0.0
      %v1047 = vmax.f32 %v979, 0.0
      %v1048 = vmax.f32 %v982, 0.0
      %v1049 = vld [vmem:[%s301] sm:$0xf]
      %v1050 = vld [vmem:[%s301 + $0x4] sm:$0xf]
      %v1051 = vld [vmem:[%s301 + $0x8] sm:$0xf]
      %v1052 = vld [vmem:[%s301 + $0xc] sm:$0xf]
      %v1053 = vld [vmem:[%s301 + $0x10] sm:$0xf]
      %v1054 = vld [vmem:[%s301 + $0x14] sm:$0xf]
      %v1055 = vld [vmem:[%s301 + $0x18] sm:$0xf]
      %v1056 = vld [vmem:[%s301 + $0x1c] sm:$0xf]
      %v1057 = vld [vmem:[%s301 + $0x20] sm:$0xf]
      %v1058 = vld [vmem:[%s301 + $0x24] sm:$0xf]
      %v1059 = vld [vmem:[%s301 + $0x28] sm:$0xf]
      %v1060 = vld [vmem:[%s301 + $0x2c] sm:$0xf]
      %v1061 = vld [vmem:[%s301 + $0x30] sm:$0xf]
      %v1062 = vld [vmem:[%s301 + $0x34] sm:$0xf]
      %v1063 = vld [vmem:[%s301 + $0x38] sm:$0xf]
      %v1064 = vld [vmem:[%s301 + $0x3c] sm:$0xf]
      %v1065 = vld [vmem:[%s301 + $0x40] sm:$0xf]
      %v1066 = vld [vmem:[%s301 + $0x44] sm:$0xf]
      %v1067 = vld [vmem:[%s301 + $0x48] sm:$0xf]
      %v1068 = vld [vmem:[%s301 + $0x4c] sm:$0xf]
      %v1069 = vld [vmem:[%s301 + $0x50] sm:$0xf]
      %v1070 = vld [vmem:[%s301 + $0x54] sm:$0xf]
      %v1071 = vld [vmem:[%s301 + $0x58] sm:$0xf]
      %v1072 = vld [vmem:[%s301 + $0x5c] sm:$0xf]
      %v1073 = vld [vmem:[%s301 + $0x60] sm:$0xf]
      %v1074 = vld [vmem:[%s301 + $0x64] sm:$0xf]
      %v1075 = vld [vmem:[%s301 + $0x68] sm:$0xf]
      %v1076 = vld [vmem:[%s301 + $0x6c] sm:$0xf]
      %v1077 = vld [vmem:[%s301 + $0x70] sm:$0xf]
      %v1078 = vld [vmem:[%s301 + $0x74] sm:$0xf]
      %v1079 = vld [vmem:[%s301 + $0x78] sm:$0xf]
      %v1080 = vld [vmem:[%s301 + $0x7c] sm:$0xf]
      %v1081 = vld [vmem:[%s301 + $0x80] sm:$0xf]
      %v1082 = vld [vmem:[%s301 + $0x84] sm:$0xf]
      %v1083 = vld [vmem:[%s301 + $0x88] sm:$0xf]
      %v1084 = vld [vmem:[%s301 + $0x8c] sm:$0xf]
      %v1085 = vld [vmem:[%s301 + $0x90] sm:$0xf]
      %v1086 = vld [vmem:[%s301 + $0x94] sm:$0xf]
      %v1087 = vld [vmem:[%s301 + $0x98] sm:$0xf]
      %v1088 = vld [vmem:[%s301 + $0x9c] sm:$0xf]
      %v1089 = vld [vmem:[%s301 + $0xa0] sm:$0xf]
      %v1090 = vld [vmem:[%s301 + $0xa4] sm:$0xf]
      %v1091 = vld [vmem:[%s301 + $0xa8] sm:$0xf]
      %v1092 = vld [vmem:[%s301 + $0xac] sm:$0xf]
      %v1093 = vld [vmem:[%s301 + $0xb0] sm:$0xf]
      %v1094 = vld [vmem:[%s301 + $0xb4] sm:$0xf]
      %v1095 = vld [vmem:[%s301 + $0xb8] sm:$0xf]
      %v1096 = vld [vmem:[%s301 + $0xbc] sm:$0xf]
      %v1097 = vld [vmem:[%s301 + $0xc0] sm:$0xf]
      %v1098 = vld [vmem:[%s301 + $0xc4] sm:$0xf]
      %v1099 = vld [vmem:[%s301 + $0xc8] sm:$0xf]
      %v1100 = vld [vmem:[%s301 + $0xcc] sm:$0xf]
      %v1101 = vld [vmem:[%s301 + $0xd0] sm:$0xf]
      %v1102 = vld [vmem:[%s301 + $0xd4] sm:$0xf]
      %v1103 = vld [vmem:[%s301 + $0xd8] sm:$0xf]
      %v1104 = vld [vmem:[%s301 + $0xdc] sm:$0xf]
      %v1105 = vld [vmem:[%s301 + $0xe0] sm:$0xf]
      %v1106 = vld [vmem:[%s301 + $0xe4] sm:$0xf]
      %v1107 = vld [vmem:[%s301 + $0xe8] sm:$0xf]
      %v1108 = vld [vmem:[%s301 + $0xec] sm:$0xf]
      %v1109 = vld [vmem:[%s301 + $0xf0] sm:$0xf]
      %v1110 = vld [vmem:[%s301 + $0xf4] sm:$0xf]
      %v1111 = vld [vmem:[%s301 + $0xf8] sm:$0xf]
      %v1112 = vld [vmem:[%s301 + $0xfc] sm:$0xf]
      %v1177 = vunpack.c.l.b16 %v1049
      %v1178 = vunpack.c.l.b16 %v1050
      %v1179 = vunpack.c.l.b16 %v1051
      %v1180 = vunpack.c.l.b16 %v1052
      %v1181 = vunpack.c.l.b16 %v1053
      %v1182 = vunpack.c.l.b16 %v1054
      %v1183 = vunpack.c.l.b16 %v1055
      %v1184 = vunpack.c.l.b16 %v1056
      %v1185 = vunpack.c.l.b16 %v1057
      %v1186 = vunpack.c.l.b16 %v1058
      %v1187 = vunpack.c.l.b16 %v1059
      %v1188 = vunpack.c.l.b16 %v1060
      %v1189 = vunpack.c.l.b16 %v1061
      %v1190 = vunpack.c.l.b16 %v1062
      %v1191 = vunpack.c.l.b16 %v1063
      %v1192 = vunpack.c.l.b16 %v1064
      %v1193 = vunpack.c.l.b16 %v1065
      %v1194 = vunpack.c.l.b16 %v1066
      %v1195 = vunpack.c.l.b16 %v1067
      %v1196 = vunpack.c.l.b16 %v1068
      %v1197 = vunpack.c.l.b16 %v1069
      %v1198 = vunpack.c.l.b16 %v1070
      %v1199 = vunpack.c.l.b16 %v1071
      %v1200 = vunpack.c.l.b16 %v1072
      %v1201 = vunpack.c.l.b16 %v1073
      %v1202 = vunpack.c.l.b16 %v1074
      %v1203 = vunpack.c.l.b16 %v1075
      %v1204 = vunpack.c.l.b16 %v1076
      %v1205 = vunpack.c.l.b16 %v1077
      %v1206 = vunpack.c.l.b16 %v1078
      %v1207 = vunpack.c.l.b16 %v1079
      %v1208 = vunpack.c.l.b16 %v1080
      %v1209 = vunpack.c.l.b16 %v1081
      %v1210 = vunpack.c.l.b16 %v1082
      %v1211 = vunpack.c.l.b16 %v1083
      %v1212 = vunpack.c.l.b16 %v1084
      %v1213 = vunpack.c.l.b16 %v1085
      %v1214 = vunpack.c.l.b16 %v1086
      %v1215 = vunpack.c.l.b16 %v1087
      %v1216 = vunpack.c.l.b16 %v1088
      %v1217 = vunpack.c.l.b16 %v1089
      %v1218 = vunpack.c.l.b16 %v1090
      %v1219 = vunpack.c.l.b16 %v1091
      %v1220 = vunpack.c.l.b16 %v1092
      %v1221 = vunpack.c.l.b16 %v1093
      %v1222 = vunpack.c.l.b16 %v1094
      %v1223 = vunpack.c.l.b16 %v1095
      %v1224 = vunpack.c.l.b16 %v1096
      %v1225 = vunpack.c.l.b16 %v1097
      %v1226 = vunpack.c.l.b16 %v1098
      %v1227 = vunpack.c.l.b16 %v1099
      %v1228 = vunpack.c.l.b16 %v1100
      %v1229 = vunpack.c.l.b16 %v1101
      %v1230 = vunpack.c.l.b16 %v1102
      %v1231 = vunpack.c.l.b16 %v1103
      %v1232 = vunpack.c.l.b16 %v1104
      %v1233 = vunpack.c.l.b16 %v1105
      %v1234 = vunpack.c.l.b16 %v1106
      %v1235 = vunpack.c.l.b16 %v1107
      %v1236 = vunpack.c.l.b16 %v1108
      %v1237 = vunpack.c.l.b16 %v1109
      %v1238 = vunpack.c.l.b16 %v1110
      %v1239 = vunpack.c.l.b16 %v1111
      %v1240 = vunpack.c.l.b16 %v1112
      %v1241 = vpack.c.b16 %v1178, %v1177
      %v1242 = vpack.c.b16 %v1180, %v1179
      %v1243 = vpack.c.b16 %v1182, %v1181
      %v1244 = vpack.c.b16 %v1184, %v1183
      %v1245 = vpack.c.b16 %v1186, %v1185
      %v1246 = vpack.c.b16 %v1188, %v1187
      %v1247 = vpack.c.b16 %v1190, %v1189
      %v1248 = vpack.c.b16 %v1192, %v1191
      %v1249 = vpack.c.b16 %v1194, %v1193
      %v1250 = vpack.c.b16 %v1196, %v1195
      %v1251 = vpack.c.b16 %v1198, %v1197
      %v1252 = vpack.c.b16 %v1200, %v1199
      %v1253 = vpack.c.b16 %v1202, %v1201
      %v1254 = vpack.c.b16 %v1204, %v1203
      %v1255 = vpack.c.b16 %v1206, %v1205
      %v1256 = vpack.c.b16 %v1208, %v1207
      %v1257 = vpack.c.b16 %v1210, %v1209
      %v1258 = vpack.c.b16 %v1212, %v1211
      %v1259 = vpack.c.b16 %v1214, %v1213
      %v1260 = vpack.c.b16 %v1216, %v1215
      %v1261 = vpack.c.b16 %v1218, %v1217
      %v1262 = vpack.c.b16 %v1220, %v1219
      %v1263 = vpack.c.b16 %v1222, %v1221
      %v1264 = vpack.c.b16 %v1224, %v1223
      %v1265 = vpack.c.b16 %v1226, %v1225
      %v1266 = vpack.c.b16 %v1228, %v1227
      %v1267 = vpack.c.b16 %v1230, %v1229
      %v1268 = vpack.c.b16 %v1232, %v1231
      %v1269 = vpack.c.b16 %v1234, %v1233
      %v1270 = vpack.c.b16 %v1236, %v1235
      %v1271 = vpack.c.b16 %v1238, %v1237
      %v1272 = vpack.c.b16 %v1240, %v1239
      %v1274 = vsel %vm592, %v1241, 0
      %v1277 = vsel %vm592, %v1242, 0
      %v1280 = vsel %vm592, %v1243, 0
      %v1283 = vsel %vm592, %v1244, 0
      %v1286 = vsel %vm592, %v1245, 0
      %v1289 = vsel %vm592, %v1246, 0
      %v1292 = vsel %vm592, %v1247, 0
      %v1295 = vsel %vm592, %v1248, 0
      %v1298 = vsel %vm592, %v1249, 0
      %v1301 = vsel %vm592, %v1250, 0
      %v1304 = vsel %vm592, %v1251, 0
      %v1307 = vsel %vm592, %v1252, 0
      %v1310 = vsel %vm592, %v1253, 0
      %v1313 = vsel %vm592, %v1254, 0
      %v1316 = vsel %vm592, %v1255, 0
      %v1319 = vsel %vm592, %v1256, 0
      %v1322 = vsel %vm592, %v1257, 0
      %v1325 = vsel %vm592, %v1258, 0
      %v1328 = vsel %vm592, %v1259, 0
      %v1331 = vsel %vm592, %v1260, 0
      %v1334 = vsel %vm592, %v1261, 0
      %v1337 = vsel %vm592, %v1262, 0
      %v1340 = vsel %vm592, %v1263, 0
      %v1343 = vsel %vm592, %v1264, 0
      %v1346 = vsel %vm592, %v1265, 0
      %v1349 = vsel %vm592, %v1266, 0
      %v1352 = vsel %vm592, %v1267, 0
      %v1355 = vsel %vm592, %v1268, 0
      %v1358 = vsel %vm592, %v1269, 0
      %v1361 = vsel %vm592, %v1270, 0
      %v1364 = vsel %vm592, %v1271, 0
      %v1367 = vsel %vm592, %v1272, 0
      %1369 = vmatprep.subr.bf16.mxu0 0
      %1370 = vmatpush1.bf16.msra.mxu0 %v583
      %1371 = vmatprep.subr.bf16.mxu0 0
      %1372 = vmatpush1.bf16.msra.mxu0 %v584
      %1373 = vmatprep.subr.bf16.mxu0 0
      %1374 = vmatpush1.bf16.msra.mxu0 %v585
      %1375 = vmatprep.subr.bf16.mxu0 0
      %1376 = vmatpush1.bf16.msra.mxu0 %v586
      %1377 = vmatprep.subr.bf16.mxu0 0
      %1378 = vmatpush1.bf16.msra.mxu0 %v694
      %1379 = vmatprep.subr.bf16.mxu0 0
      %1380 = vmatpush1.bf16.msra.mxu0 0
      %1381 = vmatprep.subr.bf16.mxu0 0
      %1382 = vmatpush1.bf16.msra.mxu0 0
      %1383 = vmatprep.subr.bf16.mxu0 0
      %1384 = vmatpush1.bf16.msra.mxu0 0
      %1385 = vmatprep.subr.bf16.mxu0 0
      %1386 = vmatpush1.bf16.msra.mxu0 0
      %1387 = vmatprep.subr.bf16.mxu0 0
      %1388 = vmatpush1.bf16.msra.mxu0 0
      %1389 = vmatprep.subr.bf16.mxu0 0
      %1390 = vmatpush1.bf16.msra.mxu0 0
      %1391 = vmatprep.subr.bf16.mxu0 0
      %1392 = vmatpush1.bf16.msra.mxu0 0
      %1393 = vmatprep.subr.bf16.mxu0 0
      %1394 = vmatpush1.bf16.msra.mxu0 0
      %1395 = vmatprep.subr.bf16.mxu0 0
      %1396 = vmatpush1.bf16.msra.mxu0 0
      %1397 = vmatprep.subr.bf16.mxu0 0
      %1398 = vmatpush1.bf16.msra.mxu0 0
      %1399 = vmatprep.subr.bf16.mxu0 0
      %1400 = vmatpush1.bf16.msra.mxu0 0
      %1401 = vmatprep.mubr.bf16.mxu0 0
      %1402 = vmatmul.mubr.bf16.gmra.mrb[0].mxu0 %v1274
      %v1403 = vpop.f32.mrb[0].mxu0
      %v1404 = vadd.f32 %v401, %v1403
      %v1405 = vpop.f32.mrb[0].mxu0
      %v1406 = vpop.f32.mrb[0].mxu0
      %v1407 = vadd.f32 %v401, %v1406
      %v1408 = vpop.f32.mrb[0].mxu0
      %1409 = vmatprep.mubr.bf16.mxu0 0
      %1410 = vmatmul.mubr.bf16.gmra.mrb[0].mxu0 %v1277
      %v1411 = vpop.f32.mrb[0].mxu0
      %v1412 = vadd.f32 %v401, %v1411
      %v1413 = vpop.f32.mrb[0].mxu0
      %v1414 = vpop.f32.mrb[0].mxu0
      %v1415 = vadd.f32 %v401, %v1414
      %v1416 = vpop.f32.mrb[0].mxu0
      %1417 = vmatprep.mubr.bf16.mxu0 0
      %1418 = vmatmul.mubr.bf16.gmra.mrb[0].mxu0 %v1280
      %v1419 = vpop.f32.mrb[0].mxu0
      %v1420 = vadd.f32 %v401, %v1419
      %v1421 = vpop.f32.mrb[0].mxu0
      %v1422 = vpop.f32.mrb[0].mxu0
      %v1423 = vadd.f32 %v401, %v1422
      %v1424 = vpop.f32.mrb[0].mxu0
      %1425 = vmatprep.mubr.bf16.mxu0 0
      %1426 = vmatmul.mubr.bf16.gmra.mrb[0].mxu0 %v1283
      %v1427 = vpop.f32.mrb[0].mxu0
      %v1428 = vadd.f32 %v401, %v1427
      %v1429 = vpop.f32.mrb[0].mxu0
      %v1430 = vpop.f32.mrb[0].mxu0
      %v1431 = vadd.f32 %v401, %v1430
      %v1432 = vpop.f32.mrb[0].mxu0
      %1433 = vmatprep.mubr.bf16.mxu0 0
      %1434 = vmatmul.mubr.bf16.gmra.mrb[0].mxu0 %v1286
      %v1435 = vpop.f32.mrb[0].mxu0
      %v1436 = vadd.f32 %v401, %v1435
      %v1437 = vpop.f32.mrb[0].mxu0
      %v1438 = vpop.f32.mrb[0].mxu0
      %v1439 = vadd.f32 %v401, %v1438
      %v1440 = vpop.f32.mrb[0].mxu0
      %1441 = vmatprep.mubr.bf16.mxu0 0
      %1442 = vmatmul.mubr.bf16.gmra.mrb[0].mxu0 %v1289
      %v1443 = vpop.f32.mrb[0].mxu0
      %v1444 = vadd.f32 %v401, %v1443
      %v1445 = vpop.f32.mrb[0].mxu0
      %v1446 = vpop.f32.mrb[0].mxu0
      %v1447 = vadd.f32 %v401, %v1446
      %v1448 = vpop.f32.mrb[0].mxu0
      %1449 = vmatprep.mubr.bf16.mxu0 0
      %1450 = vmatmul.mubr.bf16.gmra.mrb[0].mxu0 %v1292
      %v1451 = vpop.f32.mrb[0].mxu0
      %v1452 = vadd.f32 %v401, %v1451
      %v1453 = vpop.f32.mrb[0].mxu0
      %v1454 = vpop.f32.mrb[0].mxu0
      %v1455 = vadd.f32 %v401, %v1454
      %v1456 = vpop.f32.mrb[0].mxu0
      %1457 = vmatprep.mubr.bf16.mxu0 0
      %1458 = vmatmul.mubr.bf16.gmra.mrb[0].mxu0 %v1295
      %v1459 = vpop.f32.mrb[0].mxu0
      %v1460 = vadd.f32 %v401, %v1459
      %v1461 = vpop.f32.mrb[0].mxu0
      %v1462 = vpop.f32.mrb[0].mxu0
      %v1463 = vadd.f32 %v401, %v1462
      %v1464 = vpop.f32.mrb[0].mxu0
      %1465 = vmatprep.mubr.bf16.mxu0 0
      %1466 = vmatmul.mubr.bf16.gmra.mrb[0].mxu0 %v1298
      %v1467 = vpop.f32.mrb[0].mxu0
      %v1468 = vadd.f32 %v401, %v1467
      %v1469 = vpop.f32.mrb[0].mxu0
      %v1470 = vpop.f32.mrb[0].mxu0
      %v1471 = vadd.f32 %v401, %v1470
      %v1472 = vpop.f32.mrb[0].mxu0
      %1473 = vmatprep.mubr.bf16.mxu0 0
      %1474 = vmatmul.mubr.bf16.gmra.mrb[0].mxu0 %v1301
      %v1475 = vpop.f32.mrb[0].mxu0
      %v1476 = vadd.f32 %v401, %v1475
      %v1477 = vpop.f32.mrb[0].mxu0
      %v1478 = vpop.f32.mrb[0].mxu0
      %v1479 = vadd.f32 %v401, %v1478
      %v1480 = vpop.f32.mrb[0].mxu0
      %1481 = vmatprep.mubr.bf16.mxu0 0
      %1482 = vmatmul.mubr.bf16.gmra.mrb[0].mxu0 %v1304
      %v1483 = vpop.f32.mrb[0].mxu0
      %v1484 = vadd.f32 %v401, %v1483
      %v1485 = vpop.f32.mrb[0].mxu0
      %v1486 = vpop.f32.mrb[0].mxu0
      %v1487 = vadd.f32 %v401, %v1486
      %v1488 = vpop.f32.mrb[0].mxu0
      %1489 = vmatprep.mubr.bf16.mxu0 0
      %1490 = vmatmul.mubr.bf16.gmra.mrb[0].mxu0 %v1307
      %v1491 = vpop.f32.mrb[0].mxu0
      %v1492 = vadd.f32 %v401, %v1491
      %v1493 = vpop.f32.mrb[0].mxu0
      %v1494 = vpop.f32.mrb[0].mxu0
      %v1495 = vadd.f32 %v401, %v1494
      %v1496 = vpop.f32.mrb[0].mxu0
      %1497 = vmatprep.mubr.bf16.mxu0 0
      %1498 = vmatmul.mubr.bf16.gmra.mrb[0].mxu0 %v1310
      %v1499 = vpop.f32.mrb[0].mxu0
      %v1500 = vadd.f32 %v401, %v1499
      %v1501 = vpop.f32.mrb[0].mxu0
      %v1502 = vpop.f32.mrb[0].mxu0
      %v1503 = vadd.f32 %v401, %v1502
      %v1504 = vpop.f32.mrb[0].mxu0
      %1505 = vmatprep.mubr.bf16.mxu0 0
      %1506 = vmatmul.mubr.bf16.gmra.mrb[0].mxu0 %v1313
      %v1507 = vpop.f32.mrb[0].mxu0
      %v1508 = vadd.f32 %v401, %v1507
      %v1509 = vpop.f32.mrb[0].mxu0
      %v1510 = vpop.f32.mrb[0].mxu0
      %v1511 = vadd.f32 %v401, %v1510
      %v1512 = vpop.f32.mrb[0].mxu0
      %1513 = vmatprep.mubr.bf16.mxu0 0
      %1514 = vmatmul.mubr.bf16.gmra.mrb[0].mxu0 %v1316
      %v1515 = vpop.f32.mrb[0].mxu0
      %v1516 = vadd.f32 %v401, %v1515
      %v1517 = vpop.f32.mrb[0].mxu0
      %v1518 = vpop.f32.mrb[0].mxu0
      %v1519 = vadd.f32 %v401, %v1518
      %v1520 = vpop.f32.mrb[0].mxu0
      %1521 = vmatprep.mubr.bf16.mxu0 0
      %1522 = vmatmul.mubr.bf16.gmra.mrb[0].mxu0 %v1319
      %v1523 = vpop.f32.mrb[0].mxu0
      %v1524 = vadd.f32 %v401, %v1523
      %v1525 = vpop.f32.mrb[0].mxu0
      %v1526 = vpop.f32.mrb[0].mxu0
      %v1527 = vadd.f32 %v401, %v1526
      %v1528 = vpop.f32.mrb[0].mxu0
      %1529 = vmatprep.mubr.bf16.mxu0 0
      %1530 = vmatmul.mubr.bf16.gmra.mrb[0].mxu0 %v1322
      %v1531 = vpop.f32.mrb[0].mxu0
      %v1532 = vadd.f32 %v401, %v1531
      %v1533 = vpop.f32.mrb[0].mxu0
      %v1534 = vpop.f32.mrb[0].mxu0
      %v1535 = vadd.f32 %v401, %v1534
      %v1536 = vpop.f32.mrb[0].mxu0
      %1537 = vmatprep.mubr.bf16.mxu0 0
      %1538 = vmatmul.mubr.bf16.gmra.mrb[0].mxu0 %v1325
      %v1539 = vpop.f32.mrb[0].mxu0
      %v1540 = vadd.f32 %v401, %v1539
      %v1541 = vpop.f32.mrb[0].mxu0
      %v1542 = vpop.f32.mrb[0].mxu0
      %v1543 = vadd.f32 %v401, %v1542
      %v1544 = vpop.f32.mrb[0].mxu0
      %1545 = vmatprep.mubr.bf16.mxu0 0
      %1546 = vmatmul.mubr.bf16.gmra.mrb[0].mxu0 %v1328
      %v1547 = vpop.f32.mrb[0].mxu0
      %v1548 = vadd.f32 %v401, %v1547
      %v1549 = vpop.f32.mrb[0].mxu0
      %v1550 = vpop.f32.mrb[0].mxu0
      %v1551 = vadd.f32 %v401, %v1550
      %v1552 = vpop.f32.mrb[0].mxu0
      %1553 = vmatprep.mubr.bf16.mxu0 0
      %1554 = vmatmul.mubr.bf16.gmra.mrb[0].mxu0 %v1331
      %v1555 = vpop.f32.mrb[0].mxu0
      %v1556 = vadd.f32 %v401, %v1555
      %v1557 = vpop.f32.mrb[0].mxu0
      %v1558 = vpop.f32.mrb[0].mxu0
      %v1559 = vadd.f32 %v401, %v1558
      %v1560 = vpop.f32.mrb[0].mxu0
      %1561 = vmatprep.mubr.bf16.mxu0 0
      %1562 = vmatmul.mubr.bf16.gmra.mrb[0].mxu0 %v1334
      %v1563 = vpop.f32.mrb[0].mxu0
      %v1564 = vadd.f32 %v401, %v1563
      %v1565 = vpop.f32.mrb[0].mxu0
      %v1566 = vpop.f32.mrb[0].mxu0
      %v1567 = vadd.f32 %v401, %v1566
      %v1568 = vpop.f32.mrb[0].mxu0
      %1569 = vmatprep.mubr.bf16.mxu0 0
      %1570 = vmatmul.mubr.bf16.gmra.mrb[0].mxu0 %v1337
      %v1571 = vpop.f32.mrb[0].mxu0
      %v1572 = vadd.f32 %v401, %v1571
      %v1573 = vpop.f32.mrb[0].mxu0
      %v1574 = vpop.f32.mrb[0].mxu0
      %v1575 = vadd.f32 %v401, %v1574
      %v1576 = vpop.f32.mrb[0].mxu0
      %1577 = vmatprep.mubr.bf16.mxu0 0
      %1578 = vmatmul.mubr.bf16.gmra.mrb[0].mxu0 %v1340
      %v1579 = vpop.f32.mrb[0].mxu0
      %v1580 = vadd.f32 %v401, %v1579
      %v1581 = vpop.f32.mrb[0].mxu0
      %v1582 = vpop.f32.mrb[0].mxu0
      %v1583 = vadd.f32 %v401, %v1582
      %v1584 = vpop.f32.mrb[0].mxu0
      %1585 = vmatprep.mubr.bf16.mxu0 0
      %1586 = vmatmul.mubr.bf16.gmra.mrb[0].mxu0 %v1343
      %v1587 = vpop.f32.mrb[0].mxu0
      %v1588 = vadd.f32 %v401, %v1587
      %v1589 = vpop.f32.mrb[0].mxu0
      %v1590 = vpop.f32.mrb[0].mxu0
      %v1591 = vadd.f32 %v401, %v1590
      %v1592 = vpop.f32.mrb[0].mxu0
      %1593 = vmatprep.mubr.bf16.mxu0 0
      %1594 = vmatmul.mubr.bf16.gmra.mrb[0].mxu0 %v1346
      %v1595 = vpop.f32.mrb[0].mxu0
      %v1596 = vadd.f32 %v401, %v1595
      %v1597 = vpop.f32.mrb[0].mxu0
      %v1598 = vpop.f32.mrb[0].mxu0
      %v1599 = vadd.f32 %v401, %v1598
      %v1600 = vpop.f32.mrb[0].mxu0
      %1601 = vmatprep.mubr.bf16.mxu0 0
      %1602 = vmatmul.mubr.bf16.gmra.mrb[0].mxu0 %v1349
      %v1603 = vpop.f32.mrb[0].mxu0
      %v1604 = vadd.f32 %v401, %v1603
      %v1605 = vpop.f32.mrb[0].mxu0
      %v1606 = vpop.f32.mrb[0].mxu0
      %v1607 = vadd.f32 %v401, %v1606
      %v1608 = vpop.f32.mrb[0].mxu0
      %1609 = vmatprep.mubr.bf16.mxu0 0
      %1610 = vmatmul.mubr.bf16.gmra.mrb[0].mxu0 %v1352
      %v1611 = vpop.f32.mrb[0].mxu0
      %v1612 = vadd.f32 %v401, %v1611
      %v1613 = vpop.f32.mrb[0].mxu0
      %v1614 = vpop.f32.mrb[0].mxu0
      %v1615 = vadd.f32 %v401, %v1614
      %v1616 = vpop.f32.mrb[0].mxu0
      %1617 = vmatprep.mubr.bf16.mxu0 0
      %1618 = vmatmul.mubr.bf16.gmra.mrb[0].mxu0 %v1355
      %v1619 = vpop.f32.mrb[0].mxu0
      %v1620 = vadd.f32 %v401, %v1619
      %v1621 = vpop.f32.mrb[0].mxu0
      %v1622 = vpop.f32.mrb[0].mxu0
      %v1623 = vadd.f32 %v401, %v1622
      %v1624 = vpop.f32.mrb[0].mxu0
      %1625 = vmatprep.mubr.bf16.mxu0 0
      %1626 = vmatmul.mubr.bf16.gmra.mrb[0].mxu0 %v1358
      %v1627 = vpop.f32.mrb[0].mxu0
      %v1628 = vadd.f32 %v401, %v1627
      %v1629 = vpop.f32.mrb[0].mxu0
      %v1630 = vpop.f32.mrb[0].mxu0
      %v1631 = vadd.f32 %v401, %v1630
      %v1632 = vpop.f32.mrb[0].mxu0
      %1633 = vmatprep.mubr.bf16.mxu0 0
      %1634 = vmatmul.mubr.bf16.gmra.mrb[0].mxu0 %v1361
      %v1635 = vpop.f32.mrb[0].mxu0
      %v1636 = vadd.f32 %v401, %v1635
      %v1637 = vpop.f32.mrb[0].mxu0
      %v1638 = vpop.f32.mrb[0].mxu0
      %v1639 = vadd.f32 %v401, %v1638
      %v1640 = vpop.f32.mrb[0].mxu0
      %1641 = vmatprep.mubr.bf16.mxu0 0
      %1642 = vmatmul.mubr.bf16.gmra.mrb[0].mxu0 %v1364
      %v1643 = vpop.f32.mrb[0].mxu0
      %v1644 = vadd.f32 %v401, %v1643
      %v1645 = vpop.f32.mrb[0].mxu0
      %v1646 = vpop.f32.mrb[0].mxu0
      %v1647 = vadd.f32 %v401, %v1646
      %v1648 = vpop.f32.mrb[0].mxu0
      %1649 = vmatprep.mubr.bf16.mxu0 0
      %1650 = vmatmul.mubr.bf16.gmra.mrb[0].mxu0 %v1367
      %v1651 = vpop.f32.mrb[0].mxu0
      %v1652 = vadd.f32 %v401, %v1651
      %v1653 = vpop.f32.mrb[0].mxu0
      %v1654 = vpop.f32.mrb[0].mxu0
      %v1655 = vadd.f32 %v401, %v1654
      %v1656 = vpop.f32.mrb[0].mxu0
      %1657 = vdwg.mxu0
      %v1658 = vmax.f32 %v1404, 0.0
      %v1659 = vmax.f32 %v1407, 0.0
      %v1660 = vmax.f32 %v1412, 0.0
      %v1661 = vmax.f32 %v1415, 0.0
      %v1662 = vmax.f32 %v1420, 0.0
      %v1663 = vmax.f32 %v1423, 0.0
      %v1664 = vmax.f32 %v1428, 0.0
      %v1665 = vmax.f32 %v1431, 0.0
      %v1666 = vmax.f32 %v1436, 0.0
      %v1667 = vmax.f32 %v1439, 0.0
      %v1668 = vmax.f32 %v1444, 0.0
      %v1669 = vmax.f32 %v1447, 0.0
      %v1670 = vmax.f32 %v1452, 0.0
      %v1671 = vmax.f32 %v1455, 0.0
      %v1672 = vmax.f32 %v1460, 0.0
      %v1673 = vmax.f32 %v1463, 0.0
      %v1674 = vmax.f32 %v1468, 0.0
      %v1675 = vmax.f32 %v1471, 0.0
      %v1676 = vmax.f32 %v1476, 0.0
      %v1677 = vmax.f32 %v1479, 0.0
      %v1678 = vmax.f32 %v1484, 0.0
      %v1679 = vmax.f32 %v1487, 0.0
      %v1680 = vmax.f32 %v1492, 0.0
      %v1681 = vmax.f32 %v1495, 0.0
      %v1682 = vmax.f32 %v1500, 0.0
      %v1683 = vmax.f32 %v1503, 0.0
      %v1684 = vmax.f32 %v1508, 0.0
      %v1685 = vmax.f32 %v1511, 0.0
      %v1686 = vmax.f32 %v1516, 0.0
      %v1687 = vmax.f32 %v1519, 0.0
      %v1688 = vmax.f32 %v1524, 0.0
      %v1689 = vmax.f32 %v1527, 0.0
      %v1690 = vmax.f32 %v1532, 0.0
      %v1691 = vmax.f32 %v1535, 0.0
      %v1692 = vmax.f32 %v1540, 0.0
      %v1693 = vmax.f32 %v1543, 0.0
      %v1694 = vmax.f32 %v1548, 0.0
      %v1695 = vmax.f32 %v1551, 0.0
      %v1696 = vmax.f32 %v1556, 0.0
      %v1697 = vmax.f32 %v1559, 0.0
      %v1698 = vmax.f32 %v1564, 0.0
      %v1699 = vmax.f32 %v1567, 0.0
      %v1700 = vmax.f32 %v1572, 0.0
      %v1701 = vmax.f32 %v1575, 0.0
      %v1702 = vmax.f32 %v1580, 0.0
      %v1703 = vmax.f32 %v1583, 0.0
      %v1704 = vmax.f32 %v1588, 0.0
      %v1705 = vmax.f32 %v1591, 0.0
      %v1706 = vmax.f32 %v1596, 0.0
      %v1707 = vmax.f32 %v1599, 0.0
      %v1708 = vmax.f32 %v1604, 0.0
      %v1709 = vmax.f32 %v1607, 0.0
      %v1710 = vmax.f32 %v1612, 0.0
      %v1711 = vmax.f32 %v1615, 0.0
      %v1712 = vmax.f32 %v1620, 0.0
      %v1713 = vmax.f32 %v1623, 0.0
      %v1714 = vmax.f32 %v1628, 0.0
      %v1715 = vmax.f32 %v1631, 0.0
      %v1716 = vmax.f32 %v1636, 0.0
      %v1717 = vmax.f32 %v1639, 0.0
      %v1718 = vmax.f32 %v1644, 0.0
      %v1719 = vmax.f32 %v1647, 0.0
      %v1720 = vmax.f32 %v1652, 0.0
      %v1721 = vmax.f32 %v1655, 0.0
      %v1722 = vmax.f32 %v985, %v1658
      %v1723 = vmax.f32 %v986, %v1659
      %v1724 = vmax.f32 %v987, %v1660
      %v1725 = vmax.f32 %v988, %v1661
      %v1726 = vmax.f32 %v989, %v1662
      %v1727 = vmax.f32 %v990, %v1663
      %v1728 = vmax.f32 %v991, %v1664
      %v1729 = vmax.f32 %v992, %v1665
      %v1730 = vmax.f32 %v993, %v1666
      %v1731 = vmax.f32 %v994, %v1667
      %v1732 = vmax.f32 %v995, %v1668
      %v1733 = vmax.f32 %v996, %v1669
      %v1734 = vmax.f32 %v997, %v1670
      %v1735 = vmax.f32 %v998, %v1671
      %v1736 = vmax.f32 %v999, %v1672
      %v1737 = vmax.f32 %v1000, %v1673
      %v1738 = vmax.f32 %v1001, %v1674
      %v1739 = vmax.f32 %v1002, %v1675
      %v1740 = vmax.f32 %v1003, %v1676
      %v1741 = vmax.f32 %v1004, %v1677
      %v1742 = vmax.f32 %v1005, %v1678
      %v1743 = vmax.f32 %v1006, %v1679
      %v1744 = vmax.f32 %v1007, %v1680
      %v1745 = vmax.f32 %v1008, %v1681
      %v1746 = vmax.f32 %v1009, %v1682
      %v1747 = vmax.f32 %v1010, %v1683
      %v1748 = vmax.f32 %v1011, %v1684
      %v1749 = vmax.f32 %v1012, %v1685
      %v1750 = vmax.f32 %v1013, %v1686
      %v1751 = vmax.f32 %v1014, %v1687
      %v1752 = vmax.f32 %v1015, %v1688
      %v1753 = vmax.f32 %v1016, %v1689
      %v1754 = vmax.f32 %v1017, %v1690
      %v1755 = vmax.f32 %v1018, %v1691
      %v1756 = vmax.f32 %v1019, %v1692
      %v1757 = vmax.f32 %v1020, %v1693
      %v1758 = vmax.f32 %v1021, %v1694
      %v1759 = vmax.f32 %v1022, %v1695
      %v1760 = vmax.f32 %v1023, %v1696
      %v1761 = vmax.f32 %v1024, %v1697
      %v1762 = vmax.f32 %v1025, %v1698
      %v1763 = vmax.f32 %v1026, %v1699
      %v1764 = vmax.f32 %v1027, %v1700
      %v1765 = vmax.f32 %v1028, %v1701
      %v1766 = vmax.f32 %v1029, %v1702
      %v1767 = vmax.f32 %v1030, %v1703
      %v1768 = vmax.f32 %v1031, %v1704
      %v1769 = vmax.f32 %v1032, %v1705
      %v1770 = vmax.f32 %v1033, %v1706
      %v1771 = vmax.f32 %v1034, %v1707
      %v1772 = vmax.f32 %v1035, %v1708
      %v1773 = vmax.f32 %v1036, %v1709
      %v1774 = vmax.f32 %v1037, %v1710
      %v1775 = vmax.f32 %v1038, %v1711
      %v1776 = vmax.f32 %v1039, %v1712
      %v1777 = vmax.f32 %v1040, %v1713
      %v1778 = vmax.f32 %v1041, %v1714
      %v1779 = vmax.f32 %v1042, %v1715
      %v1780 = vmax.f32 %v1043, %v1716
      %v1781 = vmax.f32 %v1044, %v1717
      %v1782 = vmax.f32 %v1045, %v1718
      %v1783 = vmax.f32 %v1046, %v1719
      %v1784 = vmax.f32 %v1047, %v1720
      %v1785 = vmax.f32 %v1048, %v1721
      %v1786 = vld [vmem:[%s307] sm:$0xf]
      %v1787 = vld [vmem:[%s307 + $0x4] sm:$0xf]
      %v1788 = vld [vmem:[%s307 + $0x8] sm:$0xf]
      %v1789 = vld [vmem:[%s307 + $0xc] sm:$0xf]
      %v1790 = vld [vmem:[%s307 + $0x10] sm:$0xf]
      %v1791 = vld [vmem:[%s307 + $0x14] sm:$0xf]
      %v1792 = vld [vmem:[%s307 + $0x18] sm:$0xf]
      %v1793 = vld [vmem:[%s307 + $0x1c] sm:$0xf]
      %v1794 = vld [vmem:[%s307 + $0x20] sm:$0xf]
      %v1795 = vld [vmem:[%s307 + $0x24] sm:$0xf]
      %v1796 = vld [vmem:[%s307 + $0x28] sm:$0xf]
      %v1797 = vld [vmem:[%s307 + $0x2c] sm:$0xf]
      %v1798 = vld [vmem:[%s307 + $0x30] sm:$0xf]
      %v1799 = vld [vmem:[%s307 + $0x34] sm:$0xf]
      %v1800 = vld [vmem:[%s307 + $0x38] sm:$0xf]
      %v1801 = vld [vmem:[%s307 + $0x3c] sm:$0xf]
      %v1802 = vld [vmem:[%s307 + $0x40] sm:$0xf]
      %v1803 = vld [vmem:[%s307 + $0x44] sm:$0xf]
      %v1804 = vld [vmem:[%s307 + $0x48] sm:$0xf]
      %v1805 = vld [vmem:[%s307 + $0x4c] sm:$0xf]
      %v1806 = vld [vmem:[%s307 + $0x50] sm:$0xf]
      %v1807 = vld [vmem:[%s307 + $0x54] sm:$0xf]
      %v1808 = vld [vmem:[%s307 + $0x58] sm:$0xf]
      %v1809 = vld [vmem:[%s307 + $0x5c] sm:$0xf]
      %v1810 = vld [vmem:[%s307 + $0x60] sm:$0xf]
      %v1811 = vld [vmem:[%s307 + $0x64] sm:$0xf]
      %v1812 = vld [vmem:[%s307 + $0x68] sm:$0xf]
      %v1813 = vld [vmem:[%s307 + $0x6c] sm:$0xf]
      %v1814 = vld [vmem:[%s307 + $0x70] sm:$0xf]
      %v1815 = vld [vmem:[%s307 + $0x74] sm:$0xf]
      %v1816 = vld [vmem:[%s307 + $0x78] sm:$0xf]
      %v1817 = vld [vmem:[%s307 + $0x7c] sm:$0xf]
      %v1818 = vld [vmem:[%s307 + $0x80] sm:$0xf]
      %v1819 = vld [vmem:[%s307 + $0x84] sm:$0xf]
      %v1820 = vld [vmem:[%s307 + $0x88] sm:$0xf]
      %v1821 = vld [vmem:[%s307 + $0x8c] sm:$0xf]
      %v1822 = vld [vmem:[%s307 + $0x90] sm:$0xf]
      %v1823 = vld [vmem:[%s307 + $0x94] sm:$0xf]
      %v1824 = vld [vmem:[%s307 + $0x98] sm:$0xf]
      %v1825 = vld [vmem:[%s307 + $0x9c] sm:$0xf]
      %v1826 = vld [vmem:[%s307 + $0xa0] sm:$0xf]
      %v1827 = vld [vmem:[%s307 + $0xa4] sm:$0xf]
      %v1828 = vld [vmem:[%s307 + $0xa8] sm:$0xf]
      %v1829 = vld [vmem:[%s307 + $0xac] sm:$0xf]
      %v1830 = vld [vmem:[%s307 + $0xb0] sm:$0xf]
      %v1831 = vld [vmem:[%s307 + $0xb4] sm:$0xf]
      %v1832 = vld [vmem:[%s307 + $0xb8] sm:$0xf]
      %v1833 = vld [vmem:[%s307 + $0xbc] sm:$0xf]
      %v1834 = vld [vmem:[%s307 + $0xc0] sm:$0xf]
      %v1835 = vld [vmem:[%s307 + $0xc4] sm:$0xf]
      %v1836 = vld [vmem:[%s307 + $0xc8] sm:$0xf]
      %v1837 = vld [vmem:[%s307 + $0xcc] sm:$0xf]
      %v1838 = vld [vmem:[%s307 + $0xd0] sm:$0xf]
      %v1839 = vld [vmem:[%s307 + $0xd4] sm:$0xf]
      %v1840 = vld [vmem:[%s307 + $0xd8] sm:$0xf]
      %v1841 = vld [vmem:[%s307 + $0xdc] sm:$0xf]
      %v1842 = vld [vmem:[%s307 + $0xe0] sm:$0xf]
      %v1843 = vld [vmem:[%s307 + $0xe4] sm:$0xf]
      %v1844 = vld [vmem:[%s307 + $0xe8] sm:$0xf]
      %v1845 = vld [vmem:[%s307 + $0xec] sm:$0xf]
      %v1846 = vld [vmem:[%s307 + $0xf0] sm:$0xf]
      %v1847 = vld [vmem:[%s307 + $0xf4] sm:$0xf]
      %v1848 = vld [vmem:[%s307 + $0xf8] sm:$0xf]
      %v1849 = vld [vmem:[%s307 + $0xfc] sm:$0xf]
      %v1914 = vunpack.c.l.b16 %v1786
      %v1915 = vunpack.c.l.b16 %v1787
      %v1916 = vunpack.c.l.b16 %v1788
      %v1917 = vunpack.c.l.b16 %v1789
      %v1918 = vunpack.c.l.b16 %v1790
      %v1919 = vunpack.c.l.b16 %v1791
      %v1920 = vunpack.c.l.b16 %v1792
      %v1921 = vunpack.c.l.b16 %v1793
      %v1922 = vunpack.c.l.b16 %v1794
      %v1923 = vunpack.c.l.b16 %v1795
      %v1924 = vunpack.c.l.b16 %v1796
      %v1925 = vunpack.c.l.b16 %v1797
      %v1926 = vunpack.c.l.b16 %v1798
      %v1927 = vunpack.c.l.b16 %v1799
      %v1928 = vunpack.c.l.b16 %v1800
      %v1929 = vunpack.c.l.b16 %v1801
      %v1930 = vunpack.c.l.b16 %v1802
      %v1931 = vunpack.c.l.b16 %v1803
      %v1932 = vunpack.c.l.b16 %v1804
      %v1933 = vunpack.c.l.b16 %v1805
      %v1934 = vunpack.c.l.b16 %v1806
      %v1935 = vunpack.c.l.b16 %v1807
      %v1936 = vunpack.c.l.b16 %v1808
      %v1937 = vunpack.c.l.b16 %v1809
      %v1938 = vunpack.c.l.b16 %v1810
      %v1939 = vunpack.c.l.b16 %v1811
      %v1940 = vunpack.c.l.b16 %v1812
      %v1941 = vunpack.c.l.b16 %v1813
      %v1942 = vunpack.c.l.b16 %v1814
      %v1943 = vunpack.c.l.b16 %v1815
      %v1944 = vunpack.c.l.b16 %v1816
      %v1945 = vunpack.c.l.b16 %v1817
      %v1946 = vunpack.c.l.b16 %v1818
      %v1947 = vunpack.c.l.b16 %v1819
      %v1948 = vunpack.c.l.b16 %v1820
      %v1949 = vunpack.c.l.b16 %v1821
      %v1950 = vunpack.c.l.b16 %v1822
      %v1951 = vunpack.c.l.b16 %v1823
      %v1952 = vunpack.c.l.b16 %v1824
      %v1953 = vunpack.c.l.b16 %v1825
      %v1954 = vunpack.c.l.b16 %v1826
      %v1955 = vunpack.c.l.b16 %v1827
      %v1956 = vunpack.c.l.b16 %v1828
      %v1957 = vunpack.c.l.b16 %v1829
      %v1958 = vunpack.c.l.b16 %v1830
      %v1959 = vunpack.c.l.b16 %v1831
      %v1960 = vunpack.c.l.b16 %v1832
      %v1961 = vunpack.c.l.b16 %v1833
      %v1962 = vunpack.c.l.b16 %v1834
      %v1963 = vunpack.c.l.b16 %v1835
      %v1964 = vunpack.c.l.b16 %v1836
      %v1965 = vunpack.c.l.b16 %v1837
      %v1966 = vunpack.c.l.b16 %v1838
      %v1967 = vunpack.c.l.b16 %v1839
      %v1968 = vunpack.c.l.b16 %v1840
      %v1969 = vunpack.c.l.b16 %v1841
      %v1970 = vunpack.c.l.b16 %v1842
      %v1971 = vunpack.c.l.b16 %v1843
      %v1972 = vunpack.c.l.b16 %v1844
      %v1973 = vunpack.c.l.b16 %v1845
      %v1974 = vunpack.c.l.b16 %v1846
      %v1975 = vunpack.c.l.b16 %v1847
      %v1976 = vunpack.c.l.b16 %v1848
      %v1977 = vunpack.c.l.b16 %v1849
      %v1978 = vpack.c.b16 %v1915, %v1914
      %v1979 = vpack.c.b16 %v1917, %v1916
      %v1980 = vpack.c.b16 %v1919, %v1918
      %v1981 = vpack.c.b16 %v1921, %v1920
      %v1982 = vpack.c.b16 %v1923, %v1922
      %v1983 = vpack.c.b16 %v1925, %v1924
      %v1984 = vpack.c.b16 %v1927, %v1926
      %v1985 = vpack.c.b16 %v1929, %v1928
      %v1986 = vpack.c.b16 %v1931, %v1930
      %v1987 = vpack.c.b16 %v1933, %v1932
      %v1988 = vpack.c.b16 %v1935, %v1934
      %v1989 = vpack.c.b16 %v1937, %v1936
      %v1990 = vpack.c.b16 %v1939, %v1938
      %v1991 = vpack.c.b16 %v1941, %v1940
      %v1992 = vpack.c.b16 %v1943, %v1942
      %v1993 = vpack.c.b16 %v1945, %v1944
      %v1994 = vpack.c.b16 %v1947, %v1946
      %v1995 = vpack.c.b16 %v1949, %v1948
      %v1996 = vpack.c.b16 %v1951, %v1950
      %v1997 = vpack.c.b16 %v1953, %v1952
      %v1998 = vpack.c.b16 %v1955, %v1954
      %v1999 = vpack.c.b16 %v1957, %v1956
      %v2000 = vpack.c.b16 %v1959, %v1958
      %v2001 = vpack.c.b16 %v1961, %v1960
      %v2002 = vpack.c.b16 %v1963, %v1962
      %v2003 = vpack.c.b16 %v1965, %v1964
      %v2004 = vpack.c.b16 %v1967, %v1966
      %v2005 = vpack.c.b16 %v1969, %v1968
      %v2006 = vpack.c.b16 %v1971, %v1970
      %v2007 = vpack.c.b16 %v1973, %v1972
      %v2008 = vpack.c.b16 %v1975, %v1974
      %v2009 = vpack.c.b16 %v1977, %v1976
      %v2011 = vsel %vm592, %v1978, 0
      %v2014 = vsel %vm592, %v1979, 0
      %v2017 = vsel %vm592, %v1980, 0
      %v2020 = vsel %vm592, %v1981, 0
      %v2023 = vsel %vm592, %v1982, 0
      %v2026 = vsel %vm592, %v1983, 0
      %v2029 = vsel %vm592, %v1984, 0
      %v2032 = vsel %vm592, %v1985, 0
      %v2035 = vsel %vm592, %v1986, 0
      %v2038 = vsel %vm592, %v1987, 0
      %v2041 = vsel %vm592, %v1988, 0
      %v2044 = vsel %vm592, %v1989, 0
      %v2047 = vsel %vm592, %v1990, 0
      %v2050 = vsel %vm592, %v1991, 0
      %v2053 = vsel %vm592, %v1992, 0
      %v2056 = vsel %vm592, %v1993, 0
      %v2059 = vsel %vm592, %v1994, 0
      %v2062 = vsel %vm592, %v1995, 0
      %v2065 = vsel %vm592, %v1996, 0
      %v2068 = vsel %vm592, %v1997, 0
      %v2071 = vsel %vm592, %v1998, 0
      %v2074 = vsel %vm592, %v1999, 0
      %v2077 = vsel %vm592, %v2000, 0
      %v2080 = vsel %vm592, %v2001, 0
      %v2083 = vsel %vm592, %v2002, 0
      %v2086 = vsel %vm592, %v2003, 0
      %v2089 = vsel %vm592, %v2004, 0
      %v2092 = vsel %vm592, %v2005, 0
      %v2095 = vsel %vm592, %v2006, 0
      %v2098 = vsel %vm592, %v2007, 0
      %v2101 = vsel %vm592, %v2008, 0
      %v2104 = vsel %vm592, %v2009, 0
      %2106 = vmatprep.subr.bf16.mxu0 0
      %2107 = vmatpush1.bf16.msra.mxu0 %v583
      %2108 = vmatprep.subr.bf16.mxu0 0
      %2109 = vmatpush1.bf16.msra.mxu0 %v584
      %2110 = vmatprep.subr.bf16.mxu0 0
      %2111 = vmatpush1.bf16.msra.mxu0 %v585
      %2112 = vmatprep.subr.bf16.mxu0 0
      %2113 = vmatpush1.bf16.msra.mxu0 %v586
      %2114 = vmatprep.subr.bf16.mxu0 0
      %2115 = vmatpush1.bf16.msra.mxu0 %v694
      %2116 = vmatprep.subr.bf16.mxu0 0
      %2117 = vmatpush1.bf16.msra.mxu0 0
      %2118 = vmatprep.subr.bf16.mxu0 0
      %2119 = vmatpush1.bf16.msra.mxu0 0
      %2120 = vmatprep.subr.bf16.mxu0 0
      %2121 = vmatpush1.bf16.msra.mxu0 0
      %2122 = vmatprep.subr.bf16.mxu0 0
      %2123 = vmatpush1.bf16.msra.mxu0 0
      %2124 = vmatprep.subr.bf16.mxu0 0
      %2125 = vmatpush1.bf16.msra.mxu0 0
      %2126 = vmatprep.subr.bf16.mxu0 0
      %2127 = vmatpush1.bf16.msra.mxu0 0
      %2128 = vmatprep.subr.bf16.mxu0 0
      %2129 = vmatpush1.bf16.msra.mxu0 0
      %2130 = vmatprep.subr.bf16.mxu0 0
      %2131 = vmatpush1.bf16.msra.mxu0 0
      %2132 = vmatprep.subr.bf16.mxu0 0
      %2133 = vmatpush1.bf16.msra.mxu0 0
      %2134 = vmatprep.subr.bf16.mxu0 0
      %2135 = vmatpush1.bf16.msra.mxu0 0
      %2136 = vmatprep.subr.bf16.mxu0 0
      %2137 = vmatpush1.bf16.msra.mxu0 0
      %2138 = vmatprep.mubr.bf16.mxu0 0
      %2139 = vmatmul.mubr.bf16.gmra.mrb[0].mxu0 %v2011
      %v2140 = vpop.f32.mrb[0].mxu0
      %v2141 = vadd.f32 %v401, %v2140
      %v2142 = vpop.f32.mrb[0].mxu0
      %v2143 = vpop.f32.mrb[0].mxu0
      %v2144 = vadd.f32 %v401, %v2143
      %v2145 = vpop.f32.mrb[0].mxu0
      %2146 = vmatprep.mubr.bf16.mxu0 0
      %2147 = vmatmul.mubr.bf16.gmra.mrb[0].mxu0 %v2014
      %v2148 = vpop.f32.mrb[0].mxu0
      %v2149 = vadd.f32 %v401, %v2148
      %v2150 = vpop.f32.mrb[0].mxu0
      %v2151 = vpop.f32.mrb[0].mxu0
      %v2152 = vadd.f32 %v401, %v2151
      %v2153 = vpop.f32.mrb[0].mxu0
      %2154 = vmatprep.mubr.bf16.mxu0 0
      %2155 = vmatmul.mubr.bf16.gmra.mrb[0].mxu0 %v2017
      %v2156 = vpop.f32.mrb[0].mxu0
      %v2157 = vadd.f32 %v401, %v2156
      %v2158 = vpop.f32.mrb[0].mxu0
      %v2159 = vpop.f32.mrb[0].mxu0
      %v2160 = vadd.f32 %v401, %v2159
      %v2161 = vpop.f32.mrb[0].mxu0
      %2162 = vmatprep.mubr.bf16.mxu0 0
      %2163 = vmatmul.mubr.bf16.gmra.mrb[0].mxu0 %v2020
      %v2164 = vpop.f32.mrb[0].mxu0
      %v2165 = vadd.f32 %v401, %v2164
      %v2166 = vpop.f32.mrb[0].mxu0
      %v2167 = vpop.f32.mrb[0].mxu0
      %v2168 = vadd.f32 %v401, %v2167
      %v2169 = vpop.f32.mrb[0].mxu0
      %2170 = vmatprep.mubr.bf16.mxu0 0
      %2171 = vmatmul.mubr.bf16.gmra.mrb[0].mxu0 %v2023
      %v2172 = vpop.f32.mrb[0].mxu0
      %v2173 = vadd.f32 %v401, %v2172
      %v2174 = vpop.f32.mrb[0].mxu0
      %v2175 = vpop.f32.mrb[0].mxu0
      %v2176 = vadd.f32 %v401, %v2175
      %v2177 = vpop.f32.mrb[0].mxu0
      %2178 = vmatprep.mubr.bf16.mxu0 0
      %2179 = vmatmul.mubr.bf16.gmra.mrb[0].mxu0 %v2026
      %v2180 = vpop.f32.mrb[0].mxu0
      %v2181 = vadd.f32 %v401, %v2180
      %v2182 = vpop.f32.mrb[0].mxu0
      %v2183 = vpop.f32.mrb[0].mxu0
      %v2184 = vadd.f32 %v401, %v2183
      %v2185 = vpop.f32.mrb[0].mxu0
      %2186 = vmatprep.mubr.bf16.mxu0 0
      %2187 = vmatmul.mubr.bf16.gmra.mrb[0].mxu0 %v2029
      %v2188 = vpop.f32.mrb[0].mxu0
      %v2189 = vadd.f32 %v401, %v2188
      %v2190 = vpop.f32.mrb[0].mxu0
      %v2191 = vpop.f32.mrb[0].mxu0
      %v2192 = vadd.f32 %v401, %v2191
      %v2193 = vpop.f32.mrb[0].mxu0
      %2194 = vmatprep.mubr.bf16.mxu0 0
      %2195 = vmatmul.mubr.bf16.gmra.mrb[0].mxu0 %v2032
      %v2196 = vpop.f32.mrb[0].mxu0
      %v2197 = vadd.f32 %v401, %v2196
      %v2198 = vpop.f32.mrb[0].mxu0
      %v2199 = vpop.f32.mrb[0].mxu0
      %v2200 = vadd.f32 %v401, %v2199
      %v2201 = vpop.f32.mrb[0].mxu0
      %2202 = vmatprep.mubr.bf16.mxu0 0
      %2203 = vmatmul.mubr.bf16.gmra.mrb[0].mxu0 %v2035
      %v2204 = vpop.f32.mrb[0].mxu0
      %v2205 = vadd.f32 %v401, %v2204
      %v2206 = vpop.f32.mrb[0].mxu0
      %v2207 = vpop.f32.mrb[0].mxu0
      %v2208 = vadd.f32 %v401, %v2207
      %v2209 = vpop.f32.mrb[0].mxu0
      %2210 = vmatprep.mubr.bf16.mxu0 0
      %2211 = vmatmul.mubr.bf16.gmra.mrb[0].mxu0 %v2038
      %v2212 = vpop.f32.mrb[0].mxu0
      %v2213 = vadd.f32 %v401, %v2212
      %v2214 = vpop.f32.mrb[0].mxu0
      %v2215 = vpop.f32.mrb[0].mxu0
      %v2216 = vadd.f32 %v401, %v2215
      %v2217 = vpop.f32.mrb[0].mxu0
      %2218 = vmatprep.mubr.bf16.mxu0 0
      %2219 = vmatmul.mubr.bf16.gmra.mrb[0].mxu0 %v2041
      %v2220 = vpop.f32.mrb[0].mxu0
      %v2221 = vadd.f32 %v401, %v2220
      %v2222 = vpop.f32.mrb[0].mxu0
      %v2223 = vpop.f32.mrb[0].mxu0
      %v2224 = vadd.f32 %v401, %v2223
      %v2225 = vpop.f32.mrb[0].mxu0
      %2226 = vmatprep.mubr.bf16.mxu0 0
      %2227 = vmatmul.mubr.bf16.gmra.mrb[0].mxu0 %v2044
      %v2228 = vpop.f32.mrb[0].mxu0
      %v2229 = vadd.f32 %v401, %v2228
      %v2230 = vpop.f32.mrb[0].mxu0
      %v2231 = vpop.f32.mrb[0].mxu0
      %v2232 = vadd.f32 %v401, %v2231
      %v2233 = vpop.f32.mrb[0].mxu0
      %2234 = vmatprep.mubr.bf16.mxu0 0
      %2235 = vmatmul.mubr.bf16.gmra.mrb[0].mxu0 %v2047
      %v2236 = vpop.f32.mrb[0].mxu0
      %v2237 = vadd.f32 %v401, %v2236
      %v2238 = vpop.f32.mrb[0].mxu0
      %v2239 = vpop.f32.mrb[0].mxu0
      %v2240 = vadd.f32 %v401, %v2239
      %v2241 = vpop.f32.mrb[0].mxu0
      %2242 = vmatprep.mubr.bf16.mxu0 0
      %2243 = vmatmul.mubr.bf16.gmra.mrb[0].mxu0 %v2050
      %v2244 = vpop.f32.mrb[0].mxu0
      %v2245 = vadd.f32 %v401, %v2244
      %v2246 = vpop.f32.mrb[0].mxu0
      %v2247 = vpop.f32.mrb[0].mxu0
      %v2248 = vadd.f32 %v401, %v2247
      %v2249 = vpop.f32.mrb[0].mxu0
      %2250 = vmatprep.mubr.bf16.mxu0 0
      %2251 = vmatmul.mubr.bf16.gmra.mrb[0].mxu0 %v2053
      %v2252 = vpop.f32.mrb[0].mxu0
      %v2253 = vadd.f32 %v401, %v2252
      %v2254 = vpop.f32.mrb[0].mxu0
      %v2255 = vpop.f32.mrb[0].mxu0
      %v2256 = vadd.f32 %v401, %v2255
      %v2257 = vpop.f32.mrb[0].mxu0
      %2258 = vmatprep.mubr.bf16.mxu0 0
      %2259 = vmatmul.mubr.bf16.gmra.mrb[0].mxu0 %v2056
      %v2260 = vpop.f32.mrb[0].mxu0
      %v2261 = vadd.f32 %v401, %v2260
      %v2262 = vpop.f32.mrb[0].mxu0
      %v2263 = vpop.f32.mrb[0].mxu0
      %v2264 = vadd.f32 %v401, %v2263
      %v2265 = vpop.f32.mrb[0].mxu0
      %2266 = vmatprep.mubr.bf16.mxu0 0
      %2267 = vmatmul.mubr.bf16.gmra.mrb[0].mxu0 %v2059
      %v2268 = vpop.f32.mrb[0].mxu0
      %v2269 = vadd.f32 %v401, %v2268
      %v2270 = vpop.f32.mrb[0].mxu0
      %v2271 = vpop.f32.mrb[0].mxu0
      %v2272 = vadd.f32 %v401, %v2271
      %v2273 = vpop.f32.mrb[0].mxu0
      %2274 = vmatprep.mubr.bf16.mxu0 0
      %2275 = vmatmul.mubr.bf16.gmra.mrb[0].mxu0 %v2062
      %v2276 = vpop.f32.mrb[0].mxu0
      %v2277 = vadd.f32 %v401, %v2276
      %v2278 = vpop.f32.mrb[0].mxu0
      %v2279 = vpop.f32.mrb[0].mxu0
      %v2280 = vadd.f32 %v401, %v2279
      %v2281 = vpop.f32.mrb[0].mxu0
      %2282 = vmatprep.mubr.bf16.mxu0 0
      %2283 = vmatmul.mubr.bf16.gmra.mrb[0].mxu0 %v2065
      %v2284 = vpop.f32.mrb[0].mxu0
      %v2285 = vadd.f32 %v401, %v2284
      %v2286 = vpop.f32.mrb[0].mxu0
      %v2287 = vpop.f32.mrb[0].mxu0
      %v2288 = vadd.f32 %v401, %v2287
      %v2289 = vpop.f32.mrb[0].mxu0
      %2290 = vmatprep.mubr.bf16.mxu0 0
      %2291 = vmatmul.mubr.bf16.gmra.mrb[0].mxu0 %v2068
      %v2292 = vpop.f32.mrb[0].mxu0
      %v2293 = vadd.f32 %v401, %v2292
      %v2294 = vpop.f32.mrb[0].mxu0
      %v2295 = vpop.f32.mrb[0].mxu0
      %v2296 = vadd.f32 %v401, %v2295
      %v2297 = vpop.f32.mrb[0].mxu0
      %2298 = vmatprep.mubr.bf16.mxu0 0
      %2299 = vmatmul.mubr.bf16.gmra.mrb[0].mxu0 %v2071
      %v2300 = vpop.f32.mrb[0].mxu0
      %v2301 = vadd.f32 %v401, %v2300
      %v2302 = vpop.f32.mrb[0].mxu0
      %v2303 = vpop.f32.mrb[0].mxu0
      %v2304 = vadd.f32 %v401, %v2303
      %v2305 = vpop.f32.mrb[0].mxu0
      %2306 = vmatprep.mubr.bf16.mxu0 0
      %2307 = vmatmul.mubr.bf16.gmra.mrb[0].mxu0 %v2074
      %v2308 = vpop.f32.mrb[0].mxu0
      %v2309 = vadd.f32 %v401, %v2308
      %v2310 = vpop.f32.mrb[0].mxu0
      %v2311 = vpop.f32.mrb[0].mxu0
      %v2312 = vadd.f32 %v401, %v2311
      %v2313 = vpop.f32.mrb[0].mxu0
      %2314 = vmatprep.mubr.bf16.mxu0 0
      %2315 = vmatmul.mubr.bf16.gmra.mrb[0].mxu0 %v2077
      %v2316 = vpop.f32.mrb[0].mxu0
      %v2317 = vadd.f32 %v401, %v2316
      %v2318 = vpop.f32.mrb[0].mxu0
      %v2319 = vpop.f32.mrb[0].mxu0
      %v2320 = vadd.f32 %v401, %v2319
      %v2321 = vpop.f32.mrb[0].mxu0
      %2322 = vmatprep.mubr.bf16.mxu0 0
      %2323 = vmatmul.mubr.bf16.gmra.mrb[0].mxu0 %v2080
      %v2324 = vpop.f32.mrb[0].mxu0
      %v2325 = vadd.f32 %v401, %v2324
      %v2326 = vpop.f32.mrb[0].mxu0
      %v2327 = vpop.f32.mrb[0].mxu0
      %v2328 = vadd.f32 %v401, %v2327
      %v2329 = vpop.f32.mrb[0].mxu0
      %2330 = vmatprep.mubr.bf16.mxu0 0
      %2331 = vmatmul.mubr.bf16.gmra.mrb[0].mxu0 %v2083
      %v2332 = vpop.f32.mrb[0].mxu0
      %v2333 = vadd.f32 %v401, %v2332
      %v2334 = vpop.f32.mrb[0].mxu0
      %v2335 = vpop.f32.mrb[0].mxu0
      %v2336 = vadd.f32 %v401, %v2335
      %v2337 = vpop.f32.mrb[0].mxu0
      %2338 = vmatprep.mubr.bf16.mxu0 0
      %2339 = vmatmul.mubr.bf16.gmra.mrb[0].mxu0 %v2086
      %v2340 = vpop.f32.mrb[0].mxu0
      %v2341 = vadd.f32 %v401, %v2340
      %v2342 = vpop.f32.mrb[0].mxu0
      %v2343 = vpop.f32.mrb[0].mxu0
      %v2344 = vadd.f32 %v401, %v2343
      %v2345 = vpop.f32.mrb[0].mxu0
      %2346 = vmatprep.mubr.bf16.mxu0 0
      %2347 = vmatmul.mubr.bf16.gmra.mrb[0].mxu0 %v2089
      %v2348 = vpop.f32.mrb[0].mxu0
      %v2349 = vadd.f32 %v401, %v2348
      %v2350 = vpop.f32.mrb[0].mxu0
      %v2351 = vpop.f32.mrb[0].mxu0
      %v2352 = vadd.f32 %v401, %v2351
      %v2353 = vpop.f32.mrb[0].mxu0
      %2354 = vmatprep.mubr.bf16.mxu0 0
      %2355 = vmatmul.mubr.bf16.gmra.mrb[0].mxu0 %v2092
      %v2356 = vpop.f32.mrb[0].mxu0
      %v2357 = vadd.f32 %v401, %v2356
      %v2358 = vpop.f32.mrb[0].mxu0
      %v2359 = vpop.f32.mrb[0].mxu0
      %v2360 = vadd.f32 %v401, %v2359
      %v2361 = vpop.f32.mrb[0].mxu0
      %2362 = vmatprep.mubr.bf16.mxu0 0
      %2363 = vmatmul.mubr.bf16.gmra.mrb[0].mxu0 %v2095
      %v2364 = vpop.f32.mrb[0].mxu0
      %v2365 = vadd.f32 %v401, %v2364
      %v2366 = vpop.f32.mrb[0].mxu0
      %v2367 = vpop.f32.mrb[0].mxu0
      %v2368 = vadd.f32 %v401, %v2367
      %v2369 = vpop.f32.mrb[0].mxu0
      %2370 = vmatprep.mubr.bf16.mxu0 0
      %2371 = vmatmul.mubr.bf16.gmra.mrb[0].mxu0 %v2098
      %v2372 = vpop.f32.mrb[0].mxu0
      %v2373 = vadd.f32 %v401, %v2372
      %v2374 = vpop.f32.mrb[0].mxu0
      %v2375 = vpop.f32.mrb[0].mxu0
      %v2376 = vadd.f32 %v401, %v2375
      %v2377 = vpop.f32.mrb[0].mxu0
      %2378 = vmatprep.mubr.bf16.mxu0 0
      %2379 = vmatmul.mubr.bf16.gmra.mrb[0].mxu0 %v2101
      %v2380 = vpop.f32.mrb[0].mxu0
      %v2381 = vadd.f32 %v401, %v2380
      %v2382 = vpop.f32.mrb[0].mxu0
      %v2383 = vpop.f32.mrb[0].mxu0
      %v2384 = vadd.f32 %v401, %v2383
      %v2385 = vpop.f32.mrb[0].mxu0
      %2386 = vmatprep.mubr.bf16.mxu0 0
      %2387 = vmatmul.mubr.bf16.gmra.mrb[0].mxu0 %v2104
      %v2388 = vpop.f32.mrb[0].mxu0
      %v2389 = vadd.f32 %v401, %v2388
      %v2390 = vpop.f32.mrb[0].mxu0
      %v2391 = vpop.f32.mrb[0].mxu0
      %v2392 = vadd.f32 %v401, %v2391
      %v2393 = vpop.f32.mrb[0].mxu0
      %2394 = vdwg.mxu0
      %v2395 = vmax.f32 %v2141, 0.0
      %v2396 = vmax.f32 %v2144, 0.0
      %v2397 = vmax.f32 %v2149, 0.0
      %v2398 = vmax.f32 %v2152, 0.0
      %v2399 = vmax.f32 %v2157, 0.0
      %v2400 = vmax.f32 %v2160, 0.0
      %v2401 = vmax.f32 %v2165, 0.0
      %v2402 = vmax.f32 %v2168, 0.0
      %v2403 = vmax.f32 %v2173, 0.0
      %v2404 = vmax.f32 %v2176, 0.0
      %v2405 = vmax.f32 %v2181, 0.0
      %v2406 = vmax.f32 %v2184, 0.0
      %v2407 = vmax.f32 %v2189, 0.0
      %v2408 = vmax.f32 %v2192, 0.0
      %v2409 = vmax.f32 %v2197, 0.0
      %v2410 = vmax.f32 %v2200, 0.0
      %v2411 = vmax.f32 %v2205, 0.0
      %v2412 = vmax.f32 %v2208, 0.0
      %v2413 = vmax.f32 %v2213, 0.0
      %v2414 = vmax.f32 %v2216, 0.0
      %v2415 = vmax.f32 %v2221, 0.0
      %v2416 = vmax.f32 %v2224, 0.0
      %v2417 = vmax.f32 %v2229, 0.0
      %v2418 = vmax.f32 %v2232, 0.0
      %v2419 = vmax.f32 %v2237, 0.0
      %v2420 = vmax.f32 %v2240, 0.0
      %v2421 = vmax.f32 %v2245, 0.0
      %v2422 = vmax.f32 %v2248, 0.0
      %v2423 = vmax.f32 %v2253, 0.0
      %v2424 = vmax.f32 %v2256, 0.0
      %v2425 = vmax.f32 %v2261, 0.0
      %v2426 = vmax.f32 %v2264, 0.0
      %v2427 = vmax.f32 %v2269, 0.0
      %v2428 = vmax.f32 %v2272, 0.0
      %v2429 = vmax.f32 %v2277, 0.0
      %v2430 = vmax.f32 %v2280, 0.0
      %v2431 = vmax.f32 %v2285, 0.0
      %v2432 = vmax.f32 %v2288, 0.0
      %v2433 = vmax.f32 %v2293, 0.0
      %v2434 = vmax.f32 %v2296, 0.0
      %v2435 = vmax.f32 %v2301, 0.0
      %v2436 = vmax.f32 %v2304, 0.0
      %v2437 = vmax.f32 %v2309, 0.0
      %v2438 = vmax.f32 %v2312, 0.0
      %v2439 = vmax.f32 %v2317, 0.0
      %v2440 = vmax.f32 %v2320, 0.0
      %v2441 = vmax.f32 %v2325, 0.0
      %v2442 = vmax.f32 %v2328, 0.0
      %v2443 = vmax.f32 %v2333, 0.0
      %v2444 = vmax.f32 %v2336, 0.0
      %v2445 = vmax.f32 %v2341, 0.0
      %v2446 = vmax.f32 %v2344, 0.0
      %v2447 = vmax.f32 %v2349, 0.0
      %v2448 = vmax.f32 %v2352, 0.0
      %v2449 = vmax.f32 %v2357, 0.0
      %v2450 = vmax.f32 %v2360, 0.0
      %v2451 = vmax.f32 %v2365, 0.0
      %v2452 = vmax.f32 %v2368, 0.0
      %v2453 = vmax.f32 %v2373, 0.0
      %v2454 = vmax.f32 %v2376, 0.0
      %v2455 = vmax.f32 %v2381, 0.0
      %v2456 = vmax.f32 %v2384, 0.0
      %v2457 = vmax.f32 %v2389, 0.0
      %v2458 = vmax.f32 %v2392, 0.0
      %v2459 = vld [vmem:[%s313] sm:$0xf]
      %v2460 = vld [vmem:[%s313 + $0x4] sm:$0xf]
      %v2461 = vld [vmem:[%s313 + $0x8] sm:$0xf]
      %v2462 = vld [vmem:[%s313 + $0xc] sm:$0xf]
      %v2463 = vld [vmem:[%s313 + $0x10] sm:$0xf]
      %v2464 = vld [vmem:[%s313 + $0x14] sm:$0xf]
      %v2465 = vld [vmem:[%s313 + $0x18] sm:$0xf]
      %v2466 = vld [vmem:[%s313 + $0x1c] sm:$0xf]
      %v2467 = vld [vmem:[%s313 + $0x20] sm:$0xf]
      %v2468 = vld [vmem:[%s313 + $0x24] sm:$0xf]
      %v2469 = vld [vmem:[%s313 + $0x28] sm:$0xf]
      %v2470 = vld [vmem:[%s313 + $0x2c] sm:$0xf]
      %v2471 = vld [vmem:[%s313 + $0x30] sm:$0xf]
      %v2472 = vld [vmem:[%s313 + $0x34] sm:$0xf]
      %v2473 = vld [vmem:[%s313 + $0x38] sm:$0xf]
      %v2474 = vld [vmem:[%s313 + $0x3c] sm:$0xf]
      %v2475 = vld [vmem:[%s313 + $0x40] sm:$0xf]
      %v2476 = vld [vmem:[%s313 + $0x44] sm:$0xf]
      %v2477 = vld [vmem:[%s313 + $0x48] sm:$0xf]
      %v2478 = vld [vmem:[%s313 + $0x4c] sm:$0xf]
      %v2479 = vld [vmem:[%s313 + $0x50] sm:$0xf]
      %v2480 = vld [vmem:[%s313 + $0x54] sm:$0xf]
      %v2481 = vld [vmem:[%s313 + $0x58] sm:$0xf]
      %v2482 = vld [vmem:[%s313 + $0x5c] sm:$0xf]
      %v2483 = vld [vmem:[%s313 + $0x60] sm:$0xf]
      %v2484 = vld [vmem:[%s313 + $0x64] sm:$0xf]
      %v2485 = vld [vmem:[%s313 + $0x68] sm:$0xf]
      %v2486 = vld [vmem:[%s313 + $0x6c] sm:$0xf]
      %v2487 = vld [vmem:[%s313 + $0x70] sm:$0xf]
      %v2488 = vld [vmem:[%s313 + $0x74] sm:$0xf]
      %v2489 = vld [vmem:[%s313 + $0x78] sm:$0xf]
      %v2490 = vld [vmem:[%s313 + $0x7c] sm:$0xf]
      %v2491 = vld [vmem:[%s313 + $0x80] sm:$0xf]
      %v2492 = vld [vmem:[%s313 + $0x84] sm:$0xf]
      %v2493 = vld [vmem:[%s313 + $0x88] sm:$0xf]
      %v2494 = vld [vmem:[%s313 + $0x8c] sm:$0xf]
      %v2495 = vld [vmem:[%s313 + $0x90] sm:$0xf]
      %v2496 = vld [vmem:[%s313 + $0x94] sm:$0xf]
      %v2497 = vld [vmem:[%s313 + $0x98] sm:$0xf]
      %v2498 = vld [vmem:[%s313 + $0x9c] sm:$0xf]
      %v2499 = vld [vmem:[%s313 + $0xa0] sm:$0xf]
      %v2500 = vld [vmem:[%s313 + $0xa4] sm:$0xf]
      %v2501 = vld [vmem:[%s313 + $0xa8] sm:$0xf]
      %v2502 = vld [vmem:[%s313 + $0xac] sm:$0xf]
      %v2503 = vld [vmem:[%s313 + $0xb0] sm:$0xf]
      %v2504 = vld [vmem:[%s313 + $0xb4] sm:$0xf]
      %v2505 = vld [vmem:[%s313 + $0xb8] sm:$0xf]
      %v2506 = vld [vmem:[%s313 + $0xbc] sm:$0xf]
      %v2507 = vld [vmem:[%s313 + $0xc0] sm:$0xf]
      %v2508 = vld [vmem:[%s313 + $0xc4] sm:$0xf]
      %v2509 = vld [vmem:[%s313 + $0xc8] sm:$0xf]
      %v2510 = vld [vmem:[%s313 + $0xcc] sm:$0xf]
      %v2511 = vld [vmem:[%s313 + $0xd0] sm:$0xf]
      %v2512 = vld [vmem:[%s313 + $0xd4] sm:$0xf]
      %v2513 = vld [vmem:[%s313 + $0xd8] sm:$0xf]
      %v2514 = vld [vmem:[%s313 + $0xdc] sm:$0xf]
      %v2515 = vld [vmem:[%s313 + $0xe0] sm:$0xf]
      %v2516 = vld [vmem:[%s313 + $0xe4] sm:$0xf]
      %v2517 = vld [vmem:[%s313 + $0xe8] sm:$0xf]
      %v2518 = vld [vmem:[%s313 + $0xec] sm:$0xf]
      %v2519 = vld [vmem:[%s313 + $0xf0] sm:$0xf]
      %v2520 = vld [vmem:[%s313 + $0xf4] sm:$0xf]
      %v2521 = vld [vmem:[%s313 + $0xf8] sm:$0xf]
      %v2522 = vld [vmem:[%s313 + $0xfc] sm:$0xf]
      %v2587 = vunpack.c.l.b16 %v2459
      %v2588 = vunpack.c.l.b16 %v2460
      %v2589 = vunpack.c.l.b16 %v2461
      %v2590 = vunpack.c.l.b16 %v2462
      %v2591 = vunpack.c.l.b16 %v2463
      %v2592 = vunpack.c.l.b16 %v2464
      %v2593 = vunpack.c.l.b16 %v2465
      %v2594 = vunpack.c.l.b16 %v2466
      %v2595 = vunpack.c.l.b16 %v2467
      %v2596 = vunpack.c.l.b16 %v2468
      %v2597 = vunpack.c.l.b16 %v2469
      %v2598 = vunpack.c.l.b16 %v2470
      %v2599 = vunpack.c.l.b16 %v2471
      %v2600 = vunpack.c.l.b16 %v2472
      %v2601 = vunpack.c.l.b16 %v2473
      %v2602 = vunpack.c.l.b16 %v2474
      %v2603 = vunpack.c.l.b16 %v2475
      %v2604 = vunpack.c.l.b16 %v2476
      %v2605 = vunpack.c.l.b16 %v2477
      %v2606 = vunpack.c.l.b16 %v2478
      %v2607 = vunpack.c.l.b16 %v2479
      %v2608 = vunpack.c.l.b16 %v2480
      %v2609 = vunpack.c.l.b16 %v2481
      %v2610 = vunpack.c.l.b16 %v2482
      %v2611 = vunpack.c.l.b16 %v2483
      %v2612 = vunpack.c.l.b16 %v2484
      %v2613 = vunpack.c.l.b16 %v2485
      %v2614 = vunpack.c.l.b16 %v2486
      %v2615 = vunpack.c.l.b16 %v2487
      %v2616 = vunpack.c.l.b16 %v2488
      %v2617 = vunpack.c.l.b16 %v2489
      %v2618 = vunpack.c.l.b16 %v2490
      %v2619 = vunpack.c.l.b16 %v2491
      %v2620 = vunpack.c.l.b16 %v2492
      %v2621 = vunpack.c.l.b16 %v2493
      %v2622 = vunpack.c.l.b16 %v2494
      %v2623 = vunpack.c.l.b16 %v2495
      %v2624 = vunpack.c.l.b16 %v2496
      %v2625 = vunpack.c.l.b16 %v2497
      %v2626 = vunpack.c.l.b16 %v2498
      %v2627 = vunpack.c.l.b16 %v2499
      %v2628 = vunpack.c.l.b16 %v2500
      %v2629 = vunpack.c.l.b16 %v2501
      %v2630 = vunpack.c.l.b16 %v2502
      %v2631 = vunpack.c.l.b16 %v2503
      %v2632 = vunpack.c.l.b16 %v2504
      %v2633 = vunpack.c.l.b16 %v2505
      %v2634 = vunpack.c.l.b16 %v2506
      %v2635 = vunpack.c.l.b16 %v2507
      %v2636 = vunpack.c.l.b16 %v2508
      %v2637 = vunpack.c.l.b16 %v2509
      %v2638 = vunpack.c.l.b16 %v2510
      %v2639 = vunpack.c.l.b16 %v2511
      %v2640 = vunpack.c.l.b16 %v2512
      %v2641 = vunpack.c.l.b16 %v2513
      %v2642 = vunpack.c.l.b16 %v2514
      %v2643 = vunpack.c.l.b16 %v2515
      %v2644 = vunpack.c.l.b16 %v2516
      %v2645 = vunpack.c.l.b16 %v2517
      %v2646 = vunpack.c.l.b16 %v2518
      %v2647 = vunpack.c.l.b16 %v2519
      %v2648 = vunpack.c.l.b16 %v2520
      %v2649 = vunpack.c.l.b16 %v2521
      %v2650 = vunpack.c.l.b16 %v2522
      %v2651 = vpack.c.b16 %v2588, %v2587
      %v2652 = vpack.c.b16 %v2590, %v2589
      %v2653 = vpack.c.b16 %v2592, %v2591
      %v2654 = vpack.c.b16 %v2594, %v2593
      %v2655 = vpack.c.b16 %v2596, %v2595
      %v2656 = vpack.c.b16 %v2598, %v2597
      %v2657 = vpack.c.b16 %v2600, %v2599
      %v2658 = vpack.c.b16 %v2602, %v2601
      %v2659 = vpack.c.b16 %v2604, %v2603
      %v2660 = vpack.c.b16 %v2606, %v2605
      %v2661 = vpack.c.b16 %v2608, %v2607
      %v2662 = vpack.c.b16 %v2610, %v2609
      %v2663 = vpack.c.b16 %v2612, %v2611
      %v2664 = vpack.c.b16 %v2614, %v2613
      %v2665 = vpack.c.b16 %v2616, %v2615
      %v2666 = vpack.c.b16 %v2618, %v2617
      %v2667 = vpack.c.b16 %v2620, %v2619
      %v2668 = vpack.c.b16 %v2622, %v2621
      %v2669 = vpack.c.b16 %v2624, %v2623
      %v2670 = vpack.c.b16 %v2626, %v2625
      %v2671 = vpack.c.b16 %v2628, %v2627
      %v2672 = vpack.c.b16 %v2630, %v2629
      %v2673 = vpack.c.b16 %v2632, %v2631
      %v2674 = vpack.c.b16 %v2634, %v2633
      %v2675 = vpack.c.b16 %v2636, %v2635
      %v2676 = vpack.c.b16 %v2638, %v2637
      %v2677 = vpack.c.b16 %v2640, %v2639
      %v2678 = vpack.c.b16 %v2642, %v2641
      %v2679 = vpack.c.b16 %v2644, %v2643
      %v2680 = vpack.c.b16 %v2646, %v2645
      %v2681 = vpack.c.b16 %v2648, %v2647
      %v2682 = vpack.c.b16 %v2650, %v2649
      %v2684 = vsel %vm592, %v2651, 0
      %v2687 = vsel %vm592, %v2652, 0
      %v2690 = vsel %vm592, %v2653, 0
      %v2693 = vsel %vm592, %v2654, 0
      %v2696 = vsel %vm592, %v2655, 0
      %v2699 = vsel %vm592, %v2656, 0
      %v2702 = vsel %vm592, %v2657, 0
      %v2705 = vsel %vm592, %v2658, 0
      %v2708 = vsel %vm592, %v2659, 0
      %v2711 = vsel %vm592, %v2660, 0
      %v2714 = vsel %vm592, %v2661, 0
      %v2717 = vsel %vm592, %v2662, 0
      %v2720 = vsel %vm592, %v2663, 0
      %v2723 = vsel %vm592, %v2664, 0
      %v2726 = vsel %vm592, %v2665, 0
      %v2729 = vsel %vm592, %v2666, 0
      %v2732 = vsel %vm592, %v2667, 0
      %v2735 = vsel %vm592, %v2668, 0
      %v2738 = vsel %vm592, %v2669, 0
      %v2741 = vsel %vm592, %v2670, 0
      %v2744 = vsel %vm592, %v2671, 0
      %v2747 = vsel %vm592, %v2672, 0
      %v2750 = vsel %vm592, %v2673, 0
      %v2753 = vsel %vm592, %v2674, 0
      %v2756 = vsel %vm592, %v2675, 0
      %v2759 = vsel %vm592, %v2676, 0
      %v2762 = vsel %vm592, %v2677, 0
      %v2765 = vsel %vm592, %v2678, 0
      %v2768 = vsel %vm592, %v2679, 0
      %v2771 = vsel %vm592, %v2680, 0
      %v2774 = vsel %vm592, %v2681, 0
      %v2777 = vsel %vm592, %v2682, 0
      %2779 = vmatprep.subr.bf16.mxu0 0
      %2780 = vmatpush1.bf16.msra.mxu0 %v583
      %2781 = vmatprep.subr.bf16.mxu0 0
      %2782 = vmatpush1.bf16.msra.mxu0 %v584
      %2783 = vmatprep.subr.bf16.mxu0 0
      %2784 = vmatpush1.bf16.msra.mxu0 %v585
      %2785 = vmatprep.subr.bf16.mxu0 0
      %2786 = vmatpush1.bf16.msra.mxu0 %v586
      %2787 = vmatprep.subr.bf16.mxu0 0
      %2788 = vmatpush1.bf16.msra.mxu0 %v694
      %2789 = vmatprep.subr.bf16.mxu0 0
      %2790 = vmatpush1.bf16.msra.mxu0 0
      %2791 = vmatprep.subr.bf16.mxu0 0
      %2792 = vmatpush1.bf16.msra.mxu0 0
      %2793 = vmatprep.subr.bf16.mxu0 0
      %2794 = vmatpush1.bf16.msra.mxu0 0
      %2795 = vmatprep.subr.bf16.mxu0 0
      %2796 = vmatpush1.bf16.msra.mxu0 0
      %2797 = vmatprep.subr.bf16.mxu0 0
      %2798 = vmatpush1.bf16.msra.mxu0 0
      %2799 = vmatprep.subr.bf16.mxu0 0
      %2800 = vmatpush1.bf16.msra.mxu0 0
      %2801 = vmatprep.subr.bf16.mxu0 0
      %2802 = vmatpush1.bf16.msra.mxu0 0
      %2803 = vmatprep.subr.bf16.mxu0 0
      %2804 = vmatpush1.bf16.msra.mxu0 0
      %2805 = vmatprep.subr.bf16.mxu0 0
      %2806 = vmatpush1.bf16.msra.mxu0 0
      %2807 = vmatprep.subr.bf16.mxu0 0
      %2808 = vmatpush1.bf16.msra.mxu0 0
      %2809 = vmatprep.subr.bf16.mxu0 0
      %2810 = vmatpush1.bf16.msra.mxu0 0
      %2811 = vmatprep.mubr.bf16.mxu0 0
      %2812 = vmatmul.mubr.bf16.gmra.mrb[0].mxu0 %v2684
      %v2813 = vpop.f32.mrb[0].mxu0
      %v2814 = vadd.f32 %v401, %v2813
      %v2815 = vpop.f32.mrb[0].mxu0
      %v2816 = vpop.f32.mrb[0].mxu0
      %v2817 = vadd.f32 %v401, %v2816
      %v2818 = vpop.f32.mrb[0].mxu0
      %2819 = vmatprep.mubr.bf16.mxu0 0
      %2820 = vmatmul.mubr.bf16.gmra.mrb[0].mxu0 %v2687
      %v2821 = vpop.f32.mrb[0].mxu0
      %v2822 = vadd.f32 %v401, %v2821
      %v2823 = vpop.f32.mrb[0].mxu0
      %v2824 = vpop.f32.mrb[0].mxu0
      %v2825 = vadd.f32 %v401, %v2824
      %v2826 = vpop.f32.mrb[0].mxu0
      %2827 = vmatprep.mubr.bf16.mxu0 0
      %2828 = vmatmul.mubr.bf16.gmra.mrb[0].mxu0 %v2690
      %v2829 = vpop.f32.mrb[0].mxu0
      %v2830 = vadd.f32 %v401, %v2829
      %v2831 = vpop.f32.mrb[0].mxu0
      %v2832 = vpop.f32.mrb[0].mxu0
      %v2833 = vadd.f32 %v401, %v2832
      %v2834 = vpop.f32.mrb[0].mxu0
      %2835 = vmatprep.mubr.bf16.mxu0 0
      %2836 = vmatmul.mubr.bf16.gmra.mrb[0].mxu0 %v2693
      %v2837 = vpop.f32.mrb[0].mxu0
      %v2838 = vadd.f32 %v401, %v2837
      %v2839 = vpop.f32.mrb[0].mxu0
      %v2840 = vpop.f32.mrb[0].mxu0
      %v2841 = vadd.f32 %v401, %v2840
      %v2842 = vpop.f32.mrb[0].mxu0
      %2843 = vmatprep.mubr.bf16.mxu0 0
      %2844 = vmatmul.mubr.bf16.gmra.mrb[0].mxu0 %v2696
      %v2845 = vpop.f32.mrb[0].mxu0
      %v2846 = vadd.f32 %v401, %v2845
      %v2847 = vpop.f32.mrb[0].mxu0
      %v2848 = vpop.f32.mrb[0].mxu0
      %v2849 = vadd.f32 %v401, %v2848
      %v2850 = vpop.f32.mrb[0].mxu0
      %2851 = vmatprep.mubr.bf16.mxu0 0
      %2852 = vmatmul.mubr.bf16.gmra.mrb[0].mxu0 %v2699
      %v2853 = vpop.f32.mrb[0].mxu0
      %v2854 = vadd.f32 %v401, %v2853
      %v2855 = vpop.f32.mrb[0].mxu0
      %v2856 = vpop.f32.mrb[0].mxu0
      %v2857 = vadd.f32 %v401, %v2856
      %v2858 = vpop.f32.mrb[0].mxu0
      %2859 = vmatprep.mubr.bf16.mxu0 0
      %2860 = vmatmul.mubr.bf16.gmra.mrb[0].mxu0 %v2702
      %v2861 = vpop.f32.mrb[0].mxu0
      %v2862 = vadd.f32 %v401, %v2861
      %v2863 = vpop.f32.mrb[0].mxu0
      %v2864 = vpop.f32.mrb[0].mxu0
      %v2865 = vadd.f32 %v401, %v2864
      %v2866 = vpop.f32.mrb[0].mxu0
      %2867 = vmatprep.mubr.bf16.mxu0 0
      %2868 = vmatmul.mubr.bf16.gmra.mrb[0].mxu0 %v2705
      %v2869 = vpop.f32.mrb[0].mxu0
      %v2870 = vadd.f32 %v401, %v2869
      %v2871 = vpop.f32.mrb[0].mxu0
      %v2872 = vpop.f32.mrb[0].mxu0
      %v2873 = vadd.f32 %v401, %v2872
      %v2874 = vpop.f32.mrb[0].mxu0
      %2875 = vmatprep.mubr.bf16.mxu0 0
      %2876 = vmatmul.mubr.bf16.gmra.mrb[0].mxu0 %v2708
      %v2877 = vpop.f32.mrb[0].mxu0
      %v2878 = vadd.f32 %v401, %v2877
      %v2879 = vpop.f32.mrb[0].mxu0
      %v2880 = vpop.f32.mrb[0].mxu0
      %v2881 = vadd.f32 %v401, %v2880
      %v2882 = vpop.f32.mrb[0].mxu0
      %2883 = vmatprep.mubr.bf16.mxu0 0
      %2884 = vmatmul.mubr.bf16.gmra.mrb[0].mxu0 %v2711
      %v2885 = vpop.f32.mrb[0].mxu0
      %v2886 = vadd.f32 %v401, %v2885
      %v2887 = vpop.f32.mrb[0].mxu0
      %v2888 = vpop.f32.mrb[0].mxu0
      %v2889 = vadd.f32 %v401, %v2888
      %v2890 = vpop.f32.mrb[0].mxu0
      %2891 = vmatprep.mubr.bf16.mxu0 0
      %2892 = vmatmul.mubr.bf16.gmra.mrb[0].mxu0 %v2714
      %v2893 = vpop.f32.mrb[0].mxu0
      %v2894 = vadd.f32 %v401, %v2893
      %v2895 = vpop.f32.mrb[0].mxu0
      %v2896 = vpop.f32.mrb[0].mxu0
      %v2897 = vadd.f32 %v401, %v2896
      %v2898 = vpop.f32.mrb[0].mxu0
      %2899 = vmatprep.mubr.bf16.mxu0 0
      %2900 = vmatmul.mubr.bf16.gmra.mrb[0].mxu0 %v2717
      %v2901 = vpop.f32.mrb[0].mxu0
      %v2902 = vadd.f32 %v401, %v2901
      %v2903 = vpop.f32.mrb[0].mxu0
      %v2904 = vpop.f32.mrb[0].mxu0
      %v2905 = vadd.f32 %v401, %v2904
      %v2906 = vpop.f32.mrb[0].mxu0
      %2907 = vmatprep.mubr.bf16.mxu0 0
      %2908 = vmatmul.mubr.bf16.gmra.mrb[0].mxu0 %v2720
      %v2909 = vpop.f32.mrb[0].mxu0
      %v2910 = vadd.f32 %v401, %v2909
      %v2911 = vpop.f32.mrb[0].mxu0
      %v2912 = vpop.f32.mrb[0].mxu0
      %v2913 = vadd.f32 %v401, %v2912
      %v2914 = vpop.f32.mrb[0].mxu0
      %2915 = vmatprep.mubr.bf16.mxu0 0
      %2916 = vmatmul.mubr.bf16.gmra.mrb[0].mxu0 %v2723
      %v2917 = vpop.f32.mrb[0].mxu0
      %v2918 = vadd.f32 %v401, %v2917
      %v2919 = vpop.f32.mrb[0].mxu0
      %v2920 = vpop.f32.mrb[0].mxu0
      %v2921 = vadd.f32 %v401, %v2920
      %v2922 = vpop.f32.mrb[0].mxu0
      %2923 = vmatprep.mubr.bf16.mxu0 0
      %2924 = vmatmul.mubr.bf16.gmra.mrb[0].mxu0 %v2726
      %v2925 = vpop.f32.mrb[0].mxu0
      %v2926 = vadd.f32 %v401, %v2925
      %v2927 = vpop.f32.mrb[0].mxu0
      %v2928 = vpop.f32.mrb[0].mxu0
      %v2929 = vadd.f32 %v401, %v2928
      %v2930 = vpop.f32.mrb[0].mxu0
      %2931 = vmatprep.mubr.bf16.mxu0 0
      %2932 = vmatmul.mubr.bf16.gmra.mrb[0].mxu0 %v2729
      %v2933 = vpop.f32.mrb[0].mxu0
      %v2934 = vadd.f32 %v401, %v2933
      %v2935 = vpop.f32.mrb[0].mxu0
      %v2936 = vpop.f32.mrb[0].mxu0
      %v2937 = vadd.f32 %v401, %v2936
      %v2938 = vpop.f32.mrb[0].mxu0
      %2939 = vmatprep.mubr.bf16.mxu0 0
      %2940 = vmatmul.mubr.bf16.gmra.mrb[0].mxu0 %v2732
      %v2941 = vpop.f32.mrb[0].mxu0
      %v2942 = vadd.f32 %v401, %v2941
      %v2943 = vpop.f32.mrb[0].mxu0
      %v2944 = vpop.f32.mrb[0].mxu0
      %v2945 = vadd.f32 %v401, %v2944
      %v2946 = vpop.f32.mrb[0].mxu0
      %2947 = vmatprep.mubr.bf16.mxu0 0
      %2948 = vmatmul.mubr.bf16.gmra.mrb[0].mxu0 %v2735
      %v2949 = vpop.f32.mrb[0].mxu0
      %v2950 = vadd.f32 %v401, %v2949
      %v2951 = vpop.f32.mrb[0].mxu0
      %v2952 = vpop.f32.mrb[0].mxu0
      %v2953 = vadd.f32 %v401, %v2952
      %v2954 = vpop.f32.mrb[0].mxu0
      %2955 = vmatprep.mubr.bf16.mxu0 0
      %2956 = vmatmul.mubr.bf16.gmra.mrb[0].mxu0 %v2738
      %v2957 = vpop.f32.mrb[0].mxu0
      %v2958 = vadd.f32 %v401, %v2957
      %v2959 = vpop.f32.mrb[0].mxu0
      %v2960 = vpop.f32.mrb[0].mxu0
      %v2961 = vadd.f32 %v401, %v2960
      %v2962 = vpop.f32.mrb[0].mxu0
      %2963 = vmatprep.mubr.bf16.mxu0 0
      %2964 = vmatmul.mubr.bf16.gmra.mrb[0].mxu0 %v2741
      %v2965 = vpop.f32.mrb[0].mxu0
      %v2966 = vadd.f32 %v401, %v2965
      %v2967 = vpop.f32.mrb[0].mxu0
      %v2968 = vpop.f32.mrb[0].mxu0
      %v2969 = vadd.f32 %v401, %v2968
      %v2970 = vpop.f32.mrb[0].mxu0
      %2971 = vmatprep.mubr.bf16.mxu0 0
      %2972 = vmatmul.mubr.bf16.gmra.mrb[0].mxu0 %v2744
      %v2973 = vpop.f32.mrb[0].mxu0
      %v2974 = vadd.f32 %v401, %v2973
      %v2975 = vpop.f32.mrb[0].mxu0
      %v2976 = vpop.f32.mrb[0].mxu0
      %v2977 = vadd.f32 %v401, %v2976
      %v2978 = vpop.f32.mrb[0].mxu0
      %2979 = vmatprep.mubr.bf16.mxu0 0
      %2980 = vmatmul.mubr.bf16.gmra.mrb[0].mxu0 %v2747
      %v2981 = vpop.f32.mrb[0].mxu0
      %v2982 = vadd.f32 %v401, %v2981
      %v2983 = vpop.f32.mrb[0].mxu0
      %v2984 = vpop.f32.mrb[0].mxu0
      %v2985 = vadd.f32 %v401, %v2984
      %v2986 = vpop.f32.mrb[0].mxu0
      %2987 = vmatprep.mubr.bf16.mxu0 0
      %2988 = vmatmul.mubr.bf16.gmra.mrb[0].mxu0 %v2750
      %v2989 = vpop.f32.mrb[0].mxu0
      %v2990 = vadd.f32 %v401, %v2989
      %v2991 = vpop.f32.mrb[0].mxu0
      %v2992 = vpop.f32.mrb[0].mxu0
      %v2993 = vadd.f32 %v401, %v2992
      %v2994 = vpop.f32.mrb[0].mxu0
      %2995 = vmatprep.mubr.bf16.mxu0 0
      %2996 = vmatmul.mubr.bf16.gmra.mrb[0].mxu0 %v2753
      %v2997 = vpop.f32.mrb[0].mxu0
      %v2998 = vadd.f32 %v401, %v2997
      %v2999 = vpop.f32.mrb[0].mxu0
      %v3000 = vpop.f32.mrb[0].mxu0
      %v3001 = vadd.f32 %v401, %v3000
      %v3002 = vpop.f32.mrb[0].mxu0
      %3003 = vmatprep.mubr.bf16.mxu0 0
      %3004 = vmatmul.mubr.bf16.gmra.mrb[0].mxu0 %v2756
      %v3005 = vpop.f32.mrb[0].mxu0
      %v3006 = vadd.f32 %v401, %v3005
      %v3007 = vpop.f32.mrb[0].mxu0
      %v3008 = vpop.f32.mrb[0].mxu0
      %v3009 = vadd.f32 %v401, %v3008
      %v3010 = vpop.f32.mrb[0].mxu0
      %3011 = vmatprep.mubr.bf16.mxu0 0
      %3012 = vmatmul.mubr.bf16.gmra.mrb[0].mxu0 %v2759
      %v3013 = vpop.f32.mrb[0].mxu0
      %v3014 = vadd.f32 %v401, %v3013
      %v3015 = vpop.f32.mrb[0].mxu0
      %v3016 = vpop.f32.mrb[0].mxu0
      %v3017 = vadd.f32 %v401, %v3016
      %v3018 = vpop.f32.mrb[0].mxu0
      %3019 = vmatprep.mubr.bf16.mxu0 0
      %3020 = vmatmul.mubr.bf16.gmra.mrb[0].mxu0 %v2762
      %v3021 = vpop.f32.mrb[0].mxu0
      %v3022 = vadd.f32 %v401, %v3021
      %v3023 = vpop.f32.mrb[0].mxu0
      %v3024 = vpop.f32.mrb[0].mxu0
      %v3025 = vadd.f32 %v401, %v3024
      %v3026 = vpop.f32.mrb[0].mxu0
      %3027 = vmatprep.mubr.bf16.mxu0 0
      %3028 = vmatmul.mubr.bf16.gmra.mrb[0].mxu0 %v2765
      %v3029 = vpop.f32.mrb[0].mxu0
      %v3030 = vadd.f32 %v401, %v3029
      %v3031 = vpop.f32.mrb[0].mxu0
      %v3032 = vpop.f32.mrb[0].mxu0
      %v3033 = vadd.f32 %v401, %v3032
      %v3034 = vpop.f32.mrb[0].mxu0
      %3035 = vmatprep.mubr.bf16.mxu0 0
      %3036 = vmatmul.mubr.bf16.gmra.mrb[0].mxu0 %v2768
      %v3037 = vpop.f32.mrb[0].mxu0
      %v3038 = vadd.f32 %v401, %v3037
      %v3039 = vpop.f32.mrb[0].mxu0
      %v3040 = vpop.f32.mrb[0].mxu0
      %v3041 = vadd.f32 %v401, %v3040
      %v3042 = vpop.f32.mrb[0].mxu0
      %3043 = vmatprep.mubr.bf16.mxu0 0
      %3044 = vmatmul.mubr.bf16.gmra.mrb[0].mxu0 %v2771
      %v3045 = vpop.f32.mrb[0].mxu0
      %v3046 = vadd.f32 %v401, %v3045
      %v3047 = vpop.f32.mrb[0].mxu0
      %v3048 = vpop.f32.mrb[0].mxu0
      %v3049 = vadd.f32 %v401, %v3048
      %v3050 = vpop.f32.mrb[0].mxu0
      %3051 = vmatprep.mubr.bf16.mxu0 0
      %3052 = vmatmul.mubr.bf16.gmra.mrb[0].mxu0 %v2774
      %v3053 = vpop.f32.mrb[0].mxu0
      %v3054 = vadd.f32 %v401, %v3053
      %v3055 = vpop.f32.mrb[0].mxu0
      %v3056 = vpop.f32.mrb[0].mxu0
      %v3057 = vadd.f32 %v401, %v3056
      %v3058 = vpop.f32.mrb[0].mxu0
      %3059 = vmatprep.mubr.bf16.mxu0 0
      %3060 = vmatmul.mubr.bf16.gmra.mrb[0].mxu0 %v2777
      %v3061 = vpop.f32.mrb[0].mxu0
      %v3062 = vadd.f32 %v401, %v3061
      %v3063 = vpop.f32.mrb[0].mxu0
      %v3064 = vpop.f32.mrb[0].mxu0
      %v3065 = vadd.f32 %v401, %v3064
      %v3066 = vpop.f32.mrb[0].mxu0
      %3067 = vdwg.mxu0
      %v3068 = vmax.f32 %v2814, 0.0
      %v3069 = vmax.f32 %v2817, 0.0
      %v3070 = vmax.f32 %v2822, 0.0
      %v3071 = vmax.f32 %v2825, 0.0
      %v3072 = vmax.f32 %v2830, 0.0
      %v3073 = vmax.f32 %v2833, 0.0
      %v3074 = vmax.f32 %v2838, 0.0
      %v3075 = vmax.f32 %v2841, 0.0
      %v3076 = vmax.f32 %v2846, 0.0
      %v3077 = vmax.f32 %v2849, 0.0
      %v3078 = vmax.f32 %v2854, 0.0
      %v3079 = vmax.f32 %v2857, 0.0
      %v3080 = vmax.f32 %v2862, 0.0
      %v3081 = vmax.f32 %v2865, 0.0
      %v3082 = vmax.f32 %v2870, 0.0
      %v3083 = vmax.f32 %v2873, 0.0
      %v3084 = vmax.f32 %v2878, 0.0
      %v3085 = vmax.f32 %v2881, 0.0
      %v3086 = vmax.f32 %v2886, 0.0
      %v3087 = vmax.f32 %v2889, 0.0
      %v3088 = vmax.f32 %v2894, 0.0
      %v3089 = vmax.f32 %v2897, 0.0
      %v3090 = vmax.f32 %v2902, 0.0
      %v3091 = vmax.f32 %v2905, 0.0
      %v3092 = vmax.f32 %v2910, 0.0
      %v3093 = vmax.f32 %v2913, 0.0
      %v3094 = vmax.f32 %v2918, 0.0
      %v3095 = vmax.f32 %v2921, 0.0
      %v3096 = vmax.f32 %v2926, 0.0
      %v3097 = vmax.f32 %v2929, 0.0
      %v3098 = vmax.f32 %v2934, 0.0
      %v3099 = vmax.f32 %v2937, 0.0
      %v3100 = vmax.f32 %v2942, 0.0
      %v3101 = vmax.f32 %v2945, 0.0
      %v3102 = vmax.f32 %v2950, 0.0
      %v3103 = vmax.f32 %v2953, 0.0
      %v3104 = vmax.f32 %v2958, 0.0
      %v3105 = vmax.f32 %v2961, 0.0
      %v3106 = vmax.f32 %v2966, 0.0
      %v3107 = vmax.f32 %v2969, 0.0
      %v3108 = vmax.f32 %v2974, 0.0
      %v3109 = vmax.f32 %v2977, 0.0
      %v3110 = vmax.f32 %v2982, 0.0
      %v3111 = vmax.f32 %v2985, 0.0
      %v3112 = vmax.f32 %v2990, 0.0
      %v3113 = vmax.f32 %v2993, 0.0
      %v3114 = vmax.f32 %v2998, 0.0
      %v3115 = vmax.f32 %v3001, 0.0
      %v3116 = vmax.f32 %v3006, 0.0
      %v3117 = vmax.f32 %v3009, 0.0
      %v3118 = vmax.f32 %v3014, 0.0
      %v3119 = vmax.f32 %v3017, 0.0
      %v3120 = vmax.f32 %v3022, 0.0
      %v3121 = vmax.f32 %v3025, 0.0
      %v3122 = vmax.f32 %v3030, 0.0
      %v3123 = vmax.f32 %v3033, 0.0
      %v3124 = vmax.f32 %v3038, 0.0
      %v3125 = vmax.f32 %v3041, 0.0
      %v3126 = vmax.f32 %v3046, 0.0
      %v3127 = vmax.f32 %v3049, 0.0
      %v3128 = vmax.f32 %v3054, 0.0
      %v3129 = vmax.f32 %v3057, 0.0
      %v3130 = vmax.f32 %v3062, 0.0
      %v3131 = vmax.f32 %v3065, 0.0
      %v3132 = vmax.f32 %v2395, %v3068
      %v3133 = vmax.f32 %v2396, %v3069
      %v3134 = vmax.f32 %v2397, %v3070
      %v3135 = vmax.f32 %v2398, %v3071
      %v3136 = vmax.f32 %v2399, %v3072
      %v3137 = vmax.f32 %v2400, %v3073
      %v3138 = vmax.f32 %v2401, %v3074
      %v3139 = vmax.f32 %v2402, %v3075
      %v3140 = vmax.f32 %v2403, %v3076
      %v3141 = vmax.f32 %v2404, %v3077
      %v3142 = vmax.f32 %v2405, %v3078
      %v3143 = vmax.f32 %v2406, %v3079
      %v3144 = vmax.f32 %v2407, %v3080
      %v3145 = vmax.f32 %v2408, %v3081
      %v3146 = vmax.f32 %v2409, %v3082
      %v3147 = vmax.f32 %v2410, %v3083
      %v3148 = vmax.f32 %v2411, %v3084
      %v3149 = vmax.f32 %v2412, %v3085
      %v3150 = vmax.f32 %v2413, %v3086
      %v3151 = vmax.f32 %v2414, %v3087
      %v3152 = vmax.f32 %v2415, %v3088
      %v3153 = vmax.f32 %v2416, %v3089
      %v3154 = vmax.f32 %v2417, %v3090
      %v3155 = vmax.f32 %v2418, %v3091
      %v3156 = vmax.f32 %v2419, %v3092
      %v3157 = vmax.f32 %v2420, %v3093
      %v3158 = vmax.f32 %v2421, %v3094
      %v3159 = vmax.f32 %v2422, %v3095
      %v3160 = vmax.f32 %v2423, %v3096
      %v3161 = vmax.f32 %v2424, %v3097
      %v3162 = vmax.f32 %v2425, %v3098
      %v3163 = vmax.f32 %v2426, %v3099
      %v3164 = vmax.f32 %v2427, %v3100
      %v3165 = vmax.f32 %v2428, %v3101
      %v3166 = vmax.f32 %v2429, %v3102
      %v3167 = vmax.f32 %v2430, %v3103
      %v3168 = vmax.f32 %v2431, %v3104
      %v3169 = vmax.f32 %v2432, %v3105
      %v3170 = vmax.f32 %v2433, %v3106
      %v3171 = vmax.f32 %v2434, %v3107
      %v3172 = vmax.f32 %v2435, %v3108
      %v3173 = vmax.f32 %v2436, %v3109
      %v3174 = vmax.f32 %v2437, %v3110
      %v3175 = vmax.f32 %v2438, %v3111
      %v3176 = vmax.f32 %v2439, %v3112
      %v3177 = vmax.f32 %v2440, %v3113
      %v3178 = vmax.f32 %v2441, %v3114
      %v3179 = vmax.f32 %v2442, %v3115
      %v3180 = vmax.f32 %v2443, %v3116
      %v3181 = vmax.f32 %v2444, %v3117
      %v3182 = vmax.f32 %v2445, %v3118
      %v3183 = vmax.f32 %v2446, %v3119
      %v3184 = vmax.f32 %v2447, %v3120
      %v3185 = vmax.f32 %v2448, %v3121
      %v3186 = vmax.f32 %v2449, %v3122
      %v3187 = vmax.f32 %v2450, %v3123
      %v3188 = vmax.f32 %v2451, %v3124
      %v3189 = vmax.f32 %v2452, %v3125
      %v3190 = vmax.f32 %v2453, %v3126
      %v3191 = vmax.f32 %v2454, %v3127
      %v3192 = vmax.f32 %v2455, %v3128
      %v3193 = vmax.f32 %v2456, %v3129
      %v3194 = vmax.f32 %v2457, %v3130
      %v3195 = vmax.f32 %v2458, %v3131
      %v3196 = vmax.f32 %v1722, %v3132
      %v3197 = vmax.f32 %v1723, %v3133
      %v3198 = vmax.f32 %v1724, %v3134
      %v3199 = vmax.f32 %v1725, %v3135
      %v3200 = vmax.f32 %v1726, %v3136
      %v3201 = vmax.f32 %v1727, %v3137
      %v3202 = vmax.f32 %v1728, %v3138
      %v3203 = vmax.f32 %v1729, %v3139
      %v3204 = vmax.f32 %v1730, %v3140
      %v3205 = vmax.f32 %v1731, %v3141
      %v3206 = vmax.f32 %v1732, %v3142
      %v3207 = vmax.f32 %v1733, %v3143
      %v3208 = vmax.f32 %v1734, %v3144
      %v3209 = vmax.f32 %v1735, %v3145
      %v3210 = vmax.f32 %v1736, %v3146
      %v3211 = vmax.f32 %v1737, %v3147
      %v3212 = vmax.f32 %v1738, %v3148
      %v3213 = vmax.f32 %v1739, %v3149
      %v3214 = vmax.f32 %v1740, %v3150
      %v3215 = vmax.f32 %v1741, %v3151
      %v3216 = vmax.f32 %v1742, %v3152
      %v3217 = vmax.f32 %v1743, %v3153
      %v3218 = vmax.f32 %v1744, %v3154
      %v3219 = vmax.f32 %v1745, %v3155
      %v3220 = vmax.f32 %v1746, %v3156
      %v3221 = vmax.f32 %v1747, %v3157
      %v3222 = vmax.f32 %v1748, %v3158
      %v3223 = vmax.f32 %v1749, %v3159
      %v3224 = vmax.f32 %v1750, %v3160
      %v3225 = vmax.f32 %v1751, %v3161
      %v3226 = vmax.f32 %v1752, %v3162
      %v3227 = vmax.f32 %v1753, %v3163
      %v3228 = vmax.f32 %v1754, %v3164
      %v3229 = vmax.f32 %v1755, %v3165
      %v3230 = vmax.f32 %v1756, %v3166
      %v3231 = vmax.f32 %v1757, %v3167
      %v3232 = vmax.f32 %v1758, %v3168
      %v3233 = vmax.f32 %v1759, %v3169
      %v3234 = vmax.f32 %v1760, %v3170
      %v3235 = vmax.f32 %v1761, %v3171
      %v3236 = vmax.f32 %v1762, %v3172
      %v3237 = vmax.f32 %v1763, %v3173
      %v3238 = vmax.f32 %v1764, %v3174
      %v3239 = vmax.f32 %v1765, %v3175
      %v3240 = vmax.f32 %v1766, %v3176
      %v3241 = vmax.f32 %v1767, %v3177
      %v3242 = vmax.f32 %v1768, %v3178
      %v3243 = vmax.f32 %v1769, %v3179
      %v3244 = vmax.f32 %v1770, %v3180
      %v3245 = vmax.f32 %v1771, %v3181
      %v3246 = vmax.f32 %v1772, %v3182
      %v3247 = vmax.f32 %v1773, %v3183
      %v3248 = vmax.f32 %v1774, %v3184
      %v3249 = vmax.f32 %v1775, %v3185
      %v3250 = vmax.f32 %v1776, %v3186
      %v3251 = vmax.f32 %v1777, %v3187
      %v3252 = vmax.f32 %v1778, %v3188
      %v3253 = vmax.f32 %v1779, %v3189
      %v3254 = vmax.f32 %v1780, %v3190
      %v3255 = vmax.f32 %v1781, %v3191
      %v3256 = vmax.f32 %v1782, %v3192
      %v3257 = vmax.f32 %v1783, %v3193
      %v3258 = vmax.f32 %v1784, %v3194
      %v3259 = vmax.f32 %v1785, %v3195
      %v3260 = vpack.c.bf16 %v3197, %v3196
      %v3261 = vpack.c.bf16 %v3199, %v3198
      %v3262 = vpack.c.bf16 %v3201, %v3200
      %v3263 = vpack.c.bf16 %v3203, %v3202
      %v3264 = vpack.c.bf16 %v3205, %v3204
      %v3265 = vpack.c.bf16 %v3207, %v3206
      %v3266 = vpack.c.bf16 %v3209, %v3208
      %v3267 = vpack.c.bf16 %v3211, %v3210
      %v3268 = vpack.c.bf16 %v3213, %v3212
      %v3269 = vpack.c.bf16 %v3215, %v3214
      %v3270 = vpack.c.bf16 %v3217, %v3216
      %v3271 = vpack.c.bf16 %v3219, %v3218
      %v3272 = vpack.c.bf16 %v3221, %v3220
      %v3273 = vpack.c.bf16 %v3223, %v3222
      %v3274 = vpack.c.bf16 %v3225, %v3224
      %v3275 = vpack.c.bf16 %v3227, %v3226
      %v3276 = vpack.c.bf16 %v3229, %v3228
      %v3277 = vpack.c.bf16 %v3231, %v3230
      %v3278 = vpack.c.bf16 %v3233, %v3232
      %v3279 = vpack.c.bf16 %v3235, %v3234
      %v3280 = vpack.c.bf16 %v3237, %v3236
      %v3281 = vpack.c.bf16 %v3239, %v3238
      %v3282 = vpack.c.bf16 %v3241, %v3240
      %v3283 = vpack.c.bf16 %v3243, %v3242
      %v3284 = vpack.c.bf16 %v3245, %v3244
      %v3285 = vpack.c.bf16 %v3247, %v3246
      %v3286 = vpack.c.bf16 %v3249, %v3248
      %v3287 = vpack.c.bf16 %v3251, %v3250
      %v3288 = vpack.c.bf16 %v3253, %v3252
      %v3289 = vpack.c.bf16 %v3255, %v3254
      %v3290 = vpack.c.bf16 %v3257, %v3256
      %v3291 = vpack.c.bf16 %v3259, %v3258
      %v3324 = vunpack.c.l.b16 %v3260
      %v3325 = vunpack.c.h.b16 %v3260
      %v3326 = vunpack.c.l.b16 %v3261
      %v3327 = vunpack.c.h.b16 %v3261
      %v3328 = vunpack.c.l.b16 %v3262
      %v3329 = vunpack.c.h.b16 %v3262
      %v3330 = vunpack.c.l.b16 %v3263
      %v3331 = vunpack.c.h.b16 %v3263
      %v3332 = vunpack.c.l.b16 %v3264
      %v3333 = vunpack.c.h.b16 %v3264
      %v3334 = vunpack.c.l.b16 %v3265
      %v3335 = vunpack.c.h.b16 %v3265
      %v3336 = vunpack.c.l.b16 %v3266
      %v3337 = vunpack.c.h.b16 %v3266
      %v3338 = vunpack.c.l.b16 %v3267
      %v3339 = vunpack.c.h.b16 %v3267
      %v3340 = vunpack.c.l.b16 %v3268
      %v3341 = vunpack.c.h.b16 %v3268
      %v3342 = vunpack.c.l.b16 %v3269
      %v3343 = vunpack.c.h.b16 %v3269
      %v3344 = vunpack.c.l.b16 %v3270
      %v3345 = vunpack.c.h.b16 %v3270
      %v3346 = vunpack.c.l.b16 %v3271
      %v3347 = vunpack.c.h.b16 %v3271
      %v3348 = vunpack.c.l.b16 %v3272
      %v3349 = vunpack.c.h.b16 %v3272
      %v3350 = vunpack.c.l.b16 %v3273
      %v3351 = vunpack.c.h.b16 %v3273
      %v3352 = vunpack.c.l.b16 %v3274
      %v3353 = vunpack.c.h.b16 %v3274
      %v3354 = vunpack.c.l.b16 %v3275
      %v3355 = vunpack.c.h.b16 %v3275
      %v3356 = vunpack.c.l.b16 %v3276
      %v3357 = vunpack.c.h.b16 %v3276
      %v3358 = vunpack.c.l.b16 %v3277
      %v3359 = vunpack.c.h.b16 %v3277
      %v3360 = vunpack.c.l.b16 %v3278
      %v3361 = vunpack.c.h.b16 %v3278
      %v3362 = vunpack.c.l.b16 %v3279
      %v3363 = vunpack.c.h.b16 %v3279
      %v3364 = vunpack.c.l.b16 %v3280
      %v3365 = vunpack.c.h.b16 %v3280
      %v3366 = vunpack.c.l.b16 %v3281
      %v3367 = vunpack.c.h.b16 %v3281
      %v3368 = vunpack.c.l.b16 %v3282
      %v3369 = vunpack.c.h.b16 %v3282
      %v3370 = vunpack.c.l.b16 %v3283
      %v3371 = vunpack.c.h.b16 %v3283
      %v3372 = vunpack.c.l.b16 %v3284
      %v3373 = vunpack.c.h.b16 %v3284
      %v3374 = vunpack.c.l.b16 %v3285
      %v3375 = vunpack.c.h.b16 %v3285
      %v3376 = vunpack.c.l.b16 %v3286
      %v3377 = vunpack.c.h.b16 %v3286
      %v3378 = vunpack.c.l.b16 %v3287
      %v3379 = vunpack.c.h.b16 %v3287
      %v3380 = vunpack.c.l.b16 %v3288
      %v3381 = vunpack.c.h.b16 %v3288
      %v3382 = vunpack.c.l.b16 %v3289
      %v3383 = vunpack.c.h.b16 %v3289
      %v3384 = vunpack.c.l.b16 %v3290
      %v3385 = vunpack.c.h.b16 %v3290
      %v3386 = vunpack.c.l.b16 %v3291
      %v3387 = vunpack.c.h.b16 %v3291
      %v3388 = vpack.c.b16 %v3324, %v3324
      %v3389 = vpack.c.b16 %v3325, %v3325
      %v3390 = vpack.c.b16 %v3326, %v3326
      %v3391 = vpack.c.b16 %v3327, %v3327
      %v3392 = vpack.c.b16 %v3328, %v3328
      %v3393 = vpack.c.b16 %v3329, %v3329
      %v3394 = vpack.c.b16 %v3330, %v3330
      %v3395 = vpack.c.b16 %v3331, %v3331
      %v3396 = vpack.c.b16 %v3332, %v3332
      %v3397 = vpack.c.b16 %v3333, %v3333
      %v3398 = vpack.c.b16 %v3334, %v3334
      %v3399 = vpack.c.b16 %v3335, %v3335
      %v3400 = vpack.c.b16 %v3336, %v3336
      %v3401 = vpack.c.b16 %v3337, %v3337
      %v3402 = vpack.c.b16 %v3338, %v3338
      %v3403 = vpack.c.b16 %v3339, %v3339
      %v3404 = vpack.c.b16 %v3340, %v3340
      %v3405 = vpack.c.b16 %v3341, %v3341
      %v3406 = vpack.c.b16 %v3342, %v3342
      %v3407 = vpack.c.b16 %v3343, %v3343
      %v3408 = vpack.c.b16 %v3344, %v3344
      %v3409 = vpack.c.b16 %v3345, %v3345
      %v3410 = vpack.c.b16 %v3346, %v3346
      %v3411 = vpack.c.b16 %v3347, %v3347
      %v3412 = vpack.c.b16 %v3348, %v3348
      %v3413 = vpack.c.b16 %v3349, %v3349
      %v3414 = vpack.c.b16 %v3350, %v3350
      %v3415 = vpack.c.b16 %v3351, %v3351
      %v3416 = vpack.c.b16 %v3352, %v3352
      %v3417 = vpack.c.b16 %v3353, %v3353
      %v3418 = vpack.c.b16 %v3354, %v3354
      %v3419 = vpack.c.b16 %v3355, %v3355
      %v3420 = vpack.c.b16 %v3356, %v3356
      %v3421 = vpack.c.b16 %v3357, %v3357
      %v3422 = vpack.c.b16 %v3358, %v3358
      %v3423 = vpack.c.b16 %v3359, %v3359
      %v3424 = vpack.c.b16 %v3360, %v3360
      %v3425 = vpack.c.b16 %v3361, %v3361
      %v3426 = vpack.c.b16 %v3362, %v3362
      %v3427 = vpack.c.b16 %v3363, %v3363
      %v3428 = vpack.c.b16 %v3364, %v3364
      %v3429 = vpack.c.b16 %v3365, %v3365
      %v3430 = vpack.c.b16 %v3366, %v3366
      %v3431 = vpack.c.b16 %v3367, %v3367
      %v3432 = vpack.c.b16 %v3368, %v3368
      %v3433 = vpack.c.b16 %v3369, %v3369
      %v3434 = vpack.c.b16 %v3370, %v3370
      %v3435 = vpack.c.b16 %v3371, %v3371
      %v3436 = vpack.c.b16 %v3372, %v3372
      %v3437 = vpack.c.b16 %v3373, %v3373
      %v3438 = vpack.c.b16 %v3374, %v3374
      %v3439 = vpack.c.b16 %v3375, %v3375
      %v3440 = vpack.c.b16 %v3376, %v3376
      %v3441 = vpack.c.b16 %v3377, %v3377
      %v3442 = vpack.c.b16 %v3378, %v3378
      %v3443 = vpack.c.b16 %v3379, %v3379
      %v3444 = vpack.c.b16 %v3380, %v3380
      %v3445 = vpack.c.b16 %v3381, %v3381
      %v3446 = vpack.c.b16 %v3382, %v3382
      %v3447 = vpack.c.b16 %v3383, %v3383
      %v3448 = vpack.c.b16 %v3384, %v3384
      %v3449 = vpack.c.b16 %v3385, %v3385
      %v3450 = vpack.c.b16 %v3386, %v3386
      %v3451 = vpack.c.b16 %v3387, %v3387
      %3516 = vst [vmem:[%s319] sm:$0xf] %v3388
      %3517 = vst [vmem:[%s319 + $0x4] sm:$0xf] %v3389
      %3518 = vst [vmem:[%s319 + $0x8] sm:$0xf] %v3390
      %3519 = vst [vmem:[%s319 + $0xc] sm:$0xf] %v3391
      %3520 = vst [vmem:[%s319 + $0x10] sm:$0xf] %v3392
      %3521 = vst [vmem:[%s319 + $0x14] sm:$0xf] %v3393
      %3522 = vst [vmem:[%s319 + $0x18] sm:$0xf] %v3394
      %3523 = vst [vmem:[%s319 + $0x1c] sm:$0xf] %v3395
      %3524 = vst [vmem:[%s319 + $0x20] sm:$0xf] %v3396
      %3525 = vst [vmem:[%s319 + $0x24] sm:$0xf] %v3397
      %3526 = vst [vmem:[%s319 + $0x28] sm:$0xf] %v3398
      %3527 = vst [vmem:[%s319 + $0x2c] sm:$0xf] %v3399
      %3528 = vst [vmem:[%s319 + $0x30] sm:$0xf] %v3400
      %3529 = vst [vmem:[%s319 + $0x34] sm:$0xf] %v3401
      %3530 = vst [vmem:[%s319 + $0x38] sm:$0xf] %v3402
      %3531 = vst [vmem:[%s319 + $0x3c] sm:$0xf] %v3403
      %3532 = vst [vmem:[%s319 + $0x40] sm:$0xf] %v3404
      %3533 = vst [vmem:[%s319 + $0x44] sm:$0xf] %v3405
      %3534 = vst [vmem:[%s319 + $0x48] sm:$0xf] %v3406
      %3535 = vst [vmem:[%s319 + $0x4c] sm:$0xf] %v3407
      %3536 = vst [vmem:[%s319 + $0x50] sm:$0xf] %v3408
      %3537 = vst [vmem:[%s319 + $0x54] sm:$0xf] %v3409
      %3538 = vst [vmem:[%s319 + $0x58] sm:$0xf] %v3410
      %3539 = vst [vmem:[%s319 + $0x5c] sm:$0xf] %v3411
      %3540 = vst [vmem:[%s319 + $0x60] sm:$0xf] %v3412
      %3541 = vst [vmem:[%s319 + $0x64] sm:$0xf] %v3413
      %3542 = vst [vmem:[%s319 + $0x68] sm:$0xf] %v3414
      %3543 = vst [vmem:[%s319 + $0x6c] sm:$0xf] %v3415
      %3544 = vst [vmem:[%s319 + $0x70] sm:$0xf] %v3416
      %3545 = vst [vmem:[%s319 + $0x74] sm:$0xf] %v3417
      %3546 = vst [vmem:[%s319 + $0x78] sm:$0xf] %v3418
      %3547 = vst [vmem:[%s319 + $0x7c] sm:$0xf] %v3419
      %3548 = vst [vmem:[%s319 + $0x80] sm:$0xf] %v3420
      %3549 = vst [vmem:[%s319 + $0x84] sm:$0xf] %v3421
      %3550 = vst [vmem:[%s319 + $0x88] sm:$0xf] %v3422
      %3551 = vst [vmem:[%s319 + $0x8c] sm:$0xf] %v3423
      %3552 = vst [vmem:[%s319 + $0x90] sm:$0xf] %v3424
      %3553 = vst [vmem:[%s319 + $0x94] sm:$0xf] %v3425
      %3554 = vst [vmem:[%s319 + $0x98] sm:$0xf] %v3426
      %3555 = vst [vmem:[%s319 + $0x9c] sm:$0xf] %v3427
      %3556 = vst [vmem:[%s319 + $0xa0] sm:$0xf] %v3428
      %3557 = vst [vmem:[%s319 + $0xa4] sm:$0xf] %v3429
      %3558 = vst [vmem:[%s319 + $0xa8] sm:$0xf] %v3430
      %3559 = vst [vmem:[%s319 + $0xac] sm:$0xf] %v3431
      %3560 = vst [vmem:[%s319 + $0xb0] sm:$0xf] %v3432
      %3561 = vst [vmem:[%s319 + $0xb4] sm:$0xf] %v3433
      %3562 = vst [vmem:[%s319 + $0xb8] sm:$0xf] %v3434
      %3563 = vst [vmem:[%s319 + $0xbc] sm:$0xf] %v3435
      %3564 = vst [vmem:[%s319 + $0xc0] sm:$0xf] %v3436
      %3565 = vst [vmem:[%s319 + $0xc4] sm:$0xf] %v3437
      %3566 = vst [vmem:[%s319 + $0xc8] sm:$0xf] %v3438
      %3567 = vst [vmem:[%s319 + $0xcc] sm:$0xf] %v3439
      %3568 = vst [vmem:[%s319 + $0xd0] sm:$0xf] %v3440
      %3569 = vst [vmem:[%s319 + $0xd4] sm:$0xf] %v3441
      %3570 = vst [vmem:[%s319 + $0xd8] sm:$0xf] %v3442
      %3571 = vst [vmem:[%s319 + $0xdc] sm:$0xf] %v3443
      %3572 = vst [vmem:[%s319 + $0xe0] sm:$0xf] %v3444
      %3573 = vst [vmem:[%s319 + $0xe4] sm:$0xf] %v3445
      %3574 = vst [vmem:[%s319 + $0xe8] sm:$0xf] %v3446
      %3575 = vst [vmem:[%s319 + $0xec] sm:$0xf] %v3447
      %3576 = vst [vmem:[%s319 + $0xf0] sm:$0xf] %v3448
      %3577 = vst [vmem:[%s319 + $0xf4] sm:$0xf] %v3449
      %3578 = vst [vmem:[%s319 + $0xf8] sm:$0xf] %v3450
      %3579 = vst [vmem:[%s319 + $0xfc] sm:$0xf] %v3451
      %s3580 = smul.u32 64, %s17
      %p3581 = scmp.lt.s32.totalorder %s3580, 575
      %s3582 = scalar_select %p3581, %s3580, 575
      %s3583 = smul.addr %s3582, 4
      %s3584 = scalar_lea.vmem %s6, %s3583
      // Predicated region
      $region45: #{cnn_forward.3} parent=43 // pred_check
        %p3585 = pneg %p181
      $region46: #{cnn_forward.3} parent=43 // pred_check_branch
        %3587 = sbr.rel (%p3585) target = $region48
      $region47: #{cnn_forward.3} parent=43 // pred_region
        %s3588 = smul.u32 64, %s17
      $region48: #{cnn_forward.3} parent=43 // pred_fallthru
        _
    $region44: #{cnn_forward.3} parent=5 // pred_fallthru
      _
    %p3589 = scmp.le.s32.totalorder 2, %s12
    // Predicated region
    $region49: #{cnn_forward.3} parent=5 // pred_check
      %p3590 = pneg %p3589
    $region50: #{cnn_forward.3} parent=5 // pred_check_branch
      %3592 = sbr.rel (%p3590) target = $region52
    $region51: #{cnn_forward.3} parent=5 // pred_region
      %s3593 = ssub.s32 %s12, 2
      // Predicated region
      $region53: #{cnn_forward.3} parent=51 // pred_check
        %p3594 = pneg %p187
      $region54: #{cnn_forward.3} parent=51 // pred_check_branch
        %3596 = sbr.rel (%p3594) target = $region56
      $region55: #{cnn_forward.3} parent=51 // pred_region
        %s3597 = smul.u32 64, %s18
        %p3598 = scmp.lt.s32.totalorder %s3597, 575
        %s3599 = scalar_select %p3598, %s3597, 575
        %s3600 = smul.addr %s3599, 4
        %s3601 = scalar_lea.vmem %s6, %s3600
      $region56: #{cnn_forward.3} parent=51 // pred_fallthru
        _
    $region52: #{cnn_forward.3} parent=5 // pred_fallthru
      _
  $region6: #{cnn_forward.3} parent=0 // loop_footer
    %s16 = sadd.s32 1, %s12
  $region7: #{cnn_forward.3} parent=0 // loop_footer_branch
    %11 = sbr.rel target = $region3
  $region8: #{cnn_forward.3} parent=0 // loop_exit
    _

// kernel: cnn_forward.4
$region0: #{cnn_forward.4}
  #allocation0 [shape = 'u32[]', space=smem, size = 0x4, offset = 0x4, fixed_abs, tag = 'smem constant byte address 0x4 - core index']
  #allocation1 [shape = 'u32[144,128]{1,0:T(1,128)}', space=vmem, size = 0x12000, scoped, tag = 'internal scratch']
  %s0 = inlined_call_operand.vmem [shape: bf16[1024,150], index: 0, kind: input, shape index: {}]
  %s1 = inlined_call_operand.vmem [shape: bf16[1024,150], index: 1, kind: input, shape index: {}]
  %s2 = inlined_call_operand.vmem [shape: bf16[1024,150], index: 2, kind: input, shape index: {}]
  %s3 = inlined_call_operand.vmem [shape: bf16[1024,150], index: 3, kind: input, shape index: {}]
  %s4 = inlined_call_operand.vmem [shape: bf16[150,128], index: 4, kind: input, shape index: {}]
  %s5 = inlined_call_operand.vmem [shape: f32[1,128], index: 5, kind: input, shape index: {}]
  %s6 = inlined_call_operand.vmem [shape: bf16[1024,128], index: 6, kind: output, shape index: {}]
  %s7 = sld [smem:[#allocation0]]
  $region57: #{cnn_forward.4} parent=0
    _
  %s9 = ssub.s32 1, %s7
  %s10 = scalar_select 0, %s9, %s7
  loop: start=0, step=1, limit=4
  $region2: #{cnn_forward.4} parent=0 // loop_pre_header
    _
  $region3: #{cnn_forward.4} parent=0 // loop_header
    %s12 = sphi 0, %s16
    %p13 = scmp.ge.s32.totalorder %s12, 4
    %s22 = sphi 0, %s24
    %s25 = sphi 0, %s22
    %s26 = sphi 0, %s25
    %s42 = sphi 0, %s26
    %s48 = sphi 0, %s50
    %s51 = sphi 0, %s48
    %s52 = sphi 0, %s51
    %s68 = sphi 0, %s52
    %s74 = sphi 0, %s76
    %s77 = sphi 0, %s74
    %s78 = sphi 0, %s77
    %s94 = sphi 0, %s78
    %s100 = sphi 0, %s102
    %s103 = sphi 0, %s100
    %s104 = sphi 0, %s103
    %s120 = sphi 0, %s104
    %s124 = sphi 0, %s124
    %s126 = sphi 0, %s124
    %s127 = sphi 0, %s126
    %s141 = sphi 0, %s127
    %s145 = sphi 0, %s145
    %s147 = sphi 0, %s145
    %s148 = sphi 0, %s147
    %s162 = sphi 0, %s148
    %s168 = sphi 0, %s170
    %s171 = sphi 0, %s168
    %s172 = sphi 0, %s171
    %s188 = sphi 0, %s172
  $region4: #{cnn_forward.4} parent=0 // loop_header_branch
    %15 = sbr.rel (%p13) target = $region8
  $region5: #{cnn_forward.4} parent=0 // loop_body
    %s17 = ssub.s32 %s12, 1
    %s18 = ssub.s32 %s12, 2
    %s19 = sadd.s32 %s12, 1
    %s20 = ssub.s32 %s12, %s19
    %p21 = scmp.eq.s32.totalorder %s20, 0
    %s23 = sadd.s32 %s22, 1
    %s24 = scalar_select %p21, %s22, %s23
    %p27 = pneg %p21
    %p28 = scmp.eq.s32.totalorder %s12, 1
    %p29 = por %p27, %p28
    %p30 = scmp.ne.s32.totalorder %s22, %s25
    %p31 = scmp.eq.s32.totalorder %s12, 0
    %p32 = por %p30, %p31
    %p33 = scmp.ne.s32.totalorder %s22, %s25
    %p34 = scmp.eq.s32.totalorder %s17, 1
    %p35 = por %p33, %p34
    %p36 = scmp.ne.s32.totalorder %s25, %s26
    %p37 = scmp.eq.s32.totalorder %s17, 0
    %p38 = por %p36, %p37
    %p39 = scmp.ne.s32.totalorder %s25, %s26
    %p40 = scmp.eq.s32.totalorder %s18, 1
    %p41 = por %p39, %p40
    %p43 = scmp.ne.s32.totalorder %s26, %s42
    %p44 = scmp.eq.s32.totalorder %s18, 0
    %p45 = por %p43, %p44
    %s46 = ssub.s32 %s12, %s19
    %p47 = scmp.eq.s32.totalorder %s46, 0
    %s49 = sadd.s32 %s48, 1
    %s50 = scalar_select %p47, %s48, %s49
    %p53 = pneg %p47
    %p54 = scmp.eq.s32.totalorder %s12, 1
    %p55 = por %p53, %p54
    %p56 = scmp.ne.s32.totalorder %s48, %s51
    %p57 = scmp.eq.s32.totalorder %s12, 0
    %p58 = por %p56, %p57
    %p59 = scmp.ne.s32.totalorder %s48, %s51
    %p60 = scmp.eq.s32.totalorder %s17, 1
    %p61 = por %p59, %p60
    %p62 = scmp.ne.s32.totalorder %s51, %s52
    %p63 = scmp.eq.s32.totalorder %s17, 0
    %p64 = por %p62, %p63
    %p65 = scmp.ne.s32.totalorder %s51, %s52
    %p66 = scmp.eq.s32.totalorder %s18, 1
    %p67 = por %p65, %p66
    %p69 = scmp.ne.s32.totalorder %s52, %s68
    %p70 = scmp.eq.s32.totalorder %s18, 0
    %p71 = por %p69, %p70
    %s72 = ssub.s32 %s12, %s19
    %p73 = scmp.eq.s32.totalorder %s72, 0
    %s75 = sadd.s32 %s74, 1
    %s76 = scalar_select %p73, %s74, %s75
    %p79 = pneg %p73
    %p80 = scmp.eq.s32.totalorder %s12, 1
    %p81 = por %p79, %p80
    %p82 = scmp.ne.s32.totalorder %s74, %s77
    %p83 = scmp.eq.s32.totalorder %s12, 0
    %p84 = por %p82, %p83
    %p85 = scmp.ne.s32.totalorder %s74, %s77
    %p86 = scmp.eq.s32.totalorder %s17, 1
    %p87 = por %p85, %p86
    %p88 = scmp.ne.s32.totalorder %s77, %s78
    %p89 = scmp.eq.s32.totalorder %s17, 0
    %p90 = por %p88, %p89
    %p91 = scmp.ne.s32.totalorder %s77, %s78
    %p92 = scmp.eq.s32.totalorder %s18, 1
    %p93 = por %p91, %p92
    %p95 = scmp.ne.s32.totalorder %s78, %s94
    %p96 = scmp.eq.s32.totalorder %s18, 0
    %p97 = por %p95, %p96
    %s98 = ssub.s32 %s12, %s19
    %p99 = scmp.eq.s32.totalorder %s98, 0
    %s101 = sadd.s32 %s100, 1
    %s102 = scalar_select %p99, %s100, %s101
    %p105 = pneg %p99
    %p106 = scmp.eq.s32.totalorder %s12, 1
    %p107 = por %p105, %p106
    %p108 = scmp.ne.s32.totalorder %s100, %s103
    %p109 = scmp.eq.s32.totalorder %s12, 0
    %p110 = por %p108, %p109
    %p111 = scmp.ne.s32.totalorder %s100, %s103
    %p112 = scmp.eq.s32.totalorder %s17, 1
    %p113 = por %p111, %p112
    %p114 = scmp.ne.s32.totalorder %s103, %s104
    %p115 = scmp.eq.s32.totalorder %s17, 0
    %p116 = por %p114, %p115
    %p117 = scmp.ne.s32.totalorder %s103, %s104
    %p118 = scmp.eq.s32.totalorder %s18, 1
    %p119 = por %p117, %p118
    %p121 = scmp.ne.s32.totalorder %s104, %s120
    %p122 = scmp.eq.s32.totalorder %s18, 0
    %p123 = por %p121, %p122
    %s125 = sadd.s32 %s124, 1
    %p128 = scmp.eq.s32.totalorder %s12, 1
    %p129 = scmp.ne.s32.totalorder %s124, %s126
    %p130 = scmp.eq.s32.totalorder %s12, 0
    %p131 = por %p129, %p130
    %p132 = scmp.ne.s32.totalorder %s124, %s126
    %p133 = scmp.eq.s32.totalorder %s17, 1
    %p134 = por %p132, %p133
    %p135 = scmp.ne.s32.totalorder %s126, %s127
    %p136 = scmp.eq.s32.totalorder %s17, 0
    %p137 = por %p135, %p136
    %p138 = scmp.ne.s32.totalorder %s126, %s127
    %p139 = scmp.eq.s32.totalorder %s18, 1
    %p140 = por %p138, %p139
    %p142 = scmp.ne.s32.totalorder %s127, %s141
    %p143 = scmp.eq.s32.totalorder %s18, 0
    %p144 = por %p142, %p143
    %s146 = sadd.s32 %s145, 1
    %p149 = scmp.eq.s32.totalorder %s12, 1
    %p150 = scmp.ne.s32.totalorder %s145, %s147
    %p151 = scmp.eq.s32.totalorder %s12, 0
    %p152 = por %p150, %p151
    %p153 = scmp.ne.s32.totalorder %s145, %s147
    %p154 = scmp.eq.s32.totalorder %s17, 1
    %p155 = por %p153, %p154
    %p156 = scmp.ne.s32.totalorder %s147, %s148
    %p157 = scmp.eq.s32.totalorder %s17, 0
    %p158 = por %p156, %p157
    %p159 = scmp.ne.s32.totalorder %s147, %s148
    %p160 = scmp.eq.s32.totalorder %s18, 1
    %p161 = por %p159, %p160
    %p163 = scmp.ne.s32.totalorder %s148, %s162
    %p164 = scmp.eq.s32.totalorder %s18, 0
    %p165 = por %p163, %p164
    %s166 = ssub.s32 %s12, %s19
    %p167 = scmp.eq.s32.totalorder %s166, 0
    %s169 = sadd.s32 %s168, 1
    %s170 = scalar_select %p167, %s168, %s169
    %p173 = pneg %p167
    %p174 = scmp.eq.s32.totalorder %s12, 1
    %p175 = por %p173, %p174
    %p176 = scmp.ne.s32.totalorder %s168, %s171
    %p177 = scmp.eq.s32.totalorder %s12, 0
    %p178 = por %p176, %p177
    %p179 = scmp.ne.s32.totalorder %s168, %s171
    %p180 = scmp.eq.s32.totalorder %s17, 1
    %p181 = por %p179, %p180
    %p182 = scmp.ne.s32.totalorder %s171, %s172
    %p183 = scmp.eq.s32.totalorder %s17, 0
    %p184 = por %p182, %p183
    %p185 = scmp.ne.s32.totalorder %s171, %s172
    %p186 = scmp.eq.s32.totalorder %s18, 1
    %p187 = por %p185, %p186
    %p189 = scmp.ne.s32.totalorder %s172, %s188
    %p190 = scmp.eq.s32.totalorder %s18, 0
    %p191 = por %p189, %p190
    %p192 = scmp.le.s32.totalorder 1, %s12
    %p193 = scmp.lt.s32.totalorder %s12, 3
    %p194 = pnand %p192, %p193
    %p195 = pneg %p194
    // Predicated region
    $region9: #{cnn_forward.4} parent=5 // pred_check
      _
    $region10: #{cnn_forward.4} parent=5 // pred_check_branch
      %197 = sbr.rel (%p194) target = $region12
    $region11: #{cnn_forward.4} parent=5 // pred_region
      %s198 = ssub.s32 %s12, 1
      // Predicated region
      $region13: #{cnn_forward.4} parent=11 // pred_check
        %p199 = pneg %p137
      $region14: #{cnn_forward.4} parent=11 // pred_check_branch
        %201 = sbr.rel (%p199) target = $region16
      $region15: #{cnn_forward.4} parent=11 // pred_region
        _
      $region16: #{cnn_forward.4} parent=11 // pred_fallthru
        _
      // Predicated region
      $region17: #{cnn_forward.4} parent=11 // pred_check
        %p202 = pneg %p158
      $region18: #{cnn_forward.4} parent=11 // pred_check_branch
        %204 = sbr.rel (%p202) target = $region20
      $region19: #{cnn_forward.4} parent=11 // pred_region
        _
      $region20: #{cnn_forward.4} parent=11 // pred_fallthru
        _
    $region12: #{cnn_forward.4} parent=5 // pred_fallthru
      _
    %p205 = scmp.lt.s32.totalorder %s12, 2
    // Predicated region
    $region21: #{cnn_forward.4} parent=5 // pred_check
      %p206 = pneg %p205
    $region22: #{cnn_forward.4} parent=5 // pred_check_branch
      %208 = sbr.rel (%p206) target = $region24
    $region23: #{cnn_forward.4} parent=5 // pred_region
      // Predicated region
      $region25: #{cnn_forward.4} parent=23 // pred_check
        %p209 = pneg %p32
      $region26: #{cnn_forward.4} parent=23 // pred_check_branch
        %211 = sbr.rel (%p209) target = $region28
      $region27: #{cnn_forward.4} parent=23 // pred_region
        %s212 = smul.u32 64, %s12
        %p213 = scmp.lt.s32.totalorder %s212, 127
        %s214 = scalar_select %p213, %s212, 127
        %s215 = smul.addr %s214, 2
        %s216 = smul.addr %s215, 4
        %s217 = scalar_lea.vmem %s0, %s216
        %s218 = smul.u32 64, %s12
      $region28: #{cnn_forward.4} parent=23 // pred_fallthru
        _
      // Predicated region
      $region29: #{cnn_forward.4} parent=23 // pred_check
        %p219 = pneg %p58
      $region30: #{cnn_forward.4} parent=23 // pred_check_branch
        %221 = sbr.rel (%p219) target = $region32
      $region31: #{cnn_forward.4} parent=23 // pred_region
        %s222 = smul.u32 64, %s12
        %p223 = scmp.lt.s32.totalorder %s222, 127
        %s224 = scalar_select %p223, %s222, 127
        %s225 = smul.addr %s224, 2
        %s226 = smul.addr %s225, 4
        %s227 = scalar_lea.vmem %s1, %s226
        %s228 = smul.u32 64, %s12
      $region32: #{cnn_forward.4} parent=23 // pred_fallthru
        _
      // Predicated region
      $region33: #{cnn_forward.4} parent=23 // pred_check
        %p229 = pneg %p84
      $region34: #{cnn_forward.4} parent=23 // pred_check_branch
        %231 = sbr.rel (%p229) target = $region36
      $region35: #{cnn_forward.4} parent=23 // pred_region
        %s232 = smul.u32 64, %s12
        %p233 = scmp.lt.s32.totalorder %s232, 127
        %s234 = scalar_select %p233, %s232, 127
        %s235 = smul.addr %s234, 2
        %s236 = smul.addr %s235, 4
        %s237 = scalar_lea.vmem %s2, %s236
        %s238 = smul.u32 64, %s12
      $region36: #{cnn_forward.4} parent=23 // pred_fallthru
        _
      // Predicated region
      $region37: #{cnn_forward.4} parent=23 // pred_check
        %p239 = pneg %p110
      $region38: #{cnn_forward.4} parent=23 // pred_check_branch
        %241 = sbr.rel (%p239) target = $region40
      $region39: #{cnn_forward.4} parent=23 // pred_region
        %s242 = smul.u32 64, %s12
        %p243 = scmp.lt.s32.totalorder %s242, 127
        %s244 = scalar_select %p243, %s242, 127
        %s245 = smul.addr %s244, 2
        %s246 = smul.addr %s245, 4
        %s247 = scalar_lea.vmem %s3, %s246
        %s248 = smul.u32 64, %s12
      $region40: #{cnn_forward.4} parent=23 // pred_fallthru
        _
    $region24: #{cnn_forward.4} parent=5 // pred_fallthru
      _
    %p249 = scmp.le.s32.totalorder 1, %s12
    %p250 = scmp.lt.s32.totalorder %s12, 3
    %p251 = pnand %p249, %p250
    %p252 = pneg %p251
    // Predicated region
    $region41: #{cnn_forward.4} parent=5 // pred_check
      _
    $region42: #{cnn_forward.4} parent=5 // pred_check_branch
      %254 = sbr.rel (%p251) target = $region44
    $region43: #{cnn_forward.4} parent=5 // pred_region
      %s255 = ssub.s32 %s12, 1
      %s256 = smul.u32 64, %s17
      %p257 = scmp.lt.s32.totalorder %s256, 127
      %s258 = scalar_select %p257, %s256, 127
      %s259 = smul.addr %s258, 2
      %s260 = smul.addr %s259, 4
      %s261 = scalar_lea.vmem %s0, %s260
      %p262 = pneg %p38
      %p263 = pneg %p35
      %s264 = smul.u32 64, %s17
      %p265 = scmp.lt.s32.totalorder %s264, 127
      %s266 = scalar_select %p265, %s264, 127
      %s267 = smul.addr %s266, 2
      %s268 = smul.addr %s267, 4
      %s269 = scalar_lea.vmem %s1, %s268
      %p270 = pneg %p64
      %p271 = pneg %p61
      %s272 = smul.u32 64, %s17
      %p273 = scmp.lt.s32.totalorder %s272, 127
      %s274 = scalar_select %p273, %s272, 127
      %s275 = smul.addr %s274, 2
      %s276 = smul.addr %s275, 4
      %s277 = scalar_lea.vmem %s2, %s276
      %p278 = pneg %p90
      %p279 = pneg %p87
      %s280 = smul.u32 64, %s17
      %p281 = scmp.lt.s32.totalorder %s280, 127
      %s282 = scalar_select %p281, %s280, 127
      %s283 = smul.addr %s282, 2
      %s284 = smul.addr %s283, 4
      %s285 = scalar_lea.vmem %s3, %s284
      %p286 = pneg %p116
      %p287 = pneg %p113
      %p288 = pneg %p137
      %p289 = pneg %p134
      %p290 = pneg %p158
      %p291 = pneg %p155
      %p292 = pneg %p184
      %p293 = pneg %p181
      %s294 = smul.u32 64, %s17
      %p295 = scmp.lt.s32.totalorder %s294, 127
      %s296 = scalar_select %p295, %s294, 127
      %s297 = smul.addr %s296, 4
      %s298 = scalar_lea.vmem %s6, %s297
      %s299 = smul.u32 64, %s17
      %p300 = scmp.lt.s32.totalorder %s299, 127
      %s301 = scalar_select %p300, %s299, 127
      %s302 = smul.addr %s301, 2
      %s303 = smul.addr %s302, 4
      %s304 = scalar_lea.vmem %s0, %s303
      %s305 = smul.u32 64, %s17
      %s306 = smul.u32 64, %s17
      %p307 = scmp.lt.s32.totalorder %s306, 127
      %s308 = scalar_select %p307, %s306, 127
      %s309 = smul.addr %s308, 2
      %s310 = smul.addr %s309, 4
      %s311 = scalar_lea.vmem %s1, %s310
      %s312 = smul.u32 64, %s17
      %s313 = smul.u32 64, %s17
      %p314 = scmp.lt.s32.totalorder %s313, 127
      %s315 = scalar_select %p314, %s313, 127
      %s316 = smul.addr %s315, 2
      %s317 = smul.addr %s316, 4
      %s318 = scalar_lea.vmem %s2, %s317
      %s319 = smul.u32 64, %s17
      %s320 = smul.u32 64, %s17
      %p321 = scmp.lt.s32.totalorder %s320, 127
      %s322 = scalar_select %p321, %s320, 127
      %s323 = smul.addr %s322, 2
      %s324 = smul.addr %s323, 4
      %s325 = scalar_lea.vmem %s3, %s324
      %s326 = smul.u32 64, %s17
      %s327 = smul.u32 64, %s17
      %p328 = scmp.lt.s32.totalorder %s327, 127
      %s329 = scalar_select %p328, %s327, 127
      %s330 = smul.addr %s329, 4
      %s331 = scalar_lea.vmem %s6, %s330
      %s332 = smul.u32 64, %s17
      %v334 = vld [vmem:[%s4] sm:$0xf]
      %v335 = vld [vmem:[%s4 + $0x4] sm:$0xf]
      %v336 = vld [vmem:[%s4 + $0x8] sm:$0xf]
      %v337 = vld [vmem:[%s4 + $0xc] sm:$0xf]
      %v338 = vld [vmem:[%s4 + $0x10] sm:$0xf]
      %v339 = vld [vmem:[%s4 + $0x14] sm:$0xf]
      %v340 = vld [vmem:[%s4 + $0x18] sm:$0xf]
      %v341 = vld [vmem:[%s4 + $0x1c] sm:$0xf]
      %v342 = vld [vmem:[%s4 + $0x20] sm:$0xf]
      %v343 = vld [vmem:[%s4 + $0x24] sm:$0xf]
      %v344 = vld [vmem:[%s4 + $0x28] sm:$0xf]
      %v345 = vld [vmem:[%s4 + $0x2c] sm:$0xf]
      %v346 = vld [vmem:[%s4 + $0x30] sm:$0xf]
      %v347 = vld [vmem:[%s4 + $0x34] sm:$0xf]
      %v348 = vld [vmem:[%s4 + $0x38] sm:$0xf]
      %v349 = vld [vmem:[%s4 + $0x3c] sm:$0xf]
      %v350 = vld [vmem:[%s4 + $0x40] sm:$0xf]
      %v351 = vld [vmem:[%s4 + $0x44] sm:$0xf]
      %v352 = vld [vmem:[%s4 + $0x48] sm:$0x7]
      %v353 = vld [vmem:[%s5] sm:$0x1]
      %v354 = vld [vmem:[%s304] sm:$0xff]
      %v355 = vld [vmem:[%s304 + $0x8] sm:$0xff]
      %v356 = vld [vmem:[%s304 + $0x10] sm:$0xff]
      %v357 = vld [vmem:[%s304 + $0x18] sm:$0xff]
      %v358 = vld [vmem:[%s304 + $0x20] sm:$0xff]
      %v359 = vld [vmem:[%s304 + $0x28] sm:$0xff]
      %v360 = vld [vmem:[%s304 + $0x30] sm:$0xff]
      %v361 = vld [vmem:[%s304 + $0x38] sm:$0xff]
      %v362 = vld [vmem:[%s304 + $0x40] sm:$0xff]
      %v363 = vld [vmem:[%s304 + $0x48] sm:$0xff]
      %v364 = vld [vmem:[%s304 + $0x50] sm:$0xff]
      %v365 = vld [vmem:[%s304 + $0x58] sm:$0xff]
      %v366 = vld [vmem:[%s304 + $0x60] sm:$0xff]
      %v367 = vld [vmem:[%s304 + $0x68] sm:$0xff]
      %v368 = vld [vmem:[%s304 + $0x70] sm:$0xff]
      %v369 = vld [vmem:[%s304 + $0x78] sm:$0xff]
      %v370 = vld [vmem:[%s304 + $0x80] sm:$0xff]
      %v371 = vld [vmem:[%s304 + $0x88] sm:$0xff]
      %v372 = vld [vmem:[%s304 + $0x90] sm:$0xff]
      %v373 = vld [vmem:[%s304 + $0x98] sm:$0xff]
      %v374 = vld [vmem:[%s304 + $0xa0] sm:$0xff]
      %v375 = vld [vmem:[%s304 + $0xa8] sm:$0xff]
      %v376 = vld [vmem:[%s304 + $0xb0] sm:$0xff]
      %v377 = vld [vmem:[%s304 + $0xb8] sm:$0xff]
      %v378 = vld [vmem:[%s304 + $0xc0] sm:$0xff]
      %v379 = vld [vmem:[%s304 + $0xc8] sm:$0xff]
      %v380 = vld [vmem:[%s304 + $0xd0] sm:$0xff]
      %v381 = vld [vmem:[%s304 + $0xd8] sm:$0xff]
      %v382 = vld [vmem:[%s304 + $0xe0] sm:$0xff]
      %v383 = vld [vmem:[%s304 + $0xe8] sm:$0xff]
      %v384 = vld [vmem:[%s304 + $0xf0] sm:$0xff]
      %v385 = vld [vmem:[%s304 + $0xf8] sm:$0xff]
      %v386 = vld [vmem:[%s304 + $0x100] sm:$0xff]
      %v387 = vld [vmem:[%s304 + $0x108] sm:$0xff]
      %v388 = vld [vmem:[%s304 + $0x110] sm:$0xff]
      %v389 = vld [vmem:[%s304 + $0x118] sm:$0xff]
      %v390 = vld [vmem:[%s304 + $0x120] sm:$0xff]
      %v391 = vld [vmem:[%s304 + $0x128] sm:$0xff]
      %v392 = vld [vmem:[%s304 + $0x130] sm:$0xff]
      %v393 = vld [vmem:[%s304 + $0x138] sm:$0xff]
      %v394 = vld [vmem:[%s304 + $0x140] sm:$0xff]
      %v395 = vld [vmem:[%s304 + $0x148] sm:$0xff]
      %v396 = vld [vmem:[%s304 + $0x150] sm:$0xff]
      %v397 = vld [vmem:[%s304 + $0x158] sm:$0xff]
      %v398 = vld [vmem:[%s304 + $0x160] sm:$0xff]
      %v399 = vld [vmem:[%s304 + $0x168] sm:$0xff]
      %v400 = vld [vmem:[%s304 + $0x170] sm:$0xff]
      %v401 = vld [vmem:[%s304 + $0x178] sm:$0xff]
      %v402 = vld [vmem:[%s304 + $0x180] sm:$0xff]
      %v403 = vld [vmem:[%s304 + $0x188] sm:$0xff]
      %v404 = vld [vmem:[%s304 + $0x190] sm:$0xff]
      %v405 = vld [vmem:[%s304 + $0x198] sm:$0xff]
      %v406 = vld [vmem:[%s304 + $0x1a0] sm:$0xff]
      %v407 = vld [vmem:[%s304 + $0x1a8] sm:$0xff]
      %v408 = vld [vmem:[%s304 + $0x1b0] sm:$0xff]
      %v409 = vld [vmem:[%s304 + $0x1b8] sm:$0xff]
      %v410 = vld [vmem:[%s304 + $0x1c0] sm:$0xff]
      %v411 = vld [vmem:[%s304 + $0x1c8] sm:$0xff]
      %v412 = vld [vmem:[%s304 + $0x1d0] sm:$0xff]
      %v413 = vld [vmem:[%s304 + $0x1d8] sm:$0xff]
      %v414 = vld [vmem:[%s304 + $0x1e0] sm:$0xff]
      %v415 = vld [vmem:[%s304 + $0x1e8] sm:$0xff]
      %v416 = vld [vmem:[%s304 + $0x1f0] sm:$0xff]
      %v417 = vld [vmem:[%s304 + $0x1f8] sm:$0xff]
      %v419 = vlaneseq
      %v420 = vshrl.u32 %v419, 7
      %v421 = vsub.s32 0, %v420
      %v422 = vrot.slane %v353, %v421
      %v488 = vunpack.c.l.b16 %v354
      %v489 = vunpack.c.h.b16 %v354
      %v490 = vunpack.c.l.b16 %v355
      %v491 = vunpack.c.h.b16 %v355
      %v492 = vunpack.c.l.b16 %v356
      %v493 = vunpack.c.h.b16 %v356
      %v494 = vunpack.c.l.b16 %v357
      %v495 = vunpack.c.h.b16 %v357
      %v496 = vunpack.c.l.b16 %v358
      %v497 = vunpack.c.h.b16 %v358
      %v498 = vunpack.c.l.b16 %v359
      %v499 = vunpack.c.h.b16 %v359
      %v500 = vunpack.c.l.b16 %v360
      %v501 = vunpack.c.h.b16 %v360
      %v502 = vunpack.c.l.b16 %v361
      %v503 = vunpack.c.h.b16 %v361
      %v504 = vunpack.c.l.b16 %v362
      %v505 = vunpack.c.h.b16 %v362
      %v506 = vunpack.c.l.b16 %v363
      %v507 = vunpack.c.h.b16 %v363
      %v508 = vunpack.c.l.b16 %v364
      %v509 = vunpack.c.h.b16 %v364
      %v510 = vunpack.c.l.b16 %v365
      %v511 = vunpack.c.h.b16 %v365
      %v512 = vunpack.c.l.b16 %v366
      %v513 = vunpack.c.h.b16 %v366
      %v514 = vunpack.c.l.b16 %v367
      %v515 = vunpack.c.h.b16 %v367
      %v516 = vunpack.c.l.b16 %v368
      %v517 = vunpack.c.h.b16 %v368
      %v518 = vunpack.c.l.b16 %v369
      %v519 = vunpack.c.h.b16 %v369
      %v520 = vunpack.c.l.b16 %v370
      %v521 = vunpack.c.h.b16 %v370
      %v522 = vunpack.c.l.b16 %v371
      %v523 = vunpack.c.h.b16 %v371
      %v524 = vunpack.c.l.b16 %v372
      %v525 = vunpack.c.h.b16 %v372
      %v526 = vunpack.c.l.b16 %v373
      %v527 = vunpack.c.h.b16 %v373
      %v528 = vunpack.c.l.b16 %v374
      %v529 = vunpack.c.h.b16 %v374
      %v530 = vunpack.c.l.b16 %v375
      %v531 = vunpack.c.h.b16 %v375
      %v532 = vunpack.c.l.b16 %v376
      %v533 = vunpack.c.h.b16 %v376
      %v534 = vunpack.c.l.b16 %v377
      %v535 = vunpack.c.h.b16 %v377
      %v536 = vunpack.c.l.b16 %v378
      %v537 = vunpack.c.h.b16 %v378
      %v538 = vunpack.c.l.b16 %v379
      %v539 = vunpack.c.h.b16 %v379
      %v540 = vunpack.c.l.b16 %v380
      %v541 = vunpack.c.h.b16 %v380
      %v542 = vunpack.c.l.b16 %v381
      %v543 = vunpack.c.h.b16 %v381
      %v544 = vunpack.c.l.b16 %v382
      %v545 = vunpack.c.h.b16 %v382
      %v546 = vunpack.c.l.b16 %v383
      %v547 = vunpack.c.h.b16 %v383
      %v548 = vunpack.c.l.b16 %v384
      %v549 = vunpack.c.h.b16 %v384
      %v550 = vunpack.c.l.b16 %v385
      %v551 = vunpack.c.h.b16 %v385
      %v552 = vunpack.c.l.b16 %v386
      %v553 = vunpack.c.h.b16 %v386
      %v554 = vunpack.c.l.b16 %v387
      %v555 = vunpack.c.h.b16 %v387
      %v556 = vunpack.c.l.b16 %v388
      %v557 = vunpack.c.h.b16 %v388
      %v558 = vunpack.c.l.b16 %v389
      %v559 = vunpack.c.h.b16 %v389
      %v560 = vunpack.c.l.b16 %v390
      %v561 = vunpack.c.h.b16 %v390
      %v562 = vunpack.c.l.b16 %v391
      %v563 = vunpack.c.h.b16 %v391
      %v564 = vunpack.c.l.b16 %v392
      %v565 = vunpack.c.h.b16 %v392
      %v566 = vunpack.c.l.b16 %v393
      %v567 = vunpack.c.h.b16 %v393
      %v568 = vunpack.c.l.b16 %v394
      %v569 = vunpack.c.h.b16 %v394
      %v570 = vunpack.c.l.b16 %v395
      %v571 = vunpack.c.h.b16 %v395
      %v572 = vunpack.c.l.b16 %v396
      %v573 = vunpack.c.h.b16 %v396
      %v574 = vunpack.c.l.b16 %v397
      %v575 = vunpack.c.h.b16 %v397
      %v576 = vunpack.c.l.b16 %v398
      %v577 = vunpack.c.h.b16 %v398
      %v578 = vunpack.c.l.b16 %v399
      %v579 = vunpack.c.h.b16 %v399
      %v580 = vunpack.c.l.b16 %v400
      %v581 = vunpack.c.h.b16 %v400
      %v582 = vunpack.c.l.b16 %v401
      %v583 = vunpack.c.h.b16 %v401
      %v584 = vunpack.c.l.b16 %v402
      %v585 = vunpack.c.h.b16 %v402
      %v586 = vunpack.c.l.b16 %v403
      %v587 = vunpack.c.h.b16 %v403
      %v588 = vunpack.c.l.b16 %v404
      %v589 = vunpack.c.h.b16 %v404
      %v590 = vunpack.c.l.b16 %v405
      %v591 = vunpack.c.h.b16 %v405
      %v592 = vunpack.c.l.b16 %v406
      %v593 = vunpack.c.h.b16 %v406
      %v594 = vunpack.c.l.b16 %v407
      %v595 = vunpack.c.h.b16 %v407
      %v596 = vunpack.c.l.b16 %v408
      %v597 = vunpack.c.h.b16 %v408
      %v598 = vunpack.c.l.b16 %v409
      %v599 = vunpack.c.h.b16 %v409
      %v600 = vunpack.c.l.b16 %v410
      %v601 = vunpack.c.h.b16 %v410
      %v602 = vunpack.c.l.b16 %v411
      %v603 = vunpack.c.h.b16 %v411
      %v604 = vunpack.c.l.b16 %v412
      %v605 = vunpack.c.h.b16 %v412
      %v606 = vunpack.c.l.b16 %v413
      %v607 = vunpack.c.h.b16 %v413
      %v608 = vunpack.c.l.b16 %v414
      %v609 = vunpack.c.h.b16 %v414
      %v610 = vunpack.c.l.b16 %v415
      %v611 = vunpack.c.h.b16 %v415
      %v612 = vunpack.c.l.b16 %v416
      %v613 = vunpack.c.h.b16 %v416
      %v614 = vunpack.c.l.b16 %v417
      %v615 = vunpack.c.h.b16 %v417
      %v616 = vpack.c.b16 %v490, %v488
      %v617 = vpack.c.b16 %v491, %v489
      %v618 = vpack.c.b16 %v494, %v492
      %v619 = vpack.c.b16 %v495, %v493
      %v620 = vpack.c.b16 %v498, %v496
      %v621 = vpack.c.b16 %v499, %v497
      %v622 = vpack.c.b16 %v502, %v500
      %v623 = vpack.c.b16 %v503, %v501
      %v624 = vpack.c.b16 %v506, %v504
      %v625 = vpack.c.b16 %v507, %v505
      %v626 = vpack.c.b16 %v510, %v508
      %v627 = vpack.c.b16 %v511, %v509
      %v628 = vpack.c.b16 %v514, %v512
      %v629 = vpack.c.b16 %v515, %v513
      %v630 = vpack.c.b16 %v518, %v516
      %v631 = vpack.c.b16 %v519, %v517
      %v632 = vpack.c.b16 %v522, %v520
      %v633 = vpack.c.b16 %v523, %v521
      %v634 = vpack.c.b16 %v526, %v524
      %v635 = vpack.c.b16 %v527, %v525
      %v636 = vpack.c.b16 %v530, %v528
      %v637 = vpack.c.b16 %v531, %v529
      %v638 = vpack.c.b16 %v534, %v532
      %v639 = vpack.c.b16 %v535, %v533
      %v640 = vpack.c.b16 %v538, %v536
      %v641 = vpack.c.b16 %v539, %v537
      %v642 = vpack.c.b16 %v542, %v540
      %v643 = vpack.c.b16 %v543, %v541
      %v644 = vpack.c.b16 %v546, %v544
      %v645 = vpack.c.b16 %v547, %v545
      %v646 = vpack.c.b16 %v550, %v548
      %v647 = vpack.c.b16 %v551, %v549
      %v648 = vpack.c.b16 %v554, %v552
      %v649 = vpack.c.b16 %v555, %v553
      %v650 = vpack.c.b16 %v558, %v556
      %v651 = vpack.c.b16 %v559, %v557
      %v652 = vpack.c.b16 %v562, %v560
      %v653 = vpack.c.b16 %v563, %v561
      %v654 = vpack.c.b16 %v566, %v564
      %v655 = vpack.c.b16 %v567, %v565
      %v656 = vpack.c.b16 %v570, %v568
      %v657 = vpack.c.b16 %v571, %v569
      %v658 = vpack.c.b16 %v574, %v572
      %v659 = vpack.c.b16 %v575, %v573
      %v660 = vpack.c.b16 %v578, %v576
      %v661 = vpack.c.b16 %v579, %v577
      %v662 = vpack.c.b16 %v582, %v580
      %v663 = vpack.c.b16 %v583, %v581
      %v664 = vpack.c.b16 %v586, %v584
      %v665 = vpack.c.b16 %v587, %v585
      %v666 = vpack.c.b16 %v590, %v588
      %v667 = vpack.c.b16 %v591, %v589
      %v668 = vpack.c.b16 %v594, %v592
      %v669 = vpack.c.b16 %v595, %v593
      %v670 = vpack.c.b16 %v598, %v596
      %v671 = vpack.c.b16 %v599, %v597
      %v672 = vpack.c.b16 %v602, %v600
      %v673 = vpack.c.b16 %v603, %v601
      %v674 = vpack.c.b16 %v606, %v604
      %v675 = vpack.c.b16 %v607, %v605
      %v676 = vpack.c.b16 %v610, %v608
      %v677 = vpack.c.b16 %v611, %v609
      %v678 = vpack.c.b16 %v614, %v612
      %v679 = vpack.c.b16 %v615, %v613
      %v731 = vunpack.c.l.b16 %v334
      %v732 = vunpack.c.l.b16 %v335
      %v733 = vunpack.c.l.b16 %v336
      %v734 = vunpack.c.l.b16 %v337
      %v735 = vunpack.c.l.b16 %v338
      %v736 = vunpack.c.l.b16 %v339
      %v737 = vunpack.c.l.b16 %v340
      %v738 = vunpack.c.l.b16 %v341
      %v739 = vunpack.c.l.b16 %v342
      %v740 = vunpack.c.l.b16 %v343
      %v741 = vunpack.c.l.b16 %v344
      %v742 = vunpack.c.l.b16 %v345
      %v743 = vunpack.c.l.b16 %v346
      %v744 = vunpack.c.l.b16 %v347
      %v745 = vunpack.c.l.b16 %v348
      %v746 = vunpack.c.l.b16 %v349
      %v747 = vunpack.c.l.b16 %v350
      %v748 = vunpack.c.l.b16 %v351
      %v749 = vunpack.c.l.b16 %v352
      %v750 = vpack.c.b16 %v732, %v731
      %v751 = vpack.c.b16 %v734, %v733
      %v752 = vpack.c.b16 %v736, %v735
      %v753 = vpack.c.b16 %v738, %v737
      %v754 = vpack.c.b16 %v740, %v739
      %v755 = vpack.c.b16 %v742, %v741
      %v756 = vpack.c.b16 %v744, %v743
      %v757 = vpack.c.b16 %v746, %v745
      %v758 = vpack.c.b16 %v748, %v747
      %v759 = vpack.c.b16 %v749, %v749
      %vm769 = vcmask 179200
      %v771 = vsel %vm769, %v617, 0
      %v774 = vsel %vm769, %v619, 0
      %v777 = vsel %vm769, %v621, 0
      %v780 = vsel %vm769, %v623, 0
      %v783 = vsel %vm769, %v625, 0
      %v786 = vsel %vm769, %v627, 0
      %v789 = vsel %vm769, %v629, 0
      %v792 = vsel %vm769, %v631, 0
      %v795 = vsel %vm769, %v633, 0
      %v798 = vsel %vm769, %v635, 0
      %v801 = vsel %vm769, %v637, 0
      %v804 = vsel %vm769, %v639, 0
      %v807 = vsel %vm769, %v641, 0
      %v810 = vsel %vm769, %v643, 0
      %v813 = vsel %vm769, %v645, 0
      %v816 = vsel %vm769, %v647, 0
      %v819 = vsel %vm769, %v649, 0
      %v822 = vsel %vm769, %v651, 0
      %v825 = vsel %vm769, %v653, 0
      %v828 = vsel %vm769, %v655, 0
      %v831 = vsel %vm769, %v657, 0
      %v834 = vsel %vm769, %v659, 0
      %v837 = vsel %vm769, %v661, 0
      %v840 = vsel %vm769, %v663, 0
      %v843 = vsel %vm769, %v665, 0
      %v846 = vsel %vm769, %v667, 0
      %v849 = vsel %vm769, %v669, 0
      %v852 = vsel %vm769, %v671, 0
      %v855 = vsel %vm769, %v673, 0
      %v858 = vsel %vm769, %v675, 0
      %v861 = vsel %vm769, %v677, 0
      %v864 = vsel %vm769, %v679, 0
      %vm866 = vcmask 1042432
      %v868 = vsel %vm866, %v759, 0
      %870 = vmatprep.subr.bf16.mxu0 0
      %871 = vmatpush1.bf16.msra.mxu0 %v750
      %872 = vmatprep.subr.bf16.mxu0 0
      %873 = vmatpush1.bf16.msra.mxu0 %v751
      %874 = vmatprep.subr.bf16.mxu0 0
      %875 = vmatpush1.bf16.msra.mxu0 %v752
      %876 = vmatprep.subr.bf16.mxu0 0
      %877 = vmatpush1.bf16.msra.mxu0 %v753
      %878 = vmatprep.subr.bf16.mxu0 0
      %879 = vmatpush1.bf16.msra.mxu0 %v754
      %880 = vmatprep.subr.bf16.mxu0 0
      %881 = vmatpush1.bf16.msra.mxu0 %v755
      %882 = vmatprep.subr.bf16.mxu0 0
      %883 = vmatpush1.bf16.msra.mxu0 %v756
      %884 = vmatprep.subr.bf16.mxu0 0
      %885 = vmatpush1.bf16.msra.mxu0 %v757
      %886 = vmatprep.subr.bf16.mxu0 0
      %887 = vmatpush1.bf16.msra.mxu0 %v758
      %888 = vmatprep.subr.bf16.mxu0 0
      %889 = vmatpush1.bf16.msra.mxu0 %v868
      %890 = vmatprep.subr.bf16.mxu0 0
      %891 = vmatpush1.bf16.msra.mxu0 0
      %892 = vmatprep.subr.bf16.mxu0 0
      %893 = vmatpush1.bf16.msra.mxu0 0
      %894 = vmatprep.subr.bf16.mxu0 0
      %895 = vmatpush1.bf16.msra.mxu0 0
      %896 = vmatprep.subr.bf16.mxu0 0
      %897 = vmatpush1.bf16.msra.mxu0 0
      %898 = vmatprep.subr.bf16.mxu0 0
      %899 = vmatpush1.bf16.msra.mxu0 0
      %900 = vmatprep.subr.bf16.mxu0 0
      %901 = vmatpush1.bf16.msra.mxu0 0
      %902 = vmatprep.mubr.bf16.mxu0 %v771
      %903 = vmatmul.mubr.bf16.gmra.mrb[0].mxu0 %v616
      %v904 = vpop.f32.mrb[0].mxu0
      %v905 = vadd.f32 %v422, %v904
      %v906 = vpop.f32.mrb[0].mxu0
      %v907 = vpop.f32.mrb[0].mxu0
      %v908 = vadd.f32 %v422, %v907
      %v909 = vpop.f32.mrb[0].mxu0
      %910 = vmatprep.mubr.bf16.mxu0 %v774
      %911 = vmatmul.mubr.bf16.gmra.mrb[0].mxu0 %v618
      %v912 = vpop.f32.mrb[0].mxu0
      %v913 = vadd.f32 %v422, %v912
      %v914 = vpop.f32.mrb[0].mxu0
      %v915 = vpop.f32.mrb[0].mxu0
      %v916 = vadd.f32 %v422, %v915
      %v917 = vpop.f32.mrb[0].mxu0
      %918 = vmatprep.mubr.bf16.mxu0 %v777
      %919 = vmatmul.mubr.bf16.gmra.mrb[0].mxu0 %v620
      %v920 = vpop.f32.mrb[0].mxu0
      %v921 = vadd.f32 %v422, %v920
      %v922 = vpop.f32.mrb[0].mxu0
      %v923 = vpop.f32.mrb[0].mxu0
      %v924 = vadd.f32 %v422, %v923
      %v925 = vpop.f32.mrb[0].mxu0
      %926 = vmatprep.mubr.bf16.mxu0 %v780
      %927 = vmatmul.mubr.bf16.gmra.mrb[0].mxu0 %v622
      %v928 = vpop.f32.mrb[0].mxu0
      %v929 = vadd.f32 %v422, %v928
      %v930 = vpop.f32.mrb[0].mxu0
      %v931 = vpop.f32.mrb[0].mxu0
      %v932 = vadd.f32 %v422, %v931
      %v933 = vpop.f32.mrb[0].mxu0
      %934 = vmatprep.mubr.bf16.mxu0 %v783
      %935 = vmatmul.mubr.bf16.gmra.mrb[0].mxu0 %v624
      %v936 = vpop.f32.mrb[0].mxu0
      %v937 = vadd.f32 %v422, %v936
      %v938 = vpop.f32.mrb[0].mxu0
      %v939 = vpop.f32.mrb[0].mxu0
      %v940 = vadd.f32 %v422, %v939
      %v941 = vpop.f32.mrb[0].mxu0
      %942 = vmatprep.mubr.bf16.mxu0 %v786
      %943 = vmatmul.mubr.bf16.gmra.mrb[0].mxu0 %v626
      %v944 = vpop.f32.mrb[0].mxu0
      %v945 = vadd.f32 %v422, %v944
      %v946 = vpop.f32.mrb[0].mxu0
      %v947 = vpop.f32.mrb[0].mxu0
      %v948 = vadd.f32 %v422, %v947
      %v949 = vpop.f32.mrb[0].mxu0
      %950 = vmatprep.mubr.bf16.mxu0 %v789
      %951 = vmatmul.mubr.bf16.gmra.mrb[0].mxu0 %v628
      %v952 = vpop.f32.mrb[0].mxu0
      %v953 = vadd.f32 %v422, %v952
      %v954 = vpop.f32.mrb[0].mxu0
      %v955 = vpop.f32.mrb[0].mxu0
      %v956 = vadd.f32 %v422, %v955
      %v957 = vpop.f32.mrb[0].mxu0
      %958 = vmatprep.mubr.bf16.mxu0 %v792
      %959 = vmatmul.mubr.bf16.gmra.mrb[0].mxu0 %v630
      %v960 = vpop.f32.mrb[0].mxu0
      %v961 = vadd.f32 %v422, %v960
      %v962 = vpop.f32.mrb[0].mxu0
      %v963 = vpop.f32.mrb[0].mxu0
      %v964 = vadd.f32 %v422, %v963
      %v965 = vpop.f32.mrb[0].mxu0
      %966 = vmatprep.mubr.bf16.mxu0 %v795
      %967 = vmatmul.mubr.bf16.gmra.mrb[0].mxu0 %v632
      %v968 = vpop.f32.mrb[0].mxu0
      %v969 = vadd.f32 %v422, %v968
      %v970 = vpop.f32.mrb[0].mxu0
      %v971 = vpop.f32.mrb[0].mxu0
      %v972 = vadd.f32 %v422, %v971
      %v973 = vpop.f32.mrb[0].mxu0
      %974 = vmatprep.mubr.bf16.mxu0 %v798
      %975 = vmatmul.mubr.bf16.gmra.mrb[0].mxu0 %v634
      %v976 = vpop.f32.mrb[0].mxu0
      %v977 = vadd.f32 %v422, %v976
      %v978 = vpop.f32.mrb[0].mxu0
      %v979 = vpop.f32.mrb[0].mxu0
      %v980 = vadd.f32 %v422, %v979
      %v981 = vpop.f32.mrb[0].mxu0
      %982 = vmatprep.mubr.bf16.mxu0 %v801
      %983 = vmatmul.mubr.bf16.gmra.mrb[0].mxu0 %v636
      %v984 = vpop.f32.mrb[0].mxu0
      %v985 = vadd.f32 %v422, %v984
      %v986 = vpop.f32.mrb[0].mxu0
      %v987 = vpop.f32.mrb[0].mxu0
      %v988 = vadd.f32 %v422, %v987
      %v989 = vpop.f32.mrb[0].mxu0
      %990 = vmatprep.mubr.bf16.mxu0 %v804
      %991 = vmatmul.mubr.bf16.gmra.mrb[0].mxu0 %v638
      %v992 = vpop.f32.mrb[0].mxu0
      %v993 = vadd.f32 %v422, %v992
      %v994 = vpop.f32.mrb[0].mxu0
      %v995 = vpop.f32.mrb[0].mxu0
      %v996 = vadd.f32 %v422, %v995
      %v997 = vpop.f32.mrb[0].mxu0
      %998 = vmatprep.mubr.bf16.mxu0 %v807
      %999 = vmatmul.mubr.bf16.gmra.mrb[0].mxu0 %v640
      %v1000 = vpop.f32.mrb[0].mxu0
      %v1001 = vadd.f32 %v422, %v1000
      %v1002 = vpop.f32.mrb[0].mxu0
      %v1003 = vpop.f32.mrb[0].mxu0
      %v1004 = vadd.f32 %v422, %v1003
      %v1005 = vpop.f32.mrb[0].mxu0
      %1006 = vmatprep.mubr.bf16.mxu0 %v810
      %1007 = vmatmul.mubr.bf16.gmra.mrb[0].mxu0 %v642
      %v1008 = vpop.f32.mrb[0].mxu0
      %v1009 = vadd.f32 %v422, %v1008
      %v1010 = vpop.f32.mrb[0].mxu0
      %v1011 = vpop.f32.mrb[0].mxu0
      %v1012 = vadd.f32 %v422, %v1011
      %v1013 = vpop.f32.mrb[0].mxu0
      %1014 = vmatprep.mubr.bf16.mxu0 %v813
      %1015 = vmatmul.mubr.bf16.gmra.mrb[0].mxu0 %v644
      %v1016 = vpop.f32.mrb[0].mxu0
      %v1017 = vadd.f32 %v422, %v1016
      %v1018 = vpop.f32.mrb[0].mxu0
      %v1019 = vpop.f32.mrb[0].mxu0
      %v1020 = vadd.f32 %v422, %v1019
      %v1021 = vpop.f32.mrb[0].mxu0
      %1022 = vmatprep.mubr.bf16.mxu0 %v816
      %1023 = vmatmul.mubr.bf16.gmra.mrb[0].mxu0 %v646
      %v1024 = vpop.f32.mrb[0].mxu0
      %v1025 = vadd.f32 %v422, %v1024
      %v1026 = vpop.f32.mrb[0].mxu0
      %v1027 = vpop.f32.mrb[0].mxu0
      %v1028 = vadd.f32 %v422, %v1027
      %v1029 = vpop.f32.mrb[0].mxu0
      %1030 = vmatprep.mubr.bf16.mxu0 %v819
      %1031 = vmatmul.mubr.bf16.gmra.mrb[0].mxu0 %v648
      %v1032 = vpop.f32.mrb[0].mxu0
      %v1033 = vadd.f32 %v422, %v1032
      %v1034 = vpop.f32.mrb[0].mxu0
      %v1035 = vpop.f32.mrb[0].mxu0
      %v1036 = vadd.f32 %v422, %v1035
      %v1037 = vpop.f32.mrb[0].mxu0
      %1038 = vmatprep.mubr.bf16.mxu0 %v822
      %1039 = vmatmul.mubr.bf16.gmra.mrb[0].mxu0 %v650
      %v1040 = vpop.f32.mrb[0].mxu0
      %v1041 = vadd.f32 %v422, %v1040
      %v1042 = vpop.f32.mrb[0].mxu0
      %v1043 = vpop.f32.mrb[0].mxu0
      %v1044 = vadd.f32 %v422, %v1043
      %v1045 = vpop.f32.mrb[0].mxu0
      %1046 = vmatprep.mubr.bf16.mxu0 %v825
      %1047 = vmatmul.mubr.bf16.gmra.mrb[0].mxu0 %v652
      %v1048 = vpop.f32.mrb[0].mxu0
      %v1049 = vadd.f32 %v422, %v1048
      %v1050 = vpop.f32.mrb[0].mxu0
      %v1051 = vpop.f32.mrb[0].mxu0
      %v1052 = vadd.f32 %v422, %v1051
      %v1053 = vpop.f32.mrb[0].mxu0
      %1054 = vmatprep.mubr.bf16.mxu0 %v828
      %1055 = vmatmul.mubr.bf16.gmra.mrb[0].mxu0 %v654
      %v1056 = vpop.f32.mrb[0].mxu0
      %v1057 = vadd.f32 %v422, %v1056
      %v1058 = vpop.f32.mrb[0].mxu0
      %v1059 = vpop.f32.mrb[0].mxu0
      %v1060 = vadd.f32 %v422, %v1059
      %v1061 = vpop.f32.mrb[0].mxu0
      %1062 = vmatprep.mubr.bf16.mxu0 %v831
      %1063 = vmatmul.mubr.bf16.gmra.mrb[0].mxu0 %v656
      %v1064 = vpop.f32.mrb[0].mxu0
      %v1065 = vadd.f32 %v422, %v1064
      %v1066 = vpop.f32.mrb[0].mxu0
      %v1067 = vpop.f32.mrb[0].mxu0
      %v1068 = vadd.f32 %v422, %v1067
      %v1069 = vpop.f32.mrb[0].mxu0
      %1070 = vmatprep.mubr.bf16.mxu0 %v834
      %1071 = vmatmul.mubr.bf16.gmra.mrb[0].mxu0 %v658
      %v1072 = vpop.f32.mrb[0].mxu0
      %v1073 = vadd.f32 %v422, %v1072
      %v1074 = vpop.f32.mrb[0].mxu0
      %v1075 = vpop.f32.mrb[0].mxu0
      %v1076 = vadd.f32 %v422, %v1075
      %v1077 = vpop.f32.mrb[0].mxu0
      %1078 = vmatprep.mubr.bf16.mxu0 %v837
      %1079 = vmatmul.mubr.bf16.gmra.mrb[0].mxu0 %v660
      %v1080 = vpop.f32.mrb[0].mxu0
      %v1081 = vadd.f32 %v422, %v1080
      %v1082 = vpop.f32.mrb[0].mxu0
      %v1083 = vpop.f32.mrb[0].mxu0
      %v1084 = vadd.f32 %v422, %v1083
      %v1085 = vpop.f32.mrb[0].mxu0
      %1086 = vmatprep.mubr.bf16.mxu0 %v840
      %1087 = vmatmul.mubr.bf16.gmra.mrb[0].mxu0 %v662
      %v1088 = vpop.f32.mrb[0].mxu0
      %v1089 = vadd.f32 %v422, %v1088
      %v1090 = vpop.f32.mrb[0].mxu0
      %v1091 = vpop.f32.mrb[0].mxu0
      %v1092 = vadd.f32 %v422, %v1091
      %v1093 = vpop.f32.mrb[0].mxu0
      %1094 = vmatprep.mubr.bf16.mxu0 %v843
      %1095 = vmatmul.mubr.bf16.gmra.mrb[0].mxu0 %v664
      %v1096 = vpop.f32.mrb[0].mxu0
      %v1097 = vadd.f32 %v422, %v1096
      %v1098 = vpop.f32.mrb[0].mxu0
      %v1099 = vpop.f32.mrb[0].mxu0
      %v1100 = vadd.f32 %v422, %v1099
      %v1101 = vpop.f32.mrb[0].mxu0
      %1102 = vmatprep.mubr.bf16.mxu0 %v846
      %1103 = vmatmul.mubr.bf16.gmra.mrb[0].mxu0 %v666
      %v1104 = vpop.f32.mrb[0].mxu0
      %v1105 = vadd.f32 %v422, %v1104
      %v1106 = vpop.f32.mrb[0].mxu0
      %v1107 = vpop.f32.mrb[0].mxu0
      %v1108 = vadd.f32 %v422, %v1107
      %v1109 = vpop.f32.mrb[0].mxu0
      %1110 = vmatprep.mubr.bf16.mxu0 %v849
      %1111 = vmatmul.mubr.bf16.gmra.mrb[0].mxu0 %v668
      %v1112 = vpop.f32.mrb[0].mxu0
      %v1113 = vadd.f32 %v422, %v1112
      %v1114 = vpop.f32.mrb[0].mxu0
      %v1115 = vpop.f32.mrb[0].mxu0
      %v1116 = vadd.f32 %v422, %v1115
      %v1117 = vpop.f32.mrb[0].mxu0
      %1118 = vmatprep.mubr.bf16.mxu0 %v852
      %1119 = vmatmul.mubr.bf16.gmra.mrb[0].mxu0 %v670
      %v1120 = vpop.f32.mrb[0].mxu0
      %v1121 = vadd.f32 %v422, %v1120
      %v1122 = vpop.f32.mrb[0].mxu0
      %v1123 = vpop.f32.mrb[0].mxu0
      %v1124 = vadd.f32 %v422, %v1123
      %v1125 = vpop.f32.mrb[0].mxu0
      %1126 = vmatprep.mubr.bf16.mxu0 %v855
      %1127 = vmatmul.mubr.bf16.gmra.mrb[0].mxu0 %v672
      %v1128 = vpop.f32.mrb[0].mxu0
      %v1129 = vadd.f32 %v422, %v1128
      %v1130 = vpop.f32.mrb[0].mxu0
      %v1131 = vpop.f32.mrb[0].mxu0
      %v1132 = vadd.f32 %v422, %v1131
      %v1133 = vpop.f32.mrb[0].mxu0
      %1134 = vmatprep.mubr.bf16.mxu0 %v858
      %1135 = vmatmul.mubr.bf16.gmra.mrb[0].mxu0 %v674
      %v1136 = vpop.f32.mrb[0].mxu0
      %v1137 = vadd.f32 %v422, %v1136
      %v1138 = vpop.f32.mrb[0].mxu0
      %v1139 = vpop.f32.mrb[0].mxu0
      %v1140 = vadd.f32 %v422, %v1139
      %v1141 = vpop.f32.mrb[0].mxu0
      %1142 = vmatprep.mubr.bf16.mxu0 %v861
      %1143 = vmatmul.mubr.bf16.gmra.mrb[0].mxu0 %v676
      %v1144 = vpop.f32.mrb[0].mxu0
      %v1145 = vadd.f32 %v422, %v1144
      %v1146 = vpop.f32.mrb[0].mxu0
      %v1147 = vpop.f32.mrb[0].mxu0
      %v1148 = vadd.f32 %v422, %v1147
      %v1149 = vpop.f32.mrb[0].mxu0
      %1150 = vmatprep.mubr.bf16.mxu0 %v864
      %1151 = vmatmul.mubr.bf16.gmra.mrb[0].mxu0 %v678
      %v1152 = vpop.f32.mrb[0].mxu0
      %v1153 = vadd.f32 %v422, %v1152
      %v1154 = vpop.f32.mrb[0].mxu0
      %v1155 = vpop.f32.mrb[0].mxu0
      %v1156 = vadd.f32 %v422, %v1155
      %v1157 = vpop.f32.mrb[0].mxu0
      %1158 = vdwg.mxu0
      %v1159 = vmax.f32 %v905, 0.0
      %v1160 = vmax.f32 %v908, 0.0
      %v1161 = vmax.f32 %v913, 0.0
      %v1162 = vmax.f32 %v916, 0.0
      %v1163 = vmax.f32 %v921, 0.0
      %v1164 = vmax.f32 %v924, 0.0
      %v1165 = vmax.f32 %v929, 0.0
      %v1166 = vmax.f32 %v932, 0.0
      %v1167 = vmax.f32 %v937, 0.0
      %v1168 = vmax.f32 %v940, 0.0
      %v1169 = vmax.f32 %v945, 0.0
      %v1170 = vmax.f32 %v948, 0.0
      %v1171 = vmax.f32 %v953, 0.0
      %v1172 = vmax.f32 %v956, 0.0
      %v1173 = vmax.f32 %v961, 0.0
      %v1174 = vmax.f32 %v964, 0.0
      %v1175 = vmax.f32 %v969, 0.0
      %v1176 = vmax.f32 %v972, 0.0
      %v1177 = vmax.f32 %v977, 0.0
      %v1178 = vmax.f32 %v980, 0.0
      %v1179 = vmax.f32 %v985, 0.0
      %v1180 = vmax.f32 %v988, 0.0
      %v1181 = vmax.f32 %v993, 0.0
      %v1182 = vmax.f32 %v996, 0.0
      %v1183 = vmax.f32 %v1001, 0.0
      %v1184 = vmax.f32 %v1004, 0.0
      %v1185 = vmax.f32 %v1009, 0.0
      %v1186 = vmax.f32 %v1012, 0.0
      %v1187 = vmax.f32 %v1017, 0.0
      %v1188 = vmax.f32 %v1020, 0.0
      %v1189 = vmax.f32 %v1025, 0.0
      %v1190 = vmax.f32 %v1028, 0.0
      %v1191 = vmax.f32 %v1033, 0.0
      %v1192 = vmax.f32 %v1036, 0.0
      %v1193 = vmax.f32 %v1041, 0.0
      %v1194 = vmax.f32 %v1044, 0.0
      %v1195 = vmax.f32 %v1049, 0.0
      %v1196 = vmax.f32 %v1052, 0.0
      %v1197 = vmax.f32 %v1057, 0.0
      %v1198 = vmax.f32 %v1060, 0.0
      %v1199 = vmax.f32 %v1065, 0.0
      %v1200 = vmax.f32 %v1068, 0.0
      %v1201 = vmax.f32 %v1073, 0.0
      %v1202 = vmax.f32 %v1076, 0.0
      %v1203 = vmax.f32 %v1081, 0.0
      %v1204 = vmax.f32 %v1084, 0.0
      %v1205 = vmax.f32 %v1089, 0.0
      %v1206 = vmax.f32 %v1092, 0.0
      %v1207 = vmax.f32 %v1097, 0.0
      %v1208 = vmax.f32 %v1100, 0.0
      %v1209 = vmax.f32 %v1105, 0.0
      %v1210 = vmax.f32 %v1108, 0.0
      %v1211 = vmax.f32 %v1113, 0.0
      %v1212 = vmax.f32 %v1116, 0.0
      %v1213 = vmax.f32 %v1121, 0.0
      %v1214 = vmax.f32 %v1124, 0.0
      %v1215 = vmax.f32 %v1129, 0.0
      %v1216 = vmax.f32 %v1132, 0.0
      %v1217 = vmax.f32 %v1137, 0.0
      %v1218 = vmax.f32 %v1140, 0.0
      %v1219 = vmax.f32 %v1145, 0.0
      %v1220 = vmax.f32 %v1148, 0.0
      %v1221 = vmax.f32 %v1153, 0.0
      %v1222 = vmax.f32 %v1156, 0.0
      %v1223 = vld [vmem:[%s311] sm:$0xff]
      %v1224 = vld [vmem:[%s311 + $0x8] sm:$0xff]
      %v1225 = vld [vmem:[%s311 + $0x10] sm:$0xff]
      %v1226 = vld [vmem:[%s311 + $0x18] sm:$0xff]
      %v1227 = vld [vmem:[%s311 + $0x20] sm:$0xff]
      %v1228 = vld [vmem:[%s311 + $0x28] sm:$0xff]
      %v1229 = vld [vmem:[%s311 + $0x30] sm:$0xff]
      %v1230 = vld [vmem:[%s311 + $0x38] sm:$0xff]
      %v1231 = vld [vmem:[%s311 + $0x40] sm:$0xff]
      %v1232 = vld [vmem:[%s311 + $0x48] sm:$0xff]
      %v1233 = vld [vmem:[%s311 + $0x50] sm:$0xff]
      %v1234 = vld [vmem:[%s311 + $0x58] sm:$0xff]
      %v1235 = vld [vmem:[%s311 + $0x60] sm:$0xff]
      %v1236 = vld [vmem:[%s311 + $0x68] sm:$0xff]
      %v1237 = vld [vmem:[%s311 + $0x70] sm:$0xff]
      %v1238 = vld [vmem:[%s311 + $0x78] sm:$0xff]
      %v1239 = vld [vmem:[%s311 + $0x80] sm:$0xff]
      %v1240 = vld [vmem:[%s311 + $0x88] sm:$0xff]
      %v1241 = vld [vmem:[%s311 + $0x90] sm:$0xff]
      %v1242 = vld [vmem:[%s311 + $0x98] sm:$0xff]
      %v1243 = vld [vmem:[%s311 + $0xa0] sm:$0xff]
      %v1244 = vld [vmem:[%s311 + $0xa8] sm:$0xff]
      %v1245 = vld [vmem:[%s311 + $0xb0] sm:$0xff]
      %v1246 = vld [vmem:[%s311 + $0xb8] sm:$0xff]
      %v1247 = vld [vmem:[%s311 + $0xc0] sm:$0xff]
      %v1248 = vld [vmem:[%s311 + $0xc8] sm:$0xff]
      %v1249 = vld [vmem:[%s311 + $0xd0] sm:$0xff]
      %v1250 = vld [vmem:[%s311 + $0xd8] sm:$0xff]
      %v1251 = vld [vmem:[%s311 + $0xe0] sm:$0xff]
      %v1252 = vld [vmem:[%s311 + $0xe8] sm:$0xff]
      %v1253 = vld [vmem:[%s311 + $0xf0] sm:$0xff]
      %v1254 = vld [vmem:[%s311 + $0xf8] sm:$0xff]
      %v1255 = vld [vmem:[%s311 + $0x100] sm:$0xff]
      %v1256 = vld [vmem:[%s311 + $0x108] sm:$0xff]
      %v1257 = vld [vmem:[%s311 + $0x110] sm:$0xff]
      %v1258 = vld [vmem:[%s311 + $0x118] sm:$0xff]
      %v1259 = vld [vmem:[%s311 + $0x120] sm:$0xff]
      %v1260 = vld [vmem:[%s311 + $0x128] sm:$0xff]
      %v1261 = vld [vmem:[%s311 + $0x130] sm:$0xff]
      %v1262 = vld [vmem:[%s311 + $0x138] sm:$0xff]
      %v1263 = vld [vmem:[%s311 + $0x140] sm:$0xff]
      %v1264 = vld [vmem:[%s311 + $0x148] sm:$0xff]
      %v1265 = vld [vmem:[%s311 + $0x150] sm:$0xff]
      %v1266 = vld [vmem:[%s311 + $0x158] sm:$0xff]
      %v1267 = vld [vmem:[%s311 + $0x160] sm:$0xff]
      %v1268 = vld [vmem:[%s311 + $0x168] sm:$0xff]
      %v1269 = vld [vmem:[%s311 + $0x170] sm:$0xff]
      %v1270 = vld [vmem:[%s311 + $0x178] sm:$0xff]
      %v1271 = vld [vmem:[%s311 + $0x180] sm:$0xff]
      %v1272 = vld [vmem:[%s311 + $0x188] sm:$0xff]
      %v1273 = vld [vmem:[%s311 + $0x190] sm:$0xff]
      %v1274 = vld [vmem:[%s311 + $0x198] sm:$0xff]
      %v1275 = vld [vmem:[%s311 + $0x1a0] sm:$0xff]
      %v1276 = vld [vmem:[%s311 + $0x1a8] sm:$0xff]
      %v1277 = vld [vmem:[%s311 + $0x1b0] sm:$0xff]
      %v1278 = vld [vmem:[%s311 + $0x1b8] sm:$0xff]
      %v1279 = vld [vmem:[%s311 + $0x1c0] sm:$0xff]
      %v1280 = vld [vmem:[%s311 + $0x1c8] sm:$0xff]
      %v1281 = vld [vmem:[%s311 + $0x1d0] sm:$0xff]
      %v1282 = vld [vmem:[%s311 + $0x1d8] sm:$0xff]
      %v1283 = vld [vmem:[%s311 + $0x1e0] sm:$0xff]
      %v1284 = vld [vmem:[%s311 + $0x1e8] sm:$0xff]
      %v1285 = vld [vmem:[%s311 + $0x1f0] sm:$0xff]
      %v1286 = vld [vmem:[%s311 + $0x1f8] sm:$0xff]
      %v1351 = vunpack.c.l.b16 %v1223
      %v1352 = vunpack.c.h.b16 %v1223
      %v1353 = vunpack.c.l.b16 %v1224
      %v1354 = vunpack.c.h.b16 %v1224
      %v1355 = vunpack.c.l.b16 %v1225
      %v1356 = vunpack.c.h.b16 %v1225
      %v1357 = vunpack.c.l.b16 %v1226
      %v1358 = vunpack.c.h.b16 %v1226
      %v1359 = vunpack.c.l.b16 %v1227
      %v1360 = vunpack.c.h.b16 %v1227
      %v1361 = vunpack.c.l.b16 %v1228
      %v1362 = vunpack.c.h.b16 %v1228
      %v1363 = vunpack.c.l.b16 %v1229
      %v1364 = vunpack.c.h.b16 %v1229
      %v1365 = vunpack.c.l.b16 %v1230
      %v1366 = vunpack.c.h.b16 %v1230
      %v1367 = vunpack.c.l.b16 %v1231
      %v1368 = vunpack.c.h.b16 %v1231
      %v1369 = vunpack.c.l.b16 %v1232
      %v1370 = vunpack.c.h.b16 %v1232
      %v1371 = vunpack.c.l.b16 %v1233
      %v1372 = vunpack.c.h.b16 %v1233
      %v1373 = vunpack.c.l.b16 %v1234
      %v1374 = vunpack.c.h.b16 %v1234
      %v1375 = vunpack.c.l.b16 %v1235
      %v1376 = vunpack.c.h.b16 %v1235
      %v1377 = vunpack.c.l.b16 %v1236
      %v1378 = vunpack.c.h.b16 %v1236
      %v1379 = vunpack.c.l.b16 %v1237
      %v1380 = vunpack.c.h.b16 %v1237
      %v1381 = vunpack.c.l.b16 %v1238
      %v1382 = vunpack.c.h.b16 %v1238
      %v1383 = vunpack.c.l.b16 %v1239
      %v1384 = vunpack.c.h.b16 %v1239
      %v1385 = vunpack.c.l.b16 %v1240
      %v1386 = vunpack.c.h.b16 %v1240
      %v1387 = vunpack.c.l.b16 %v1241
      %v1388 = vunpack.c.h.b16 %v1241
      %v1389 = vunpack.c.l.b16 %v1242
      %v1390 = vunpack.c.h.b16 %v1242
      %v1391 = vunpack.c.l.b16 %v1243
      %v1392 = vunpack.c.h.b16 %v1243
      %v1393 = vunpack.c.l.b16 %v1244
      %v1394 = vunpack.c.h.b16 %v1244
      %v1395 = vunpack.c.l.b16 %v1245
      %v1396 = vunpack.c.h.b16 %v1245
      %v1397 = vunpack.c.l.b16 %v1246
      %v1398 = vunpack.c.h.b16 %v1246
      %v1399 = vunpack.c.l.b16 %v1247
      %v1400 = vunpack.c.h.b16 %v1247
      %v1401 = vunpack.c.l.b16 %v1248
      %v1402 = vunpack.c.h.b16 %v1248
      %v1403 = vunpack.c.l.b16 %v1249
      %v1404 = vunpack.c.h.b16 %v1249
      %v1405 = vunpack.c.l.b16 %v1250
      %v1406 = vunpack.c.h.b16 %v1250
      %v1407 = vunpack.c.l.b16 %v1251
      %v1408 = vunpack.c.h.b16 %v1251
      %v1409 = vunpack.c.l.b16 %v1252
      %v1410 = vunpack.c.h.b16 %v1252
      %v1411 = vunpack.c.l.b16 %v1253
      %v1412 = vunpack.c.h.b16 %v1253
      %v1413 = vunpack.c.l.b16 %v1254
      %v1414 = vunpack.c.h.b16 %v1254
      %v1415 = vunpack.c.l.b16 %v1255
      %v1416 = vunpack.c.h.b16 %v1255
      %v1417 = vunpack.c.l.b16 %v1256
      %v1418 = vunpack.c.h.b16 %v1256
      %v1419 = vunpack.c.l.b16 %v1257
      %v1420 = vunpack.c.h.b16 %v1257
      %v1421 = vunpack.c.l.b16 %v1258
      %v1422 = vunpack.c.h.b16 %v1258
      %v1423 = vunpack.c.l.b16 %v1259
      %v1424 = vunpack.c.h.b16 %v1259
      %v1425 = vunpack.c.l.b16 %v1260
      %v1426 = vunpack.c.h.b16 %v1260
      %v1427 = vunpack.c.l.b16 %v1261
      %v1428 = vunpack.c.h.b16 %v1261
      %v1429 = vunpack.c.l.b16 %v1262
      %v1430 = vunpack.c.h.b16 %v1262
      %v1431 = vunpack.c.l.b16 %v1263
      %v1432 = vunpack.c.h.b16 %v1263
      %v1433 = vunpack.c.l.b16 %v1264
      %v1434 = vunpack.c.h.b16 %v1264
      %v1435 = vunpack.c.l.b16 %v1265
      %v1436 = vunpack.c.h.b16 %v1265
      %v1437 = vunpack.c.l.b16 %v1266
      %v1438 = vunpack.c.h.b16 %v1266
      %v1439 = vunpack.c.l.b16 %v1267
      %v1440 = vunpack.c.h.b16 %v1267
      %v1441 = vunpack.c.l.b16 %v1268
      %v1442 = vunpack.c.h.b16 %v1268
      %v1443 = vunpack.c.l.b16 %v1269
      %v1444 = vunpack.c.h.b16 %v1269
      %v1445 = vunpack.c.l.b16 %v1270
      %v1446 = vunpack.c.h.b16 %v1270
      %v1447 = vunpack.c.l.b16 %v1271
      %v1448 = vunpack.c.h.b16 %v1271
      %v1449 = vunpack.c.l.b16 %v1272
      %v1450 = vunpack.c.h.b16 %v1272
      %v1451 = vunpack.c.l.b16 %v1273
      %v1452 = vunpack.c.h.b16 %v1273
      %v1453 = vunpack.c.l.b16 %v1274
      %v1454 = vunpack.c.h.b16 %v1274
      %v1455 = vunpack.c.l.b16 %v1275
      %v1456 = vunpack.c.h.b16 %v1275
      %v1457 = vunpack.c.l.b16 %v1276
      %v1458 = vunpack.c.h.b16 %v1276
      %v1459 = vunpack.c.l.b16 %v1277
      %v1460 = vunpack.c.h.b16 %v1277
      %v1461 = vunpack.c.l.b16 %v1278
      %v1462 = vunpack.c.h.b16 %v1278
      %v1463 = vunpack.c.l.b16 %v1279
      %v1464 = vunpack.c.h.b16 %v1279
      %v1465 = vunpack.c.l.b16 %v1280
      %v1466 = vunpack.c.h.b16 %v1280
      %v1467 = vunpack.c.l.b16 %v1281
      %v1468 = vunpack.c.h.b16 %v1281
      %v1469 = vunpack.c.l.b16 %v1282
      %v1470 = vunpack.c.h.b16 %v1282
      %v1471 = vunpack.c.l.b16 %v1283
      %v1472 = vunpack.c.h.b16 %v1283
      %v1473 = vunpack.c.l.b16 %v1284
      %v1474 = vunpack.c.h.b16 %v1284
      %v1475 = vunpack.c.l.b16 %v1285
      %v1476 = vunpack.c.h.b16 %v1285
      %v1477 = vunpack.c.l.b16 %v1286
      %v1478 = vunpack.c.h.b16 %v1286
      %v1479 = vpack.c.b16 %v1353, %v1351
      %v1480 = vpack.c.b16 %v1354, %v1352
      %v1481 = vpack.c.b16 %v1357, %v1355
      %v1482 = vpack.c.b16 %v1358, %v1356
      %v1483 = vpack.c.b16 %v1361, %v1359
      %v1484 = vpack.c.b16 %v1362, %v1360
      %v1485 = vpack.c.b16 %v1365, %v1363
      %v1486 = vpack.c.b16 %v1366, %v1364
      %v1487 = vpack.c.b16 %v1369, %v1367
      %v1488 = vpack.c.b16 %v1370, %v1368
      %v1489 = vpack.c.b16 %v1373, %v1371
      %v1490 = vpack.c.b16 %v1374, %v1372
      %v1491 = vpack.c.b16 %v1377, %v1375
      %v1492 = vpack.c.b16 %v1378, %v1376
      %v1493 = vpack.c.b16 %v1381, %v1379
      %v1494 = vpack.c.b16 %v1382, %v1380
      %v1495 = vpack.c.b16 %v1385, %v1383
      %v1496 = vpack.c.b16 %v1386, %v1384
      %v1497 = vpack.c.b16 %v1389, %v1387
      %v1498 = vpack.c.b16 %v1390, %v1388
      %v1499 = vpack.c.b16 %v1393, %v1391
      %v1500 = vpack.c.b16 %v1394, %v1392
      %v1501 = vpack.c.b16 %v1397, %v1395
      %v1502 = vpack.c.b16 %v1398, %v1396
      %v1503 = vpack.c.b16 %v1401, %v1399
      %v1504 = vpack.c.b16 %v1402, %v1400
      %v1505 = vpack.c.b16 %v1405, %v1403
      %v1506 = vpack.c.b16 %v1406, %v1404
      %v1507 = vpack.c.b16 %v1409, %v1407
      %v1508 = vpack.c.b16 %v1410, %v1408
      %v1509 = vpack.c.b16 %v1413, %v1411
      %v1510 = vpack.c.b16 %v1414, %v1412
      %v1511 = vpack.c.b16 %v1417, %v1415
      %v1512 = vpack.c.b16 %v1418, %v1416
      %v1513 = vpack.c.b16 %v1421, %v1419
      %v1514 = vpack.c.b16 %v1422, %v1420
      %v1515 = vpack.c.b16 %v1425, %v1423
      %v1516 = vpack.c.b16 %v1426, %v1424
      %v1517 = vpack.c.b16 %v1429, %v1427
      %v1518 = vpack.c.b16 %v1430, %v1428
      %v1519 = vpack.c.b16 %v1433, %v1431
      %v1520 = vpack.c.b16 %v1434, %v1432
      %v1521 = vpack.c.b16 %v1437, %v1435
      %v1522 = vpack.c.b16 %v1438, %v1436
      %v1523 = vpack.c.b16 %v1441, %v1439
      %v1524 = vpack.c.b16 %v1442, %v1440
      %v1525 = vpack.c.b16 %v1445, %v1443
      %v1526 = vpack.c.b16 %v1446, %v1444
      %v1527 = vpack.c.b16 %v1449, %v1447
      %v1528 = vpack.c.b16 %v1450, %v1448
      %v1529 = vpack.c.b16 %v1453, %v1451
      %v1530 = vpack.c.b16 %v1454, %v1452
      %v1531 = vpack.c.b16 %v1457, %v1455
      %v1532 = vpack.c.b16 %v1458, %v1456
      %v1533 = vpack.c.b16 %v1461, %v1459
      %v1534 = vpack.c.b16 %v1462, %v1460
      %v1535 = vpack.c.b16 %v1465, %v1463
      %v1536 = vpack.c.b16 %v1466, %v1464
      %v1537 = vpack.c.b16 %v1469, %v1467
      %v1538 = vpack.c.b16 %v1470, %v1468
      %v1539 = vpack.c.b16 %v1473, %v1471
      %v1540 = vpack.c.b16 %v1474, %v1472
      %v1541 = vpack.c.b16 %v1477, %v1475
      %v1542 = vpack.c.b16 %v1478, %v1476
      %v1576 = vsel %vm769, %v1480, 0
      %v1579 = vsel %vm769, %v1482, 0
      %v1582 = vsel %vm769, %v1484, 0
      %v1585 = vsel %vm769, %v1486, 0
      %v1588 = vsel %vm769, %v1488, 0
      %v1591 = vsel %vm769, %v1490, 0
      %v1594 = vsel %vm769, %v1492, 0
      %v1597 = vsel %vm769, %v1494, 0
      %v1600 = vsel %vm769, %v1496, 0
      %v1603 = vsel %vm769, %v1498, 0
      %v1606 = vsel %vm769, %v1500, 0
      %v1609 = vsel %vm769, %v1502, 0
      %v1612 = vsel %vm769, %v1504, 0
      %v1615 = vsel %vm769, %v1506, 0
      %v1618 = vsel %vm769, %v1508, 0
      %v1621 = vsel %vm769, %v1510, 0
      %v1624 = vsel %vm769, %v1512, 0
      %v1627 = vsel %vm769, %v1514, 0
      %v1630 = vsel %vm769, %v1516, 0
      %v1633 = vsel %vm769, %v1518, 0
      %v1636 = vsel %vm769, %v1520, 0
      %v1639 = vsel %vm769, %v1522, 0
      %v1642 = vsel %vm769, %v1524, 0
      %v1645 = vsel %vm769, %v1526, 0
      %v1648 = vsel %vm769, %v1528, 0
      %v1651 = vsel %vm769, %v1530, 0
      %v1654 = vsel %vm769, %v1532, 0
      %v1657 = vsel %vm769, %v1534, 0
      %v1660 = vsel %vm769, %v1536, 0
      %v1663 = vsel %vm769, %v1538, 0
      %v1666 = vsel %vm769, %v1540, 0
      %v1669 = vsel %vm769, %v1542, 0
      %1671 = vmatprep.subr.bf16.mxu0 0
      %1672 = vmatpush1.bf16.msra.mxu0 %v750
      %1673 = vmatprep.subr.bf16.mxu0 0
      %1674 = vmatpush1.bf16.msra.mxu0 %v751
      %1675 = vmatprep.subr.bf16.mxu0 0
      %1676 = vmatpush1.bf16.msra.mxu0 %v752
      %1677 = vmatprep.subr.bf16.mxu0 0
      %1678 = vmatpush1.bf16.msra.mxu0 %v753
      %1679 = vmatprep.subr.bf16.mxu0 0
      %1680 = vmatpush1.bf16.msra.mxu0 %v754
      %1681 = vmatprep.subr.bf16.mxu0 0
      %1682 = vmatpush1.bf16.msra.mxu0 %v755
      %1683 = vmatprep.subr.bf16.mxu0 0
      %1684 = vmatpush1.bf16.msra.mxu0 %v756
      %1685 = vmatprep.subr.bf16.mxu0 0
      %1686 = vmatpush1.bf16.msra.mxu0 %v757
      %1687 = vmatprep.subr.bf16.mxu0 0
      %1688 = vmatpush1.bf16.msra.mxu0 %v758
      %1689 = vmatprep.subr.bf16.mxu0 0
      %1690 = vmatpush1.bf16.msra.mxu0 %v868
      %1691 = vmatprep.subr.bf16.mxu0 0
      %1692 = vmatpush1.bf16.msra.mxu0 0
      %1693 = vmatprep.subr.bf16.mxu0 0
      %1694 = vmatpush1.bf16.msra.mxu0 0
      %1695 = vmatprep.subr.bf16.mxu0 0
      %1696 = vmatpush1.bf16.msra.mxu0 0
      %1697 = vmatprep.subr.bf16.mxu0 0
      %1698 = vmatpush1.bf16.msra.mxu0 0
      %1699 = vmatprep.subr.bf16.mxu0 0
      %1700 = vmatpush1.bf16.msra.mxu0 0
      %1701 = vmatprep.subr.bf16.mxu0 0
      %1702 = vmatpush1.bf16.msra.mxu0 0
      %1703 = vmatprep.mubr.bf16.mxu0 %v1576
      %1704 = vmatmul.mubr.bf16.gmra.mrb[0].mxu0 %v1479
      %v1705 = vpop.f32.mrb[0].mxu0
      %v1706 = vadd.f32 %v422, %v1705
      %v1707 = vpop.f32.mrb[0].mxu0
      %v1708 = vpop.f32.mrb[0].mxu0
      %v1709 = vadd.f32 %v422, %v1708
      %v1710 = vpop.f32.mrb[0].mxu0
      %1711 = vmatprep.mubr.bf16.mxu0 %v1579
      %1712 = vmatmul.mubr.bf16.gmra.mrb[0].mxu0 %v1481
      %v1713 = vpop.f32.mrb[0].mxu0
      %v1714 = vadd.f32 %v422, %v1713
      %v1715 = vpop.f32.mrb[0].mxu0
      %v1716 = vpop.f32.mrb[0].mxu0
      %v1717 = vadd.f32 %v422, %v1716
      %v1718 = vpop.f32.mrb[0].mxu0
      %1719 = vmatprep.mubr.bf16.mxu0 %v1582
      %1720 = vmatmul.mubr.bf16.gmra.mrb[0].mxu0 %v1483
      %v1721 = vpop.f32.mrb[0].mxu0
      %v1722 = vadd.f32 %v422, %v1721
      %v1723 = vpop.f32.mrb[0].mxu0
      %v1724 = vpop.f32.mrb[0].mxu0
      %v1725 = vadd.f32 %v422, %v1724
      %v1726 = vpop.f32.mrb[0].mxu0
      %1727 = vmatprep.mubr.bf16.mxu0 %v1585
      %1728 = vmatmul.mubr.bf16.gmra.mrb[0].mxu0 %v1485
      %v1729 = vpop.f32.mrb[0].mxu0
      %v1730 = vadd.f32 %v422, %v1729
      %v1731 = vpop.f32.mrb[0].mxu0
      %v1732 = vpop.f32.mrb[0].mxu0
      %v1733 = vadd.f32 %v422, %v1732
      %v1734 = vpop.f32.mrb[0].mxu0
      %1735 = vmatprep.mubr.bf16.mxu0 %v1588
      %1736 = vmatmul.mubr.bf16.gmra.mrb[0].mxu0 %v1487
      %v1737 = vpop.f32.mrb[0].mxu0
      %v1738 = vadd.f32 %v422, %v1737
      %v1739 = vpop.f32.mrb[0].mxu0
      %v1740 = vpop.f32.mrb[0].mxu0
      %v1741 = vadd.f32 %v422, %v1740
      %v1742 = vpop.f32.mrb[0].mxu0
      %1743 = vmatprep.mubr.bf16.mxu0 %v1591
      %1744 = vmatmul.mubr.bf16.gmra.mrb[0].mxu0 %v1489
      %v1745 = vpop.f32.mrb[0].mxu0
      %v1746 = vadd.f32 %v422, %v1745
      %v1747 = vpop.f32.mrb[0].mxu0
      %v1748 = vpop.f32.mrb[0].mxu0
      %v1749 = vadd.f32 %v422, %v1748
      %v1750 = vpop.f32.mrb[0].mxu0
      %1751 = vmatprep.mubr.bf16.mxu0 %v1594
      %1752 = vmatmul.mubr.bf16.gmra.mrb[0].mxu0 %v1491
      %v1753 = vpop.f32.mrb[0].mxu0
      %v1754 = vadd.f32 %v422, %v1753
      %v1755 = vpop.f32.mrb[0].mxu0
      %v1756 = vpop.f32.mrb[0].mxu0
      %v1757 = vadd.f32 %v422, %v1756
      %v1758 = vpop.f32.mrb[0].mxu0
      %1759 = vmatprep.mubr.bf16.mxu0 %v1597
      %1760 = vmatmul.mubr.bf16.gmra.mrb[0].mxu0 %v1493
      %v1761 = vpop.f32.mrb[0].mxu0
      %v1762 = vadd.f32 %v422, %v1761
      %v1763 = vpop.f32.mrb[0].mxu0
      %v1764 = vpop.f32.mrb[0].mxu0
      %v1765 = vadd.f32 %v422, %v1764
      %v1766 = vpop.f32.mrb[0].mxu0
      %1767 = vmatprep.mubr.bf16.mxu0 %v1600
      %1768 = vmatmul.mubr.bf16.gmra.mrb[0].mxu0 %v1495
      %v1769 = vpop.f32.mrb[0].mxu0
      %v1770 = vadd.f32 %v422, %v1769
      %v1771 = vpop.f32.mrb[0].mxu0
      %v1772 = vpop.f32.mrb[0].mxu0
      %v1773 = vadd.f32 %v422, %v1772
      %v1774 = vpop.f32.mrb[0].mxu0
      %1775 = vmatprep.mubr.bf16.mxu0 %v1603
      %1776 = vmatmul.mubr.bf16.gmra.mrb[0].mxu0 %v1497
      %v1777 = vpop.f32.mrb[0].mxu0
      %v1778 = vadd.f32 %v422, %v1777
      %v1779 = vpop.f32.mrb[0].mxu0
      %v1780 = vpop.f32.mrb[0].mxu0
      %v1781 = vadd.f32 %v422, %v1780
      %v1782 = vpop.f32.mrb[0].mxu0
      %1783 = vmatprep.mubr.bf16.mxu0 %v1606
      %1784 = vmatmul.mubr.bf16.gmra.mrb[0].mxu0 %v1499
      %v1785 = vpop.f32.mrb[0].mxu0
      %v1786 = vadd.f32 %v422, %v1785
      %v1787 = vpop.f32.mrb[0].mxu0
      %v1788 = vpop.f32.mrb[0].mxu0
      %v1789 = vadd.f32 %v422, %v1788
      %v1790 = vpop.f32.mrb[0].mxu0
      %1791 = vmatprep.mubr.bf16.mxu0 %v1609
      %1792 = vmatmul.mubr.bf16.gmra.mrb[0].mxu0 %v1501
      %v1793 = vpop.f32.mrb[0].mxu0
      %v1794 = vadd.f32 %v422, %v1793
      %v1795 = vpop.f32.mrb[0].mxu0
      %v1796 = vpop.f32.mrb[0].mxu0
      %v1797 = vadd.f32 %v422, %v1796
      %v1798 = vpop.f32.mrb[0].mxu0
      %1799 = vmatprep.mubr.bf16.mxu0 %v1612
      %1800 = vmatmul.mubr.bf16.gmra.mrb[0].mxu0 %v1503
      %v1801 = vpop.f32.mrb[0].mxu0
      %v1802 = vadd.f32 %v422, %v1801
      %v1803 = vpop.f32.mrb[0].mxu0
      %v1804 = vpop.f32.mrb[0].mxu0
      %v1805 = vadd.f32 %v422, %v1804
      %v1806 = vpop.f32.mrb[0].mxu0
      %1807 = vmatprep.mubr.bf16.mxu0 %v1615
      %1808 = vmatmul.mubr.bf16.gmra.mrb[0].mxu0 %v1505
      %v1809 = vpop.f32.mrb[0].mxu0
      %v1810 = vadd.f32 %v422, %v1809
      %v1811 = vpop.f32.mrb[0].mxu0
      %v1812 = vpop.f32.mrb[0].mxu0
      %v1813 = vadd.f32 %v422, %v1812
      %v1814 = vpop.f32.mrb[0].mxu0
      %1815 = vmatprep.mubr.bf16.mxu0 %v1618
      %1816 = vmatmul.mubr.bf16.gmra.mrb[0].mxu0 %v1507
      %v1817 = vpop.f32.mrb[0].mxu0
      %v1818 = vadd.f32 %v422, %v1817
      %v1819 = vpop.f32.mrb[0].mxu0
      %v1820 = vpop.f32.mrb[0].mxu0
      %v1821 = vadd.f32 %v422, %v1820
      %v1822 = vpop.f32.mrb[0].mxu0
      %1823 = vmatprep.mubr.bf16.mxu0 %v1621
      %1824 = vmatmul.mubr.bf16.gmra.mrb[0].mxu0 %v1509
      %v1825 = vpop.f32.mrb[0].mxu0
      %v1826 = vadd.f32 %v422, %v1825
      %v1827 = vpop.f32.mrb[0].mxu0
      %v1828 = vpop.f32.mrb[0].mxu0
      %v1829 = vadd.f32 %v422, %v1828
      %v1830 = vpop.f32.mrb[0].mxu0
      %1831 = vmatprep.mubr.bf16.mxu0 %v1624
      %1832 = vmatmul.mubr.bf16.gmra.mrb[0].mxu0 %v1511
      %v1833 = vpop.f32.mrb[0].mxu0
      %v1834 = vadd.f32 %v422, %v1833
      %v1835 = vpop.f32.mrb[0].mxu0
      %v1836 = vpop.f32.mrb[0].mxu0
      %v1837 = vadd.f32 %v422, %v1836
      %v1838 = vpop.f32.mrb[0].mxu0
      %1839 = vmatprep.mubr.bf16.mxu0 %v1627
      %1840 = vmatmul.mubr.bf16.gmra.mrb[0].mxu0 %v1513
      %v1841 = vpop.f32.mrb[0].mxu0
      %v1842 = vadd.f32 %v422, %v1841
      %v1843 = vpop.f32.mrb[0].mxu0
      %v1844 = vpop.f32.mrb[0].mxu0
      %v1845 = vadd.f32 %v422, %v1844
      %v1846 = vpop.f32.mrb[0].mxu0
      %1847 = vmatprep.mubr.bf16.mxu0 %v1630
      %1848 = vmatmul.mubr.bf16.gmra.mrb[0].mxu0 %v1515
      %v1849 = vpop.f32.mrb[0].mxu0
      %v1850 = vadd.f32 %v422, %v1849
      %v1851 = vpop.f32.mrb[0].mxu0
      %v1852 = vpop.f32.mrb[0].mxu0
      %v1853 = vadd.f32 %v422, %v1852
      %v1854 = vpop.f32.mrb[0].mxu0
      %1855 = vmatprep.mubr.bf16.mxu0 %v1633
      %1856 = vmatmul.mubr.bf16.gmra.mrb[0].mxu0 %v1517
      %v1857 = vpop.f32.mrb[0].mxu0
      %v1858 = vadd.f32 %v422, %v1857
      %v1859 = vpop.f32.mrb[0].mxu0
      %v1860 = vpop.f32.mrb[0].mxu0
      %v1861 = vadd.f32 %v422, %v1860
      %v1862 = vpop.f32.mrb[0].mxu0
      %1863 = vmatprep.mubr.bf16.mxu0 %v1636
      %1864 = vmatmul.mubr.bf16.gmra.mrb[0].mxu0 %v1519
      %v1865 = vpop.f32.mrb[0].mxu0
      %v1866 = vadd.f32 %v422, %v1865
      %v1867 = vpop.f32.mrb[0].mxu0
      %v1868 = vpop.f32.mrb[0].mxu0
      %v1869 = vadd.f32 %v422, %v1868
      %v1870 = vpop.f32.mrb[0].mxu0
      %1871 = vmatprep.mubr.bf16.mxu0 %v1639
      %1872 = vmatmul.mubr.bf16.gmra.mrb[0].mxu0 %v1521
      %v1873 = vpop.f32.mrb[0].mxu0
      %v1874 = vadd.f32 %v422, %v1873
      %v1875 = vpop.f32.mrb[0].mxu0
      %v1876 = vpop.f32.mrb[0].mxu0
      %v1877 = vadd.f32 %v422, %v1876
      %v1878 = vpop.f32.mrb[0].mxu0
      %1879 = vmatprep.mubr.bf16.mxu0 %v1642
      %1880 = vmatmul.mubr.bf16.gmra.mrb[0].mxu0 %v1523
      %v1881 = vpop.f32.mrb[0].mxu0
      %v1882 = vadd.f32 %v422, %v1881
      %v1883 = vpop.f32.mrb[0].mxu0
      %v1884 = vpop.f32.mrb[0].mxu0
      %v1885 = vadd.f32 %v422, %v1884
      %v1886 = vpop.f32.mrb[0].mxu0
      %1887 = vmatprep.mubr.bf16.mxu0 %v1645
      %1888 = vmatmul.mubr.bf16.gmra.mrb[0].mxu0 %v1525
      %v1889 = vpop.f32.mrb[0].mxu0
      %v1890 = vadd.f32 %v422, %v1889
      %v1891 = vpop.f32.mrb[0].mxu0
      %v1892 = vpop.f32.mrb[0].mxu0
      %v1893 = vadd.f32 %v422, %v1892
      %v1894 = vpop.f32.mrb[0].mxu0
      %1895 = vmatprep.mubr.bf16.mxu0 %v1648
      %1896 = vmatmul.mubr.bf16.gmra.mrb[0].mxu0 %v1527
      %v1897 = vpop.f32.mrb[0].mxu0
      %v1898 = vadd.f32 %v422, %v1897
      %v1899 = vpop.f32.mrb[0].mxu0
      %v1900 = vpop.f32.mrb[0].mxu0
      %v1901 = vadd.f32 %v422, %v1900
      %v1902 = vpop.f32.mrb[0].mxu0
      %1903 = vmatprep.mubr.bf16.mxu0 %v1651
      %1904 = vmatmul.mubr.bf16.gmra.mrb[0].mxu0 %v1529
      %v1905 = vpop.f32.mrb[0].mxu0
      %v1906 = vadd.f32 %v422, %v1905
      %v1907 = vpop.f32.mrb[0].mxu0
      %v1908 = vpop.f32.mrb[0].mxu0
      %v1909 = vadd.f32 %v422, %v1908
      %v1910 = vpop.f32.mrb[0].mxu0
      %1911 = vmatprep.mubr.bf16.mxu0 %v1654
      %1912 = vmatmul.mubr.bf16.gmra.mrb[0].mxu0 %v1531
      %v1913 = vpop.f32.mrb[0].mxu0
      %v1914 = vadd.f32 %v422, %v1913
      %v1915 = vpop.f32.mrb[0].mxu0
      %v1916 = vpop.f32.mrb[0].mxu0
      %v1917 = vadd.f32 %v422, %v1916
      %v1918 = vpop.f32.mrb[0].mxu0
      %1919 = vmatprep.mubr.bf16.mxu0 %v1657
      %1920 = vmatmul.mubr.bf16.gmra.mrb[0].mxu0 %v1533
      %v1921 = vpop.f32.mrb[0].mxu0
      %v1922 = vadd.f32 %v422, %v1921
      %v1923 = vpop.f32.mrb[0].mxu0
      %v1924 = vpop.f32.mrb[0].mxu0
      %v1925 = vadd.f32 %v422, %v1924
      %v1926 = vpop.f32.mrb[0].mxu0
      %1927 = vmatprep.mubr.bf16.mxu0 %v1660
      %1928 = vmatmul.mubr.bf16.gmra.mrb[0].mxu0 %v1535
      %v1929 = vpop.f32.mrb[0].mxu0
      %v1930 = vadd.f32 %v422, %v1929
      %v1931 = vpop.f32.mrb[0].mxu0
      %v1932 = vpop.f32.mrb[0].mxu0
      %v1933 = vadd.f32 %v422, %v1932
      %v1934 = vpop.f32.mrb[0].mxu0
      %1935 = vmatprep.mubr.bf16.mxu0 %v1663
      %1936 = vmatmul.mubr.bf16.gmra.mrb[0].mxu0 %v1537
      %v1937 = vpop.f32.mrb[0].mxu0
      %v1938 = vadd.f32 %v422, %v1937
      %v1939 = vpop.f32.mrb[0].mxu0
      %v1940 = vpop.f32.mrb[0].mxu0
      %v1941 = vadd.f32 %v422, %v1940
      %v1942 = vpop.f32.mrb[0].mxu0
      %1943 = vmatprep.mubr.bf16.mxu0 %v1666
      %1944 = vmatmul.mubr.bf16.gmra.mrb[0].mxu0 %v1539
      %v1945 = vpop.f32.mrb[0].mxu0
      %v1946 = vadd.f32 %v422, %v1945
      %v1947 = vpop.f32.mrb[0].mxu0
      %v1948 = vpop.f32.mrb[0].mxu0
      %v1949 = vadd.f32 %v422, %v1948
      %v1950 = vpop.f32.mrb[0].mxu0
      %1951 = vmatprep.mubr.bf16.mxu0 %v1669
      %1952 = vmatmul.mubr.bf16.gmra.mrb[0].mxu0 %v1541
      %v1953 = vpop.f32.mrb[0].mxu0
      %v1954 = vadd.f32 %v422, %v1953
      %v1955 = vpop.f32.mrb[0].mxu0
      %v1956 = vpop.f32.mrb[0].mxu0
      %v1957 = vadd.f32 %v422, %v1956
      %v1958 = vpop.f32.mrb[0].mxu0
      %1959 = vdwg.mxu0
      %v1960 = vmax.f32 %v1706, 0.0
      %v1961 = vmax.f32 %v1709, 0.0
      %v1962 = vmax.f32 %v1714, 0.0
      %v1963 = vmax.f32 %v1717, 0.0
      %v1964 = vmax.f32 %v1722, 0.0
      %v1965 = vmax.f32 %v1725, 0.0
      %v1966 = vmax.f32 %v1730, 0.0
      %v1967 = vmax.f32 %v1733, 0.0
      %v1968 = vmax.f32 %v1738, 0.0
      %v1969 = vmax.f32 %v1741, 0.0
      %v1970 = vmax.f32 %v1746, 0.0
      %v1971 = vmax.f32 %v1749, 0.0
      %v1972 = vmax.f32 %v1754, 0.0
      %v1973 = vmax.f32 %v1757, 0.0
      %v1974 = vmax.f32 %v1762, 0.0
      %v1975 = vmax.f32 %v1765, 0.0
      %v1976 = vmax.f32 %v1770, 0.0
      %v1977 = vmax.f32 %v1773, 0.0
      %v1978 = vmax.f32 %v1778, 0.0
      %v1979 = vmax.f32 %v1781, 0.0
      %v1980 = vmax.f32 %v1786, 0.0
      %v1981 = vmax.f32 %v1789, 0.0
      %v1982 = vmax.f32 %v1794, 0.0
      %v1983 = vmax.f32 %v1797, 0.0
      %v1984 = vmax.f32 %v1802, 0.0
      %v1985 = vmax.f32 %v1805, 0.0
      %v1986 = vmax.f32 %v1810, 0.0
      %v1987 = vmax.f32 %v1813, 0.0
      %v1988 = vmax.f32 %v1818, 0.0
      %v1989 = vmax.f32 %v1821, 0.0
      %v1990 = vmax.f32 %v1826, 0.0
      %v1991 = vmax.f32 %v1829, 0.0
      %v1992 = vmax.f32 %v1834, 0.0
      %v1993 = vmax.f32 %v1837, 0.0
      %v1994 = vmax.f32 %v1842, 0.0
      %v1995 = vmax.f32 %v1845, 0.0
      %v1996 = vmax.f32 %v1850, 0.0
      %v1997 = vmax.f32 %v1853, 0.0
      %v1998 = vmax.f32 %v1858, 0.0
      %v1999 = vmax.f32 %v1861, 0.0
      %v2000 = vmax.f32 %v1866, 0.0
      %v2001 = vmax.f32 %v1869, 0.0
      %v2002 = vmax.f32 %v1874, 0.0
      %v2003 = vmax.f32 %v1877, 0.0
      %v2004 = vmax.f32 %v1882, 0.0
      %v2005 = vmax.f32 %v1885, 0.0
      %v2006 = vmax.f32 %v1890, 0.0
      %v2007 = vmax.f32 %v1893, 0.0
      %v2008 = vmax.f32 %v1898, 0.0
      %v2009 = vmax.f32 %v1901, 0.0
      %v2010 = vmax.f32 %v1906, 0.0
      %v2011 = vmax.f32 %v1909, 0.0
      %v2012 = vmax.f32 %v1914, 0.0
      %v2013 = vmax.f32 %v1917, 0.0
      %v2014 = vmax.f32 %v1922, 0.0
      %v2015 = vmax.f32 %v1925, 0.0
      %v2016 = vmax.f32 %v1930, 0.0
      %v2017 = vmax.f32 %v1933, 0.0
      %v2018 = vmax.f32 %v1938, 0.0
      %v2019 = vmax.f32 %v1941, 0.0
      %v2020 = vmax.f32 %v1946, 0.0
      %v2021 = vmax.f32 %v1949, 0.0
      %v2022 = vmax.f32 %v1954, 0.0
      %v2023 = vmax.f32 %v1957, 0.0
      %v2024 = vmax.f32 %v1159, %v1960
      %v2025 = vmax.f32 %v1160, %v1961
      %v2026 = vmax.f32 %v1161, %v1962
      %v2027 = vmax.f32 %v1162, %v1963
      %v2028 = vmax.f32 %v1163, %v1964
      %v2029 = vmax.f32 %v1164, %v1965
      %v2030 = vmax.f32 %v1165, %v1966
      %v2031 = vmax.f32 %v1166, %v1967
      %v2032 = vmax.f32 %v1167, %v1968
      %v2033 = vmax.f32 %v1168, %v1969
      %v2034 = vmax.f32 %v1169, %v1970
      %v2035 = vmax.f32 %v1170, %v1971
      %v2036 = vmax.f32 %v1171, %v1972
      %v2037 = vmax.f32 %v1172, %v1973
      %v2038 = vmax.f32 %v1173, %v1974
      %v2039 = vmax.f32 %v1174, %v1975
      %v2040 = vmax.f32 %v1175, %v1976
      %v2041 = vmax.f32 %v1176, %v1977
      %v2042 = vmax.f32 %v1177, %v1978
      %v2043 = vmax.f32 %v1178, %v1979
      %v2044 = vmax.f32 %v1179, %v1980
      %v2045 = vmax.f32 %v1180, %v1981
      %v2046 = vmax.f32 %v1181, %v1982
      %v2047 = vmax.f32 %v1182, %v1983
      %v2048 = vmax.f32 %v1183, %v1984
      %v2049 = vmax.f32 %v1184, %v1985
      %v2050 = vmax.f32 %v1185, %v1986
      %v2051 = vmax.f32 %v1186, %v1987
      %v2052 = vmax.f32 %v1187, %v1988
      %v2053 = vmax.f32 %v1188, %v1989
      %v2054 = vmax.f32 %v1189, %v1990
      %v2055 = vmax.f32 %v1190, %v1991
      %v2056 = vmax.f32 %v1191, %v1992
      %v2057 = vmax.f32 %v1192, %v1993
      %v2058 = vmax.f32 %v1193, %v1994
      %v2059 = vmax.f32 %v1194, %v1995
      %v2060 = vmax.f32 %v1195, %v1996
      %v2061 = vmax.f32 %v1196, %v1997
      %v2062 = vmax.f32 %v1197, %v1998
      %v2063 = vmax.f32 %v1198, %v1999
      %v2064 = vmax.f32 %v1199, %v2000
      %v2065 = vmax.f32 %v1200, %v2001
      %v2066 = vmax.f32 %v1201, %v2002
      %v2067 = vmax.f32 %v1202, %v2003
      %v2068 = vmax.f32 %v1203, %v2004
      %v2069 = vmax.f32 %v1204, %v2005
      %v2070 = vmax.f32 %v1205, %v2006
      %v2071 = vmax.f32 %v1206, %v2007
      %v2072 = vmax.f32 %v1207, %v2008
      %v2073 = vmax.f32 %v1208, %v2009
      %v2074 = vmax.f32 %v1209, %v2010
      %v2075 = vmax.f32 %v1210, %v2011
      %v2076 = vmax.f32 %v1211, %v2012
      %v2077 = vmax.f32 %v1212, %v2013
      %v2078 = vmax.f32 %v1213, %v2014
      %v2079 = vmax.f32 %v1214, %v2015
      %v2080 = vmax.f32 %v1215, %v2016
      %v2081 = vmax.f32 %v1216, %v2017
      %v2082 = vmax.f32 %v1217, %v2018
      %v2083 = vmax.f32 %v1218, %v2019
      %v2084 = vmax.f32 %v1219, %v2020
      %v2085 = vmax.f32 %v1220, %v2021
      %v2086 = vmax.f32 %v1221, %v2022
      %v2087 = vmax.f32 %v1222, %v2023
      %v2088 = vld [vmem:[%s318] sm:$0xff]
      %v2089 = vld [vmem:[%s318 + $0x8] sm:$0xff]
      %v2090 = vld [vmem:[%s318 + $0x10] sm:$0xff]
      %v2091 = vld [vmem:[%s318 + $0x18] sm:$0xff]
      %v2092 = vld [vmem:[%s318 + $0x20] sm:$0xff]
      %v2093 = vld [vmem:[%s318 + $0x28] sm:$0xff]
      %v2094 = vld [vmem:[%s318 + $0x30] sm:$0xff]
      %v2095 = vld [vmem:[%s318 + $0x38] sm:$0xff]
      %v2096 = vld [vmem:[%s318 + $0x40] sm:$0xff]
      %v2097 = vld [vmem:[%s318 + $0x48] sm:$0xff]
      %v2098 = vld [vmem:[%s318 + $0x50] sm:$0xff]
      %v2099 = vld [vmem:[%s318 + $0x58] sm:$0xff]
      %v2100 = vld [vmem:[%s318 + $0x60] sm:$0xff]
      %v2101 = vld [vmem:[%s318 + $0x68] sm:$0xff]
      %v2102 = vld [vmem:[%s318 + $0x70] sm:$0xff]
      %v2103 = vld [vmem:[%s318 + $0x78] sm:$0xff]
      %v2104 = vld [vmem:[%s318 + $0x80] sm:$0xff]
      %v2105 = vld [vmem:[%s318 + $0x88] sm:$0xff]
      %v2106 = vld [vmem:[%s318 + $0x90] sm:$0xff]
      %v2107 = vld [vmem:[%s318 + $0x98] sm:$0xff]
      %v2108 = vld [vmem:[%s318 + $0xa0] sm:$0xff]
      %v2109 = vld [vmem:[%s318 + $0xa8] sm:$0xff]
      %v2110 = vld [vmem:[%s318 + $0xb0] sm:$0xff]
      %v2111 = vld [vmem:[%s318 + $0xb8] sm:$0xff]
      %v2112 = vld [vmem:[%s318 + $0xc0] sm:$0xff]
      %v2113 = vld [vmem:[%s318 + $0xc8] sm:$0xff]
      %v2114 = vld [vmem:[%s318 + $0xd0] sm:$0xff]
      %v2115 = vld [vmem:[%s318 + $0xd8] sm:$0xff]
      %v2116 = vld [vmem:[%s318 + $0xe0] sm:$0xff]
      %v2117 = vld [vmem:[%s318 + $0xe8] sm:$0xff]
      %v2118 = vld [vmem:[%s318 + $0xf0] sm:$0xff]
      %v2119 = vld [vmem:[%s318 + $0xf8] sm:$0xff]
      %v2120 = vld [vmem:[%s318 + $0x100] sm:$0xff]
      %v2121 = vld [vmem:[%s318 + $0x108] sm:$0xff]
      %v2122 = vld [vmem:[%s318 + $0x110] sm:$0xff]
      %v2123 = vld [vmem:[%s318 + $0x118] sm:$0xff]
      %v2124 = vld [vmem:[%s318 + $0x120] sm:$0xff]
      %v2125 = vld [vmem:[%s318 + $0x128] sm:$0xff]
      %v2126 = vld [vmem:[%s318 + $0x130] sm:$0xff]
      %v2127 = vld [vmem:[%s318 + $0x138] sm:$0xff]
      %v2128 = vld [vmem:[%s318 + $0x140] sm:$0xff]
      %v2129 = vld [vmem:[%s318 + $0x148] sm:$0xff]
      %v2130 = vld [vmem:[%s318 + $0x150] sm:$0xff]
      %v2131 = vld [vmem:[%s318 + $0x158] sm:$0xff]
      %v2132 = vld [vmem:[%s318 + $0x160] sm:$0xff]
      %v2133 = vld [vmem:[%s318 + $0x168] sm:$0xff]
      %v2134 = vld [vmem:[%s318 + $0x170] sm:$0xff]
      %v2135 = vld [vmem:[%s318 + $0x178] sm:$0xff]
      %v2136 = vld [vmem:[%s318 + $0x180] sm:$0xff]
      %v2137 = vld [vmem:[%s318 + $0x188] sm:$0xff]
      %v2138 = vld [vmem:[%s318 + $0x190] sm:$0xff]
      %v2139 = vld [vmem:[%s318 + $0x198] sm:$0xff]
      %v2140 = vld [vmem:[%s318 + $0x1a0] sm:$0xff]
      %v2141 = vld [vmem:[%s318 + $0x1a8] sm:$0xff]
      %v2142 = vld [vmem:[%s318 + $0x1b0] sm:$0xff]
      %v2143 = vld [vmem:[%s318 + $0x1b8] sm:$0xff]
      %v2144 = vld [vmem:[%s318 + $0x1c0] sm:$0xff]
      %v2145 = vld [vmem:[%s318 + $0x1c8] sm:$0xff]
      %v2146 = vld [vmem:[%s318 + $0x1d0] sm:$0xff]
      %v2147 = vld [vmem:[%s318 + $0x1d8] sm:$0xff]
      %v2148 = vld [vmem:[%s318 + $0x1e0] sm:$0xff]
      %v2149 = vld [vmem:[%s318 + $0x1e8] sm:$0xff]
      %v2150 = vld [vmem:[%s318 + $0x1f0] sm:$0xff]
      %v2151 = vld [vmem:[%s318 + $0x1f8] sm:$0xff]
      %v2216 = vunpack.c.l.b16 %v2088
      %v2217 = vunpack.c.h.b16 %v2088
      %v2218 = vunpack.c.l.b16 %v2089
      %v2219 = vunpack.c.h.b16 %v2089
      %v2220 = vunpack.c.l.b16 %v2090
      %v2221 = vunpack.c.h.b16 %v2090
      %v2222 = vunpack.c.l.b16 %v2091
      %v2223 = vunpack.c.h.b16 %v2091
      %v2224 = vunpack.c.l.b16 %v2092
      %v2225 = vunpack.c.h.b16 %v2092
      %v2226 = vunpack.c.l.b16 %v2093
      %v2227 = vunpack.c.h.b16 %v2093
      %v2228 = vunpack.c.l.b16 %v2094
      %v2229 = vunpack.c.h.b16 %v2094
      %v2230 = vunpack.c.l.b16 %v2095
      %v2231 = vunpack.c.h.b16 %v2095
      %v2232 = vunpack.c.l.b16 %v2096
      %v2233 = vunpack.c.h.b16 %v2096
      %v2234 = vunpack.c.l.b16 %v2097
      %v2235 = vunpack.c.h.b16 %v2097
      %v2236 = vunpack.c.l.b16 %v2098
      %v2237 = vunpack.c.h.b16 %v2098
      %v2238 = vunpack.c.l.b16 %v2099
      %v2239 = vunpack.c.h.b16 %v2099
      %v2240 = vunpack.c.l.b16 %v2100
      %v2241 = vunpack.c.h.b16 %v2100
      %v2242 = vunpack.c.l.b16 %v2101
      %v2243 = vunpack.c.h.b16 %v2101
      %v2244 = vunpack.c.l.b16 %v2102
      %v2245 = vunpack.c.h.b16 %v2102
      %v2246 = vunpack.c.l.b16 %v2103
      %v2247 = vunpack.c.h.b16 %v2103
      %v2248 = vunpack.c.l.b16 %v2104
      %v2249 = vunpack.c.h.b16 %v2104
      %v2250 = vunpack.c.l.b16 %v2105
      %v2251 = vunpack.c.h.b16 %v2105
      %v2252 = vunpack.c.l.b16 %v2106
      %v2253 = vunpack.c.h.b16 %v2106
      %v2254 = vunpack.c.l.b16 %v2107
      %v2255 = vunpack.c.h.b16 %v2107
      %v2256 = vunpack.c.l.b16 %v2108
      %v2257 = vunpack.c.h.b16 %v2108
      %v2258 = vunpack.c.l.b16 %v2109
      %v2259 = vunpack.c.h.b16 %v2109
      %v2260 = vunpack.c.l.b16 %v2110
      %v2261 = vunpack.c.h.b16 %v2110
      %v2262 = vunpack.c.l.b16 %v2111
      %v2263 = vunpack.c.h.b16 %v2111
      %v2264 = vunpack.c.l.b16 %v2112
      %v2265 = vunpack.c.h.b16 %v2112
      %v2266 = vunpack.c.l.b16 %v2113
      %v2267 = vunpack.c.h.b16 %v2113
      %v2268 = vunpack.c.l.b16 %v2114
      %v2269 = vunpack.c.h.b16 %v2114
      %v2270 = vunpack.c.l.b16 %v2115
      %v2271 = vunpack.c.h.b16 %v2115
      %v2272 = vunpack.c.l.b16 %v2116
      %v2273 = vunpack.c.h.b16 %v2116
      %v2274 = vunpack.c.l.b16 %v2117
      %v2275 = vunpack.c.h.b16 %v2117
      %v2276 = vunpack.c.l.b16 %v2118
      %v2277 = vunpack.c.h.b16 %v2118
      %v2278 = vunpack.c.l.b16 %v2119
      %v2279 = vunpack.c.h.b16 %v2119
      %v2280 = vunpack.c.l.b16 %v2120
      %v2281 = vunpack.c.h.b16 %v2120
      %v2282 = vunpack.c.l.b16 %v2121
      %v2283 = vunpack.c.h.b16 %v2121
      %v2284 = vunpack.c.l.b16 %v2122
      %v2285 = vunpack.c.h.b16 %v2122
      %v2286 = vunpack.c.l.b16 %v2123
      %v2287 = vunpack.c.h.b16 %v2123
      %v2288 = vunpack.c.l.b16 %v2124
      %v2289 = vunpack.c.h.b16 %v2124
      %v2290 = vunpack.c.l.b16 %v2125
      %v2291 = vunpack.c.h.b16 %v2125
      %v2292 = vunpack.c.l.b16 %v2126
      %v2293 = vunpack.c.h.b16 %v2126
      %v2294 = vunpack.c.l.b16 %v2127
      %v2295 = vunpack.c.h.b16 %v2127
      %v2296 = vunpack.c.l.b16 %v2128
      %v2297 = vunpack.c.h.b16 %v2128
      %v2298 = vunpack.c.l.b16 %v2129
      %v2299 = vunpack.c.h.b16 %v2129
      %v2300 = vunpack.c.l.b16 %v2130
      %v2301 = vunpack.c.h.b16 %v2130
      %v2302 = vunpack.c.l.b16 %v2131
      %v2303 = vunpack.c.h.b16 %v2131
      %v2304 = vunpack.c.l.b16 %v2132
      %v2305 = vunpack.c.h.b16 %v2132
      %v2306 = vunpack.c.l.b16 %v2133
      %v2307 = vunpack.c.h.b16 %v2133
      %v2308 = vunpack.c.l.b16 %v2134
      %v2309 = vunpack.c.h.b16 %v2134
      %v2310 = vunpack.c.l.b16 %v2135
      %v2311 = vunpack.c.h.b16 %v2135
      %v2312 = vunpack.c.l.b16 %v2136
      %v2313 = vunpack.c.h.b16 %v2136
      %v2314 = vunpack.c.l.b16 %v2137
      %v2315 = vunpack.c.h.b16 %v2137
      %v2316 = vunpack.c.l.b16 %v2138
      %v2317 = vunpack.c.h.b16 %v2138
      %v2318 = vunpack.c.l.b16 %v2139
      %v2319 = vunpack.c.h.b16 %v2139
      %v2320 = vunpack.c.l.b16 %v2140
      %v2321 = vunpack.c.h.b16 %v2140
      %v2322 = vunpack.c.l.b16 %v2141
      %v2323 = vunpack.c.h.b16 %v2141
      %v2324 = vunpack.c.l.b16 %v2142
      %v2325 = vunpack.c.h.b16 %v2142
      %v2326 = vunpack.c.l.b16 %v2143
      %v2327 = vunpack.c.h.b16 %v2143
      %v2328 = vunpack.c.l.b16 %v2144
      %v2329 = vunpack.c.h.b16 %v2144
      %v2330 = vunpack.c.l.b16 %v2145
      %v2331 = vunpack.c.h.b16 %v2145
      %v2332 = vunpack.c.l.b16 %v2146
      %v2333 = vunpack.c.h.b16 %v2146
      %v2334 = vunpack.c.l.b16 %v2147
      %v2335 = vunpack.c.h.b16 %v2147
      %v2336 = vunpack.c.l.b16 %v2148
      %v2337 = vunpack.c.h.b16 %v2148
      %v2338 = vunpack.c.l.b16 %v2149
      %v2339 = vunpack.c.h.b16 %v2149
      %v2340 = vunpack.c.l.b16 %v2150
      %v2341 = vunpack.c.h.b16 %v2150
      %v2342 = vunpack.c.l.b16 %v2151
      %v2343 = vunpack.c.h.b16 %v2151
      %v2344 = vpack.c.b16 %v2218, %v2216
      %v2345 = vpack.c.b16 %v2219, %v2217
      %v2346 = vpack.c.b16 %v2222, %v2220
      %v2347 = vpack.c.b16 %v2223, %v2221
      %v2348 = vpack.c.b16 %v2226, %v2224
      %v2349 = vpack.c.b16 %v2227, %v2225
      %v2350 = vpack.c.b16 %v2230, %v2228
      %v2351 = vpack.c.b16 %v2231, %v2229
      %v2352 = vpack.c.b16 %v2234, %v2232
      %v2353 = vpack.c.b16 %v2235, %v2233
      %v2354 = vpack.c.b16 %v2238, %v2236
      %v2355 = vpack.c.b16 %v2239, %v2237
      %v2356 = vpack.c.b16 %v2242, %v2240
      %v2357 = vpack.c.b16 %v2243, %v2241
      %v2358 = vpack.c.b16 %v2246, %v2244
      %v2359 = vpack.c.b16 %v2247, %v2245
      %v2360 = vpack.c.b16 %v2250, %v2248
      %v2361 = vpack.c.b16 %v2251, %v2249
      %v2362 = vpack.c.b16 %v2254, %v2252
      %v2363 = vpack.c.b16 %v2255, %v2253
      %v2364 = vpack.c.b16 %v2258, %v2256
      %v2365 = vpack.c.b16 %v2259, %v2257
      %v2366 = vpack.c.b16 %v2262, %v2260
      %v2367 = vpack.c.b16 %v2263, %v2261
      %v2368 = vpack.c.b16 %v2266, %v2264
      %v2369 = vpack.c.b16 %v2267, %v2265
      %v2370 = vpack.c.b16 %v2270, %v2268
      %v2371 = vpack.c.b16 %v2271, %v2269
      %v2372 = vpack.c.b16 %v2274, %v2272
      %v2373 = vpack.c.b16 %v2275, %v2273
      %v2374 = vpack.c.b16 %v2278, %v2276
      %v2375 = vpack.c.b16 %v2279, %v2277
      %v2376 = vpack.c.b16 %v2282, %v2280
      %v2377 = vpack.c.b16 %v2283, %v2281
      %v2378 = vpack.c.b16 %v2286, %v2284
      %v2379 = vpack.c.b16 %v2287, %v2285
      %v2380 = vpack.c.b16 %v2290, %v2288
      %v2381 = vpack.c.b16 %v2291, %v2289
      %v2382 = vpack.c.b16 %v2294, %v2292
      %v2383 = vpack.c.b16 %v2295, %v2293
      %v2384 = vpack.c.b16 %v2298, %v2296
      %v2385 = vpack.c.b16 %v2299, %v2297
      %v2386 = vpack.c.b16 %v2302, %v2300
      %v2387 = vpack.c.b16 %v2303, %v2301
      %v2388 = vpack.c.b16 %v2306, %v2304
      %v2389 = vpack.c.b16 %v2307, %v2305
      %v2390 = vpack.c.b16 %v2310, %v2308
      %v2391 = vpack.c.b16 %v2311, %v2309
      %v2392 = vpack.c.b16 %v2314, %v2312
      %v2393 = vpack.c.b16 %v2315, %v2313
      %v2394 = vpack.c.b16 %v2318, %v2316
      %v2395 = vpack.c.b16 %v2319, %v2317
      %v2396 = vpack.c.b16 %v2322, %v2320
      %v2397 = vpack.c.b16 %v2323, %v2321
      %v2398 = vpack.c.b16 %v2326, %v2324
      %v2399 = vpack.c.b16 %v2327, %v2325
      %v2400 = vpack.c.b16 %v2330, %v2328
      %v2401 = vpack.c.b16 %v2331, %v2329
      %v2402 = vpack.c.b16 %v2334, %v2332
      %v2403 = vpack.c.b16 %v2335, %v2333
      %v2404 = vpack.c.b16 %v2338, %v2336
      %v2405 = vpack.c.b16 %v2339, %v2337
      %v2406 = vpack.c.b16 %v2342, %v2340
      %v2407 = vpack.c.b16 %v2343, %v2341
      %v2441 = vsel %vm769, %v2345, 0
      %v2444 = vsel %vm769, %v2347, 0
      %v2447 = vsel %vm769, %v2349, 0
      %v2450 = vsel %vm769, %v2351, 0
      %v2453 = vsel %vm769, %v2353, 0
      %v2456 = vsel %vm769, %v2355, 0
      %v2459 = vsel %vm769, %v2357, 0
      %v2462 = vsel %vm769, %v2359, 0
      %v2465 = vsel %vm769, %v2361, 0
      %v2468 = vsel %vm769, %v2363, 0
      %v2471 = vsel %vm769, %v2365, 0
      %v2474 = vsel %vm769, %v2367, 0
      %v2477 = vsel %vm769, %v2369, 0
      %v2480 = vsel %vm769, %v2371, 0
      %v2483 = vsel %vm769, %v2373, 0
      %v2486 = vsel %vm769, %v2375, 0
      %v2489 = vsel %vm769, %v2377, 0
      %v2492 = vsel %vm769, %v2379, 0
      %v2495 = vsel %vm769, %v2381, 0
      %v2498 = vsel %vm769, %v2383, 0
      %v2501 = vsel %vm769, %v2385, 0
      %v2504 = vsel %vm769, %v2387, 0
      %v2507 = vsel %vm769, %v2389, 0
      %v2510 = vsel %vm769, %v2391, 0
      %v2513 = vsel %vm769, %v2393, 0
      %v2516 = vsel %vm769, %v2395, 0
      %v2519 = vsel %vm769, %v2397, 0
      %v2522 = vsel %vm769, %v2399, 0
      %v2525 = vsel %vm769, %v2401, 0
      %v2528 = vsel %vm769, %v2403, 0
      %v2531 = vsel %vm769, %v2405, 0
      %v2534 = vsel %vm769, %v2407, 0
      %2536 = vmatprep.subr.bf16.mxu0 0
      %2537 = vmatpush1.bf16.msra.mxu0 %v750
      %2538 = vmatprep.subr.bf16.mxu0 0
      %2539 = vmatpush1.bf16.msra.mxu0 %v751
      %2540 = vmatprep.subr.bf16.mxu0 0
      %2541 = vmatpush1.bf16.msra.mxu0 %v752
      %2542 = vmatprep.subr.bf16.mxu0 0
      %2543 = vmatpush1.bf16.msra.mxu0 %v753
      %2544 = vmatprep.subr.bf16.mxu0 0
      %2545 = vmatpush1.bf16.msra.mxu0 %v754
      %2546 = vmatprep.subr.bf16.mxu0 0
      %2547 = vmatpush1.bf16.msra.mxu0 %v755
      %2548 = vmatprep.subr.bf16.mxu0 0
      %2549 = vmatpush1.bf16.msra.mxu0 %v756
      %2550 = vmatprep.subr.bf16.mxu0 0
      %2551 = vmatpush1.bf16.msra.mxu0 %v757
      %2552 = vmatprep.subr.bf16.mxu0 0
      %2553 = vmatpush1.bf16.msra.mxu0 %v758
      %2554 = vmatprep.subr.bf16.mxu0 0
      %2555 = vmatpush1.bf16.msra.mxu0 %v868
      %2556 = vmatprep.subr.bf16.mxu0 0
      %2557 = vmatpush1.bf16.msra.mxu0 0
      %2558 = vmatprep.subr.bf16.mxu0 0
      %2559 = vmatpush1.bf16.msra.mxu0 0
      %2560 = vmatprep.subr.bf16.mxu0 0
      %2561 = vmatpush1.bf16.msra.mxu0 0
      %2562 = vmatprep.subr.bf16.mxu0 0
      %2563 = vmatpush1.bf16.msra.mxu0 0
      %2564 = vmatprep.subr.bf16.mxu0 0
      %2565 = vmatpush1.bf16.msra.mxu0 0
      %2566 = vmatprep.subr.bf16.mxu0 0
      %2567 = vmatpush1.bf16.msra.mxu0 0
      %2568 = vmatprep.mubr.bf16.mxu0 %v2441
      %2569 = vmatmul.mubr.bf16.gmra.mrb[0].mxu0 %v2344
      %v2570 = vpop.f32.mrb[0].mxu0
      %v2571 = vadd.f32 %v422, %v2570
      %v2572 = vpop.f32.mrb[0].mxu0
      %v2573 = vpop.f32.mrb[0].mxu0
      %v2574 = vadd.f32 %v422, %v2573
      %v2575 = vpop.f32.mrb[0].mxu0
      %2576 = vmatprep.mubr.bf16.mxu0 %v2444
      %2577 = vmatmul.mubr.bf16.gmra.mrb[0].mxu0 %v2346
      %v2578 = vpop.f32.mrb[0].mxu0
      %v2579 = vadd.f32 %v422, %v2578
      %v2580 = vpop.f32.mrb[0].mxu0
      %v2581 = vpop.f32.mrb[0].mxu0
      %v2582 = vadd.f32 %v422, %v2581
      %v2583 = vpop.f32.mrb[0].mxu0
      %2584 = vmatprep.mubr.bf16.mxu0 %v2447
      %2585 = vmatmul.mubr.bf16.gmra.mrb[0].mxu0 %v2348
      %v2586 = vpop.f32.mrb[0].mxu0
      %v2587 = vadd.f32 %v422, %v2586
      %v2588 = vpop.f32.mrb[0].mxu0
      %v2589 = vpop.f32.mrb[0].mxu0
      %v2590 = vadd.f32 %v422, %v2589
      %v2591 = vpop.f32.mrb[0].mxu0
      %2592 = vmatprep.mubr.bf16.mxu0 %v2450
      %2593 = vmatmul.mubr.bf16.gmra.mrb[0].mxu0 %v2350
      %v2594 = vpop.f32.mrb[0].mxu0
      %v2595 = vadd.f32 %v422, %v2594
      %v2596 = vpop.f32.mrb[0].mxu0
      %v2597 = vpop.f32.mrb[0].mxu0
      %v2598 = vadd.f32 %v422, %v2597
      %v2599 = vpop.f32.mrb[0].mxu0
      %2600 = vmatprep.mubr.bf16.mxu0 %v2453
      %2601 = vmatmul.mubr.bf16.gmra.mrb[0].mxu0 %v2352
      %v2602 = vpop.f32.mrb[0].mxu0
      %v2603 = vadd.f32 %v422, %v2602
      %v2604 = vpop.f32.mrb[0].mxu0
      %v2605 = vpop.f32.mrb[0].mxu0
      %v2606 = vadd.f32 %v422, %v2605
      %v2607 = vpop.f32.mrb[0].mxu0
      %2608 = vmatprep.mubr.bf16.mxu0 %v2456
      %2609 = vmatmul.mubr.bf16.gmra.mrb[0].mxu0 %v2354
      %v2610 = vpop.f32.mrb[0].mxu0
      %v2611 = vadd.f32 %v422, %v2610
      %v2612 = vpop.f32.mrb[0].mxu0
      %v2613 = vpop.f32.mrb[0].mxu0
      %v2614 = vadd.f32 %v422, %v2613
      %v2615 = vpop.f32.mrb[0].mxu0
      %2616 = vmatprep.mubr.bf16.mxu0 %v2459
      %2617 = vmatmul.mubr.bf16.gmra.mrb[0].mxu0 %v2356
      %v2618 = vpop.f32.mrb[0].mxu0
      %v2619 = vadd.f32 %v422, %v2618
      %v2620 = vpop.f32.mrb[0].mxu0
      %v2621 = vpop.f32.mrb[0].mxu0
      %v2622 = vadd.f32 %v422, %v2621
      %v2623 = vpop.f32.mrb[0].mxu0
      %2624 = vmatprep.mubr.bf16.mxu0 %v2462
      %2625 = vmatmul.mubr.bf16.gmra.mrb[0].mxu0 %v2358
      %v2626 = vpop.f32.mrb[0].mxu0
      %v2627 = vadd.f32 %v422, %v2626
      %v2628 = vpop.f32.mrb[0].mxu0
      %v2629 = vpop.f32.mrb[0].mxu0
      %v2630 = vadd.f32 %v422, %v2629
      %v2631 = vpop.f32.mrb[0].mxu0
      %2632 = vmatprep.mubr.bf16.mxu0 %v2465
      %2633 = vmatmul.mubr.bf16.gmra.mrb[0].mxu0 %v2360
      %v2634 = vpop.f32.mrb[0].mxu0
      %v2635 = vadd.f32 %v422, %v2634
      %v2636 = vpop.f32.mrb[0].mxu0
      %v2637 = vpop.f32.mrb[0].mxu0
      %v2638 = vadd.f32 %v422, %v2637
      %v2639 = vpop.f32.mrb[0].mxu0
      %2640 = vmatprep.mubr.bf16.mxu0 %v2468
      %2641 = vmatmul.mubr.bf16.gmra.mrb[0].mxu0 %v2362
      %v2642 = vpop.f32.mrb[0].mxu0
      %v2643 = vadd.f32 %v422, %v2642
      %v2644 = vpop.f32.mrb[0].mxu0
      %v2645 = vpop.f32.mrb[0].mxu0
      %v2646 = vadd.f32 %v422, %v2645
      %v2647 = vpop.f32.mrb[0].mxu0
      %2648 = vmatprep.mubr.bf16.mxu0 %v2471
      %2649 = vmatmul.mubr.bf16.gmra.mrb[0].mxu0 %v2364
      %v2650 = vpop.f32.mrb[0].mxu0
      %v2651 = vadd.f32 %v422, %v2650
      %v2652 = vpop.f32.mrb[0].mxu0
      %v2653 = vpop.f32.mrb[0].mxu0
      %v2654 = vadd.f32 %v422, %v2653
      %v2655 = vpop.f32.mrb[0].mxu0
      %2656 = vmatprep.mubr.bf16.mxu0 %v2474
      %2657 = vmatmul.mubr.bf16.gmra.mrb[0].mxu0 %v2366
      %v2658 = vpop.f32.mrb[0].mxu0
      %v2659 = vadd.f32 %v422, %v2658
      %v2660 = vpop.f32.mrb[0].mxu0
      %v2661 = vpop.f32.mrb[0].mxu0
      %v2662 = vadd.f32 %v422, %v2661
      %v2663 = vpop.f32.mrb[0].mxu0
      %2664 = vmatprep.mubr.bf16.mxu0 %v2477
      %2665 = vmatmul.mubr.bf16.gmra.mrb[0].mxu0 %v2368
      %v2666 = vpop.f32.mrb[0].mxu0
      %v2667 = vadd.f32 %v422, %v2666
      %v2668 = vpop.f32.mrb[0].mxu0
      %v2669 = vpop.f32.mrb[0].mxu0
      %v2670 = vadd.f32 %v422, %v2669
      %v2671 = vpop.f32.mrb[0].mxu0
      %2672 = vmatprep.mubr.bf16.mxu0 %v2480
      %2673 = vmatmul.mubr.bf16.gmra.mrb[0].mxu0 %v2370
      %v2674 = vpop.f32.mrb[0].mxu0
      %v2675 = vadd.f32 %v422, %v2674
      %v2676 = vpop.f32.mrb[0].mxu0
      %v2677 = vpop.f32.mrb[0].mxu0
      %v2678 = vadd.f32 %v422, %v2677
      %v2679 = vpop.f32.mrb[0].mxu0
      %2680 = vmatprep.mubr.bf16.mxu0 %v2483
      %2681 = vmatmul.mubr.bf16.gmra.mrb[0].mxu0 %v2372
      %v2682 = vpop.f32.mrb[0].mxu0
      %v2683 = vadd.f32 %v422, %v2682
      %v2684 = vpop.f32.mrb[0].mxu0
      %v2685 = vpop.f32.mrb[0].mxu0
      %v2686 = vadd.f32 %v422, %v2685
      %v2687 = vpop.f32.mrb[0].mxu0
      %2688 = vmatprep.mubr.bf16.mxu0 %v2486
      %2689 = vmatmul.mubr.bf16.gmra.mrb[0].mxu0 %v2374
      %v2690 = vpop.f32.mrb[0].mxu0
      %v2691 = vadd.f32 %v422, %v2690
      %v2692 = vpop.f32.mrb[0].mxu0
      %v2693 = vpop.f32.mrb[0].mxu0
      %v2694 = vadd.f32 %v422, %v2693
      %v2695 = vpop.f32.mrb[0].mxu0
      %2696 = vmatprep.mubr.bf16.mxu0 %v2489
      %2697 = vmatmul.mubr.bf16.gmra.mrb[0].mxu0 %v2376
      %v2698 = vpop.f32.mrb[0].mxu0
      %v2699 = vadd.f32 %v422, %v2698
      %v2700 = vpop.f32.mrb[0].mxu0
      %v2701 = vpop.f32.mrb[0].mxu0
      %v2702 = vadd.f32 %v422, %v2701
      %v2703 = vpop.f32.mrb[0].mxu0
      %2704 = vmatprep.mubr.bf16.mxu0 %v2492
      %2705 = vmatmul.mubr.bf16.gmra.mrb[0].mxu0 %v2378
      %v2706 = vpop.f32.mrb[0].mxu0
      %v2707 = vadd.f32 %v422, %v2706
      %v2708 = vpop.f32.mrb[0].mxu0
      %v2709 = vpop.f32.mrb[0].mxu0
      %v2710 = vadd.f32 %v422, %v2709
      %v2711 = vpop.f32.mrb[0].mxu0
      %2712 = vmatprep.mubr.bf16.mxu0 %v2495
      %2713 = vmatmul.mubr.bf16.gmra.mrb[0].mxu0 %v2380
      %v2714 = vpop.f32.mrb[0].mxu0
      %v2715 = vadd.f32 %v422, %v2714
      %v2716 = vpop.f32.mrb[0].mxu0
      %v2717 = vpop.f32.mrb[0].mxu0
      %v2718 = vadd.f32 %v422, %v2717
      %v2719 = vpop.f32.mrb[0].mxu0
      %2720 = vmatprep.mubr.bf16.mxu0 %v2498
      %2721 = vmatmul.mubr.bf16.gmra.mrb[0].mxu0 %v2382
      %v2722 = vpop.f32.mrb[0].mxu0
      %v2723 = vadd.f32 %v422, %v2722
      %v2724 = vpop.f32.mrb[0].mxu0
      %v2725 = vpop.f32.mrb[0].mxu0
      %v2726 = vadd.f32 %v422, %v2725
      %v2727 = vpop.f32.mrb[0].mxu0
      %2728 = vmatprep.mubr.bf16.mxu0 %v2501
      %2729 = vmatmul.mubr.bf16.gmra.mrb[0].mxu0 %v2384
      %v2730 = vpop.f32.mrb[0].mxu0
      %v2731 = vadd.f32 %v422, %v2730
      %v2732 = vpop.f32.mrb[0].mxu0
      %v2733 = vpop.f32.mrb[0].mxu0
      %v2734 = vadd.f32 %v422, %v2733
      %v2735 = vpop.f32.mrb[0].mxu0
      %2736 = vmatprep.mubr.bf16.mxu0 %v2504
      %2737 = vmatmul.mubr.bf16.gmra.mrb[0].mxu0 %v2386
      %v2738 = vpop.f32.mrb[0].mxu0
      %v2739 = vadd.f32 %v422, %v2738
      %v2740 = vpop.f32.mrb[0].mxu0
      %v2741 = vpop.f32.mrb[0].mxu0
      %v2742 = vadd.f32 %v422, %v2741
      %v2743 = vpop.f32.mrb[0].mxu0
      %2744 = vmatprep.mubr.bf16.mxu0 %v2507
      %2745 = vmatmul.mubr.bf16.gmra.mrb[0].mxu0 %v2388
      %v2746 = vpop.f32.mrb[0].mxu0
      %v2747 = vadd.f32 %v422, %v2746
      %v2748 = vpop.f32.mrb[0].mxu0
      %v2749 = vpop.f32.mrb[0].mxu0
      %v2750 = vadd.f32 %v422, %v2749
      %v2751 = vpop.f32.mrb[0].mxu0
      %2752 = vmatprep.mubr.bf16.mxu0 %v2510
      %2753 = vmatmul.mubr.bf16.gmra.mrb[0].mxu0 %v2390
      %v2754 = vpop.f32.mrb[0].mxu0
      %v2755 = vadd.f32 %v422, %v2754
      %v2756 = vpop.f32.mrb[0].mxu0
      %v2757 = vpop.f32.mrb[0].mxu0
      %v2758 = vadd.f32 %v422, %v2757
      %v2759 = vpop.f32.mrb[0].mxu0
      %2760 = vmatprep.mubr.bf16.mxu0 %v2513
      %2761 = vmatmul.mubr.bf16.gmra.mrb[0].mxu0 %v2392
      %v2762 = vpop.f32.mrb[0].mxu0
      %v2763 = vadd.f32 %v422, %v2762
      %v2764 = vpop.f32.mrb[0].mxu0
      %v2765 = vpop.f32.mrb[0].mxu0
      %v2766 = vadd.f32 %v422, %v2765
      %v2767 = vpop.f32.mrb[0].mxu0
      %2768 = vmatprep.mubr.bf16.mxu0 %v2516
      %2769 = vmatmul.mubr.bf16.gmra.mrb[0].mxu0 %v2394
      %v2770 = vpop.f32.mrb[0].mxu0
      %v2771 = vadd.f32 %v422, %v2770
      %v2772 = vpop.f32.mrb[0].mxu0
      %v2773 = vpop.f32.mrb[0].mxu0
      %v2774 = vadd.f32 %v422, %v2773
      %v2775 = vpop.f32.mrb[0].mxu0
      %2776 = vmatprep.mubr.bf16.mxu0 %v2519
      %2777 = vmatmul.mubr.bf16.gmra.mrb[0].mxu0 %v2396
      %v2778 = vpop.f32.mrb[0].mxu0
      %v2779 = vadd.f32 %v422, %v2778
      %v2780 = vpop.f32.mrb[0].mxu0
      %v2781 = vpop.f32.mrb[0].mxu0
      %v2782 = vadd.f32 %v422, %v2781
      %v2783 = vpop.f32.mrb[0].mxu0
      %2784 = vmatprep.mubr.bf16.mxu0 %v2522
      %2785 = vmatmul.mubr.bf16.gmra.mrb[0].mxu0 %v2398
      %v2786 = vpop.f32.mrb[0].mxu0
      %v2787 = vadd.f32 %v422, %v2786
      %v2788 = vpop.f32.mrb[0].mxu0
      %v2789 = vpop.f32.mrb[0].mxu0
      %v2790 = vadd.f32 %v422, %v2789
      %v2791 = vpop.f32.mrb[0].mxu0
      %2792 = vmatprep.mubr.bf16.mxu0 %v2525
      %2793 = vmatmul.mubr.bf16.gmra.mrb[0].mxu0 %v2400
      %v2794 = vpop.f32.mrb[0].mxu0
      %v2795 = vadd.f32 %v422, %v2794
      %v2796 = vpop.f32.mrb[0].mxu0
      %v2797 = vpop.f32.mrb[0].mxu0
      %v2798 = vadd.f32 %v422, %v2797
      %v2799 = vpop.f32.mrb[0].mxu0
      %2800 = vmatprep.mubr.bf16.mxu0 %v2528
      %2801 = vmatmul.mubr.bf16.gmra.mrb[0].mxu0 %v2402
      %v2802 = vpop.f32.mrb[0].mxu0
      %v2803 = vadd.f32 %v422, %v2802
      %v2804 = vpop.f32.mrb[0].mxu0
      %v2805 = vpop.f32.mrb[0].mxu0
      %v2806 = vadd.f32 %v422, %v2805
      %v2807 = vpop.f32.mrb[0].mxu0
      %2808 = vmatprep.mubr.bf16.mxu0 %v2531
      %2809 = vmatmul.mubr.bf16.gmra.mrb[0].mxu0 %v2404
      %v2810 = vpop.f32.mrb[0].mxu0
      %v2811 = vadd.f32 %v422, %v2810
      %v2812 = vpop.f32.mrb[0].mxu0
      %v2813 = vpop.f32.mrb[0].mxu0
      %v2814 = vadd.f32 %v422, %v2813
      %v2815 = vpop.f32.mrb[0].mxu0
      %2816 = vmatprep.mubr.bf16.mxu0 %v2534
      %2817 = vmatmul.mubr.bf16.gmra.mrb[0].mxu0 %v2406
      %v2818 = vpop.f32.mrb[0].mxu0
      %v2819 = vadd.f32 %v422, %v2818
      %v2820 = vpop.f32.mrb[0].mxu0
      %v2821 = vpop.f32.mrb[0].mxu0
      %v2822 = vadd.f32 %v422, %v2821
      %v2823 = vpop.f32.mrb[0].mxu0
      %2824 = vdwg.mxu0
      %v2825 = vmax.f32 %v2571, 0.0
      %v2826 = vmax.f32 %v2574, 0.0
      %v2827 = vmax.f32 %v2579, 0.0
      %v2828 = vmax.f32 %v2582, 0.0
      %v2829 = vmax.f32 %v2587, 0.0
      %v2830 = vmax.f32 %v2590, 0.0
      %v2831 = vmax.f32 %v2595, 0.0
      %v2832 = vmax.f32 %v2598, 0.0
      %v2833 = vmax.f32 %v2603, 0.0
      %v2834 = vmax.f32 %v2606, 0.0
      %v2835 = vmax.f32 %v2611, 0.0
      %v2836 = vmax.f32 %v2614, 0.0
      %v2837 = vmax.f32 %v2619, 0.0
      %v2838 = vmax.f32 %v2622, 0.0
      %v2839 = vmax.f32 %v2627, 0.0
      %v2840 = vmax.f32 %v2630, 0.0
      %v2841 = vmax.f32 %v2635, 0.0
      %v2842 = vmax.f32 %v2638, 0.0
      %v2843 = vmax.f32 %v2643, 0.0
      %v2844 = vmax.f32 %v2646, 0.0
      %v2845 = vmax.f32 %v2651, 0.0
      %v2846 = vmax.f32 %v2654, 0.0
      %v2847 = vmax.f32 %v2659, 0.0
      %v2848 = vmax.f32 %v2662, 0.0
      %v2849 = vmax.f32 %v2667, 0.0
      %v2850 = vmax.f32 %v2670, 0.0
      %v2851 = vmax.f32 %v2675, 0.0
      %v2852 = vmax.f32 %v2678, 0.0
      %v2853 = vmax.f32 %v2683, 0.0
      %v2854 = vmax.f32 %v2686, 0.0
      %v2855 = vmax.f32 %v2691, 0.0
      %v2856 = vmax.f32 %v2694, 0.0
      %v2857 = vmax.f32 %v2699, 0.0
      %v2858 = vmax.f32 %v2702, 0.0
      %v2859 = vmax.f32 %v2707, 0.0
      %v2860 = vmax.f32 %v2710, 0.0
      %v2861 = vmax.f32 %v2715, 0.0
      %v2862 = vmax.f32 %v2718, 0.0
      %v2863 = vmax.f32 %v2723, 0.0
      %v2864 = vmax.f32 %v2726, 0.0
      %v2865 = vmax.f32 %v2731, 0.0
      %v2866 = vmax.f32 %v2734, 0.0
      %v2867 = vmax.f32 %v2739, 0.0
      %v2868 = vmax.f32 %v2742, 0.0
      %v2869 = vmax.f32 %v2747, 0.0
      %v2870 = vmax.f32 %v2750, 0.0
      %v2871 = vmax.f32 %v2755, 0.0
      %v2872 = vmax.f32 %v2758, 0.0
      %v2873 = vmax.f32 %v2763, 0.0
      %v2874 = vmax.f32 %v2766, 0.0
      %v2875 = vmax.f32 %v2771, 0.0
      %v2876 = vmax.f32 %v2774, 0.0
      %v2877 = vmax.f32 %v2779, 0.0
      %v2878 = vmax.f32 %v2782, 0.0
      %v2879 = vmax.f32 %v2787, 0.0
      %v2880 = vmax.f32 %v2790, 0.0
      %v2881 = vmax.f32 %v2795, 0.0
      %v2882 = vmax.f32 %v2798, 0.0
      %v2883 = vmax.f32 %v2803, 0.0
      %v2884 = vmax.f32 %v2806, 0.0
      %v2885 = vmax.f32 %v2811, 0.0
      %v2886 = vmax.f32 %v2814, 0.0
      %v2887 = vmax.f32 %v2819, 0.0
      %v2888 = vmax.f32 %v2822, 0.0
      %v2889 = vld [vmem:[%s325] sm:$0xff]
      %v2890 = vld [vmem:[%s325 + $0x8] sm:$0xff]
      %v2891 = vld [vmem:[%s325 + $0x10] sm:$0xff]
      %v2892 = vld [vmem:[%s325 + $0x18] sm:$0xff]
      %v2893 = vld [vmem:[%s325 + $0x20] sm:$0xff]
      %v2894 = vld [vmem:[%s325 + $0x28] sm:$0xff]
      %v2895 = vld [vmem:[%s325 + $0x30] sm:$0xff]
      %v2896 = vld [vmem:[%s325 + $0x38] sm:$0xff]
      %v2897 = vld [vmem:[%s325 + $0x40] sm:$0xff]
      %v2898 = vld [vmem:[%s325 + $0x48] sm:$0xff]
      %v2899 = vld [vmem:[%s325 + $0x50] sm:$0xff]
      %v2900 = vld [vmem:[%s325 + $0x58] sm:$0xff]
      %v2901 = vld [vmem:[%s325 + $0x60] sm:$0xff]
      %v2902 = vld [vmem:[%s325 + $0x68] sm:$0xff]
      %v2903 = vld [vmem:[%s325 + $0x70] sm:$0xff]
      %v2904 = vld [vmem:[%s325 + $0x78] sm:$0xff]
      %v2905 = vld [vmem:[%s325 + $0x80] sm:$0xff]
      %v2906 = vld [vmem:[%s325 + $0x88] sm:$0xff]
      %v2907 = vld [vmem:[%s325 + $0x90] sm:$0xff]
      %v2908 = vld [vmem:[%s325 + $0x98] sm:$0xff]
      %v2909 = vld [vmem:[%s325 + $0xa0] sm:$0xff]
      %v2910 = vld [vmem:[%s325 + $0xa8] sm:$0xff]
      %v2911 = vld [vmem:[%s325 + $0xb0] sm:$0xff]
      %v2912 = vld [vmem:[%s325 + $0xb8] sm:$0xff]
      %v2913 = vld [vmem:[%s325 + $0xc0] sm:$0xff]
      %v2914 = vld [vmem:[%s325 + $0xc8] sm:$0xff]
      %v2915 = vld [vmem:[%s325 + $0xd0] sm:$0xff]
      %v2916 = vld [vmem:[%s325 + $0xd8] sm:$0xff]
      %v2917 = vld [vmem:[%s325 + $0xe0] sm:$0xff]
      %v2918 = vld [vmem:[%s325 + $0xe8] sm:$0xff]
      %v2919 = vld [vmem:[%s325 + $0xf0] sm:$0xff]
      %v2920 = vld [vmem:[%s325 + $0xf8] sm:$0xff]
      %v2921 = vld [vmem:[%s325 + $0x100] sm:$0xff]
      %v2922 = vld [vmem:[%s325 + $0x108] sm:$0xff]
      %v2923 = vld [vmem:[%s325 + $0x110] sm:$0xff]
      %v2924 = vld [vmem:[%s325 + $0x118] sm:$0xff]
      %v2925 = vld [vmem:[%s325 + $0x120] sm:$0xff]
      %v2926 = vld [vmem:[%s325 + $0x128] sm:$0xff]
      %v2927 = vld [vmem:[%s325 + $0x130] sm:$0xff]
      %v2928 = vld [vmem:[%s325 + $0x138] sm:$0xff]
      %v2929 = vld [vmem:[%s325 + $0x140] sm:$0xff]
      %v2930 = vld [vmem:[%s325 + $0x148] sm:$0xff]
      %v2931 = vld [vmem:[%s325 + $0x150] sm:$0xff]
      %v2932 = vld [vmem:[%s325 + $0x158] sm:$0xff]
      %v2933 = vld [vmem:[%s325 + $0x160] sm:$0xff]
      %v2934 = vld [vmem:[%s325 + $0x168] sm:$0xff]
      %v2935 = vld [vmem:[%s325 + $0x170] sm:$0xff]
      %v2936 = vld [vmem:[%s325 + $0x178] sm:$0xff]
      %v2937 = vld [vmem:[%s325 + $0x180] sm:$0xff]
      %v2938 = vld [vmem:[%s325 + $0x188] sm:$0xff]
      %v2939 = vld [vmem:[%s325 + $0x190] sm:$0xff]
      %v2940 = vld [vmem:[%s325 + $0x198] sm:$0xff]
      %v2941 = vld [vmem:[%s325 + $0x1a0] sm:$0xff]
      %v2942 = vld [vmem:[%s325 + $0x1a8] sm:$0xff]
      %v2943 = vld [vmem:[%s325 + $0x1b0] sm:$0xff]
      %v2944 = vld [vmem:[%s325 + $0x1b8] sm:$0xff]
      %v2945 = vld [vmem:[%s325 + $0x1c0] sm:$0xff]
      %v2946 = vld [vmem:[%s325 + $0x1c8] sm:$0xff]
      %v2947 = vld [vmem:[%s325 + $0x1d0] sm:$0xff]
      %v2948 = vld [vmem:[%s325 + $0x1d8] sm:$0xff]
      %v2949 = vld [vmem:[%s325 + $0x1e0] sm:$0xff]
      %v2950 = vld [vmem:[%s325 + $0x1e8] sm:$0xff]
      %v2951 = vld [vmem:[%s325 + $0x1f0] sm:$0xff]
      %v2952 = vld [vmem:[%s325 + $0x1f8] sm:$0xff]
      %v3017 = vunpack.c.l.b16 %v2889
      %v3018 = vunpack.c.h.b16 %v2889
      %v3019 = vunpack.c.l.b16 %v2890
      %v3020 = vunpack.c.h.b16 %v2890
      %v3021 = vunpack.c.l.b16 %v2891
      %v3022 = vunpack.c.h.b16 %v2891
      %v3023 = vunpack.c.l.b16 %v2892
      %v3024 = vunpack.c.h.b16 %v2892
      %v3025 = vunpack.c.l.b16 %v2893
      %v3026 = vunpack.c.h.b16 %v2893
      %v3027 = vunpack.c.l.b16 %v2894
      %v3028 = vunpack.c.h.b16 %v2894
      %v3029 = vunpack.c.l.b16 %v2895
      %v3030 = vunpack.c.h.b16 %v2895
      %v3031 = vunpack.c.l.b16 %v2896
      %v3032 = vunpack.c.h.b16 %v2896
      %v3033 = vunpack.c.l.b16 %v2897
      %v3034 = vunpack.c.h.b16 %v2897
      %v3035 = vunpack.c.l.b16 %v2898
      %v3036 = vunpack.c.h.b16 %v2898
      %v3037 = vunpack.c.l.b16 %v2899
      %v3038 = vunpack.c.h.b16 %v2899
      %v3039 = vunpack.c.l.b16 %v2900
      %v3040 = vunpack.c.h.b16 %v2900
      %v3041 = vunpack.c.l.b16 %v2901
      %v3042 = vunpack.c.h.b16 %v2901
      %v3043 = vunpack.c.l.b16 %v2902
      %v3044 = vunpack.c.h.b16 %v2902
      %v3045 = vunpack.c.l.b16 %v2903
      %v3046 = vunpack.c.h.b16 %v2903
      %v3047 = vunpack.c.l.b16 %v2904
      %v3048 = vunpack.c.h.b16 %v2904
      %v3049 = vunpack.c.l.b16 %v2905
      %v3050 = vunpack.c.h.b16 %v2905
      %v3051 = vunpack.c.l.b16 %v2906
      %v3052 = vunpack.c.h.b16 %v2906
      %v3053 = vunpack.c.l.b16 %v2907
      %v3054 = vunpack.c.h.b16 %v2907
      %v3055 = vunpack.c.l.b16 %v2908
      %v3056 = vunpack.c.h.b16 %v2908
      %v3057 = vunpack.c.l.b16 %v2909
      %v3058 = vunpack.c.h.b16 %v2909
      %v3059 = vunpack.c.l.b16 %v2910
      %v3060 = vunpack.c.h.b16 %v2910
      %v3061 = vunpack.c.l.b16 %v2911
      %v3062 = vunpack.c.h.b16 %v2911
      %v3063 = vunpack.c.l.b16 %v2912
      %v3064 = vunpack.c.h.b16 %v2912
      %v3065 = vunpack.c.l.b16 %v2913
      %v3066 = vunpack.c.h.b16 %v2913
      %v3067 = vunpack.c.l.b16 %v2914
      %v3068 = vunpack.c.h.b16 %v2914
      %v3069 = vunpack.c.l.b16 %v2915
      %v3070 = vunpack.c.h.b16 %v2915
      %v3071 = vunpack.c.l.b16 %v2916
      %v3072 = vunpack.c.h.b16 %v2916
      %v3073 = vunpack.c.l.b16 %v2917
      %v3074 = vunpack.c.h.b16 %v2917
      %v3075 = vunpack.c.l.b16 %v2918
      %v3076 = vunpack.c.h.b16 %v2918
      %v3077 = vunpack.c.l.b16 %v2919
      %v3078 = vunpack.c.h.b16 %v2919
      %v3079 = vunpack.c.l.b16 %v2920
      %v3080 = vunpack.c.h.b16 %v2920
      %v3081 = vunpack.c.l.b16 %v2921
      %v3082 = vunpack.c.h.b16 %v2921
      %v3083 = vunpack.c.l.b16 %v2922
      %v3084 = vunpack.c.h.b16 %v2922
      %v3085 = vunpack.c.l.b16 %v2923
      %v3086 = vunpack.c.h.b16 %v2923
      %v3087 = vunpack.c.l.b16 %v2924
      %v3088 = vunpack.c.h.b16 %v2924
      %v3089 = vunpack.c.l.b16 %v2925
      %v3090 = vunpack.c.h.b16 %v2925
      %v3091 = vunpack.c.l.b16 %v2926
      %v3092 = vunpack.c.h.b16 %v2926
      %v3093 = vunpack.c.l.b16 %v2927
      %v3094 = vunpack.c.h.b16 %v2927
      %v3095 = vunpack.c.l.b16 %v2928
      %v3096 = vunpack.c.h.b16 %v2928
      %v3097 = vunpack.c.l.b16 %v2929
      %v3098 = vunpack.c.h.b16 %v2929
      %v3099 = vunpack.c.l.b16 %v2930
      %v3100 = vunpack.c.h.b16 %v2930
      %v3101 = vunpack.c.l.b16 %v2931
      %v3102 = vunpack.c.h.b16 %v2931
      %v3103 = vunpack.c.l.b16 %v2932
      %v3104 = vunpack.c.h.b16 %v2932
      %v3105 = vunpack.c.l.b16 %v2933
      %v3106 = vunpack.c.h.b16 %v2933
      %v3107 = vunpack.c.l.b16 %v2934
      %v3108 = vunpack.c.h.b16 %v2934
      %v3109 = vunpack.c.l.b16 %v2935
      %v3110 = vunpack.c.h.b16 %v2935
      %v3111 = vunpack.c.l.b16 %v2936
      %v3112 = vunpack.c.h.b16 %v2936
      %v3113 = vunpack.c.l.b16 %v2937
      %v3114 = vunpack.c.h.b16 %v2937
      %v3115 = vunpack.c.l.b16 %v2938
      %v3116 = vunpack.c.h.b16 %v2938
      %v3117 = vunpack.c.l.b16 %v2939
      %v3118 = vunpack.c.h.b16 %v2939
      %v3119 = vunpack.c.l.b16 %v2940
      %v3120 = vunpack.c.h.b16 %v2940
      %v3121 = vunpack.c.l.b16 %v2941
      %v3122 = vunpack.c.h.b16 %v2941
      %v3123 = vunpack.c.l.b16 %v2942
      %v3124 = vunpack.c.h.b16 %v2942
      %v3125 = vunpack.c.l.b16 %v2943
      %v3126 = vunpack.c.h.b16 %v2943
      %v3127 = vunpack.c.l.b16 %v2944
      %v3128 = vunpack.c.h.b16 %v2944
      %v3129 = vunpack.c.l.b16 %v2945
      %v3130 = vunpack.c.h.b16 %v2945
      %v3131 = vunpack.c.l.b16 %v2946
      %v3132 = vunpack.c.h.b16 %v2946
      %v3133 = vunpack.c.l.b16 %v2947
      %v3134 = vunpack.c.h.b16 %v2947
      %v3135 = vunpack.c.l.b16 %v2948
      %v3136 = vunpack.c.h.b16 %v2948
      %v3137 = vunpack.c.l.b16 %v2949
      %v3138 = vunpack.c.h.b16 %v2949
      %v3139 = vunpack.c.l.b16 %v2950
      %v3140 = vunpack.c.h.b16 %v2950
      %v3141 = vunpack.c.l.b16 %v2951
      %v3142 = vunpack.c.h.b16 %v2951
      %v3143 = vunpack.c.l.b16 %v2952
      %v3144 = vunpack.c.h.b16 %v2952
      %v3145 = vpack.c.b16 %v3019, %v3017
      %v3146 = vpack.c.b16 %v3020, %v3018
      %v3147 = vpack.c.b16 %v3023, %v3021
      %v3148 = vpack.c.b16 %v3024, %v3022
      %v3149 = vpack.c.b16 %v3027, %v3025
      %v3150 = vpack.c.b16 %v3028, %v3026
      %v3151 = vpack.c.b16 %v3031, %v3029
      %v3152 = vpack.c.b16 %v3032, %v3030
      %v3153 = vpack.c.b16 %v3035, %v3033
      %v3154 = vpack.c.b16 %v3036, %v3034
      %v3155 = vpack.c.b16 %v3039, %v3037
      %v3156 = vpack.c.b16 %v3040, %v3038
      %v3157 = vpack.c.b16 %v3043, %v3041
      %v3158 = vpack.c.b16 %v3044, %v3042
      %v3159 = vpack.c.b16 %v3047, %v3045
      %v3160 = vpack.c.b16 %v3048, %v3046
      %v3161 = vpack.c.b16 %v3051, %v3049
      %v3162 = vpack.c.b16 %v3052, %v3050
      %v3163 = vpack.c.b16 %v3055, %v3053
      %v3164 = vpack.c.b16 %v3056, %v3054
      %v3165 = vpack.c.b16 %v3059, %v3057
      %v3166 = vpack.c.b16 %v3060, %v3058
      %v3167 = vpack.c.b16 %v3063, %v3061
      %v3168 = vpack.c.b16 %v3064, %v3062
      %v3169 = vpack.c.b16 %v3067, %v3065
      %v3170 = vpack.c.b16 %v3068, %v3066
      %v3171 = vpack.c.b16 %v3071, %v3069
      %v3172 = vpack.c.b16 %v3072, %v3070
      %v3173 = vpack.c.b16 %v3075, %v3073
      %v3174 = vpack.c.b16 %v3076, %v3074
      %v3175 = vpack.c.b16 %v3079, %v3077
      %v3176 = vpack.c.b16 %v3080, %v3078
      %v3177 = vpack.c.b16 %v3083, %v3081
      %v3178 = vpack.c.b16 %v3084, %v3082
      %v3179 = vpack.c.b16 %v3087, %v3085
      %v3180 = vpack.c.b16 %v3088, %v3086
      %v3181 = vpack.c.b16 %v3091, %v3089
      %v3182 = vpack.c.b16 %v3092, %v3090
      %v3183 = vpack.c.b16 %v3095, %v3093
      %v3184 = vpack.c.b16 %v3096, %v3094
      %v3185 = vpack.c.b16 %v3099, %v3097
      %v3186 = vpack.c.b16 %v3100, %v3098
      %v3187 = vpack.c.b16 %v3103, %v3101
      %v3188 = vpack.c.b16 %v3104, %v3102
      %v3189 = vpack.c.b16 %v3107, %v3105
      %v3190 = vpack.c.b16 %v3108, %v3106
      %v3191 = vpack.c.b16 %v3111, %v3109
      %v3192 = vpack.c.b16 %v3112, %v3110
      %v3193 = vpack.c.b16 %v3115, %v3113
      %v3194 = vpack.c.b16 %v3116, %v3114
      %v3195 = vpack.c.b16 %v3119, %v3117
      %v3196 = vpack.c.b16 %v3120, %v3118
      %v3197 = vpack.c.b16 %v3123, %v3121
      %v3198 = vpack.c.b16 %v3124, %v3122
      %v3199 = vpack.c.b16 %v3127, %v3125
      %v3200 = vpack.c.b16 %v3128, %v3126
      %v3201 = vpack.c.b16 %v3131, %v3129
      %v3202 = vpack.c.b16 %v3132, %v3130
      %v3203 = vpack.c.b16 %v3135, %v3133
      %v3204 = vpack.c.b16 %v3136, %v3134
      %v3205 = vpack.c.b16 %v3139, %v3137
      %v3206 = vpack.c.b16 %v3140, %v3138
      %v3207 = vpack.c.b16 %v3143, %v3141
      %v3208 = vpack.c.b16 %v3144, %v3142
      %v3242 = vsel %vm769, %v3146, 0
      %v3245 = vsel %vm769, %v3148, 0
      %v3248 = vsel %vm769, %v3150, 0
      %v3251 = vsel %vm769, %v3152, 0
      %v3254 = vsel %vm769, %v3154, 0
      %v3257 = vsel %vm769, %v3156, 0
      %v3260 = vsel %vm769, %v3158, 0
      %v3263 = vsel %vm769, %v3160, 0
      %v3266 = vsel %vm769, %v3162, 0
      %v3269 = vsel %vm769, %v3164, 0
      %v3272 = vsel %vm769, %v3166, 0
      %v3275 = vsel %vm769, %v3168, 0
      %v3278 = vsel %vm769, %v3170, 0
      %v3281 = vsel %vm769, %v3172, 0
      %v3284 = vsel %vm769, %v3174, 0
      %v3287 = vsel %vm769, %v3176, 0
      %v3290 = vsel %vm769, %v3178, 0
      %v3293 = vsel %vm769, %v3180, 0
      %v3296 = vsel %vm769, %v3182, 0
      %v3299 = vsel %vm769, %v3184, 0
      %v3302 = vsel %vm769, %v3186, 0
      %v3305 = vsel %vm769, %v3188, 0
      %v3308 = vsel %vm769, %v3190, 0
      %v3311 = vsel %vm769, %v3192, 0
      %v3314 = vsel %vm769, %v3194, 0
      %v3317 = vsel %vm769, %v3196, 0
      %v3320 = vsel %vm769, %v3198, 0
      %v3323 = vsel %vm769, %v3200, 0
      %v3326 = vsel %vm769, %v3202, 0
      %v3329 = vsel %vm769, %v3204, 0
      %v3332 = vsel %vm769, %v3206, 0
      %v3335 = vsel %vm769, %v3208, 0
      %3337 = vmatprep.subr.bf16.mxu0 0
      %3338 = vmatpush1.bf16.msra.mxu0 %v750
      %3339 = vmatprep.subr.bf16.mxu0 0
      %3340 = vmatpush1.bf16.msra.mxu0 %v751
      %3341 = vmatprep.subr.bf16.mxu0 0
      %3342 = vmatpush1.bf16.msra.mxu0 %v752
      %3343 = vmatprep.subr.bf16.mxu0 0
      %3344 = vmatpush1.bf16.msra.mxu0 %v753
      %3345 = vmatprep.subr.bf16.mxu0 0
      %3346 = vmatpush1.bf16.msra.mxu0 %v754
      %3347 = vmatprep.subr.bf16.mxu0 0
      %3348 = vmatpush1.bf16.msra.mxu0 %v755
      %3349 = vmatprep.subr.bf16.mxu0 0
      %3350 = vmatpush1.bf16.msra.mxu0 %v756
      %3351 = vmatprep.subr.bf16.mxu0 0
      %3352 = vmatpush1.bf16.msra.mxu0 %v757
      %3353 = vmatprep.subr.bf16.mxu0 0
      %3354 = vmatpush1.bf16.msra.mxu0 %v758
      %3355 = vmatprep.subr.bf16.mxu0 0
      %3356 = vmatpush1.bf16.msra.mxu0 %v868
      %3357 = vmatprep.subr.bf16.mxu0 0
      %3358 = vmatpush1.bf16.msra.mxu0 0
      %3359 = vmatprep.subr.bf16.mxu0 0
      %3360 = vmatpush1.bf16.msra.mxu0 0
      %3361 = vmatprep.subr.bf16.mxu0 0
      %3362 = vmatpush1.bf16.msra.mxu0 0
      %3363 = vmatprep.subr.bf16.mxu0 0
      %3364 = vmatpush1.bf16.msra.mxu0 0
      %3365 = vmatprep.subr.bf16.mxu0 0
      %3366 = vmatpush1.bf16.msra.mxu0 0
      %3367 = vmatprep.subr.bf16.mxu0 0
      %3368 = vmatpush1.bf16.msra.mxu0 0
      %3369 = vmatprep.mubr.bf16.mxu0 %v3242
      %3370 = vmatmul.mubr.bf16.gmra.mrb[0].mxu0 %v3145
      %v3371 = vpop.f32.mrb[0].mxu0
      %v3372 = vadd.f32 %v422, %v3371
      %v3373 = vpop.f32.mrb[0].mxu0
      %v3374 = vpop.f32.mrb[0].mxu0
      %v3375 = vadd.f32 %v422, %v3374
      %v3376 = vpop.f32.mrb[0].mxu0
      %3377 = vmatprep.mubr.bf16.mxu0 %v3245
      %3378 = vmatmul.mubr.bf16.gmra.mrb[0].mxu0 %v3147
      %v3379 = vpop.f32.mrb[0].mxu0
      %v3380 = vadd.f32 %v422, %v3379
      %v3381 = vpop.f32.mrb[0].mxu0
      %v3382 = vpop.f32.mrb[0].mxu0
      %v3383 = vadd.f32 %v422, %v3382
      %v3384 = vpop.f32.mrb[0].mxu0
      %3385 = vmatprep.mubr.bf16.mxu0 %v3248
      %3386 = vmatmul.mubr.bf16.gmra.mrb[0].mxu0 %v3149
      %v3387 = vpop.f32.mrb[0].mxu0
      %v3388 = vadd.f32 %v422, %v3387
      %v3389 = vpop.f32.mrb[0].mxu0
      %v3390 = vpop.f32.mrb[0].mxu0
      %v3391 = vadd.f32 %v422, %v3390
      %v3392 = vpop.f32.mrb[0].mxu0
      %3393 = vmatprep.mubr.bf16.mxu0 %v3251
      %3394 = vmatmul.mubr.bf16.gmra.mrb[0].mxu0 %v3151
      %v3395 = vpop.f32.mrb[0].mxu0
      %v3396 = vadd.f32 %v422, %v3395
      %v3397 = vpop.f32.mrb[0].mxu0
      %v3398 = vpop.f32.mrb[0].mxu0
      %v3399 = vadd.f32 %v422, %v3398
      %v3400 = vpop.f32.mrb[0].mxu0
      %3401 = vmatprep.mubr.bf16.mxu0 %v3254
      %3402 = vmatmul.mubr.bf16.gmra.mrb[0].mxu0 %v3153
      %v3403 = vpop.f32.mrb[0].mxu0
      %v3404 = vadd.f32 %v422, %v3403
      %v3405 = vpop.f32.mrb[0].mxu0
      %v3406 = vpop.f32.mrb[0].mxu0
      %v3407 = vadd.f32 %v422, %v3406
      %v3408 = vpop.f32.mrb[0].mxu0
      %3409 = vmatprep.mubr.bf16.mxu0 %v3257
      %3410 = vmatmul.mubr.bf16.gmra.mrb[0].mxu0 %v3155
      %v3411 = vpop.f32.mrb[0].mxu0
      %v3412 = vadd.f32 %v422, %v3411
      %v3413 = vpop.f32.mrb[0].mxu0
      %v3414 = vpop.f32.mrb[0].mxu0
      %v3415 = vadd.f32 %v422, %v3414
      %v3416 = vpop.f32.mrb[0].mxu0
      %3417 = vmatprep.mubr.bf16.mxu0 %v3260
      %3418 = vmatmul.mubr.bf16.gmra.mrb[0].mxu0 %v3157
      %v3419 = vpop.f32.mrb[0].mxu0
      %v3420 = vadd.f32 %v422, %v3419
      %v3421 = vpop.f32.mrb[0].mxu0
      %v3422 = vpop.f32.mrb[0].mxu0
      %v3423 = vadd.f32 %v422, %v3422
      %v3424 = vpop.f32.mrb[0].mxu0
      %3425 = vmatprep.mubr.bf16.mxu0 %v3263
      %3426 = vmatmul.mubr.bf16.gmra.mrb[0].mxu0 %v3159
      %v3427 = vpop.f32.mrb[0].mxu0
      %v3428 = vadd.f32 %v422, %v3427
      %v3429 = vpop.f32.mrb[0].mxu0
      %v3430 = vpop.f32.mrb[0].mxu0
      %v3431 = vadd.f32 %v422, %v3430
      %v3432 = vpop.f32.mrb[0].mxu0
      %3433 = vmatprep.mubr.bf16.mxu0 %v3266
      %3434 = vmatmul.mubr.bf16.gmra.mrb[0].mxu0 %v3161
      %v3435 = vpop.f32.mrb[0].mxu0
      %v3436 = vadd.f32 %v422, %v3435
      %v3437 = vpop.f32.mrb[0].mxu0
      %v3438 = vpop.f32.mrb[0].mxu0
      %v3439 = vadd.f32 %v422, %v3438
      %v3440 = vpop.f32.mrb[0].mxu0
      %3441 = vmatprep.mubr.bf16.mxu0 %v3269
      %3442 = vmatmul.mubr.bf16.gmra.mrb[0].mxu0 %v3163
      %v3443 = vpop.f32.mrb[0].mxu0
      %v3444 = vadd.f32 %v422, %v3443
      %v3445 = vpop.f32.mrb[0].mxu0
      %v3446 = vpop.f32.mrb[0].mxu0
      %v3447 = vadd.f32 %v422, %v3446
      %v3448 = vpop.f32.mrb[0].mxu0
      %3449 = vmatprep.mubr.bf16.mxu0 %v3272
      %3450 = vmatmul.mubr.bf16.gmra.mrb[0].mxu0 %v3165
      %v3451 = vpop.f32.mrb[0].mxu0
      %v3452 = vadd.f32 %v422, %v3451
      %v3453 = vpop.f32.mrb[0].mxu0
      %v3454 = vpop.f32.mrb[0].mxu0
      %v3455 = vadd.f32 %v422, %v3454
      %v3456 = vpop.f32.mrb[0].mxu0
      %3457 = vmatprep.mubr.bf16.mxu0 %v3275
      %3458 = vmatmul.mubr.bf16.gmra.mrb[0].mxu0 %v3167
      %v3459 = vpop.f32.mrb[0].mxu0
      %v3460 = vadd.f32 %v422, %v3459
      %v3461 = vpop.f32.mrb[0].mxu0
      %v3462 = vpop.f32.mrb[0].mxu0
      %v3463 = vadd.f32 %v422, %v3462
      %v3464 = vpop.f32.mrb[0].mxu0
      %3465 = vmatprep.mubr.bf16.mxu0 %v3278
      %3466 = vmatmul.mubr.bf16.gmra.mrb[0].mxu0 %v3169
      %v3467 = vpop.f32.mrb[0].mxu0
      %v3468 = vadd.f32 %v422, %v3467
      %v3469 = vpop.f32.mrb[0].mxu0
      %v3470 = vpop.f32.mrb[0].mxu0
      %v3471 = vadd.f32 %v422, %v3470
      %v3472 = vpop.f32.mrb[0].mxu0
      %3473 = vmatprep.mubr.bf16.mxu0 %v3281
      %3474 = vmatmul.mubr.bf16.gmra.mrb[0].mxu0 %v3171
      %v3475 = vpop.f32.mrb[0].mxu0
      %v3476 = vadd.f32 %v422, %v3475
      %v3477 = vpop.f32.mrb[0].mxu0
      %v3478 = vpop.f32.mrb[0].mxu0
      %v3479 = vadd.f32 %v422, %v3478
      %v3480 = vpop.f32.mrb[0].mxu0
      %3481 = vmatprep.mubr.bf16.mxu0 %v3284
      %3482 = vmatmul.mubr.bf16.gmra.mrb[0].mxu0 %v3173
      %v3483 = vpop.f32.mrb[0].mxu0
      %v3484 = vadd.f32 %v422, %v3483
      %v3485 = vpop.f32.mrb[0].mxu0
      %v3486 = vpop.f32.mrb[0].mxu0
      %v3487 = vadd.f32 %v422, %v3486
      %v3488 = vpop.f32.mrb[0].mxu0
      %3489 = vmatprep.mubr.bf16.mxu0 %v3287
      %3490 = vmatmul.mubr.bf16.gmra.mrb[0].mxu0 %v3175
      %v3491 = vpop.f32.mrb[0].mxu0
      %v3492 = vadd.f32 %v422, %v3491
      %v3493 = vpop.f32.mrb[0].mxu0
      %v3494 = vpop.f32.mrb[0].mxu0
      %v3495 = vadd.f32 %v422, %v3494
      %v3496 = vpop.f32.mrb[0].mxu0
      %3497 = vmatprep.mubr.bf16.mxu0 %v3290
      %3498 = vmatmul.mubr.bf16.gmra.mrb[0].mxu0 %v3177
      %v3499 = vpop.f32.mrb[0].mxu0
      %v3500 = vadd.f32 %v422, %v3499
      %v3501 = vpop.f32.mrb[0].mxu0
      %v3502 = vpop.f32.mrb[0].mxu0
      %v3503 = vadd.f32 %v422, %v3502
      %v3504 = vpop.f32.mrb[0].mxu0
      %3505 = vmatprep.mubr.bf16.mxu0 %v3293
      %3506 = vmatmul.mubr.bf16.gmra.mrb[0].mxu0 %v3179
      %v3507 = vpop.f32.mrb[0].mxu0
      %v3508 = vadd.f32 %v422, %v3507
      %v3509 = vpop.f32.mrb[0].mxu0
      %v3510 = vpop.f32.mrb[0].mxu0
      %v3511 = vadd.f32 %v422, %v3510
      %v3512 = vpop.f32.mrb[0].mxu0
      %3513 = vmatprep.mubr.bf16.mxu0 %v3296
      %3514 = vmatmul.mubr.bf16.gmra.mrb[0].mxu0 %v3181
      %v3515 = vpop.f32.mrb[0].mxu0
      %v3516 = vadd.f32 %v422, %v3515
      %v3517 = vpop.f32.mrb[0].mxu0
      %v3518 = vpop.f32.mrb[0].mxu0
      %v3519 = vadd.f32 %v422, %v3518
      %v3520 = vpop.f32.mrb[0].mxu0
      %3521 = vmatprep.mubr.bf16.mxu0 %v3299
      %3522 = vmatmul.mubr.bf16.gmra.mrb[0].mxu0 %v3183
      %v3523 = vpop.f32.mrb[0].mxu0
      %v3524 = vadd.f32 %v422, %v3523
      %v3525 = vpop.f32.mrb[0].mxu0
      %v3526 = vpop.f32.mrb[0].mxu0
      %v3527 = vadd.f32 %v422, %v3526
      %v3528 = vpop.f32.mrb[0].mxu0
      %3529 = vmatprep.mubr.bf16.mxu0 %v3302
      %3530 = vmatmul.mubr.bf16.gmra.mrb[0].mxu0 %v3185
      %v3531 = vpop.f32.mrb[0].mxu0
      %v3532 = vadd.f32 %v422, %v3531
      %v3533 = vpop.f32.mrb[0].mxu0
      %v3534 = vpop.f32.mrb[0].mxu0
      %v3535 = vadd.f32 %v422, %v3534
      %v3536 = vpop.f32.mrb[0].mxu0
      %3537 = vmatprep.mubr.bf16.mxu0 %v3305
      %3538 = vmatmul.mubr.bf16.gmra.mrb[0].mxu0 %v3187
      %v3539 = vpop.f32.mrb[0].mxu0
      %v3540 = vadd.f32 %v422, %v3539
      %v3541 = vpop.f32.mrb[0].mxu0
      %v3542 = vpop.f32.mrb[0].mxu0
      %v3543 = vadd.f32 %v422, %v3542
      %v3544 = vpop.f32.mrb[0].mxu0
      %3545 = vmatprep.mubr.bf16.mxu0 %v3308
      %3546 = vmatmul.mubr.bf16.gmra.mrb[0].mxu0 %v3189
      %v3547 = vpop.f32.mrb[0].mxu0
      %v3548 = vadd.f32 %v422, %v3547
      %v3549 = vpop.f32.mrb[0].mxu0
      %v3550 = vpop.f32.mrb[0].mxu0
      %v3551 = vadd.f32 %v422, %v3550
      %v3552 = vpop.f32.mrb[0].mxu0
      %3553 = vmatprep.mubr.bf16.mxu0 %v3311
      %3554 = vmatmul.mubr.bf16.gmra.mrb[0].mxu0 %v3191
      %v3555 = vpop.f32.mrb[0].mxu0
      %v3556 = vadd.f32 %v422, %v3555
      %v3557 = vpop.f32.mrb[0].mxu0
      %v3558 = vpop.f32.mrb[0].mxu0
      %v3559 = vadd.f32 %v422, %v3558
      %v3560 = vpop.f32.mrb[0].mxu0
      %3561 = vmatprep.mubr.bf16.mxu0 %v3314
      %3562 = vmatmul.mubr.bf16.gmra.mrb[0].mxu0 %v3193
      %v3563 = vpop.f32.mrb[0].mxu0
      %v3564 = vadd.f32 %v422, %v3563
      %v3565 = vpop.f32.mrb[0].mxu0
      %v3566 = vpop.f32.mrb[0].mxu0
      %v3567 = vadd.f32 %v422, %v3566
      %v3568 = vpop.f32.mrb[0].mxu0
      %3569 = vmatprep.mubr.bf16.mxu0 %v3317
      %3570 = vmatmul.mubr.bf16.gmra.mrb[0].mxu0 %v3195
      %v3571 = vpop.f32.mrb[0].mxu0
      %v3572 = vadd.f32 %v422, %v3571
      %v3573 = vpop.f32.mrb[0].mxu0
      %v3574 = vpop.f32.mrb[0].mxu0
      %v3575 = vadd.f32 %v422, %v3574
      %v3576 = vpop.f32.mrb[0].mxu0
      %3577 = vmatprep.mubr.bf16.mxu0 %v3320
      %3578 = vmatmul.mubr.bf16.gmra.mrb[0].mxu0 %v3197
      %v3579 = vpop.f32.mrb[0].mxu0
      %v3580 = vadd.f32 %v422, %v3579
      %v3581 = vpop.f32.mrb[0].mxu0
      %v3582 = vpop.f32.mrb[0].mxu0
      %v3583 = vadd.f32 %v422, %v3582
      %v3584 = vpop.f32.mrb[0].mxu0
      %3585 = vmatprep.mubr.bf16.mxu0 %v3323
      %3586 = vmatmul.mubr.bf16.gmra.mrb[0].mxu0 %v3199
      %v3587 = vpop.f32.mrb[0].mxu0
      %v3588 = vadd.f32 %v422, %v3587
      %v3589 = vpop.f32.mrb[0].mxu0
      %v3590 = vpop.f32.mrb[0].mxu0
      %v3591 = vadd.f32 %v422, %v3590
      %v3592 = vpop.f32.mrb[0].mxu0
      %3593 = vmatprep.mubr.bf16.mxu0 %v3326
      %3594 = vmatmul.mubr.bf16.gmra.mrb[0].mxu0 %v3201
      %v3595 = vpop.f32.mrb[0].mxu0
      %v3596 = vadd.f32 %v422, %v3595
      %v3597 = vpop.f32.mrb[0].mxu0
      %v3598 = vpop.f32.mrb[0].mxu0
      %v3599 = vadd.f32 %v422, %v3598
      %v3600 = vpop.f32.mrb[0].mxu0
      %3601 = vmatprep.mubr.bf16.mxu0 %v3329
      %3602 = vmatmul.mubr.bf16.gmra.mrb[0].mxu0 %v3203
      %v3603 = vpop.f32.mrb[0].mxu0
      %v3604 = vadd.f32 %v422, %v3603
      %v3605 = vpop.f32.mrb[0].mxu0
      %v3606 = vpop.f32.mrb[0].mxu0
      %v3607 = vadd.f32 %v422, %v3606
      %v3608 = vpop.f32.mrb[0].mxu0
      %3609 = vmatprep.mubr.bf16.mxu0 %v3332
      %3610 = vmatmul.mubr.bf16.gmra.mrb[0].mxu0 %v3205
      %v3611 = vpop.f32.mrb[0].mxu0
      %v3612 = vadd.f32 %v422, %v3611
      %v3613 = vpop.f32.mrb[0].mxu0
      %v3614 = vpop.f32.mrb[0].mxu0
      %v3615 = vadd.f32 %v422, %v3614
      %v3616 = vpop.f32.mrb[0].mxu0
      %3617 = vmatprep.mubr.bf16.mxu0 %v3335
      %3618 = vmatmul.mubr.bf16.gmra.mrb[0].mxu0 %v3207
      %v3619 = vpop.f32.mrb[0].mxu0
      %v3620 = vadd.f32 %v422, %v3619
      %v3621 = vpop.f32.mrb[0].mxu0
      %v3622 = vpop.f32.mrb[0].mxu0
      %v3623 = vadd.f32 %v422, %v3622
      %v3624 = vpop.f32.mrb[0].mxu0
      %3625 = vdwg.mxu0
      %v3626 = vmax.f32 %v3372, 0.0
      %v3627 = vmax.f32 %v3375, 0.0
      %v3628 = vmax.f32 %v3380, 0.0
      %v3629 = vmax.f32 %v3383, 0.0
      %v3630 = vmax.f32 %v3388, 0.0
      %v3631 = vmax.f32 %v3391, 0.0
      %v3632 = vmax.f32 %v3396, 0.0
      %v3633 = vmax.f32 %v3399, 0.0
      %v3634 = vmax.f32 %v3404, 0.0
      %v3635 = vmax.f32 %v3407, 0.0
      %v3636 = vmax.f32 %v3412, 0.0
      %v3637 = vmax.f32 %v3415, 0.0
      %v3638 = vmax.f32 %v3420, 0.0
      %v3639 = vmax.f32 %v3423, 0.0
      %v3640 = vmax.f32 %v3428, 0.0
      %v3641 = vmax.f32 %v3431, 0.0
      %v3642 = vmax.f32 %v3436, 0.0
      %v3643 = vmax.f32 %v3439, 0.0
      %v3644 = vmax.f32 %v3444, 0.0
      %v3645 = vmax.f32 %v3447, 0.0
      %v3646 = vmax.f32 %v3452, 0.0
      %v3647 = vmax.f32 %v3455, 0.0
      %v3648 = vmax.f32 %v3460, 0.0
      %v3649 = vmax.f32 %v3463, 0.0
      %v3650 = vmax.f32 %v3468, 0.0
      %v3651 = vmax.f32 %v3471, 0.0
      %v3652 = vmax.f32 %v3476, 0.0
      %v3653 = vmax.f32 %v3479, 0.0
      %v3654 = vmax.f32 %v3484, 0.0
      %v3655 = vmax.f32 %v3487, 0.0
      %v3656 = vmax.f32 %v3492, 0.0
      %v3657 = vmax.f32 %v3495, 0.0
      %v3658 = vmax.f32 %v3500, 0.0
      %v3659 = vmax.f32 %v3503, 0.0
      %v3660 = vmax.f32 %v3508, 0.0
      %v3661 = vmax.f32 %v3511, 0.0
      %v3662 = vmax.f32 %v3516, 0.0
      %v3663 = vmax.f32 %v3519, 0.0
      %v3664 = vmax.f32 %v3524, 0.0
      %v3665 = vmax.f32 %v3527, 0.0
      %v3666 = vmax.f32 %v3532, 0.0
      %v3667 = vmax.f32 %v3535, 0.0
      %v3668 = vmax.f32 %v3540, 0.0
      %v3669 = vmax.f32 %v3543, 0.0
      %v3670 = vmax.f32 %v3548, 0.0
      %v3671 = vmax.f32 %v3551, 0.0
      %v3672 = vmax.f32 %v3556, 0.0
      %v3673 = vmax.f32 %v3559, 0.0
      %v3674 = vmax.f32 %v3564, 0.0
      %v3675 = vmax.f32 %v3567, 0.0
      %v3676 = vmax.f32 %v3572, 0.0
      %v3677 = vmax.f32 %v3575, 0.0
      %v3678 = vmax.f32 %v3580, 0.0
      %v3679 = vmax.f32 %v3583, 0.0
      %v3680 = vmax.f32 %v3588, 0.0
      %v3681 = vmax.f32 %v3591, 0.0
      %v3682 = vmax.f32 %v3596, 0.0
      %v3683 = vmax.f32 %v3599, 0.0
      %v3684 = vmax.f32 %v3604, 0.0
      %v3685 = vmax.f32 %v3607, 0.0
      %v3686 = vmax.f32 %v3612, 0.0
      %v3687 = vmax.f32 %v3615, 0.0
      %v3688 = vmax.f32 %v3620, 0.0
      %v3689 = vmax.f32 %v3623, 0.0
      %v3690 = vmax.f32 %v2825, %v3626
      %v3691 = vmax.f32 %v2826, %v3627
      %v3692 = vmax.f32 %v2827, %v3628
      %v3693 = vmax.f32 %v2828, %v3629
      %v3694 = vmax.f32 %v2829, %v3630
      %v3695 = vmax.f32 %v2830, %v3631
      %v3696 = vmax.f32 %v2831, %v3632
      %v3697 = vmax.f32 %v2832, %v3633
      %v3698 = vmax.f32 %v2833, %v3634
      %v3699 = vmax.f32 %v2834, %v3635
      %v3700 = vmax.f32 %v2835, %v3636
      %v3701 = vmax.f32 %v2836, %v3637
      %v3702 = vmax.f32 %v2837, %v3638
      %v3703 = vmax.f32 %v2838, %v3639
      %v3704 = vmax.f32 %v2839, %v3640
      %v3705 = vmax.f32 %v2840, %v3641
      %v3706 = vmax.f32 %v2841, %v3642
      %v3707 = vmax.f32 %v2842, %v3643
      %v3708 = vmax.f32 %v2843, %v3644
      %v3709 = vmax.f32 %v2844, %v3645
      %v3710 = vmax.f32 %v2845, %v3646
      %v3711 = vmax.f32 %v2846, %v3647
      %v3712 = vmax.f32 %v2847, %v3648
      %v3713 = vmax.f32 %v2848, %v3649
      %v3714 = vmax.f32 %v2849, %v3650
      %v3715 = vmax.f32 %v2850, %v3651
      %v3716 = vmax.f32 %v2851, %v3652
      %v3717 = vmax.f32 %v2852, %v3653
      %v3718 = vmax.f32 %v2853, %v3654
      %v3719 = vmax.f32 %v2854, %v3655
      %v3720 = vmax.f32 %v2855, %v3656
      %v3721 = vmax.f32 %v2856, %v3657
      %v3722 = vmax.f32 %v2857, %v3658
      %v3723 = vmax.f32 %v2858, %v3659
      %v3724 = vmax.f32 %v2859, %v3660
      %v3725 = vmax.f32 %v2860, %v3661
      %v3726 = vmax.f32 %v2861, %v3662
      %v3727 = vmax.f32 %v2862, %v3663
      %v3728 = vmax.f32 %v2863, %v3664
      %v3729 = vmax.f32 %v2864, %v3665
      %v3730 = vmax.f32 %v2865, %v3666
      %v3731 = vmax.f32 %v2866, %v3667
      %v3732 = vmax.f32 %v2867, %v3668
      %v3733 = vmax.f32 %v2868, %v3669
      %v3734 = vmax.f32 %v2869, %v3670
      %v3735 = vmax.f32 %v2870, %v3671
      %v3736 = vmax.f32 %v2871, %v3672
      %v3737 = vmax.f32 %v2872, %v3673
      %v3738 = vmax.f32 %v2873, %v3674
      %v3739 = vmax.f32 %v2874, %v3675
      %v3740 = vmax.f32 %v2875, %v3676
      %v3741 = vmax.f32 %v2876, %v3677
      %v3742 = vmax.f32 %v2877, %v3678
      %v3743 = vmax.f32 %v2878, %v3679
      %v3744 = vmax.f32 %v2879, %v3680
      %v3745 = vmax.f32 %v2880, %v3681
      %v3746 = vmax.f32 %v2881, %v3682
      %v3747 = vmax.f32 %v2882, %v3683
      %v3748 = vmax.f32 %v2883, %v3684
      %v3749 = vmax.f32 %v2884, %v3685
      %v3750 = vmax.f32 %v2885, %v3686
      %v3751 = vmax.f32 %v2886, %v3687
      %v3752 = vmax.f32 %v2887, %v3688
      %v3753 = vmax.f32 %v2888, %v3689
      %v3754 = vmax.f32 %v2024, %v3690
      %v3755 = vmax.f32 %v2025, %v3691
      %v3756 = vmax.f32 %v2026, %v3692
      %v3757 = vmax.f32 %v2027, %v3693
      %v3758 = vmax.f32 %v2028, %v3694
      %v3759 = vmax.f32 %v2029, %v3695
      %v3760 = vmax.f32 %v2030, %v3696
      %v3761 = vmax.f32 %v2031, %v3697
      %v3762 = vmax.f32 %v2032, %v3698
      %v3763 = vmax.f32 %v2033, %v3699
      %v3764 = vmax.f32 %v2034, %v3700
      %v3765 = vmax.f32 %v2035, %v3701
      %v3766 = vmax.f32 %v2036, %v3702
      %v3767 = vmax.f32 %v2037, %v3703
      %v3768 = vmax.f32 %v2038, %v3704
      %v3769 = vmax.f32 %v2039, %v3705
      %v3770 = vmax.f32 %v2040, %v3706
      %v3771 = vmax.f32 %v2041, %v3707
      %v3772 = vmax.f32 %v2042, %v3708
      %v3773 = vmax.f32 %v2043, %v3709
      %v3774 = vmax.f32 %v2044, %v3710
      %v3775 = vmax.f32 %v2045, %v3711
      %v3776 = vmax.f32 %v2046, %v3712
      %v3777 = vmax.f32 %v2047, %v3713
      %v3778 = vmax.f32 %v2048, %v3714
      %v3779 = vmax.f32 %v2049, %v3715
      %v3780 = vmax.f32 %v2050, %v3716
      %v3781 = vmax.f32 %v2051, %v3717
      %v3782 = vmax.f32 %v2052, %v3718
      %v3783 = vmax.f32 %v2053, %v3719
      %v3784 = vmax.f32 %v2054, %v3720
      %v3785 = vmax.f32 %v2055, %v3721
      %v3786 = vmax.f32 %v2056, %v3722
      %v3787 = vmax.f32 %v2057, %v3723
      %v3788 = vmax.f32 %v2058, %v3724
      %v3789 = vmax.f32 %v2059, %v3725
      %v3790 = vmax.f32 %v2060, %v3726
      %v3791 = vmax.f32 %v2061, %v3727
      %v3792 = vmax.f32 %v2062, %v3728
      %v3793 = vmax.f32 %v2063, %v3729
      %v3794 = vmax.f32 %v2064, %v3730
      %v3795 = vmax.f32 %v2065, %v3731
      %v3796 = vmax.f32 %v2066, %v3732
      %v3797 = vmax.f32 %v2067, %v3733
      %v3798 = vmax.f32 %v2068, %v3734
      %v3799 = vmax.f32 %v2069, %v3735
      %v3800 = vmax.f32 %v2070, %v3736
      %v3801 = vmax.f32 %v2071, %v3737
      %v3802 = vmax.f32 %v2072, %v3738
      %v3803 = vmax.f32 %v2073, %v3739
      %v3804 = vmax.f32 %v2074, %v3740
      %v3805 = vmax.f32 %v2075, %v3741
      %v3806 = vmax.f32 %v2076, %v3742
      %v3807 = vmax.f32 %v2077, %v3743
      %v3808 = vmax.f32 %v2078, %v3744
      %v3809 = vmax.f32 %v2079, %v3745
      %v3810 = vmax.f32 %v2080, %v3746
      %v3811 = vmax.f32 %v2081, %v3747
      %v3812 = vmax.f32 %v2082, %v3748
      %v3813 = vmax.f32 %v2083, %v3749
      %v3814 = vmax.f32 %v2084, %v3750
      %v3815 = vmax.f32 %v2085, %v3751
      %v3816 = vmax.f32 %v2086, %v3752
      %v3817 = vmax.f32 %v2087, %v3753
      %v3818 = vpack.c.bf16 %v3755, %v3754
      %v3819 = vpack.c.bf16 %v3757, %v3756
      %v3820 = vpack.c.bf16 %v3759, %v3758
      %v3821 = vpack.c.bf16 %v3761, %v3760
      %v3822 = vpack.c.bf16 %v3763, %v3762
      %v3823 = vpack.c.bf16 %v3765, %v3764
      %v3824 = vpack.c.bf16 %v3767, %v3766
      %v3825 = vpack.c.bf16 %v3769, %v3768
      %v3826 = vpack.c.bf16 %v3771, %v3770
      %v3827 = vpack.c.bf16 %v3773, %v3772
      %v3828 = vpack.c.bf16 %v3775, %v3774
      %v3829 = vpack.c.bf16 %v3777, %v3776
      %v3830 = vpack.c.bf16 %v3779, %v3778
      %v3831 = vpack.c.bf16 %v3781, %v3780
      %v3832 = vpack.c.bf16 %v3783, %v3782
      %v3833 = vpack.c.bf16 %v3785, %v3784
      %v3834 = vpack.c.bf16 %v3787, %v3786
      %v3835 = vpack.c.bf16 %v3789, %v3788
      %v3836 = vpack.c.bf16 %v3791, %v3790
      %v3837 = vpack.c.bf16 %v3793, %v3792
      %v3838 = vpack.c.bf16 %v3795, %v3794
      %v3839 = vpack.c.bf16 %v3797, %v3796
      %v3840 = vpack.c.bf16 %v3799, %v3798
      %v3841 = vpack.c.bf16 %v3801, %v3800
      %v3842 = vpack.c.bf16 %v3803, %v3802
      %v3843 = vpack.c.bf16 %v3805, %v3804
      %v3844 = vpack.c.bf16 %v3807, %v3806
      %v3845 = vpack.c.bf16 %v3809, %v3808
      %v3846 = vpack.c.bf16 %v3811, %v3810
      %v3847 = vpack.c.bf16 %v3813, %v3812
      %v3848 = vpack.c.bf16 %v3815, %v3814
      %v3849 = vpack.c.bf16 %v3817, %v3816
      %v3882 = vunpack.c.l.b16 %v3818
      %v3883 = vunpack.c.h.b16 %v3818
      %v3884 = vunpack.c.l.b16 %v3819
      %v3885 = vunpack.c.h.b16 %v3819
      %v3886 = vunpack.c.l.b16 %v3820
      %v3887 = vunpack.c.h.b16 %v3820
      %v3888 = vunpack.c.l.b16 %v3821
      %v3889 = vunpack.c.h.b16 %v3821
      %v3890 = vunpack.c.l.b16 %v3822
      %v3891 = vunpack.c.h.b16 %v3822
      %v3892 = vunpack.c.l.b16 %v3823
      %v3893 = vunpack.c.h.b16 %v3823
      %v3894 = vunpack.c.l.b16 %v3824
      %v3895 = vunpack.c.h.b16 %v3824
      %v3896 = vunpack.c.l.b16 %v3825
      %v3897 = vunpack.c.h.b16 %v3825
      %v3898 = vunpack.c.l.b16 %v3826
      %v3899 = vunpack.c.h.b16 %v3826
      %v3900 = vunpack.c.l.b16 %v3827
      %v3901 = vunpack.c.h.b16 %v3827
      %v3902 = vunpack.c.l.b16 %v3828
      %v3903 = vunpack.c.h.b16 %v3828
      %v3904 = vunpack.c.l.b16 %v3829
      %v3905 = vunpack.c.h.b16 %v3829
      %v3906 = vunpack.c.l.b16 %v3830
      %v3907 = vunpack.c.h.b16 %v3830
      %v3908 = vunpack.c.l.b16 %v3831
      %v3909 = vunpack.c.h.b16 %v3831
      %v3910 = vunpack.c.l.b16 %v3832
      %v3911 = vunpack.c.h.b16 %v3832
      %v3912 = vunpack.c.l.b16 %v3833
      %v3913 = vunpack.c.h.b16 %v3833
      %v3914 = vunpack.c.l.b16 %v3834
      %v3915 = vunpack.c.h.b16 %v3834
      %v3916 = vunpack.c.l.b16 %v3835
      %v3917 = vunpack.c.h.b16 %v3835
      %v3918 = vunpack.c.l.b16 %v3836
      %v3919 = vunpack.c.h.b16 %v3836
      %v3920 = vunpack.c.l.b16 %v3837
      %v3921 = vunpack.c.h.b16 %v3837
      %v3922 = vunpack.c.l.b16 %v3838
      %v3923 = vunpack.c.h.b16 %v3838
      %v3924 = vunpack.c.l.b16 %v3839
      %v3925 = vunpack.c.h.b16 %v3839
      %v3926 = vunpack.c.l.b16 %v3840
      %v3927 = vunpack.c.h.b16 %v3840
      %v3928 = vunpack.c.l.b16 %v3841
      %v3929 = vunpack.c.h.b16 %v3841
      %v3930 = vunpack.c.l.b16 %v3842
      %v3931 = vunpack.c.h.b16 %v3842
      %v3932 = vunpack.c.l.b16 %v3843
      %v3933 = vunpack.c.h.b16 %v3843
      %v3934 = vunpack.c.l.b16 %v3844
      %v3935 = vunpack.c.h.b16 %v3844
      %v3936 = vunpack.c.l.b16 %v3845
      %v3937 = vunpack.c.h.b16 %v3845
      %v3938 = vunpack.c.l.b16 %v3846
      %v3939 = vunpack.c.h.b16 %v3846
      %v3940 = vunpack.c.l.b16 %v3847
      %v3941 = vunpack.c.h.b16 %v3847
      %v3942 = vunpack.c.l.b16 %v3848
      %v3943 = vunpack.c.h.b16 %v3848
      %v3944 = vunpack.c.l.b16 %v3849
      %v3945 = vunpack.c.h.b16 %v3849
      %v3946 = vpack.c.b16 %v3882, %v3882
      %v3947 = vpack.c.b16 %v3883, %v3883
      %v3948 = vpack.c.b16 %v3884, %v3884
      %v3949 = vpack.c.b16 %v3885, %v3885
      %v3950 = vpack.c.b16 %v3886, %v3886
      %v3951 = vpack.c.b16 %v3887, %v3887
      %v3952 = vpack.c.b16 %v3888, %v3888
      %v3953 = vpack.c.b16 %v3889, %v3889
      %v3954 = vpack.c.b16 %v3890, %v3890
      %v3955 = vpack.c.b16 %v3891, %v3891
      %v3956 = vpack.c.b16 %v3892, %v3892
      %v3957 = vpack.c.b16 %v3893, %v3893
      %v3958 = vpack.c.b16 %v3894, %v3894
      %v3959 = vpack.c.b16 %v3895, %v3895
      %v3960 = vpack.c.b16 %v3896, %v3896
      %v3961 = vpack.c.b16 %v3897, %v3897
      %v3962 = vpack.c.b16 %v3898, %v3898
      %v3963 = vpack.c.b16 %v3899, %v3899
      %v3964 = vpack.c.b16 %v3900, %v3900
      %v3965 = vpack.c.b16 %v3901, %v3901
      %v3966 = vpack.c.b16 %v3902, %v3902
      %v3967 = vpack.c.b16 %v3903, %v3903
      %v3968 = vpack.c.b16 %v3904, %v3904
      %v3969 = vpack.c.b16 %v3905, %v3905
      %v3970 = vpack.c.b16 %v3906, %v3906
      %v3971 = vpack.c.b16 %v3907, %v3907
      %v3972 = vpack.c.b16 %v3908, %v3908
      %v3973 = vpack.c.b16 %v3909, %v3909
      %v3974 = vpack.c.b16 %v3910, %v3910
      %v3975 = vpack.c.b16 %v3911, %v3911
      %v3976 = vpack.c.b16 %v3912, %v3912
      %v3977 = vpack.c.b16 %v3913, %v3913
      %v3978 = vpack.c.b16 %v3914, %v3914
      %v3979 = vpack.c.b16 %v3915, %v3915
      %v3980 = vpack.c.b16 %v3916, %v3916
      %v3981 = vpack.c.b16 %v3917, %v3917
      %v3982 = vpack.c.b16 %v3918, %v3918
      %v3983 = vpack.c.b16 %v3919, %v3919
      %v3984 = vpack.c.b16 %v3920, %v3920
      %v3985 = vpack.c.b16 %v3921, %v3921
      %v3986 = vpack.c.b16 %v3922, %v3922
      %v3987 = vpack.c.b16 %v3923, %v3923
      %v3988 = vpack.c.b16 %v3924, %v3924
      %v3989 = vpack.c.b16 %v3925, %v3925
      %v3990 = vpack.c.b16 %v3926, %v3926
      %v3991 = vpack.c.b16 %v3927, %v3927
      %v3992 = vpack.c.b16 %v3928, %v3928
      %v3993 = vpack.c.b16 %v3929, %v3929
      %v3994 = vpack.c.b16 %v3930, %v3930
      %v3995 = vpack.c.b16 %v3931, %v3931
      %v3996 = vpack.c.b16 %v3932, %v3932
      %v3997 = vpack.c.b16 %v3933, %v3933
      %v3998 = vpack.c.b16 %v3934, %v3934
      %v3999 = vpack.c.b16 %v3935, %v3935
      %v4000 = vpack.c.b16 %v3936, %v3936
      %v4001 = vpack.c.b16 %v3937, %v3937
      %v4002 = vpack.c.b16 %v3938, %v3938
      %v4003 = vpack.c.b16 %v3939, %v3939
      %v4004 = vpack.c.b16 %v3940, %v3940
      %v4005 = vpack.c.b16 %v3941, %v3941
      %v4006 = vpack.c.b16 %v3942, %v3942
      %v4007 = vpack.c.b16 %v3943, %v3943
      %v4008 = vpack.c.b16 %v3944, %v3944
      %v4009 = vpack.c.b16 %v3945, %v3945
      %4074 = vst [vmem:[%s331] sm:$0xf] %v3946
      %4075 = vst [vmem:[%s331 + $0x4] sm:$0xf] %v3947
      %4076 = vst [vmem:[%s331 + $0x8] sm:$0xf] %v3948
      %4077 = vst [vmem:[%s331 + $0xc] sm:$0xf] %v3949
      %4078 = vst [vmem:[%s331 + $0x10] sm:$0xf] %v3950
      %4079 = vst [vmem:[%s331 + $0x14] sm:$0xf] %v3951
      %4080 = vst [vmem:[%s331 + $0x18] sm:$0xf] %v3952
      %4081 = vst [vmem:[%s331 + $0x1c] sm:$0xf] %v3953
      %4082 = vst [vmem:[%s331 + $0x20] sm:$0xf] %v3954
      %4083 = vst [vmem:[%s331 + $0x24] sm:$0xf] %v3955
      %4084 = vst [vmem:[%s331 + $0x28] sm:$0xf] %v3956
      %4085 = vst [vmem:[%s331 + $0x2c] sm:$0xf] %v3957
      %4086 = vst [vmem:[%s331 + $0x30] sm:$0xf] %v3958
      %4087 = vst [vmem:[%s331 + $0x34] sm:$0xf] %v3959
      %4088 = vst [vmem:[%s331 + $0x38] sm:$0xf] %v3960
      %4089 = vst [vmem:[%s331 + $0x3c] sm:$0xf] %v3961
      %4090 = vst [vmem:[%s331 + $0x40] sm:$0xf] %v3962
      %4091 = vst [vmem:[%s331 + $0x44] sm:$0xf] %v3963
      %4092 = vst [vmem:[%s331 + $0x48] sm:$0xf] %v3964
      %4093 = vst [vmem:[%s331 + $0x4c] sm:$0xf] %v3965
      %4094 = vst [vmem:[%s331 + $0x50] sm:$0xf] %v3966
      %4095 = vst [vmem:[%s331 + $0x54] sm:$0xf] %v3967
      %4096 = vst [vmem:[%s331 + $0x58] sm:$0xf] %v3968
      %4097 = vst [vmem:[%s331 + $0x5c] sm:$0xf] %v3969
      %4098 = vst [vmem:[%s331 + $0x60] sm:$0xf] %v3970
      %4099 = vst [vmem:[%s331 + $0x64] sm:$0xf] %v3971
      %4100 = vst [vmem:[%s331 + $0x68] sm:$0xf] %v3972
      %4101 = vst [vmem:[%s331 + $0x6c] sm:$0xf] %v3973
      %4102 = vst [vmem:[%s331 + $0x70] sm:$0xf] %v3974
      %4103 = vst [vmem:[%s331 + $0x74] sm:$0xf] %v3975
      %4104 = vst [vmem:[%s331 + $0x78] sm:$0xf] %v3976
      %4105 = vst [vmem:[%s331 + $0x7c] sm:$0xf] %v3977
      %4106 = vst [vmem:[%s331 + $0x80] sm:$0xf] %v3978
      %4107 = vst [vmem:[%s331 + $0x84] sm:$0xf] %v3979
      %4108 = vst [vmem:[%s331 + $0x88] sm:$0xf] %v3980
      %4109 = vst [vmem:[%s331 + $0x8c] sm:$0xf] %v3981
      %4110 = vst [vmem:[%s331 + $0x90] sm:$0xf] %v3982
      %4111 = vst [vmem:[%s331 + $0x94] sm:$0xf] %v3983
      %4112 = vst [vmem:[%s331 + $0x98] sm:$0xf] %v3984
      %4113 = vst [vmem:[%s331 + $0x9c] sm:$0xf] %v3985
      %4114 = vst [vmem:[%s331 + $0xa0] sm:$0xf] %v3986
      %4115 = vst [vmem:[%s331 + $0xa4] sm:$0xf] %v3987
      %4116 = vst [vmem:[%s331 + $0xa8] sm:$0xf] %v3988
      %4117 = vst [vmem:[%s331 + $0xac] sm:$0xf] %v3989
      %4118 = vst [vmem:[%s331 + $0xb0] sm:$0xf] %v3990
      %4119 = vst [vmem:[%s331 + $0xb4] sm:$0xf] %v3991
      %4120 = vst [vmem:[%s331 + $0xb8] sm:$0xf] %v3992
      %4121 = vst [vmem:[%s331 + $0xbc] sm:$0xf] %v3993
      %4122 = vst [vmem:[%s331 + $0xc0] sm:$0xf] %v3994
      %4123 = vst [vmem:[%s331 + $0xc4] sm:$0xf] %v3995
      %4124 = vst [vmem:[%s331 + $0xc8] sm:$0xf] %v3996
      %4125 = vst [vmem:[%s331 + $0xcc] sm:$0xf] %v3997
      %4126 = vst [vmem:[%s331 + $0xd0] sm:$0xf] %v3998
      %4127 = vst [vmem:[%s331 + $0xd4] sm:$0xf] %v3999
      %4128 = vst [vmem:[%s331 + $0xd8] sm:$0xf] %v4000
      %4129 = vst [vmem:[%s331 + $0xdc] sm:$0xf] %v4001
      %4130 = vst [vmem:[%s331 + $0xe0] sm:$0xf] %v4002
      %4131 = vst [vmem:[%s331 + $0xe4] sm:$0xf] %v4003
      %4132 = vst [vmem:[%s331 + $0xe8] sm:$0xf] %v4004
      %4133 = vst [vmem:[%s331 + $0xec] sm:$0xf] %v4005
      %4134 = vst [vmem:[%s331 + $0xf0] sm:$0xf] %v4006
      %4135 = vst [vmem:[%s331 + $0xf4] sm:$0xf] %v4007
      %4136 = vst [vmem:[%s331 + $0xf8] sm:$0xf] %v4008
      %4137 = vst [vmem:[%s331 + $0xfc] sm:$0xf] %v4009
      %s4138 = smul.u32 64, %s17
      %p4139 = scmp.lt.s32.totalorder %s4138, 127
      %s4140 = scalar_select %p4139, %s4138, 127
      %s4141 = smul.addr %s4140, 4
      %s4142 = scalar_lea.vmem %s6, %s4141
      // Predicated region
      $region45: #{cnn_forward.4} parent=43 // pred_check
        %p4143 = pneg %p181
      $region46: #{cnn_forward.4} parent=43 // pred_check_branch
        %4145 = sbr.rel (%p4143) target = $region48
      $region47: #{cnn_forward.4} parent=43 // pred_region
        %s4146 = smul.u32 64, %s17
      $region48: #{cnn_forward.4} parent=43 // pred_fallthru
        _
    $region44: #{cnn_forward.4} parent=5 // pred_fallthru
      _
    %p4147 = scmp.le.s32.totalorder 2, %s12
    // Predicated region
    $region49: #{cnn_forward.4} parent=5 // pred_check
      %p4148 = pneg %p4147
    $region50: #{cnn_forward.4} parent=5 // pred_check_branch
      %4150 = sbr.rel (%p4148) target = $region52
    $region51: #{cnn_forward.4} parent=5 // pred_region
      %s4151 = ssub.s32 %s12, 2
      // Predicated region
      $region53: #{cnn_forward.4} parent=51 // pred_check
        %p4152 = pneg %p187
      $region54: #{cnn_forward.4} parent=51 // pred_check_branch
        %4154 = sbr.rel (%p4152) target = $region56
      $region55: #{cnn_forward.4} parent=51 // pred_region
        %s4155 = smul.u32 64, %s18
        %p4156 = scmp.lt.s32.totalorder %s4155, 127
        %s4157 = scalar_select %p4156, %s4155, 127
        %s4158 = smul.addr %s4157, 4
        %s4159 = scalar_lea.vmem %s6, %s4158
      $region56: #{cnn_forward.4} parent=51 // pred_fallthru
        _
    $region52: #{cnn_forward.4} parent=5 // pred_fallthru
      _
  $region6: #{cnn_forward.4} parent=0 // loop_footer
    %s16 = sadd.s32 1, %s12
  $region7: #{cnn_forward.4} parent=0 // loop_footer_branch
    %11 = sbr.rel target = $region3
  $region8: #{cnn_forward.4} parent=0 // loop_exit
    _

// kernel: cnn_forward.5
$region0: #{cnn_forward.5}
  #allocation0 [shape = 'u32[]', space=smem, size = 0x4, offset = 0x4, fixed_abs, tag = 'smem constant byte address 0x4 - core index']
  #allocation1 [shape = 'u32[144,128]{1,0:T(1,128)}', space=vmem, size = 0x12000, scoped, tag = 'internal scratch']
  %s0 = inlined_call_operand.vmem [shape: bf16[16,7744], index: 0, kind: input, shape index: {}]
  %s1 = inlined_call_operand.vmem [shape: bf16[7744,128], index: 1, kind: input, shape index: {}]
  %s2 = inlined_call_operand.vmem [shape: f32[1,128], index: 2, kind: input, shape index: {}]
  %s3 = inlined_call_operand.vmem [shape: bf16[128,128], index: 3, kind: input, shape index: {}]
  %s4 = inlined_call_operand.vmem [shape: f32[1,128], index: 4, kind: input, shape index: {}]
  %s5 = inlined_call_operand.vmem [shape: bf16[128,128], index: 5, kind: input, shape index: {}]
  %s6 = inlined_call_operand.vmem [shape: f32[1,128], index: 6, kind: input, shape index: {}]
  %s7 = inlined_call_operand.vmem [shape: f32[16,128], index: 7, kind: output, shape index: {}]
  %s8 = sld [smem:[#allocation0]]
  $region38: #{cnn_forward.5} parent=0
    _
  %s10 = ssub.s32 1, %s8
  %s11 = scalar_select 0, %s10, %s8
  // Predicated region
  $region2: #{cnn_forward.5} parent=0 // pred_check
    _
  $region3: #{cnn_forward.5} parent=0 // pred_check_branch
    %13 = sbr.rel (0) target = $region5
  $region4: #{cnn_forward.5} parent=0 // pred_region
    _
  $region5: #{cnn_forward.5} parent=0 // pred_fallthru
    _
  // Predicated region
  $region6: #{cnn_forward.5} parent=0 // pred_check
    _
  $region7: #{cnn_forward.5} parent=0 // pred_check_branch
    %15 = sbr.rel (0) target = $region9
  $region8: #{cnn_forward.5} parent=0 // pred_region
    _
  $region9: #{cnn_forward.5} parent=0 // pred_fallthru
    _
  // Predicated region
  $region10: #{cnn_forward.5} parent=0 // pred_check
    _
  $region11: #{cnn_forward.5} parent=0 // pred_check_branch
    %17 = sbr.rel (0) target = $region13
  $region12: #{cnn_forward.5} parent=0 // pred_region
    _
  $region13: #{cnn_forward.5} parent=0 // pred_fallthru
    _
  // Predicated region
  $region14: #{cnn_forward.5} parent=0 // pred_check
    _
  $region15: #{cnn_forward.5} parent=0 // pred_check_branch
    %19 = sbr.rel (0) target = $region17
  $region16: #{cnn_forward.5} parent=0 // pred_region
    _
  $region17: #{cnn_forward.5} parent=0 // pred_fallthru
    _
  // Predicated region
  $region18: #{cnn_forward.5} parent=0 // pred_check
    _
  $region19: #{cnn_forward.5} parent=0 // pred_check_branch
    %21 = sbr.rel (0) target = $region21
  $region20: #{cnn_forward.5} parent=0 // pred_region
    _
  $region21: #{cnn_forward.5} parent=0 // pred_fallthru
    _
  // Predicated region
  $region22: #{cnn_forward.5} parent=0 // pred_check
    _
  $region23: #{cnn_forward.5} parent=0 // pred_check_branch
    %23 = sbr.rel (0) target = $region25
  $region24: #{cnn_forward.5} parent=0 // pred_region
    _
  $region25: #{cnn_forward.5} parent=0 // pred_fallthru
    _
  // Predicated region
  $region26: #{cnn_forward.5} parent=0 // pred_check
    _
  $region27: #{cnn_forward.5} parent=0 // pred_check_branch
    %25 = sbr.rel (0) target = $region29
  $region28: #{cnn_forward.5} parent=0 // pred_region
    _
  $region29: #{cnn_forward.5} parent=0 // pred_fallthru
    _
  %v27 = vld [vmem:[%s0] sm:$0xff]
  %v28 = vld [vmem:[%s0 + $0x8] sm:$0xff]
  %v29 = vld [vmem:[%s0 + $0x10] sm:$0xff]
  %v30 = vld [vmem:[%s0 + $0x18] sm:$0xff]
  %v31 = vld [vmem:[%s0 + $0x20] sm:$0xff]
  %v32 = vld [vmem:[%s0 + $0x28] sm:$0xff]
  %v33 = vld [vmem:[%s0 + $0x30] sm:$0xff]
  %v34 = vld [vmem:[%s0 + $0x38] sm:$0xff]
  %v35 = vld [vmem:[%s0 + $0x40] sm:$0xff]
  %v36 = vld [vmem:[%s0 + $0x48] sm:$0xff]
  %v37 = vld [vmem:[%s0 + $0x50] sm:$0xff]
  %v38 = vld [vmem:[%s0 + $0x58] sm:$0xff]
  %v39 = vld [vmem:[%s0 + $0x60] sm:$0xff]
  %v40 = vld [vmem:[%s0 + $0x68] sm:$0xff]
  %v41 = vld [vmem:[%s0 + $0x70] sm:$0xff]
  %v42 = vld [vmem:[%s0 + $0x78] sm:$0xff]
  %v43 = vld [vmem:[%s0 + $0x80] sm:$0xff]
  %v44 = vld [vmem:[%s0 + $0x88] sm:$0xff]
  %v45 = vld [vmem:[%s0 + $0x90] sm:$0xff]
  %v46 = vld [vmem:[%s0 + $0x98] sm:$0xff]
  %v47 = vld [vmem:[%s0 + $0xa0] sm:$0xff]
  %v48 = vld [vmem:[%s0 + $0xa8] sm:$0xff]
  %v49 = vld [vmem:[%s0 + $0xb0] sm:$0xff]
  %v50 = vld [vmem:[%s0 + $0xb8] sm:$0xff]
  %v51 = vld [vmem:[%s0 + $0xc0] sm:$0xff]
  %v52 = vld [vmem:[%s0 + $0xc8] sm:$0xff]
  %v53 = vld [vmem:[%s0 + $0xd0] sm:$0xff]
  %v54 = vld [vmem:[%s0 + $0xd8] sm:$0xff]
  %v55 = vld [vmem:[%s0 + $0xe0] sm:$0xff]
  %v56 = vld [vmem:[%s0 + $0xe8] sm:$0xff]
  %v57 = vld [vmem:[%s0 + $0xf0] sm:$0xf]
  %v58 = vld [vmem:[%s0 + $0xf4] sm:$0xff]
  %v59 = vld [vmem:[%s0 + $0xfc] sm:$0xff]
  %v60 = vld [vmem:[%s0 + $0x104] sm:$0xff]
  %v61 = vld [vmem:[%s0 + $0x10c] sm:$0xff]
  %v62 = vld [vmem:[%s0 + $0x114] sm:$0xff]
  %v63 = vld [vmem:[%s0 + $0x11c] sm:$0xff]
  %v64 = vld [vmem:[%s0 + $0x124] sm:$0xff]
  %v65 = vld [vmem:[%s0 + $0x12c] sm:$0xff]
  %v66 = vld [vmem:[%s0 + $0x134] sm:$0xff]
  %v67 = vld [vmem:[%s0 + $0x13c] sm:$0xff]
  %v68 = vld [vmem:[%s0 + $0x144] sm:$0xff]
  %v69 = vld [vmem:[%s0 + $0x14c] sm:$0xff]
  %v70 = vld [vmem:[%s0 + $0x154] sm:$0xff]
  %v71 = vld [vmem:[%s0 + $0x15c] sm:$0xff]
  %v72 = vld [vmem:[%s0 + $0x164] sm:$0xff]
  %v73 = vld [vmem:[%s0 + $0x16c] sm:$0xff]
  %v74 = vld [vmem:[%s0 + $0x174] sm:$0xff]
  %v75 = vld [vmem:[%s0 + $0x17c] sm:$0xff]
  %v76 = vld [vmem:[%s0 + $0x184] sm:$0xff]
  %v77 = vld [vmem:[%s0 + $0x18c] sm:$0xff]
  %v78 = vld [vmem:[%s0 + $0x194] sm:$0xff]
  %v79 = vld [vmem:[%s0 + $0x19c] sm:$0xff]
  %v80 = vld [vmem:[%s0 + $0x1a4] sm:$0xff]
  %v81 = vld [vmem:[%s0 + $0x1ac] sm:$0xff]
  %v82 = vld [vmem:[%s0 + $0x1b4] sm:$0xff]
  %v83 = vld [vmem:[%s0 + $0x1bc] sm:$0xff]
  %v84 = vld [vmem:[%s0 + $0x1c4] sm:$0xff]
  %v85 = vld [vmem:[%s0 + $0x1cc] sm:$0xff]
  %v86 = vld [vmem:[%s0 + $0x1d4] sm:$0xff]
  %v87 = vld [vmem:[%s0 + $0x1dc] sm:$0xff]
  %v88 = vld [vmem:[%s0 + $0x1e4] sm:$0xf]
  %v89 = vld [vmem:[%s1] sm:$0xf]
  %v90 = vld [vmem:[%s1 + $0x4] sm:$0xf]
  %v91 = vld [vmem:[%s1 + $0x8] sm:$0xf]
  %v92 = vld [vmem:[%s1 + $0xc] sm:$0xf]
  %v93 = vld [vmem:[%s1 + $0x10] sm:$0xf]
  %v94 = vld [vmem:[%s1 + $0x14] sm:$0xf]
  %v95 = vld [vmem:[%s1 + $0x18] sm:$0xf]
  %v96 = vld [vmem:[%s1 + $0x1c] sm:$0xf]
  %v97 = vld [vmem:[%s1 + $0x20] sm:$0xf]
  %v98 = vld [vmem:[%s1 + $0x24] sm:$0xf]
  %v99 = vld [vmem:[%s1 + $0x28] sm:$0xf]
  %v100 = vld [vmem:[%s1 + $0x2c] sm:$0xf]
  %v101 = vld [vmem:[%s1 + $0x30] sm:$0xf]
  %v102 = vld [vmem:[%s1 + $0x34] sm:$0xf]
  %v103 = vld [vmem:[%s1 + $0x38] sm:$0xf]
  %v104 = vld [vmem:[%s1 + $0x3c] sm:$0xf]
  %v105 = vld [vmem:[%s1 + $0x40] sm:$0xf]
  %v106 = vld [vmem:[%s1 + $0x44] sm:$0xf]
  %v107 = vld [vmem:[%s1 + $0x48] sm:$0xf]
  %v108 = vld [vmem:[%s1 + $0x4c] sm:$0xf]
  %v109 = vld [vmem:[%s1 + $0x50] sm:$0xf]
  %v110 = vld [vmem:[%s1 + $0x54] sm:$0xf]
  %v111 = vld [vmem:[%s1 + $0x58] sm:$0xf]
  %v112 = vld [vmem:[%s1 + $0x5c] sm:$0xf]
  %v113 = vld [vmem:[%s1 + $0x60] sm:$0xf]
  %v114 = vld [vmem:[%s1 + $0x64] sm:$0xf]
  %v115 = vld [vmem:[%s1 + $0x68] sm:$0xf]
  %v116 = vld [vmem:[%s1 + $0x6c] sm:$0xf]
  %v117 = vld [vmem:[%s1 + $0x70] sm:$0xf]
  %v118 = vld [vmem:[%s1 + $0x74] sm:$0xf]
  %v119 = vld [vmem:[%s1 + $0x78] sm:$0xf]
  %v120 = vld [vmem:[%s1 + $0x7c] sm:$0xf]
  %v121 = vld [vmem:[%s1 + $0x80] sm:$0xf]
  %v122 = vld [vmem:[%s1 + $0x84] sm:$0xf]
  %v123 = vld [vmem:[%s1 + $0x88] sm:$0xf]
  %v124 = vld [vmem:[%s1 + $0x8c] sm:$0xf]
  %v125 = vld [vmem:[%s1 + $0x90] sm:$0xf]
  %v126 = vld [vmem:[%s1 + $0x94] sm:$0xf]
  %v127 = vld [vmem:[%s1 + $0x98] sm:$0xf]
  %v128 = vld [vmem:[%s1 + $0x9c] sm:$0xf]
  %v129 = vld [vmem:[%s1 + $0xa0] sm:$0xf]
  %v130 = vld [vmem:[%s1 + $0xa4] sm:$0xf]
  %v131 = vld [vmem:[%s1 + $0xa8] sm:$0xf]
  %v132 = vld [vmem:[%s1 + $0xac] sm:$0xf]
  %v133 = vld [vmem:[%s1 + $0xb0] sm:$0xf]
  %v134 = vld [vmem:[%s1 + $0xb4] sm:$0xf]
  %v135 = vld [vmem:[%s1 + $0xb8] sm:$0xf]
  %v136 = vld [vmem:[%s1 + $0xbc] sm:$0xf]
  %v137 = vld [vmem:[%s1 + $0xc0] sm:$0xf]
  %v138 = vld [vmem:[%s1 + $0xc4] sm:$0xf]
  %v139 = vld [vmem:[%s1 + $0xc8] sm:$0xf]
  %v140 = vld [vmem:[%s1 + $0xcc] sm:$0xf]
  %v141 = vld [vmem:[%s1 + $0xd0] sm:$0xf]
  %v142 = vld [vmem:[%s1 + $0xd4] sm:$0xf]
  %v143 = vld [vmem:[%s1 + $0xd8] sm:$0xf]
  %v144 = vld [vmem:[%s1 + $0xdc] sm:$0xf]
  %v145 = vld [vmem:[%s1 + $0xe0] sm:$0xf]
  %v146 = vld [vmem:[%s1 + $0xe4] sm:$0xf]
  %v147 = vld [vmem:[%s1 + $0xe8] sm:$0xf]
  %v148 = vld [vmem:[%s1 + $0xec] sm:$0xf]
  %v149 = vld [vmem:[%s1 + $0xf0] sm:$0xf]
  %v150 = vld [vmem:[%s1 + $0xf4] sm:$0xf]
  %v151 = vld [vmem:[%s1 + $0xf8] sm:$0xf]
  %v152 = vld [vmem:[%s1 + $0xfc] sm:$0xf]
  %v153 = vld [vmem:[%s1 + $0x100] sm:$0xf]
  %v154 = vld [vmem:[%s1 + $0x104] sm:$0xf]
  %v155 = vld [vmem:[%s1 + $0x108] sm:$0xf]
  %v156 = vld [vmem:[%s1 + $0x10c] sm:$0xf]
  %v157 = vld [vmem:[%s1 + $0x110] sm:$0xf]
  %v158 = vld [vmem:[%s1 + $0x114] sm:$0xf]
  %v159 = vld [vmem:[%s1 + $0x118] sm:$0xf]
  %v160 = vld [vmem:[%s1 + $0x11c] sm:$0xf]
  %v161 = vld [vmem:[%s1 + $0x120] sm:$0xf]
  %v162 = vld [vmem:[%s1 + $0x124] sm:$0xf]
  %v163 = vld [vmem:[%s1 + $0x128] sm:$0xf]
  %v164 = vld [vmem:[%s1 + $0x12c] sm:$0xf]
  %v165 = vld [vmem:[%s1 + $0x130] sm:$0xf]
  %v166 = vld [vmem:[%s1 + $0x134] sm:$0xf]
  %v167 = vld [vmem:[%s1 + $0x138] sm:$0xf]
  %v168 = vld [vmem:[%s1 + $0x13c] sm:$0xf]
  %v169 = vld [vmem:[%s1 + $0x140] sm:$0xf]
  %v170 = vld [vmem:[%s1 + $0x144] sm:$0xf]
  %v171 = vld [vmem:[%s1 + $0x148] sm:$0xf]
  %v172 = vld [vmem:[%s1 + $0x14c] sm:$0xf]
  %v173 = vld [vmem:[%s1 + $0x150] sm:$0xf]
  %v174 = vld [vmem:[%s1 + $0x154] sm:$0xf]
  %v175 = vld [vmem:[%s1 + $0x158] sm:$0xf]
  %v176 = vld [vmem:[%s1 + $0x15c] sm:$0xf]
  %v177 = vld [vmem:[%s1 + $0x160] sm:$0xf]
  %v178 = vld [vmem:[%s1 + $0x164] sm:$0xf]
  %v179 = vld [vmem:[%s1 + $0x168] sm:$0xf]
  %v180 = vld [vmem:[%s1 + $0x16c] sm:$0xf]
  %v181 = vld [vmem:[%s1 + $0x170] sm:$0xf]
  %v182 = vld [vmem:[%s1 + $0x174] sm:$0xf]
  %v183 = vld [vmem:[%s1 + $0x178] sm:$0xf]
  %v184 = vld [vmem:[%s1 + $0x17c] sm:$0xf]
  %v185 = vld [vmem:[%s1 + $0x180] sm:$0xf]
  %v186 = vld [vmem:[%s1 + $0x184] sm:$0xf]
  %v187 = vld [vmem:[%s1 + $0x188] sm:$0xf]
  %v188 = vld [vmem:[%s1 + $0x18c] sm:$0xf]
  %v189 = vld [vmem:[%s1 + $0x190] sm:$0xf]
  %v190 = vld [vmem:[%s1 + $0x194] sm:$0xf]
  %v191 = vld [vmem:[%s1 + $0x198] sm:$0xf]
  %v192 = vld [vmem:[%s1 + $0x19c] sm:$0xf]
  %v193 = vld [vmem:[%s1 + $0x1a0] sm:$0xf]
  %v194 = vld [vmem:[%s1 + $0x1a4] sm:$0xf]
  %v195 = vld [vmem:[%s1 + $0x1a8] sm:$0xf]
  %v196 = vld [vmem:[%s1 + $0x1ac] sm:$0xf]
  %v197 = vld [vmem:[%s1 + $0x1b0] sm:$0xf]
  %v198 = vld [vmem:[%s1 + $0x1b4] sm:$0xf]
  %v199 = vld [vmem:[%s1 + $0x1b8] sm:$0xf]
  %v200 = vld [vmem:[%s1 + $0x1bc] sm:$0xf]
  %v201 = vld [vmem:[%s1 + $0x1c0] sm:$0xf]
  %v202 = vld [vmem:[%s1 + $0x1c4] sm:$0xf]
  %v203 = vld [vmem:[%s1 + $0x1c8] sm:$0xf]
  %v204 = vld [vmem:[%s1 + $0x1cc] sm:$0xf]
  %v205 = vld [vmem:[%s1 + $0x1d0] sm:$0xf]
  %v206 = vld [vmem:[%s1 + $0x1d4] sm:$0xf]
  %v207 = vld [vmem:[%s1 + $0x1d8] sm:$0xf]
  %v208 = vld [vmem:[%s1 + $0x1dc] sm:$0xf]
  %v209 = vld [vmem:[%s1 + $0x1e0] sm:$0xf]
  %v210 = vld [vmem:[%s1 + $0x1e4] sm:$0xf]
  %v211 = vld [vmem:[%s1 + $0x1e8] sm:$0xf]
  %v212 = vld [vmem:[%s1 + $0x1ec] sm:$0xf]
  %v213 = vld [vmem:[%s1 + $0x1f0] sm:$0xf]
  %v214 = vld [vmem:[%s1 + $0x1f4] sm:$0xf]
  %v215 = vld [vmem:[%s1 + $0x1f8] sm:$0xf]
  %v216 = vld [vmem:[%s1 + $0x1fc] sm:$0xf]
  %v217 = vld [vmem:[%s1 + $0x200] sm:$0xf]
  %v218 = vld [vmem:[%s1 + $0x204] sm:$0xf]
  %v219 = vld [vmem:[%s1 + $0x208] sm:$0xf]
  %v220 = vld [vmem:[%s1 + $0x20c] sm:$0xf]
  %v221 = vld [vmem:[%s1 + $0x210] sm:$0xf]
  %v222 = vld [vmem:[%s1 + $0x214] sm:$0xf]
  %v223 = vld [vmem:[%s1 + $0x218] sm:$0xf]
  %v224 = vld [vmem:[%s1 + $0x21c] sm:$0xf]
  %v225 = vld [vmem:[%s1 + $0x220] sm:$0xf]
  %v226 = vld [vmem:[%s1 + $0x224] sm:$0xf]
  %v227 = vld [vmem:[%s1 + $0x228] sm:$0xf]
  %v228 = vld [vmem:[%s1 + $0x22c] sm:$0xf]
  %v229 = vld [vmem:[%s1 + $0x230] sm:$0xf]
  %v230 = vld [vmem:[%s1 + $0x234] sm:$0xf]
  %v231 = vld [vmem:[%s1 + $0x238] sm:$0xf]
  %v232 = vld [vmem:[%s1 + $0x23c] sm:$0xf]
  %v233 = vld [vmem:[%s1 + $0x240] sm:$0xf]
  %v234 = vld [vmem:[%s1 + $0x244] sm:$0xf]
  %v235 = vld [vmem:[%s1 + $0x248] sm:$0xf]
  %v236 = vld [vmem:[%s1 + $0x24c] sm:$0xf]
  %v237 = vld [vmem:[%s1 + $0x250] sm:$0xf]
  %v238 = vld [vmem:[%s1 + $0x254] sm:$0xf]
  %v239 = vld [vmem:[%s1 + $0x258] sm:$0xf]
  %v240 = vld [vmem:[%s1 + $0x25c] sm:$0xf]
  %v241 = vld [vmem:[%s1 + $0x260] sm:$0xf]
  %v242 = vld [vmem:[%s1 + $0x264] sm:$0xf]
  %v243 = vld [vmem:[%s1 + $0x268] sm:$0xf]
  %v244 = vld [vmem:[%s1 + $0x26c] sm:$0xf]
  %v245 = vld [vmem:[%s1 + $0x270] sm:$0xf]
  %v246 = vld [vmem:[%s1 + $0x274] sm:$0xf]
  %v247 = vld [vmem:[%s1 + $0x278] sm:$0xf]
  %v248 = vld [vmem:[%s1 + $0x27c] sm:$0xf]
  %v249 = vld [vmem:[%s1 + $0x280] sm:$0xf]
  %v250 = vld [vmem:[%s1 + $0x284] sm:$0xf]
  %v251 = vld [vmem:[%s1 + $0x288] sm:$0xf]
  %v252 = vld [vmem:[%s1 + $0x28c] sm:$0xf]
  %v253 = vld [vmem:[%s1 + $0x290] sm:$0xf]
  %v254 = vld [vmem:[%s1 + $0x294] sm:$0xf]
  %v255 = vld [vmem:[%s1 + $0x298] sm:$0xf]
  %v256 = vld [vmem:[%s1 + $0x29c] sm:$0xf]
  %v257 = vld [vmem:[%s1 + $0x2a0] sm:$0xf]
  %v258 = vld [vmem:[%s1 + $0x2a4] sm:$0xf]
  %v259 = vld [vmem:[%s1 + $0x2a8] sm:$0xf]
  %v260 = vld [vmem:[%s1 + $0x2ac] sm:$0xf]
  %v261 = vld [vmem:[%s1 + $0x2b0] sm:$0xf]
  %v262 = vld [vmem:[%s1 + $0x2b4] sm:$0xf]
  %v263 = vld [vmem:[%s1 + $0x2b8] sm:$0xf]
  %v264 = vld [vmem:[%s1 + $0x2bc] sm:$0xf]
  %v265 = vld [vmem:[%s1 + $0x2c0] sm:$0xf]
  %v266 = vld [vmem:[%s1 + $0x2c4] sm:$0xf]
  %v267 = vld [vmem:[%s1 + $0x2c8] sm:$0xf]
  %v268 = vld [vmem:[%s1 + $0x2cc] sm:$0xf]
  %v269 = vld [vmem:[%s1 + $0x2d0] sm:$0xf]
  %v270 = vld [vmem:[%s1 + $0x2d4] sm:$0xf]
  %v271 = vld [vmem:[%s1 + $0x2d8] sm:$0xf]
  %v272 = vld [vmem:[%s1 + $0x2dc] sm:$0xf]
  %v273 = vld [vmem:[%s1 + $0x2e0] sm:$0xf]
  %v274 = vld [vmem:[%s1 + $0x2e4] sm:$0xf]
  %v275 = vld [vmem:[%s1 + $0x2e8] sm:$0xf]
  %v276 = vld [vmem:[%s1 + $0x2ec] sm:$0xf]
  %v277 = vld [vmem:[%s1 + $0x2f0] sm:$0xf]
  %v278 = vld [vmem:[%s1 + $0x2f4] sm:$0xf]
  %v279 = vld [vmem:[%s1 + $0x2f8] sm:$0xf]
  %v280 = vld [vmem:[%s1 + $0x2fc] sm:$0xf]
  %v281 = vld [vmem:[%s1 + $0x300] sm:$0xf]
  %v282 = vld [vmem:[%s1 + $0x304] sm:$0xf]
  %v283 = vld [vmem:[%s1 + $0x308] sm:$0xf]
  %v284 = vld [vmem:[%s1 + $0x30c] sm:$0xf]
  %v285 = vld [vmem:[%s1 + $0x310] sm:$0xf]
  %v286 = vld [vmem:[%s1 + $0x314] sm:$0xf]
  %v287 = vld [vmem:[%s1 + $0x318] sm:$0xf]
  %v288 = vld [vmem:[%s1 + $0x31c] sm:$0xf]
  %v289 = vld [vmem:[%s1 + $0x320] sm:$0xf]
  %v290 = vld [vmem:[%s1 + $0x324] sm:$0xf]
  %v291 = vld [vmem:[%s1 + $0x328] sm:$0xf]
  %v292 = vld [vmem:[%s1 + $0x32c] sm:$0xf]
  %v293 = vld [vmem:[%s1 + $0x330] sm:$0xf]
  %v294 = vld [vmem:[%s1 + $0x334] sm:$0xf]
  %v295 = vld [vmem:[%s1 + $0x338] sm:$0xf]
  %v296 = vld [vmem:[%s1 + $0x33c] sm:$0xf]
  %v297 = vld [vmem:[%s1 + $0x340] sm:$0xf]
  %v298 = vld [vmem:[%s1 + $0x344] sm:$0xf]
  %v299 = vld [vmem:[%s1 + $0x348] sm:$0xf]
  %v300 = vld [vmem:[%s1 + $0x34c] sm:$0xf]
  %v301 = vld [vmem:[%s1 + $0x350] sm:$0xf]
  %v302 = vld [vmem:[%s1 + $0x354] sm:$0xf]
  %v303 = vld [vmem:[%s1 + $0x358] sm:$0xf]
  %v304 = vld [vmem:[%s1 + $0x35c] sm:$0xf]
  %v305 = vld [vmem:[%s1 + $0x360] sm:$0xf]
  %v306 = vld [vmem:[%s1 + $0x364] sm:$0xf]
  %v307 = vld [vmem:[%s1 + $0x368] sm:$0xf]
  %v308 = vld [vmem:[%s1 + $0x36c] sm:$0xf]
  %v309 = vld [vmem:[%s1 + $0x370] sm:$0xf]
  %v310 = vld [vmem:[%s1 + $0x374] sm:$0xf]
  %v311 = vld [vmem:[%s1 + $0x378] sm:$0xf]
  %v312 = vld [vmem:[%s1 + $0x37c] sm:$0xf]
  %v313 = vld [vmem:[%s1 + $0x380] sm:$0xf]
  %v314 = vld [vmem:[%s1 + $0x384] sm:$0xf]
  %v315 = vld [vmem:[%s1 + $0x388] sm:$0xf]
  %v316 = vld [vmem:[%s1 + $0x38c] sm:$0xf]
  %v317 = vld [vmem:[%s1 + $0x390] sm:$0xf]
  %v318 = vld [vmem:[%s1 + $0x394] sm:$0xf]
  %v319 = vld [vmem:[%s1 + $0x398] sm:$0xf]
  %v320 = vld [vmem:[%s1 + $0x39c] sm:$0xf]
  %v321 = vld [vmem:[%s1 + $0x3a0] sm:$0xf]
  %v322 = vld [vmem:[%s1 + $0x3a4] sm:$0xf]
  %v323 = vld [vmem:[%s1 + $0x3a8] sm:$0xf]
  %v324 = vld [vmem:[%s1 + $0x3ac] sm:$0xf]
  %v325 = vld [vmem:[%s1 + $0x3b0] sm:$0xf]
  %v326 = vld [vmem:[%s1 + $0x3b4] sm:$0xf]
  %v327 = vld [vmem:[%s1 + $0x3b8] sm:$0xf]
  %v328 = vld [vmem:[%s1 + $0x3bc] sm:$0xf]
  %v329 = vld [vmem:[%s1 + $0x3c0] sm:$0xf]
  %v330 = vld [vmem:[%s1 + $0x3c4] sm:$0xf]
  %v331 = vld [vmem:[%s1 + $0x3c8] sm:$0xf]
  %v332 = vld [vmem:[%s1 + $0x3cc] sm:$0xf]
  %v333 = vld [vmem:[%s1 + $0x3d0] sm:$0xf]
  %v334 = vld [vmem:[%s1 + $0x3d4] sm:$0xf]
  %v335 = vld [vmem:[%s1 + $0x3d8] sm:$0xf]
  %v336 = vld [vmem:[%s1 + $0x3dc] sm:$0xf]
  %v337 = vld [vmem:[%s1 + $0x3e0] sm:$0xf]
  %v338 = vld [vmem:[%s1 + $0x3e4] sm:$0xf]
  %v339 = vld [vmem:[%s1 + $0x3e8] sm:$0xf]
  %v340 = vld [vmem:[%s1 + $0x3ec] sm:$0xf]
  %v341 = vld [vmem:[%s1 + $0x3f0] sm:$0xf]
  %v342 = vld [vmem:[%s1 + $0x3f4] sm:$0xf]
  %v343 = vld [vmem:[%s1 + $0x3f8] sm:$0xf]
  %v344 = vld [vmem:[%s1 + $0x3fc] sm:$0xf]
  %v345 = vld [vmem:[%s1 + $0x400] sm:$0xf]
  %v346 = vld [vmem:[%s1 + $0x404] sm:$0xf]
  %v347 = vld [vmem:[%s1 + $0x408] sm:$0xf]
  %v348 = vld [vmem:[%s1 + $0x40c] sm:$0xf]
  %v349 = vld [vmem:[%s1 + $0x410] sm:$0xf]
  %v350 = vld [vmem:[%s1 + $0x414] sm:$0xf]
  %v351 = vld [vmem:[%s1 + $0x418] sm:$0xf]
  %v352 = vld [vmem:[%s1 + $0x41c] sm:$0xf]
  %v353 = vld [vmem:[%s1 + $0x420] sm:$0xf]
  %v354 = vld [vmem:[%s1 + $0x424] sm:$0xf]
  %v355 = vld [vmem:[%s1 + $0x428] sm:$0xf]
  %v356 = vld [vmem:[%s1 + $0x42c] sm:$0xf]
  %v357 = vld [vmem:[%s1 + $0x430] sm:$0xf]
  %v358 = vld [vmem:[%s1 + $0x434] sm:$0xf]
  %v359 = vld [vmem:[%s1 + $0x438] sm:$0xf]
  %v360 = vld [vmem:[%s1 + $0x43c] sm:$0xf]
  %v361 = vld [vmem:[%s1 + $0x440] sm:$0xf]
  %v362 = vld [vmem:[%s1 + $0x444] sm:$0xf]
  %v363 = vld [vmem:[%s1 + $0x448] sm:$0xf]
  %v364 = vld [vmem:[%s1 + $0x44c] sm:$0xf]
  %v365 = vld [vmem:[%s1 + $0x450] sm:$0xf]
  %v366 = vld [vmem:[%s1 + $0x454] sm:$0xf]
  %v367 = vld [vmem:[%s1 + $0x458] sm:$0xf]
  %v368 = vld [vmem:[%s1 + $0x45c] sm:$0xf]
  %v369 = vld [vmem:[%s1 + $0x460] sm:$0xf]
  %v370 = vld [vmem:[%s1 + $0x464] sm:$0xf]
  %v371 = vld [vmem:[%s1 + $0x468] sm:$0xf]
  %v372 = vld [vmem:[%s1 + $0x46c] sm:$0xf]
  %v373 = vld [vmem:[%s1 + $0x470] sm:$0xf]
  %v374 = vld [vmem:[%s1 + $0x474] sm:$0xf]
  %v375 = vld [vmem:[%s1 + $0x478] sm:$0xf]
  %v376 = vld [vmem:[%s1 + $0x47c] sm:$0xf]
  %v377 = vld [vmem:[%s1 + $0x480] sm:$0xf]
  %v378 = vld [vmem:[%s1 + $0x484] sm:$0xf]
  %v379 = vld [vmem:[%s1 + $0x488] sm:$0xf]
  %v380 = vld [vmem:[%s1 + $0x48c] sm:$0xf]
  %v381 = vld [vmem:[%s1 + $0x490] sm:$0xf]
  %v382 = vld [vmem:[%s1 + $0x494] sm:$0xf]
  %v383 = vld [vmem:[%s1 + $0x498] sm:$0xf]
  %v384 = vld [vmem:[%s1 + $0x49c] sm:$0xf]
  %v385 = vld [vmem:[%s1 + $0x4a0] sm:$0xf]
  %v386 = vld [vmem:[%s1 + $0x4a4] sm:$0xf]
  %v387 = vld [vmem:[%s1 + $0x4a8] sm:$0xf]
  %v388 = vld [vmem:[%s1 + $0x4ac] sm:$0xf]
  %v389 = vld [vmem:[%s1 + $0x4b0] sm:$0xf]
  %v390 = vld [vmem:[%s1 + $0x4b4] sm:$0xf]
  %v391 = vld [vmem:[%s1 + $0x4b8] sm:$0xf]
  %v392 = vld [vmem:[%s1 + $0x4bc] sm:$0xf]
  %v393 = vld [vmem:[%s1 + $0x4c0] sm:$0xf]
  %v394 = vld [vmem:[%s1 + $0x4c4] sm:$0xf]
  %v395 = vld [vmem:[%s1 + $0x4c8] sm:$0xf]
  %v396 = vld [vmem:[%s1 + $0x4cc] sm:$0xf]
  %v397 = vld [vmem:[%s1 + $0x4d0] sm:$0xf]
  %v398 = vld [vmem:[%s1 + $0x4d4] sm:$0xf]
  %v399 = vld [vmem:[%s1 + $0x4d8] sm:$0xf]
  %v400 = vld [vmem:[%s1 + $0x4dc] sm:$0xf]
  %v401 = vld [vmem:[%s1 + $0x4e0] sm:$0xf]
  %v402 = vld [vmem:[%s1 + $0x4e4] sm:$0xf]
  %v403 = vld [vmem:[%s1 + $0x4e8] sm:$0xf]
  %v404 = vld [vmem:[%s1 + $0x4ec] sm:$0xf]
  %v405 = vld [vmem:[%s1 + $0x4f0] sm:$0xf]
  %v406 = vld [vmem:[%s1 + $0x4f4] sm:$0xf]
  %v407 = vld [vmem:[%s1 + $0x4f8] sm:$0xf]
  %v408 = vld [vmem:[%s1 + $0x4fc] sm:$0xf]
  %v409 = vld [vmem:[%s1 + $0x500] sm:$0xf]
  %v410 = vld [vmem:[%s1 + $0x504] sm:$0xf]
  %v411 = vld [vmem:[%s1 + $0x508] sm:$0xf]
  %v412 = vld [vmem:[%s1 + $0x50c] sm:$0xf]
  %v413 = vld [vmem:[%s1 + $0x510] sm:$0xf]
  %v414 = vld [vmem:[%s1 + $0x514] sm:$0xf]
  %v415 = vld [vmem:[%s1 + $0x518] sm:$0xf]
  %v416 = vld [vmem:[%s1 + $0x51c] sm:$0xf]
  %v417 = vld [vmem:[%s1 + $0x520] sm:$0xf]
  %v418 = vld [vmem:[%s1 + $0x524] sm:$0xf]
  %v419 = vld [vmem:[%s1 + $0x528] sm:$0xf]
  %v420 = vld [vmem:[%s1 + $0x52c] sm:$0xf]
  %v421 = vld [vmem:[%s1 + $0x530] sm:$0xf]
  %v422 = vld [vmem:[%s1 + $0x534] sm:$0xf]
  %v423 = vld [vmem:[%s1 + $0x538] sm:$0xf]
  %v424 = vld [vmem:[%s1 + $0x53c] sm:$0xf]
  %v425 = vld [vmem:[%s1 + $0x540] sm:$0xf]
  %v426 = vld [vmem:[%s1 + $0x544] sm:$0xf]
  %v427 = vld [vmem:[%s1 + $0x548] sm:$0xf]
  %v428 = vld [vmem:[%s1 + $0x54c] sm:$0xf]
  %v429 = vld [vmem:[%s1 + $0x550] sm:$0xf]
  %v430 = vld [vmem:[%s1 + $0x554] sm:$0xf]
  %v431 = vld [vmem:[%s1 + $0x558] sm:$0xf]
  %v432 = vld [vmem:[%s1 + $0x55c] sm:$0xf]
  %v433 = vld [vmem:[%s1 + $0x560] sm:$0xf]
  %v434 = vld [vmem:[%s1 + $0x564] sm:$0xf]
  %v435 = vld [vmem:[%s1 + $0x568] sm:$0xf]
  %v436 = vld [vmem:[%s1 + $0x56c] sm:$0xf]
  %v437 = vld [vmem:[%s1 + $0x570] sm:$0xf]
  %v438 = vld [vmem:[%s1 + $0x574] sm:$0xf]
  %v439 = vld [vmem:[%s1 + $0x578] sm:$0xf]
  %v440 = vld [vmem:[%s1 + $0x57c] sm:$0xf]
  %v441 = vld [vmem:[%s1 + $0x580] sm:$0xf]
  %v442 = vld [vmem:[%s1 + $0x584] sm:$0xf]
  %v443 = vld [vmem:[%s1 + $0x588] sm:$0xf]
  %v444 = vld [vmem:[%s1 + $0x58c] sm:$0xf]
  %v445 = vld [vmem:[%s1 + $0x590] sm:$0xf]
  %v446 = vld [vmem:[%s1 + $0x594] sm:$0xf]
  %v447 = vld [vmem:[%s1 + $0x598] sm:$0xf]
  %v448 = vld [vmem:[%s1 + $0x59c] sm:$0xf]
  %v449 = vld [vmem:[%s1 + $0x5a0] sm:$0xf]
  %v450 = vld [vmem:[%s1 + $0x5a4] sm:$0xf]
  %v451 = vld [vmem:[%s1 + $0x5a8] sm:$0xf]
  %v452 = vld [vmem:[%s1 + $0x5ac] sm:$0xf]
  %v453 = vld [vmem:[%s1 + $0x5b0] sm:$0xf]
  %v454 = vld [vmem:[%s1 + $0x5b4] sm:$0xf]
  %v455 = vld [vmem:[%s1 + $0x5b8] sm:$0xf]
  %v456 = vld [vmem:[%s1 + $0x5bc] sm:$0xf]
  %v457 = vld [vmem:[%s1 + $0x5c0] sm:$0xf]
  %v458 = vld [vmem:[%s1 + $0x5c4] sm:$0xf]
  %v459 = vld [vmem:[%s1 + $0x5c8] sm:$0xf]
  %v460 = vld [vmem:[%s1 + $0x5cc] sm:$0xf]
  %v461 = vld [vmem:[%s1 + $0x5d0] sm:$0xf]
  %v462 = vld [vmem:[%s1 + $0x5d4] sm:$0xf]
  %v463 = vld [vmem:[%s1 + $0x5d8] sm:$0xf]
  %v464 = vld [vmem:[%s1 + $0x5dc] sm:$0xf]
  %v465 = vld [vmem:[%s1 + $0x5e0] sm:$0xf]
  %v466 = vld [vmem:[%s1 + $0x5e4] sm:$0xf]
  %v467 = vld [vmem:[%s1 + $0x5e8] sm:$0xf]
  %v468 = vld [vmem:[%s1 + $0x5ec] sm:$0xf]
  %v469 = vld [vmem:[%s1 + $0x5f0] sm:$0xf]
  %v470 = vld [vmem:[%s1 + $0x5f4] sm:$0xf]
  %v471 = vld [vmem:[%s1 + $0x5f8] sm:$0xf]
  %v472 = vld [vmem:[%s1 + $0x5fc] sm:$0xf]
  %v473 = vld [vmem:[%s1 + $0x600] sm:$0xf]
  %v474 = vld [vmem:[%s1 + $0x604] sm:$0xf]
  %v475 = vld [vmem:[%s1 + $0x608] sm:$0xf]
  %v476 = vld [vmem:[%s1 + $0x60c] sm:$0xf]
  %v477 = vld [vmem:[%s1 + $0x610] sm:$0xf]
  %v478 = vld [vmem:[%s1 + $0x614] sm:$0xf]
  %v479 = vld [vmem:[%s1 + $0x618] sm:$0xf]
  %v480 = vld [vmem:[%s1 + $0x61c] sm:$0xf]
  %v481 = vld [vmem:[%s1 + $0x620] sm:$0xf]
  %v482 = vld [vmem:[%s1 + $0x624] sm:$0xf]
  %v483 = vld [vmem:[%s1 + $0x628] sm:$0xf]
  %v484 = vld [vmem:[%s1 + $0x62c] sm:$0xf]
  %v485 = vld [vmem:[%s1 + $0x630] sm:$0xf]
  %v486 = vld [vmem:[%s1 + $0x634] sm:$0xf]
  %v487 = vld [vmem:[%s1 + $0x638] sm:$0xf]
  %v488 = vld [vmem:[%s1 + $0x63c] sm:$0xf]
  %v489 = vld [vmem:[%s1 + $0x640] sm:$0xf]
  %v490 = vld [vmem:[%s1 + $0x644] sm:$0xf]
  %v491 = vld [vmem:[%s1 + $0x648] sm:$0xf]
  %v492 = vld [vmem:[%s1 + $0x64c] sm:$0xf]
  %v493 = vld [vmem:[%s1 + $0x650] sm:$0xf]
  %v494 = vld [vmem:[%s1 + $0x654] sm:$0xf]
  %v495 = vld [vmem:[%s1 + $0x658] sm:$0xf]
  %v496 = vld [vmem:[%s1 + $0x65c] sm:$0xf]
  %v497 = vld [vmem:[%s1 + $0x660] sm:$0xf]
  %v498 = vld [vmem:[%s1 + $0x664] sm:$0xf]
  %v499 = vld [vmem:[%s1 + $0x668] sm:$0xf]
  %v500 = vld [vmem:[%s1 + $0x66c] sm:$0xf]
  %v501 = vld [vmem:[%s1 + $0x670] sm:$0xf]
  %v502 = vld [vmem:[%s1 + $0x674] sm:$0xf]
  %v503 = vld [vmem:[%s1 + $0x678] sm:$0xf]
  %v504 = vld [vmem:[%s1 + $0x67c] sm:$0xf]
  %v505 = vld [vmem:[%s1 + $0x680] sm:$0xf]
  %v506 = vld [vmem:[%s1 + $0x684] sm:$0xf]
  %v507 = vld [vmem:[%s1 + $0x688] sm:$0xf]
  %v508 = vld [vmem:[%s1 + $0x68c] sm:$0xf]
  %v509 = vld [vmem:[%s1 + $0x690] sm:$0xf]
  %v510 = vld [vmem:[%s1 + $0x694] sm:$0xf]
  %v511 = vld [vmem:[%s1 + $0x698] sm:$0xf]
  %v512 = vld [vmem:[%s1 + $0x69c] sm:$0xf]
  %v513 = vld [vmem:[%s1 + $0x6a0] sm:$0xf]
  %v514 = vld [vmem:[%s1 + $0x6a4] sm:$0xf]
  %v515 = vld [vmem:[%s1 + $0x6a8] sm:$0xf]
  %v516 = vld [vmem:[%s1 + $0x6ac] sm:$0xf]
  %v517 = vld [vmem:[%s1 + $0x6b0] sm:$0xf]
  %v518 = vld [vmem:[%s1 + $0x6b4] sm:$0xf]
  %v519 = vld [vmem:[%s1 + $0x6b8] sm:$0xf]
  %v520 = vld [vmem:[%s1 + $0x6bc] sm:$0xf]
  %v521 = vld [vmem:[%s1 + $0x6c0] sm:$0xf]
  %v522 = vld [vmem:[%s1 + $0x6c4] sm:$0xf]
  %v523 = vld [vmem:[%s1 + $0x6c8] sm:$0xf]
  %v524 = vld [vmem:[%s1 + $0x6cc] sm:$0xf]
  %v525 = vld [vmem:[%s1 + $0x6d0] sm:$0xf]
  %v526 = vld [vmem:[%s1 + $0x6d4] sm:$0xf]
  %v527 = vld [vmem:[%s1 + $0x6d8] sm:$0xf]
  %v528 = vld [vmem:[%s1 + $0x6dc] sm:$0xf]
  %v529 = vld [vmem:[%s1 + $0x6e0] sm:$0xf]
  %v530 = vld [vmem:[%s1 + $0x6e4] sm:$0xf]
  %v531 = vld [vmem:[%s1 + $0x6e8] sm:$0xf]
  %v532 = vld [vmem:[%s1 + $0x6ec] sm:$0xf]
  %v533 = vld [vmem:[%s1 + $0x6f0] sm:$0xf]
  %v534 = vld [vmem:[%s1 + $0x6f4] sm:$0xf]
  %v535 = vld [vmem:[%s1 + $0x6f8] sm:$0xf]
  %v536 = vld [vmem:[%s1 + $0x6fc] sm:$0xf]
  %v537 = vld [vmem:[%s1 + $0x700] sm:$0xf]
  %v538 = vld [vmem:[%s1 + $0x704] sm:$0xf]
  %v539 = vld [vmem:[%s1 + $0x708] sm:$0xf]
  %v540 = vld [vmem:[%s1 + $0x70c] sm:$0xf]
  %v541 = vld [vmem:[%s1 + $0x710] sm:$0xf]
  %v542 = vld [vmem:[%s1 + $0x714] sm:$0xf]
  %v543 = vld [vmem:[%s1 + $0x718] sm:$0xf]
  %v544 = vld [vmem:[%s1 + $0x71c] sm:$0xf]
  %v545 = vld [vmem:[%s1 + $0x720] sm:$0xf]
  %v546 = vld [vmem:[%s1 + $0x724] sm:$0xf]
  %v547 = vld [vmem:[%s1 + $0x728] sm:$0xf]
  %v548 = vld [vmem:[%s1 + $0x72c] sm:$0xf]
  %v549 = vld [vmem:[%s1 + $0x730] sm:$0xf]
  %v550 = vld [vmem:[%s1 + $0x734] sm:$0xf]
  %v551 = vld [vmem:[%s1 + $0x738] sm:$0xf]
  %v552 = vld [vmem:[%s1 + $0x73c] sm:$0xf]
  %v553 = vld [vmem:[%s1 + $0x740] sm:$0xf]
  %v554 = vld [vmem:[%s1 + $0x744] sm:$0xf]
  %v555 = vld [vmem:[%s1 + $0x748] sm:$0xf]
  %v556 = vld [vmem:[%s1 + $0x74c] sm:$0xf]
  %v557 = vld [vmem:[%s1 + $0x750] sm:$0xf]
  %v558 = vld [vmem:[%s1 + $0x754] sm:$0xf]
  %v559 = vld [vmem:[%s1 + $0x758] sm:$0xf]
  %v560 = vld [vmem:[%s1 + $0x75c] sm:$0xf]
  %v561 = vld [vmem:[%s1 + $0x760] sm:$0xf]
  %v562 = vld [vmem:[%s1 + $0x764] sm:$0xf]
  %v563 = vld [vmem:[%s1 + $0x768] sm:$0xf]
  %v564 = vld [vmem:[%s1 + $0x76c] sm:$0xf]
  %v565 = vld [vmem:[%s1 + $0x770] sm:$0xf]
  %v566 = vld [vmem:[%s1 + $0x774] sm:$0xf]
  %v567 = vld [vmem:[%s1 + $0x778] sm:$0xf]
  %v568 = vld [vmem:[%s1 + $0x77c] sm:$0xf]
  %v569 = vld [vmem:[%s1 + $0x780] sm:$0xf]
  %v570 = vld [vmem:[%s1 + $0x784] sm:$0xf]
  %v571 = vld [vmem:[%s1 + $0x788] sm:$0xf]
  %v572 = vld [vmem:[%s1 + $0x78c] sm:$0xf]
  %v573 = vld [vmem:[%s1 + $0x790] sm:$0xf]
  %v574 = vld [vmem:[%s1 + $0x794] sm:$0xf]
  %v575 = vld [vmem:[%s1 + $0x798] sm:$0xf]
  %v576 = vld [vmem:[%s1 + $0x79c] sm:$0xf]
  %v577 = vld [vmem:[%s1 + $0x7a0] sm:$0xf]
  %v578 = vld [vmem:[%s1 + $0x7a4] sm:$0xf]
  %v579 = vld [vmem:[%s1 + $0x7a8] sm:$0xf]
  %v580 = vld [vmem:[%s1 + $0x7ac] sm:$0xf]
  %v581 = vld [vmem:[%s1 + $0x7b0] sm:$0xf]
  %v582 = vld [vmem:[%s1 + $0x7b4] sm:$0xf]
  %v583 = vld [vmem:[%s1 + $0x7b8] sm:$0xf]
  %v584 = vld [vmem:[%s1 + $0x7bc] sm:$0xf]
  %v585 = vld [vmem:[%s1 + $0x7c0] sm:$0xf]
  %v586 = vld [vmem:[%s1 + $0x7c4] sm:$0xf]
  %v587 = vld [vmem:[%s1 + $0x7c8] sm:$0xf]
  %v588 = vld [vmem:[%s1 + $0x7cc] sm:$0xf]
  %v589 = vld [vmem:[%s1 + $0x7d0] sm:$0xf]
  %v590 = vld [vmem:[%s1 + $0x7d4] sm:$0xf]
  %v591 = vld [vmem:[%s1 + $0x7d8] sm:$0xf]
  %v592 = vld [vmem:[%s1 + $0x7dc] sm:$0xf]
  %v593 = vld [vmem:[%s1 + $0x7e0] sm:$0xf]
  %v594 = vld [vmem:[%s1 + $0x7e4] sm:$0xf]
  %v595 = vld [vmem:[%s1 + $0x7e8] sm:$0xf]
  %v596 = vld [vmem:[%s1 + $0x7ec] sm:$0xf]
  %v597 = vld [vmem:[%s1 + $0x7f0] sm:$0xf]
  %v598 = vld [vmem:[%s1 + $0x7f4] sm:$0xf]
  %v599 = vld [vmem:[%s1 + $0x7f8] sm:$0xf]
  %v600 = vld [vmem:[%s1 + $0x7fc] sm:$0xf]
  %v601 = vld [vmem:[%s1 + $0x800] sm:$0xf]
  %v602 = vld [vmem:[%s1 + $0x804] sm:$0xf]
  %v603 = vld [vmem:[%s1 + $0x808] sm:$0xf]
  %v604 = vld [vmem:[%s1 + $0x80c] sm:$0xf]
  %v605 = vld [vmem:[%s1 + $0x810] sm:$0xf]
  %v606 = vld [vmem:[%s1 + $0x814] sm:$0xf]
  %v607 = vld [vmem:[%s1 + $0x818] sm:$0xf]
  %v608 = vld [vmem:[%s1 + $0x81c] sm:$0xf]
  %v609 = vld [vmem:[%s1 + $0x820] sm:$0xf]
  %v610 = vld [vmem:[%s1 + $0x824] sm:$0xf]
  %v611 = vld [vmem:[%s1 + $0x828] sm:$0xf]
  %v612 = vld [vmem:[%s1 + $0x82c] sm:$0xf]
  %v613 = vld [vmem:[%s1 + $0x830] sm:$0xf]
  %v614 = vld [vmem:[%s1 + $0x834] sm:$0xf]
  %v615 = vld [vmem:[%s1 + $0x838] sm:$0xf]
  %v616 = vld [vmem:[%s1 + $0x83c] sm:$0xf]
  %v617 = vld [vmem:[%s1 + $0x840] sm:$0xf]
  %v618 = vld [vmem:[%s1 + $0x844] sm:$0xf]
  %v619 = vld [vmem:[%s1 + $0x848] sm:$0xf]
  %v620 = vld [vmem:[%s1 + $0x84c] sm:$0xf]
  %v621 = vld [vmem:[%s1 + $0x850] sm:$0xf]
  %v622 = vld [vmem:[%s1 + $0x854] sm:$0xf]
  %v623 = vld [vmem:[%s1 + $0x858] sm:$0xf]
  %v624 = vld [vmem:[%s1 + $0x85c] sm:$0xf]
  %v625 = vld [vmem:[%s1 + $0x860] sm:$0xf]
  %v626 = vld [vmem:[%s1 + $0x864] sm:$0xf]
  %v627 = vld [vmem:[%s1 + $0x868] sm:$0xf]
  %v628 = vld [vmem:[%s1 + $0x86c] sm:$0xf]
  %v629 = vld [vmem:[%s1 + $0x870] sm:$0xf]
  %v630 = vld [vmem:[%s1 + $0x874] sm:$0xf]
  %v631 = vld [vmem:[%s1 + $0x878] sm:$0xf]
  %v632 = vld [vmem:[%s1 + $0x87c] sm:$0xf]
  %v633 = vld [vmem:[%s1 + $0x880] sm:$0xf]
  %v634 = vld [vmem:[%s1 + $0x884] sm:$0xf]
  %v635 = vld [vmem:[%s1 + $0x888] sm:$0xf]
  %v636 = vld [vmem:[%s1 + $0x88c] sm:$0xf]
  %v637 = vld [vmem:[%s1 + $0x890] sm:$0xf]
  %v638 = vld [vmem:[%s1 + $0x894] sm:$0xf]
  %v639 = vld [vmem:[%s1 + $0x898] sm:$0xf]
  %v640 = vld [vmem:[%s1 + $0x89c] sm:$0xf]
  %v641 = vld [vmem:[%s1 + $0x8a0] sm:$0xf]
  %v642 = vld [vmem:[%s1 + $0x8a4] sm:$0xf]
  %v643 = vld [vmem:[%s1 + $0x8a8] sm:$0xf]
  %v644 = vld [vmem:[%s1 + $0x8ac] sm:$0xf]
  %v645 = vld [vmem:[%s1 + $0x8b0] sm:$0xf]
  %v646 = vld [vmem:[%s1 + $0x8b4] sm:$0xf]
  %v647 = vld [vmem:[%s1 + $0x8b8] sm:$0xf]
  %v648 = vld [vmem:[%s1 + $0x8bc] sm:$0xf]
  %v649 = vld [vmem:[%s1 + $0x8c0] sm:$0xf]
  %v650 = vld [vmem:[%s1 + $0x8c4] sm:$0xf]
  %v651 = vld [vmem:[%s1 + $0x8c8] sm:$0xf]
  %v652 = vld [vmem:[%s1 + $0x8cc] sm:$0xf]
  %v653 = vld [vmem:[%s1 + $0x8d0] sm:$0xf]
  %v654 = vld [vmem:[%s1 + $0x8d4] sm:$0xf]
  %v655 = vld [vmem:[%s1 + $0x8d8] sm:$0xf]
  %v656 = vld [vmem:[%s1 + $0x8dc] sm:$0xf]
  %v657 = vld [vmem:[%s1 + $0x8e0] sm:$0xf]
  %v658 = vld [vmem:[%s1 + $0x8e4] sm:$0xf]
  %v659 = vld [vmem:[%s1 + $0x8e8] sm:$0xf]
  %v660 = vld [vmem:[%s1 + $0x8ec] sm:$0xf]
  %v661 = vld [vmem:[%s1 + $0x8f0] sm:$0xf]
  %v662 = vld [vmem:[%s1 + $0x8f4] sm:$0xf]
  %v663 = vld [vmem:[%s1 + $0x8f8] sm:$0xf]
  %v664 = vld [vmem:[%s1 + $0x8fc] sm:$0xf]
  %v665 = vld [vmem:[%s1 + $0x900] sm:$0xf]
  %v666 = vld [vmem:[%s1 + $0x904] sm:$0xf]
  %v667 = vld [vmem:[%s1 + $0x908] sm:$0xf]
  %v668 = vld [vmem:[%s1 + $0x90c] sm:$0xf]
  %v669 = vld [vmem:[%s1 + $0x910] sm:$0xf]
  %v670 = vld [vmem:[%s1 + $0x914] sm:$0xf]
  %v671 = vld [vmem:[%s1 + $0x918] sm:$0xf]
  %v672 = vld [vmem:[%s1 + $0x91c] sm:$0xf]
  %v673 = vld [vmem:[%s1 + $0x920] sm:$0xf]
  %v674 = vld [vmem:[%s1 + $0x924] sm:$0xf]
  %v675 = vld [vmem:[%s1 + $0x928] sm:$0xf]
  %v676 = vld [vmem:[%s1 + $0x92c] sm:$0xf]
  %v677 = vld [vmem:[%s1 + $0x930] sm:$0xf]
  %v678 = vld [vmem:[%s1 + $0x934] sm:$0xf]
  %v679 = vld [vmem:[%s1 + $0x938] sm:$0xf]
  %v680 = vld [vmem:[%s1 + $0x93c] sm:$0xf]
  %v681 = vld [vmem:[%s1 + $0x940] sm:$0xf]
  %v682 = vld [vmem:[%s1 + $0x944] sm:$0xf]
  %v683 = vld [vmem:[%s1 + $0x948] sm:$0xf]
  %v684 = vld [vmem:[%s1 + $0x94c] sm:$0xf]
  %v685 = vld [vmem:[%s1 + $0x950] sm:$0xf]
  %v686 = vld [vmem:[%s1 + $0x954] sm:$0xf]
  %v687 = vld [vmem:[%s1 + $0x958] sm:$0xf]
  %v688 = vld [vmem:[%s1 + $0x95c] sm:$0xf]
  %v689 = vld [vmem:[%s1 + $0x960] sm:$0xf]
  %v690 = vld [vmem:[%s1 + $0x964] sm:$0xf]
  %v691 = vld [vmem:[%s1 + $0x968] sm:$0xf]
  %v692 = vld [vmem:[%s1 + $0x96c] sm:$0xf]
  %v693 = vld [vmem:[%s1 + $0x970] sm:$0xf]
  %v694 = vld [vmem:[%s1 + $0x974] sm:$0xf]
  %v695 = vld [vmem:[%s1 + $0x978] sm:$0xf]
  %v696 = vld [vmem:[%s1 + $0x97c] sm:$0xf]
  %v697 = vld [vmem:[%s1 + $0x980] sm:$0xf]
  %v698 = vld [vmem:[%s1 + $0x984] sm:$0xf]
  %v699 = vld [vmem:[%s1 + $0x988] sm:$0xf]
  %v700 = vld [vmem:[%s1 + $0x98c] sm:$0xf]
  %v701 = vld [vmem:[%s1 + $0x990] sm:$0xf]
  %v702 = vld [vmem:[%s1 + $0x994] sm:$0xf]
  %v703 = vld [vmem:[%s1 + $0x998] sm:$0xf]
  %v704 = vld [vmem:[%s1 + $0x99c] sm:$0xf]
  %v705 = vld [vmem:[%s1 + $0x9a0] sm:$0xf]
  %v706 = vld [vmem:[%s1 + $0x9a4] sm:$0xf]
  %v707 = vld [vmem:[%s1 + $0x9a8] sm:$0xf]
  %v708 = vld [vmem:[%s1 + $0x9ac] sm:$0xf]
  %v709 = vld [vmem:[%s1 + $0x9b0] sm:$0xf]
  %v710 = vld [vmem:[%s1 + $0x9b4] sm:$0xf]
  %v711 = vld [vmem:[%s1 + $0x9b8] sm:$0xf]
  %v712 = vld [vmem:[%s1 + $0x9bc] sm:$0xf]
  %v713 = vld [vmem:[%s1 + $0x9c0] sm:$0xf]
  %v714 = vld [vmem:[%s1 + $0x9c4] sm:$0xf]
  %v715 = vld [vmem:[%s1 + $0x9c8] sm:$0xf]
  %v716 = vld [vmem:[%s1 + $0x9cc] sm:$0xf]
  %v717 = vld [vmem:[%s1 + $0x9d0] sm:$0xf]
  %v718 = vld [vmem:[%s1 + $0x9d4] sm:$0xf]
  %v719 = vld [vmem:[%s1 + $0x9d8] sm:$0xf]
  %v720 = vld [vmem:[%s1 + $0x9dc] sm:$0xf]
  %v721 = vld [vmem:[%s1 + $0x9e0] sm:$0xf]
  %v722 = vld [vmem:[%s1 + $0x9e4] sm:$0xf]
  %v723 = vld [vmem:[%s1 + $0x9e8] sm:$0xf]
  %v724 = vld [vmem:[%s1 + $0x9ec] sm:$0xf]
  %v725 = vld [vmem:[%s1 + $0x9f0] sm:$0xf]
  %v726 = vld [vmem:[%s1 + $0x9f4] sm:$0xf]
  %v727 = vld [vmem:[%s1 + $0x9f8] sm:$0xf]
  %v728 = vld [vmem:[%s1 + $0x9fc] sm:$0xf]
  %v729 = vld [vmem:[%s1 + $0xa00] sm:$0xf]
  %v730 = vld [vmem:[%s1 + $0xa04] sm:$0xf]
  %v731 = vld [vmem:[%s1 + $0xa08] sm:$0xf]
  %v732 = vld [vmem:[%s1 + $0xa0c] sm:$0xf]
  %v733 = vld [vmem:[%s1 + $0xa10] sm:$0xf]
  %v734 = vld [vmem:[%s1 + $0xa14] sm:$0xf]
  %v735 = vld [vmem:[%s1 + $0xa18] sm:$0xf]
  %v736 = vld [vmem:[%s1 + $0xa1c] sm:$0xf]
  %v737 = vld [vmem:[%s1 + $0xa20] sm:$0xf]
  %v738 = vld [vmem:[%s1 + $0xa24] sm:$0xf]
  %v739 = vld [vmem:[%s1 + $0xa28] sm:$0xf]
  %v740 = vld [vmem:[%s1 + $0xa2c] sm:$0xf]
  %v741 = vld [vmem:[%s1 + $0xa30] sm:$0xf]
  %v742 = vld [vmem:[%s1 + $0xa34] sm:$0xf]
  %v743 = vld [vmem:[%s1 + $0xa38] sm:$0xf]
  %v744 = vld [vmem:[%s1 + $0xa3c] sm:$0xf]
  %v745 = vld [vmem:[%s1 + $0xa40] sm:$0xf]
  %v746 = vld [vmem:[%s1 + $0xa44] sm:$0xf]
  %v747 = vld [vmem:[%s1 + $0xa48] sm:$0xf]
  %v748 = vld [vmem:[%s1 + $0xa4c] sm:$0xf]
  %v749 = vld [vmem:[%s1 + $0xa50] sm:$0xf]
  %v750 = vld [vmem:[%s1 + $0xa54] sm:$0xf]
  %v751 = vld [vmem:[%s1 + $0xa58] sm:$0xf]
  %v752 = vld [vmem:[%s1 + $0xa5c] sm:$0xf]
  %v753 = vld [vmem:[%s1 + $0xa60] sm:$0xf]
  %v754 = vld [vmem:[%s1 + $0xa64] sm:$0xf]
  %v755 = vld [vmem:[%s1 + $0xa68] sm:$0xf]
  %v756 = vld [vmem:[%s1 + $0xa6c] sm:$0xf]
  %v757 = vld [vmem:[%s1 + $0xa70] sm:$0xf]
  %v758 = vld [vmem:[%s1 + $0xa74] sm:$0xf]
  %v759 = vld [vmem:[%s1 + $0xa78] sm:$0xf]
  %v760 = vld [vmem:[%s1 + $0xa7c] sm:$0xf]
  %v761 = vld [vmem:[%s1 + $0xa80] sm:$0xf]
  %v762 = vld [vmem:[%s1 + $0xa84] sm:$0xf]
  %v763 = vld [vmem:[%s1 + $0xa88] sm:$0xf]
  %v764 = vld [vmem:[%s1 + $0xa8c] sm:$0xf]
  %v765 = vld [vmem:[%s1 + $0xa90] sm:$0xf]
  %v766 = vld [vmem:[%s1 + $0xa94] sm:$0xf]
  %v767 = vld [vmem:[%s1 + $0xa98] sm:$0xf]
  %v768 = vld [vmem:[%s1 + $0xa9c] sm:$0xf]
  %v769 = vld [vmem:[%s1 + $0xaa0] sm:$0xf]
  %v770 = vld [vmem:[%s1 + $0xaa4] sm:$0xf]
  %v771 = vld [vmem:[%s1 + $0xaa8] sm:$0xf]
  %v772 = vld [vmem:[%s1 + $0xaac] sm:$0xf]
  %v773 = vld [vmem:[%s1 + $0xab0] sm:$0xf]
  %v774 = vld [vmem:[%s1 + $0xab4] sm:$0xf]
  %v775 = vld [vmem:[%s1 + $0xab8] sm:$0xf]
  %v776 = vld [vmem:[%s1 + $0xabc] sm:$0xf]
  %v777 = vld [vmem:[%s1 + $0xac0] sm:$0xf]
  %v778 = vld [vmem:[%s1 + $0xac4] sm:$0xf]
  %v779 = vld [vmem:[%s1 + $0xac8] sm:$0xf]
  %v780 = vld [vmem:[%s1 + $0xacc] sm:$0xf]
  %v781 = vld [vmem:[%s1 + $0xad0] sm:$0xf]
  %v782 = vld [vmem:[%s1 + $0xad4] sm:$0xf]
  %v783 = vld [vmem:[%s1 + $0xad8] sm:$0xf]
  %v784 = vld [vmem:[%s1 + $0xadc] sm:$0xf]
  %v785 = vld [vmem:[%s1 + $0xae0] sm:$0xf]
  %v786 = vld [vmem:[%s1 + $0xae4] sm:$0xf]
  %v787 = vld [vmem:[%s1 + $0xae8] sm:$0xf]
  %v788 = vld [vmem:[%s1 + $0xaec] sm:$0xf]
  %v789 = vld [vmem:[%s1 + $0xaf0] sm:$0xf]
  %v790 = vld [vmem:[%s1 + $0xaf4] sm:$0xf]
  %v791 = vld [vmem:[%s1 + $0xaf8] sm:$0xf]
  %v792 = vld [vmem:[%s1 + $0xafc] sm:$0xf]
  %v793 = vld [vmem:[%s1 + $0xb00] sm:$0xf]
  %v794 = vld [vmem:[%s1 + $0xb04] sm:$0xf]
  %v795 = vld [vmem:[%s1 + $0xb08] sm:$0xf]
  %v796 = vld [vmem:[%s1 + $0xb0c] sm:$0xf]
  %v797 = vld [vmem:[%s1 + $0xb10] sm:$0xf]
  %v798 = vld [vmem:[%s1 + $0xb14] sm:$0xf]
  %v799 = vld [vmem:[%s1 + $0xb18] sm:$0xf]
  %v800 = vld [vmem:[%s1 + $0xb1c] sm:$0xf]
  %v801 = vld [vmem:[%s1 + $0xb20] sm:$0xf]
  %v802 = vld [vmem:[%s1 + $0xb24] sm:$0xf]
  %v803 = vld [vmem:[%s1 + $0xb28] sm:$0xf]
  %v804 = vld [vmem:[%s1 + $0xb2c] sm:$0xf]
  %v805 = vld [vmem:[%s1 + $0xb30] sm:$0xf]
  %v806 = vld [vmem:[%s1 + $0xb34] sm:$0xf]
  %v807 = vld [vmem:[%s1 + $0xb38] sm:$0xf]
  %v808 = vld [vmem:[%s1 + $0xb3c] sm:$0xf]
  %v809 = vld [vmem:[%s1 + $0xb40] sm:$0xf]
  %v810 = vld [vmem:[%s1 + $0xb44] sm:$0xf]
  %v811 = vld [vmem:[%s1 + $0xb48] sm:$0xf]
  %v812 = vld [vmem:[%s1 + $0xb4c] sm:$0xf]
  %v813 = vld [vmem:[%s1 + $0xb50] sm:$0xf]
  %v814 = vld [vmem:[%s1 + $0xb54] sm:$0xf]
  %v815 = vld [vmem:[%s1 + $0xb58] sm:$0xf]
  %v816 = vld [vmem:[%s1 + $0xb5c] sm:$0xf]
  %v817 = vld [vmem:[%s1 + $0xb60] sm:$0xf]
  %v818 = vld [vmem:[%s1 + $0xb64] sm:$0xf]
  %v819 = vld [vmem:[%s1 + $0xb68] sm:$0xf]
  %v820 = vld [vmem:[%s1 + $0xb6c] sm:$0xf]
  %v821 = vld [vmem:[%s1 + $0xb70] sm:$0xf]
  %v822 = vld [vmem:[%s1 + $0xb74] sm:$0xf]
  %v823 = vld [vmem:[%s1 + $0xb78] sm:$0xf]
  %v824 = vld [vmem:[%s1 + $0xb7c] sm:$0xf]
  %v825 = vld [vmem:[%s1 + $0xb80] sm:$0xf]
  %v826 = vld [vmem:[%s1 + $0xb84] sm:$0xf]
  %v827 = vld [vmem:[%s1 + $0xb88] sm:$0xf]
  %v828 = vld [vmem:[%s1 + $0xb8c] sm:$0xf]
  %v829 = vld [vmem:[%s1 + $0xb90] sm:$0xf]
  %v830 = vld [vmem:[%s1 + $0xb94] sm:$0xf]
  %v831 = vld [vmem:[%s1 + $0xb98] sm:$0xf]
  %v832 = vld [vmem:[%s1 + $0xb9c] sm:$0xf]
  %v833 = vld [vmem:[%s1 + $0xba0] sm:$0xf]
  %v834 = vld [vmem:[%s1 + $0xba4] sm:$0xf]
  %v835 = vld [vmem:[%s1 + $0xba8] sm:$0xf]
  %v836 = vld [vmem:[%s1 + $0xbac] sm:$0xf]
  %v837 = vld [vmem:[%s1 + $0xbb0] sm:$0xf]
  %v838 = vld [vmem:[%s1 + $0xbb4] sm:$0xf]
  %v839 = vld [vmem:[%s1 + $0xbb8] sm:$0xf]
  %v840 = vld [vmem:[%s1 + $0xbbc] sm:$0xf]
  %v841 = vld [vmem:[%s1 + $0xbc0] sm:$0xf]
  %v842 = vld [vmem:[%s1 + $0xbc4] sm:$0xf]
  %v843 = vld [vmem:[%s1 + $0xbc8] sm:$0xf]
  %v844 = vld [vmem:[%s1 + $0xbcc] sm:$0xf]
  %v845 = vld [vmem:[%s1 + $0xbd0] sm:$0xf]
  %v846 = vld [vmem:[%s1 + $0xbd4] sm:$0xf]
  %v847 = vld [vmem:[%s1 + $0xbd8] sm:$0xf]
  %v848 = vld [vmem:[%s1 + $0xbdc] sm:$0xf]
  %v849 = vld [vmem:[%s1 + $0xbe0] sm:$0xf]
  %v850 = vld [vmem:[%s1 + $0xbe4] sm:$0xf]
  %v851 = vld [vmem:[%s1 + $0xbe8] sm:$0xf]
  %v852 = vld [vmem:[%s1 + $0xbec] sm:$0xf]
  %v853 = vld [vmem:[%s1 + $0xbf0] sm:$0xf]
  %v854 = vld [vmem:[%s1 + $0xbf4] sm:$0xf]
  %v855 = vld [vmem:[%s1 + $0xbf8] sm:$0xf]
  %v856 = vld [vmem:[%s1 + $0xbfc] sm:$0xf]
  %v857 = vld [vmem:[%s1 + $0xc00] sm:$0xf]
  %v858 = vld [vmem:[%s1 + $0xc04] sm:$0xf]
  %v859 = vld [vmem:[%s1 + $0xc08] sm:$0xf]
  %v860 = vld [vmem:[%s1 + $0xc0c] sm:$0xf]
  %v861 = vld [vmem:[%s1 + $0xc10] sm:$0xf]
  %v862 = vld [vmem:[%s1 + $0xc14] sm:$0xf]
  %v863 = vld [vmem:[%s1 + $0xc18] sm:$0xf]
  %v864 = vld [vmem:[%s1 + $0xc1c] sm:$0xf]
  %v865 = vld [vmem:[%s1 + $0xc20] sm:$0xf]
  %v866 = vld [vmem:[%s1 + $0xc24] sm:$0xf]
  %v867 = vld [vmem:[%s1 + $0xc28] sm:$0xf]
  %v868 = vld [vmem:[%s1 + $0xc2c] sm:$0xf]
  %v869 = vld [vmem:[%s1 + $0xc30] sm:$0xf]
  %v870 = vld [vmem:[%s1 + $0xc34] sm:$0xf]
  %v871 = vld [vmem:[%s1 + $0xc38] sm:$0xf]
  %v872 = vld [vmem:[%s1 + $0xc3c] sm:$0xf]
  %v873 = vld [vmem:[%s1 + $0xc40] sm:$0xf]
  %v874 = vld [vmem:[%s1 + $0xc44] sm:$0xf]
  %v875 = vld [vmem:[%s1 + $0xc48] sm:$0xf]
  %v876 = vld [vmem:[%s1 + $0xc4c] sm:$0xf]
  %v877 = vld [vmem:[%s1 + $0xc50] sm:$0xf]
  %v878 = vld [vmem:[%s1 + $0xc54] sm:$0xf]
  %v879 = vld [vmem:[%s1 + $0xc58] sm:$0xf]
  %v880 = vld [vmem:[%s1 + $0xc5c] sm:$0xf]
  %v881 = vld [vmem:[%s1 + $0xc60] sm:$0xf]
  %v882 = vld [vmem:[%s1 + $0xc64] sm:$0xf]
  %v883 = vld [vmem:[%s1 + $0xc68] sm:$0xf]
  %v884 = vld [vmem:[%s1 + $0xc6c] sm:$0xf]
  %v885 = vld [vmem:[%s1 + $0xc70] sm:$0xf]
  %v886 = vld [vmem:[%s1 + $0xc74] sm:$0xf]
  %v887 = vld [vmem:[%s1 + $0xc78] sm:$0xf]
  %v888 = vld [vmem:[%s1 + $0xc7c] sm:$0xf]
  %v889 = vld [vmem:[%s1 + $0xc80] sm:$0xf]
  %v890 = vld [vmem:[%s1 + $0xc84] sm:$0xf]
  %v891 = vld [vmem:[%s1 + $0xc88] sm:$0xf]
  %v892 = vld [vmem:[%s1 + $0xc8c] sm:$0xf]
  %v893 = vld [vmem:[%s1 + $0xc90] sm:$0xf]
  %v894 = vld [vmem:[%s1 + $0xc94] sm:$0xf]
  %v895 = vld [vmem:[%s1 + $0xc98] sm:$0xf]
  %v896 = vld [vmem:[%s1 + $0xc9c] sm:$0xf]
  %v897 = vld [vmem:[%s1 + $0xca0] sm:$0xf]
  %v898 = vld [vmem:[%s1 + $0xca4] sm:$0xf]
  %v899 = vld [vmem:[%s1 + $0xca8] sm:$0xf]
  %v900 = vld [vmem:[%s1 + $0xcac] sm:$0xf]
  %v901 = vld [vmem:[%s1 + $0xcb0] sm:$0xf]
  %v902 = vld [vmem:[%s1 + $0xcb4] sm:$0xf]
  %v903 = vld [vmem:[%s1 + $0xcb8] sm:$0xf]
  %v904 = vld [vmem:[%s1 + $0xcbc] sm:$0xf]
  %v905 = vld [vmem:[%s1 + $0xcc0] sm:$0xf]
  %v906 = vld [vmem:[%s1 + $0xcc4] sm:$0xf]
  %v907 = vld [vmem:[%s1 + $0xcc8] sm:$0xf]
  %v908 = vld [vmem:[%s1 + $0xccc] sm:$0xf]
  %v909 = vld [vmem:[%s1 + $0xcd0] sm:$0xf]
  %v910 = vld [vmem:[%s1 + $0xcd4] sm:$0xf]
  %v911 = vld [vmem:[%s1 + $0xcd8] sm:$0xf]
  %v912 = vld [vmem:[%s1 + $0xcdc] sm:$0xf]
  %v913 = vld [vmem:[%s1 + $0xce0] sm:$0xf]
  %v914 = vld [vmem:[%s1 + $0xce4] sm:$0xf]
  %v915 = vld [vmem:[%s1 + $0xce8] sm:$0xf]
  %v916 = vld [vmem:[%s1 + $0xcec] sm:$0xf]
  %v917 = vld [vmem:[%s1 + $0xcf0] sm:$0xf]
  %v918 = vld [vmem:[%s1 + $0xcf4] sm:$0xf]
  %v919 = vld [vmem:[%s1 + $0xcf8] sm:$0xf]
  %v920 = vld [vmem:[%s1 + $0xcfc] sm:$0xf]
  %v921 = vld [vmem:[%s1 + $0xd00] sm:$0xf]
  %v922 = vld [vmem:[%s1 + $0xd04] sm:$0xf]
  %v923 = vld [vmem:[%s1 + $0xd08] sm:$0xf]
  %v924 = vld [vmem:[%s1 + $0xd0c] sm:$0xf]
  %v925 = vld [vmem:[%s1 + $0xd10] sm:$0xf]
  %v926 = vld [vmem:[%s1 + $0xd14] sm:$0xf]
  %v927 = vld [vmem:[%s1 + $0xd18] sm:$0xf]
  %v928 = vld [vmem:[%s1 + $0xd1c] sm:$0xf]
  %v929 = vld [vmem:[%s1 + $0xd20] sm:$0xf]
  %v930 = vld [vmem:[%s1 + $0xd24] sm:$0xf]
  %v931 = vld [vmem:[%s1 + $0xd28] sm:$0xf]
  %v932 = vld [vmem:[%s1 + $0xd2c] sm:$0xf]
  %v933 = vld [vmem:[%s1 + $0xd30] sm:$0xf]
  %v934 = vld [vmem:[%s1 + $0xd34] sm:$0xf]
  %v935 = vld [vmem:[%s1 + $0xd38] sm:$0xf]
  %v936 = vld [vmem:[%s1 + $0xd3c] sm:$0xf]
  %v937 = vld [vmem:[%s1 + $0xd40] sm:$0xf]
  %v938 = vld [vmem:[%s1 + $0xd44] sm:$0xf]
  %v939 = vld [vmem:[%s1 + $0xd48] sm:$0xf]
  %v940 = vld [vmem:[%s1 + $0xd4c] sm:$0xf]
  %v941 = vld [vmem:[%s1 + $0xd50] sm:$0xf]
  %v942 = vld [vmem:[%s1 + $0xd54] sm:$0xf]
  %v943 = vld [vmem:[%s1 + $0xd58] sm:$0xf]
  %v944 = vld [vmem:[%s1 + $0xd5c] sm:$0xf]
  %v945 = vld [vmem:[%s1 + $0xd60] sm:$0xf]
  %v946 = vld [vmem:[%s1 + $0xd64] sm:$0xf]
  %v947 = vld [vmem:[%s1 + $0xd68] sm:$0xf]
  %v948 = vld [vmem:[%s1 + $0xd6c] sm:$0xf]
  %v949 = vld [vmem:[%s1 + $0xd70] sm:$0xf]
  %v950 = vld [vmem:[%s1 + $0xd74] sm:$0xf]
  %v951 = vld [vmem:[%s1 + $0xd78] sm:$0xf]
  %v952 = vld [vmem:[%s1 + $0xd7c] sm:$0xf]
  %v953 = vld [vmem:[%s1 + $0xd80] sm:$0xf]
  %v954 = vld [vmem:[%s1 + $0xd84] sm:$0xf]
  %v955 = vld [vmem:[%s1 + $0xd88] sm:$0xf]
  %v956 = vld [vmem:[%s1 + $0xd8c] sm:$0xf]
  %v957 = vld [vmem:[%s1 + $0xd90] sm:$0xf]
  %v958 = vld [vmem:[%s1 + $0xd94] sm:$0xf]
  %v959 = vld [vmem:[%s1 + $0xd98] sm:$0xf]
  %v960 = vld [vmem:[%s1 + $0xd9c] sm:$0xf]
  %v961 = vld [vmem:[%s1 + $0xda0] sm:$0xf]
  %v962 = vld [vmem:[%s1 + $0xda4] sm:$0xf]
  %v963 = vld [vmem:[%s1 + $0xda8] sm:$0xf]
  %v964 = vld [vmem:[%s1 + $0xdac] sm:$0xf]
  %v965 = vld [vmem:[%s1 + $0xdb0] sm:$0xf]
  %v966 = vld [vmem:[%s1 + $0xdb4] sm:$0xf]
  %v967 = vld [vmem:[%s1 + $0xdb8] sm:$0xf]
  %v968 = vld [vmem:[%s1 + $0xdbc] sm:$0xf]
  %v969 = vld [vmem:[%s1 + $0xdc0] sm:$0xf]
  %v970 = vld [vmem:[%s1 + $0xdc4] sm:$0xf]
  %v971 = vld [vmem:[%s1 + $0xdc8] sm:$0xf]
  %v972 = vld [vmem:[%s1 + $0xdcc] sm:$0xf]
  %v973 = vld [vmem:[%s1 + $0xdd0] sm:$0xf]
  %v974 = vld [vmem:[%s1 + $0xdd4] sm:$0xf]
  %v975 = vld [vmem:[%s1 + $0xdd8] sm:$0xf]
  %v976 = vld [vmem:[%s1 + $0xddc] sm:$0xf]
  %v977 = vld [vmem:[%s1 + $0xde0] sm:$0xf]
  %v978 = vld [vmem:[%s1 + $0xde4] sm:$0xf]
  %v979 = vld [vmem:[%s1 + $0xde8] sm:$0xf]
  %v980 = vld [vmem:[%s1 + $0xdec] sm:$0xf]
  %v981 = vld [vmem:[%s1 + $0xdf0] sm:$0xf]
  %v982 = vld [vmem:[%s1 + $0xdf4] sm:$0xf]
  %v983 = vld [vmem:[%s1 + $0xdf8] sm:$0xf]
  %v984 = vld [vmem:[%s1 + $0xdfc] sm:$0xf]
  %v985 = vld [vmem:[%s1 + $0xe00] sm:$0xf]
  %v986 = vld [vmem:[%s1 + $0xe04] sm:$0xf]
  %v987 = vld [vmem:[%s1 + $0xe08] sm:$0xf]
  %v988 = vld [vmem:[%s1 + $0xe0c] sm:$0xf]
  %v989 = vld [vmem:[%s1 + $0xe10] sm:$0xf]
  %v990 = vld [vmem:[%s1 + $0xe14] sm:$0xf]
  %v991 = vld [vmem:[%s1 + $0xe18] sm:$0xf]
  %v992 = vld [vmem:[%s1 + $0xe1c] sm:$0xf]
  %v993 = vld [vmem:[%s1 + $0xe20] sm:$0xf]
  %v994 = vld [vmem:[%s1 + $0xe24] sm:$0xf]
  %v995 = vld [vmem:[%s1 + $0xe28] sm:$0xf]
  %v996 = vld [vmem:[%s1 + $0xe2c] sm:$0xf]
  %v997 = vld [vmem:[%s1 + $0xe30] sm:$0xf]
  %v998 = vld [vmem:[%s1 + $0xe34] sm:$0xf]
  %v999 = vld [vmem:[%s1 + $0xe38] sm:$0xf]
  %v1000 = vld [vmem:[%s1 + $0xe3c] sm:$0xf]
  %v1001 = vld [vmem:[%s1 + $0xe40] sm:$0xf]
  %v1002 = vld [vmem:[%s1 + $0xe44] sm:$0xf]
  %v1003 = vld [vmem:[%s1 + $0xe48] sm:$0xf]
  %v1004 = vld [vmem:[%s1 + $0xe4c] sm:$0xf]
  %v1005 = vld [vmem:[%s1 + $0xe50] sm:$0xf]
  %v1006 = vld [vmem:[%s1 + $0xe54] sm:$0xf]
  %v1007 = vld [vmem:[%s1 + $0xe58] sm:$0xf]
  %v1008 = vld [vmem:[%s1 + $0xe5c] sm:$0xf]
  %v1009 = vld [vmem:[%s1 + $0xe60] sm:$0xf]
  %v1010 = vld [vmem:[%s1 + $0xe64] sm:$0xf]
  %v1011 = vld [vmem:[%s1 + $0xe68] sm:$0xf]
  %v1012 = vld [vmem:[%s1 + $0xe6c] sm:$0xf]
  %v1013 = vld [vmem:[%s1 + $0xe70] sm:$0xf]
  %v1014 = vld [vmem:[%s1 + $0xe74] sm:$0xf]
  %v1015 = vld [vmem:[%s1 + $0xe78] sm:$0xf]
  %v1016 = vld [vmem:[%s1 + $0xe7c] sm:$0xf]
  %v1017 = vld [vmem:[%s1 + $0xe80] sm:$0xf]
  %v1018 = vld [vmem:[%s1 + $0xe84] sm:$0xf]
  %v1019 = vld [vmem:[%s1 + $0xe88] sm:$0xf]
  %v1020 = vld [vmem:[%s1 + $0xe8c] sm:$0xf]
  %v1021 = vld [vmem:[%s1 + $0xe90] sm:$0xf]
  %v1022 = vld [vmem:[%s1 + $0xe94] sm:$0xf]
  %v1023 = vld [vmem:[%s1 + $0xe98] sm:$0xf]
  %v1024 = vld [vmem:[%s1 + $0xe9c] sm:$0xf]
  %v1025 = vld [vmem:[%s1 + $0xea0] sm:$0xf]
  %v1026 = vld [vmem:[%s1 + $0xea4] sm:$0xf]
  %v1027 = vld [vmem:[%s1 + $0xea8] sm:$0xf]
  %v1028 = vld [vmem:[%s1 + $0xeac] sm:$0xf]
  %v1029 = vld [vmem:[%s1 + $0xeb0] sm:$0xf]
  %v1030 = vld [vmem:[%s1 + $0xeb4] sm:$0xf]
  %v1031 = vld [vmem:[%s1 + $0xeb8] sm:$0xf]
  %v1032 = vld [vmem:[%s1 + $0xebc] sm:$0xf]
  %v1033 = vld [vmem:[%s1 + $0xec0] sm:$0xf]
  %v1034 = vld [vmem:[%s1 + $0xec4] sm:$0xf]
  %v1035 = vld [vmem:[%s1 + $0xec8] sm:$0xf]
  %v1036 = vld [vmem:[%s1 + $0xecc] sm:$0xf]
  %v1037 = vld [vmem:[%s1 + $0xed0] sm:$0xf]
  %v1038 = vld [vmem:[%s1 + $0xed4] sm:$0xf]
  %v1039 = vld [vmem:[%s1 + $0xed8] sm:$0xf]
  %v1040 = vld [vmem:[%s1 + $0xedc] sm:$0xf]
  %v1041 = vld [vmem:[%s1 + $0xee0] sm:$0xf]
  %v1042 = vld [vmem:[%s1 + $0xee4] sm:$0xf]
  %v1043 = vld [vmem:[%s1 + $0xee8] sm:$0xf]
  %v1044 = vld [vmem:[%s1 + $0xeec] sm:$0xf]
  %v1045 = vld [vmem:[%s1 + $0xef0] sm:$0xf]
  %v1046 = vld [vmem:[%s1 + $0xef4] sm:$0xf]
  %v1047 = vld [vmem:[%s1 + $0xef8] sm:$0xf]
  %v1048 = vld [vmem:[%s1 + $0xefc] sm:$0xf]
  %v1049 = vld [vmem:[%s1 + $0xf00] sm:$0xf]
  %v1050 = vld [vmem:[%s1 + $0xf04] sm:$0xf]
  %v1051 = vld [vmem:[%s1 + $0xf08] sm:$0xf]
  %v1052 = vld [vmem:[%s1 + $0xf0c] sm:$0xf]
  %v1053 = vld [vmem:[%s1 + $0xf10] sm:$0xf]
  %v1054 = vld [vmem:[%s1 + $0xf14] sm:$0xf]
  %v1055 = vld [vmem:[%s1 + $0xf18] sm:$0xf]
  %v1056 = vld [vmem:[%s1 + $0xf1c] sm:$0xf]
  %v1057 = vld [vmem:[%s2] sm:$0x1]
  %v1059 = vlaneseq
  %v1060 = vshrl.u32 %v1059, 7
  %v1061 = vsub.s32 0, %v1060
  %v1062 = vrot.slane %v1057, %v1061
  %v1126 = vunpack.c.l.b16 %v27
  %v1127 = vunpack.c.h.b16 %v27
  %v1128 = vunpack.c.l.b16 %v28
  %v1129 = vunpack.c.h.b16 %v28
  %v1130 = vunpack.c.l.b16 %v29
  %v1131 = vunpack.c.h.b16 %v29
  %v1132 = vunpack.c.l.b16 %v30
  %v1133 = vunpack.c.h.b16 %v30
  %v1134 = vunpack.c.l.b16 %v31
  %v1135 = vunpack.c.h.b16 %v31
  %v1136 = vunpack.c.l.b16 %v32
  %v1137 = vunpack.c.h.b16 %v32
  %v1138 = vunpack.c.l.b16 %v33
  %v1139 = vunpack.c.h.b16 %v33
  %v1140 = vunpack.c.l.b16 %v34
  %v1141 = vunpack.c.h.b16 %v34
  %v1142 = vunpack.c.l.b16 %v35
  %v1143 = vunpack.c.h.b16 %v35
  %v1144 = vunpack.c.l.b16 %v36
  %v1145 = vunpack.c.h.b16 %v36
  %v1146 = vunpack.c.l.b16 %v37
  %v1147 = vunpack.c.h.b16 %v37
  %v1148 = vunpack.c.l.b16 %v38
  %v1149 = vunpack.c.h.b16 %v38
  %v1150 = vunpack.c.l.b16 %v39
  %v1151 = vunpack.c.h.b16 %v39
  %v1152 = vunpack.c.l.b16 %v40
  %v1153 = vunpack.c.h.b16 %v40
  %v1154 = vunpack.c.l.b16 %v41
  %v1155 = vunpack.c.h.b16 %v41
  %v1156 = vunpack.c.l.b16 %v42
  %v1157 = vunpack.c.h.b16 %v42
  %v1158 = vunpack.c.l.b16 %v43
  %v1159 = vunpack.c.h.b16 %v43
  %v1160 = vunpack.c.l.b16 %v44
  %v1161 = vunpack.c.h.b16 %v44
  %v1162 = vunpack.c.l.b16 %v45
  %v1163 = vunpack.c.h.b16 %v45
  %v1164 = vunpack.c.l.b16 %v46
  %v1165 = vunpack.c.h.b16 %v46
  %v1166 = vunpack.c.l.b16 %v47
  %v1167 = vunpack.c.h.b16 %v47
  %v1168 = vunpack.c.l.b16 %v48
  %v1169 = vunpack.c.h.b16 %v48
  %v1170 = vunpack.c.l.b16 %v49
  %v1171 = vunpack.c.h.b16 %v49
  %v1172 = vunpack.c.l.b16 %v50
  %v1173 = vunpack.c.h.b16 %v50
  %v1174 = vunpack.c.l.b16 %v51
  %v1175 = vunpack.c.h.b16 %v51
  %v1176 = vunpack.c.l.b16 %v52
  %v1177 = vunpack.c.h.b16 %v52
  %v1178 = vunpack.c.l.b16 %v53
  %v1179 = vunpack.c.h.b16 %v53
  %v1180 = vunpack.c.l.b16 %v54
  %v1181 = vunpack.c.h.b16 %v54
  %v1182 = vunpack.c.l.b16 %v55
  %v1183 = vunpack.c.h.b16 %v55
  %v1184 = vunpack.c.l.b16 %v56
  %v1185 = vunpack.c.h.b16 %v56
  %v1186 = vunpack.c.l.b16 %v57
  %v1187 = vunpack.c.l.b16 %v58
  %v1188 = vunpack.c.h.b16 %v58
  %v1189 = vunpack.c.l.b16 %v59
  %v1190 = vunpack.c.h.b16 %v59
  %v1191 = vunpack.c.l.b16 %v60
  %v1192 = vunpack.c.h.b16 %v60
  %v1193 = vunpack.c.l.b16 %v61
  %v1194 = vunpack.c.h.b16 %v61
  %v1195 = vunpack.c.l.b16 %v62
  %v1196 = vunpack.c.h.b16 %v62
  %v1197 = vunpack.c.l.b16 %v63
  %v1198 = vunpack.c.h.b16 %v63
  %v1199 = vunpack.c.l.b16 %v64
  %v1200 = vunpack.c.h.b16 %v64
  %v1201 = vunpack.c.l.b16 %v65
  %v1202 = vunpack.c.h.b16 %v65
  %v1203 = vunpack.c.l.b16 %v66
  %v1204 = vunpack.c.h.b16 %v66
  %v1205 = vunpack.c.l.b16 %v67
  %v1206 = vunpack.c.h.b16 %v67
  %v1207 = vunpack.c.l.b16 %v68
  %v1208 = vunpack.c.h.b16 %v68
  %v1209 = vunpack.c.l.b16 %v69
  %v1210 = vunpack.c.h.b16 %v69
  %v1211 = vunpack.c.l.b16 %v70
  %v1212 = vunpack.c.h.b16 %v70
  %v1213 = vunpack.c.l.b16 %v71
  %v1214 = vunpack.c.h.b16 %v71
  %v1215 = vunpack.c.l.b16 %v72
  %v1216 = vunpack.c.h.b16 %v72
  %v1217 = vunpack.c.l.b16 %v73
  %v1218 = vunpack.c.h.b16 %v73
  %v1219 = vunpack.c.l.b16 %v74
  %v1220 = vunpack.c.h.b16 %v74
  %v1221 = vunpack.c.l.b16 %v75
  %v1222 = vunpack.c.h.b16 %v75
  %v1223 = vunpack.c.l.b16 %v76
  %v1224 = vunpack.c.h.b16 %v76
  %v1225 = vunpack.c.l.b16 %v77
  %v1226 = vunpack.c.h.b16 %v77
  %v1227 = vunpack.c.l.b16 %v78
  %v1228 = vunpack.c.h.b16 %v78
  %v1229 = vunpack.c.l.b16 %v79
  %v1230 = vunpack.c.h.b16 %v79
  %v1231 = vunpack.c.l.b16 %v80
  %v1232 = vunpack.c.h.b16 %v80
  %v1233 = vunpack.c.l.b16 %v81
  %v1234 = vunpack.c.h.b16 %v81
  %v1235 = vunpack.c.l.b16 %v82
  %v1236 = vunpack.c.h.b16 %v82
  %v1237 = vunpack.c.l.b16 %v83
  %v1238 = vunpack.c.h.b16 %v83
  %v1239 = vunpack.c.l.b16 %v84
  %v1240 = vunpack.c.h.b16 %v84
  %v1241 = vunpack.c.l.b16 %v85
  %v1242 = vunpack.c.h.b16 %v85
  %v1243 = vunpack.c.l.b16 %v86
  %v1244 = vunpack.c.h.b16 %v86
  %v1245 = vunpack.c.l.b16 %v87
  %v1246 = vunpack.c.h.b16 %v87
  %v1247 = vunpack.c.l.b16 %v88
  %v1248 = vpack.c.b16 %v1187, %v1126
  %v1249 = vpack.c.b16 %v1188, %v1127
  %v1250 = vpack.c.b16 %v1189, %v1128
  %v1251 = vpack.c.b16 %v1190, %v1129
  %v1252 = vpack.c.b16 %v1191, %v1130
  %v1253 = vpack.c.b16 %v1192, %v1131
  %v1254 = vpack.c.b16 %v1193, %v1132
  %v1255 = vpack.c.b16 %v1194, %v1133
  %v1256 = vpack.c.b16 %v1195, %v1134
  %v1257 = vpack.c.b16 %v1196, %v1135
  %v1258 = vpack.c.b16 %v1197, %v1136
  %v1259 = vpack.c.b16 %v1198, %v1137
  %v1260 = vpack.c.b16 %v1199, %v1138
  %v1261 = vpack.c.b16 %v1200, %v1139
  %v1262 = vpack.c.b16 %v1201, %v1140
  %v1263 = vpack.c.b16 %v1202, %v1141
  %v1264 = vpack.c.b16 %v1203, %v1142
  %v1265 = vpack.c.b16 %v1204, %v1143
  %v1266 = vpack.c.b16 %v1205, %v1144
  %v1267 = vpack.c.b16 %v1206, %v1145
  %v1268 = vpack.c.b16 %v1207, %v1146
  %v1269 = vpack.c.b16 %v1208, %v1147
  %v1270 = vpack.c.b16 %v1209, %v1148
  %v1271 = vpack.c.b16 %v1210, %v1149
  %v1272 = vpack.c.b16 %v1211, %v1150
  %v1273 = vpack.c.b16 %v1212, %v1151
  %v1274 = vpack.c.b16 %v1213, %v1152
  %v1275 = vpack.c.b16 %v1214, %v1153
  %v1276 = vpack.c.b16 %v1215, %v1154
  %v1277 = vpack.c.b16 %v1216, %v1155
  %v1278 = vpack.c.b16 %v1217, %v1156
  %v1279 = vpack.c.b16 %v1218, %v1157
  %v1280 = vpack.c.b16 %v1219, %v1158
  %v1281 = vpack.c.b16 %v1220, %v1159
  %v1282 = vpack.c.b16 %v1221, %v1160
  %v1283 = vpack.c.b16 %v1222, %v1161
  %v1284 = vpack.c.b16 %v1223, %v1162
  %v1285 = vpack.c.b16 %v1224, %v1163
  %v1286 = vpack.c.b16 %v1225, %v1164
  %v1287 = vpack.c.b16 %v1226, %v1165
  %v1288 = vpack.c.b16 %v1227, %v1166
  %v1289 = vpack.c.b16 %v1228, %v1167
  %v1290 = vpack.c.b16 %v1229, %v1168
  %v1291 = vpack.c.b16 %v1230, %v1169
  %v1292 = vpack.c.b16 %v1231, %v1170
  %v1293 = vpack.c.b16 %v1232, %v1171
  %v1294 = vpack.c.b16 %v1233, %v1172
  %v1295 = vpack.c.b16 %v1234, %v1173
  %v1296 = vpack.c.b16 %v1235, %v1174
  %v1297 = vpack.c.b16 %v1236, %v1175
  %v1298 = vpack.c.b16 %v1237, %v1176
  %v1299 = vpack.c.b16 %v1238, %v1177
  %v1300 = vpack.c.b16 %v1239, %v1178
  %v1301 = vpack.c.b16 %v1240, %v1179
  %v1302 = vpack.c.b16 %v1241, %v1180
  %v1303 = vpack.c.b16 %v1242, %v1181
  %v1304 = vpack.c.b16 %v1243, %v1182
  %v1305 = vpack.c.b16 %v1244, %v1183
  %v1306 = vpack.c.b16 %v1245, %v1184
  %v1307 = vpack.c.b16 %v1246, %v1185
  %v1308 = vpack.c.b16 %v1247, %v1186
  %v2337 = vunpack.c.l.b16 %v89
  %v2338 = vunpack.c.l.b16 %v90
  %v2339 = vunpack.c.l.b16 %v91
  %v2340 = vunpack.c.l.b16 %v92
  %v2341 = vunpack.c.l.b16 %v93
  %v2342 = vunpack.c.l.b16 %v94
  %v2343 = vunpack.c.l.b16 %v95
  %v2344 = vunpack.c.l.b16 %v96
  %v2345 = vunpack.c.l.b16 %v97
  %v2346 = vunpack.c.l.b16 %v98
  %v2347 = vunpack.c.l.b16 %v99
  %v2348 = vunpack.c.l.b16 %v100
  %v2349 = vunpack.c.l.b16 %v101
  %v2350 = vunpack.c.l.b16 %v102
  %v2351 = vunpack.c.l.b16 %v103
  %v2352 = vunpack.c.l.b16 %v104
  %v2353 = vunpack.c.l.b16 %v105
  %v2354 = vunpack.c.l.b16 %v106
  %v2355 = vunpack.c.l.b16 %v107
  %v2356 = vunpack.c.l.b16 %v108
  %v2357 = vunpack.c.l.b16 %v109
  %v2358 = vunpack.c.l.b16 %v110
  %v2359 = vunpack.c.l.b16 %v111
  %v2360 = vunpack.c.l.b16 %v112
  %v2361 = vunpack.c.l.b16 %v113
  %v2362 = vunpack.c.l.b16 %v114
  %v2363 = vunpack.c.l.b16 %v115
  %v2364 = vunpack.c.l.b16 %v116
  %v2365 = vunpack.c.l.b16 %v117
  %v2366 = vunpack.c.l.b16 %v118
  %v2367 = vunpack.c.l.b16 %v119
  %v2368 = vunpack.c.l.b16 %v120
  %v2369 = vunpack.c.l.b16 %v121
  %v2370 = vunpack.c.l.b16 %v122
  %v2371 = vunpack.c.l.b16 %v123
  %v2372 = vunpack.c.l.b16 %v124
  %v2373 = vunpack.c.l.b16 %v125
  %v2374 = vunpack.c.l.b16 %v126
  %v2375 = vunpack.c.l.b16 %v127
  %v2376 = vunpack.c.l.b16 %v128
  %v2377 = vunpack.c.l.b16 %v129
  %v2378 = vunpack.c.l.b16 %v130
  %v2379 = vunpack.c.l.b16 %v131
  %v2380 = vunpack.c.l.b16 %v132
  %v2381 = vunpack.c.l.b16 %v133
  %v2382 = vunpack.c.l.b16 %v134
  %v2383 = vunpack.c.l.b16 %v135
  %v2384 = vunpack.c.l.b16 %v136
  %v2385 = vunpack.c.l.b16 %v137
  %v2386 = vunpack.c.l.b16 %v138
  %v2387 = vunpack.c.l.b16 %v139
  %v2388 = vunpack.c.l.b16 %v140
  %v2389 = vunpack.c.l.b16 %v141
  %v2390 = vunpack.c.l.b16 %v142
  %v2391 = vunpack.c.l.b16 %v143
  %v2392 = vunpack.c.l.b16 %v144
  %v2393 = vunpack.c.l.b16 %v145
  %v2394 = vunpack.c.l.b16 %v146
  %v2395 = vunpack.c.l.b16 %v147
  %v2396 = vunpack.c.l.b16 %v148
  %v2397 = vunpack.c.l.b16 %v149
  %v2398 = vunpack.c.l.b16 %v150
  %v2399 = vunpack.c.l.b16 %v151
  %v2400 = vunpack.c.l.b16 %v152
  %v2401 = vunpack.c.l.b16 %v153
  %v2402 = vunpack.c.l.b16 %v154
  %v2403 = vunpack.c.l.b16 %v155
  %v2404 = vunpack.c.l.b16 %v156
  %v2405 = vunpack.c.l.b16 %v157
  %v2406 = vunpack.c.l.b16 %v158
  %v2407 = vunpack.c.l.b16 %v159
  %v2408 = vunpack.c.l.b16 %v160
  %v2409 = vunpack.c.l.b16 %v161
  %v2410 = vunpack.c.l.b16 %v162
  %v2411 = vunpack.c.l.b16 %v163
  %v2412 = vunpack.c.l.b16 %v164
  %v2413 = vunpack.c.l.b16 %v165
  %v2414 = vunpack.c.l.b16 %v166
  %v2415 = vunpack.c.l.b16 %v167
  %v2416 = vunpack.c.l.b16 %v168
  %v2417 = vunpack.c.l.b16 %v169
  %v2418 = vunpack.c.l.b16 %v170
  %v2419 = vunpack.c.l.b16 %v171
  %v2420 = vunpack.c.l.b16 %v172
  %v2421 = vunpack.c.l.b16 %v173
  %v2422 = vunpack.c.l.b16 %v174
  %v2423 = vunpack.c.l.b16 %v175
  %v2424 = vunpack.c.l.b16 %v176
  %v2425 = vunpack.c.l.b16 %v177
  %v2426 = vunpack.c.l.b16 %v178
  %v2427 = vunpack.c.l.b16 %v179
  %v2428 = vunpack.c.l.b16 %v180
  %v2429 = vunpack.c.l.b16 %v181
  %v2430 = vunpack.c.l.b16 %v182
  %v2431 = vunpack.c.l.b16 %v183
  %v2432 = vunpack.c.l.b16 %v184
  %v2433 = vunpack.c.l.b16 %v185
  %v2434 = vunpack.c.l.b16 %v186
  %v2435 = vunpack.c.l.b16 %v187
  %v2436 = vunpack.c.l.b16 %v188
  %v2437 = vunpack.c.l.b16 %v189
  %v2438 = vunpack.c.l.b16 %v190
  %v2439 = vunpack.c.l.b16 %v191
  %v2440 = vunpack.c.l.b16 %v192
  %v2441 = vunpack.c.l.b16 %v193
  %v2442 = vunpack.c.l.b16 %v194
  %v2443 = vunpack.c.l.b16 %v195
  %v2444 = vunpack.c.l.b16 %v196
  %v2445 = vunpack.c.l.b16 %v197
  %v2446 = vunpack.c.l.b16 %v198
  %v2447 = vunpack.c.l.b16 %v199
  %v2448 = vunpack.c.l.b16 %v200
  %v2449 = vunpack.c.l.b16 %v201
  %v2450 = vunpack.c.l.b16 %v202
  %v2451 = vunpack.c.l.b16 %v203
  %v2452 = vunpack.c.l.b16 %v204
  %v2453 = vunpack.c.l.b16 %v205
  %v2454 = vunpack.c.l.b16 %v206
  %v2455 = vunpack.c.l.b16 %v207
  %v2456 = vunpack.c.l.b16 %v208
  %v2457 = vunpack.c.l.b16 %v209
  %v2458 = vunpack.c.l.b16 %v210
  %v2459 = vunpack.c.l.b16 %v211
  %v2460 = vunpack.c.l.b16 %v212
  %v2461 = vunpack.c.l.b16 %v213
  %v2462 = vunpack.c.l.b16 %v214
  %v2463 = vunpack.c.l.b16 %v215
  %v2464 = vunpack.c.l.b16 %v216
  %v2465 = vunpack.c.l.b16 %v217
  %v2466 = vunpack.c.l.b16 %v218
  %v2467 = vunpack.c.l.b16 %v219
  %v2468 = vunpack.c.l.b16 %v220
  %v2469 = vunpack.c.l.b16 %v221
  %v2470 = vunpack.c.l.b16 %v222
  %v2471 = vunpack.c.l.b16 %v223
  %v2472 = vunpack.c.l.b16 %v224
  %v2473 = vunpack.c.l.b16 %v225
  %v2474 = vunpack.c.l.b16 %v226
  %v2475 = vunpack.c.l.b16 %v227
  %v2476 = vunpack.c.l.b16 %v228
  %v2477 = vunpack.c.l.b16 %v229
  %v2478 = vunpack.c.l.b16 %v230
  %v2479 = vunpack.c.l.b16 %v231
  %v2480 = vunpack.c.l.b16 %v232
  %v2481 = vunpack.c.l.b16 %v233
  %v2482 = vunpack.c.l.b16 %v234
  %v2483 = vunpack.c.l.b16 %v235
  %v2484 = vunpack.c.l.b16 %v236
  %v2485 = vunpack.c.l.b16 %v237
  %v2486 = vunpack.c.l.b16 %v238
  %v2487 = vunpack.c.l.b16 %v239
  %v2488 = vunpack.c.l.b16 %v240
  %v2489 = vunpack.c.l.b16 %v241
  %v2490 = vunpack.c.l.b16 %v242
  %v2491 = vunpack.c.l.b16 %v243
  %v2492 = vunpack.c.l.b16 %v244
  %v2493 = vunpack.c.l.b16 %v245
  %v2494 = vunpack.c.l.b16 %v246
  %v2495 = vunpack.c.l.b16 %v247
  %v2496 = vunpack.c.l.b16 %v248
  %v2497 = vunpack.c.l.b16 %v249
  %v2498 = vunpack.c.l.b16 %v250
  %v2499 = vunpack.c.l.b16 %v251
  %v2500 = vunpack.c.l.b16 %v252
  %v2501 = vunpack.c.l.b16 %v253
  %v2502 = vunpack.c.l.b16 %v254
  %v2503 = vunpack.c.l.b16 %v255
  %v2504 = vunpack.c.l.b16 %v256
  %v2505 = vunpack.c.l.b16 %v257
  %v2506 = vunpack.c.l.b16 %v258
  %v2507 = vunpack.c.l.b16 %v259
  %v2508 = vunpack.c.l.b16 %v260
  %v2509 = vunpack.c.l.b16 %v261
  %v2510 = vunpack.c.l.b16 %v262
  %v2511 = vunpack.c.l.b16 %v263
  %v2512 = vunpack.c.l.b16 %v264
  %v2513 = vunpack.c.l.b16 %v265
  %v2514 = vunpack.c.l.b16 %v266
  %v2515 = vunpack.c.l.b16 %v267
  %v2516 = vunpack.c.l.b16 %v268
  %v2517 = vunpack.c.l.b16 %v269
  %v2518 = vunpack.c.l.b16 %v270
  %v2519 = vunpack.c.l.b16 %v271
  %v2520 = vunpack.c.l.b16 %v272
  %v2521 = vunpack.c.l.b16 %v273
  %v2522 = vunpack.c.l.b16 %v274
  %v2523 = vunpack.c.l.b16 %v275
  %v2524 = vunpack.c.l.b16 %v276
  %v2525 = vunpack.c.l.b16 %v277
  %v2526 = vunpack.c.l.b16 %v278
  %v2527 = vunpack.c.l.b16 %v279
  %v2528 = vunpack.c.l.b16 %v280
  %v2529 = vunpack.c.l.b16 %v281
  %v2530 = vunpack.c.l.b16 %v282
  %v2531 = vunpack.c.l.b16 %v283
  %v2532 = vunpack.c.l.b16 %v284
  %v2533 = vunpack.c.l.b16 %v285
  %v2534 = vunpack.c.l.b16 %v286
  %v2535 = vunpack.c.l.b16 %v287
  %v2536 = vunpack.c.l.b16 %v288
  %v2537 = vunpack.c.l.b16 %v289
  %v2538 = vunpack.c.l.b16 %v290
  %v2539 = vunpack.c.l.b16 %v291
  %v2540 = vunpack.c.l.b16 %v292
  %v2541 = vunpack.c.l.b16 %v293
  %v2542 = vunpack.c.l.b16 %v294
  %v2543 = vunpack.c.l.b16 %v295
  %v2544 = vunpack.c.l.b16 %v296
  %v2545 = vunpack.c.l.b16 %v297
  %v2546 = vunpack.c.l.b16 %v298
  %v2547 = vunpack.c.l.b16 %v299
  %v2548 = vunpack.c.l.b16 %v300
  %v2549 = vunpack.c.l.b16 %v301
  %v2550 = vunpack.c.l.b16 %v302
  %v2551 = vunpack.c.l.b16 %v303
  %v2552 = vunpack.c.l.b16 %v304
  %v2553 = vunpack.c.l.b16 %v305
  %v2554 = vunpack.c.l.b16 %v306
  %v2555 = vunpack.c.l.b16 %v307
  %v2556 = vunpack.c.l.b16 %v308
  %v2557 = vunpack.c.l.b16 %v309
  %v2558 = vunpack.c.l.b16 %v310
  %v2559 = vunpack.c.l.b16 %v311
  %v2560 = vunpack.c.l.b16 %v312
  %v2561 = vunpack.c.l.b16 %v313
  %v2562 = vunpack.c.l.b16 %v314
  %v2563 = vunpack.c.l.b16 %v315
  %v2564 = vunpack.c.l.b16 %v316
  %v2565 = vunpack.c.l.b16 %v317
  %v2566 = vunpack.c.l.b16 %v318
  %v2567 = vunpack.c.l.b16 %v319
  %v2568 = vunpack.c.l.b16 %v320
  %v2569 = vunpack.c.l.b16 %v321
  %v2570 = vunpack.c.l.b16 %v322
  %v2571 = vunpack.c.l.b16 %v323
  %v2572 = vunpack.c.l.b16 %v324
  %v2573 = vunpack.c.l.b16 %v325
  %v2574 = vunpack.c.l.b16 %v326
  %v2575 = vunpack.c.l.b16 %v327
  %v2576 = vunpack.c.l.b16 %v328
  %v2577 = vunpack.c.l.b16 %v329
  %v2578 = vunpack.c.l.b16 %v330
  %v2579 = vunpack.c.l.b16 %v331
  %v2580 = vunpack.c.l.b16 %v332
  %v2581 = vunpack.c.l.b16 %v333
  %v2582 = vunpack.c.l.b16 %v334
  %v2583 = vunpack.c.l.b16 %v335
  %v2584 = vunpack.c.l.b16 %v336
  %v2585 = vunpack.c.l.b16 %v337
  %v2586 = vunpack.c.l.b16 %v338
  %v2587 = vunpack.c.l.b16 %v339
  %v2588 = vunpack.c.l.b16 %v340
  %v2589 = vunpack.c.l.b16 %v341
  %v2590 = vunpack.c.l.b16 %v342
  %v2591 = vunpack.c.l.b16 %v343
  %v2592 = vunpack.c.l.b16 %v344
  %v2593 = vunpack.c.l.b16 %v345
  %v2594 = vunpack.c.l.b16 %v346
  %v2595 = vunpack.c.l.b16 %v347
  %v2596 = vunpack.c.l.b16 %v348
  %v2597 = vunpack.c.l.b16 %v349
  %v2598 = vunpack.c.l.b16 %v350
  %v2599 = vunpack.c.l.b16 %v351
  %v2600 = vunpack.c.l.b16 %v352
  %v2601 = vunpack.c.l.b16 %v353
  %v2602 = vunpack.c.l.b16 %v354
  %v2603 = vunpack.c.l.b16 %v355
  %v2604 = vunpack.c.l.b16 %v356
  %v2605 = vunpack.c.l.b16 %v357
  %v2606 = vunpack.c.l.b16 %v358
  %v2607 = vunpack.c.l.b16 %v359
  %v2608 = vunpack.c.l.b16 %v360
  %v2609 = vunpack.c.l.b16 %v361
  %v2610 = vunpack.c.l.b16 %v362
  %v2611 = vunpack.c.l.b16 %v363
  %v2612 = vunpack.c.l.b16 %v364
  %v2613 = vunpack.c.l.b16 %v365
  %v2614 = vunpack.c.l.b16 %v366
  %v2615 = vunpack.c.l.b16 %v367
  %v2616 = vunpack.c.l.b16 %v368
  %v2617 = vunpack.c.l.b16 %v369
  %v2618 = vunpack.c.l.b16 %v370
  %v2619 = vunpack.c.l.b16 %v371
  %v2620 = vunpack.c.l.b16 %v372
  %v2621 = vunpack.c.l.b16 %v373
  %v2622 = vunpack.c.l.b16 %v374
  %v2623 = vunpack.c.l.b16 %v375
  %v2624 = vunpack.c.l.b16 %v376
  %v2625 = vunpack.c.l.b16 %v377
  %v2626 = vunpack.c.l.b16 %v378
  %v2627 = vunpack.c.l.b16 %v379
  %v2628 = vunpack.c.l.b16 %v380
  %v2629 = vunpack.c.l.b16 %v381
  %v2630 = vunpack.c.l.b16 %v382
  %v2631 = vunpack.c.l.b16 %v383
  %v2632 = vunpack.c.l.b16 %v384
  %v2633 = vunpack.c.l.b16 %v385
  %v2634 = vunpack.c.l.b16 %v386
  %v2635 = vunpack.c.l.b16 %v387
  %v2636 = vunpack.c.l.b16 %v388
  %v2637 = vunpack.c.l.b16 %v389
  %v2638 = vunpack.c.l.b16 %v390
  %v2639 = vunpack.c.l.b16 %v391
  %v2640 = vunpack.c.l.b16 %v392
  %v2641 = vunpack.c.l.b16 %v393
  %v2642 = vunpack.c.l.b16 %v394
  %v2643 = vunpack.c.l.b16 %v395
  %v2644 = vunpack.c.l.b16 %v396
  %v2645 = vunpack.c.l.b16 %v397
  %v2646 = vunpack.c.l.b16 %v398
  %v2647 = vunpack.c.l.b16 %v399
  %v2648 = vunpack.c.l.b16 %v400
  %v2649 = vunpack.c.l.b16 %v401
  %v2650 = vunpack.c.l.b16 %v402
  %v2651 = vunpack.c.l.b16 %v403
  %v2652 = vunpack.c.l.b16 %v404
  %v2653 = vunpack.c.l.b16 %v405
  %v2654 = vunpack.c.l.b16 %v406
  %v2655 = vunpack.c.l.b16 %v407
  %v2656 = vunpack.c.l.b16 %v408
  %v2657 = vunpack.c.l.b16 %v409
  %v2658 = vunpack.c.l.b16 %v410
  %v2659 = vunpack.c.l.b16 %v411
  %v2660 = vunpack.c.l.b16 %v412
  %v2661 = vunpack.c.l.b16 %v413
  %v2662 = vunpack.c.l.b16 %v414
  %v2663 = vunpack.c.l.b16 %v415
  %v2664 = vunpack.c.l.b16 %v416
  %v2665 = vunpack.c.l.b16 %v417
  %v2666 = vunpack.c.l.b16 %v418
  %v2667 = vunpack.c.l.b16 %v419
  %v2668 = vunpack.c.l.b16 %v420
  %v2669 = vunpack.c.l.b16 %v421
  %v2670 = vunpack.c.l.b16 %v422
  %v2671 = vunpack.c.l.b16 %v423
  %v2672 = vunpack.c.l.b16 %v424
  %v2673 = vunpack.c.l.b16 %v425
  %v2674 = vunpack.c.l.b16 %v426
  %v2675 = vunpack.c.l.b16 %v427
  %v2676 = vunpack.c.l.b16 %v428
  %v2677 = vunpack.c.l.b16 %v429
  %v2678 = vunpack.c.l.b16 %v430
  %v2679 = vunpack.c.l.b16 %v431
  %v2680 = vunpack.c.l.b16 %v432
  %v2681 = vunpack.c.l.b16 %v433
  %v2682 = vunpack.c.l.b16 %v434
  %v2683 = vunpack.c.l.b16 %v435
  %v2684 = vunpack.c.l.b16 %v436
  %v2685 = vunpack.c.l.b16 %v437
  %v2686 = vunpack.c.l.b16 %v438
  %v2687 = vunpack.c.l.b16 %v439
  %v2688 = vunpack.c.l.b16 %v440
  %v2689 = vunpack.c.l.b16 %v441
  %v2690 = vunpack.c.l.b16 %v442
  %v2691 = vunpack.c.l.b16 %v443
  %v2692 = vunpack.c.l.b16 %v444
  %v2693 = vunpack.c.l.b16 %v445
  %v2694 = vunpack.c.l.b16 %v446
  %v2695 = vunpack.c.l.b16 %v447
  %v2696 = vunpack.c.l.b16 %v448
  %v2697 = vunpack.c.l.b16 %v449
  %v2698 = vunpack.c.l.b16 %v450
  %v2699 = vunpack.c.l.b16 %v451
  %v2700 = vunpack.c.l.b16 %v452
  %v2701 = vunpack.c.l.b16 %v453
  %v2702 = vunpack.c.l.b16 %v454
  %v2703 = vunpack.c.l.b16 %v455
  %v2704 = vunpack.c.l.b16 %v456
  %v2705 = vunpack.c.l.b16 %v457
  %v2706 = vunpack.c.l.b16 %v458
  %v2707 = vunpack.c.l.b16 %v459
  %v2708 = vunpack.c.l.b16 %v460
  %v2709 = vunpack.c.l.b16 %v461
  %v2710 = vunpack.c.l.b16 %v462
  %v2711 = vunpack.c.l.b16 %v463
  %v2712 = vunpack.c.l.b16 %v464
  %v2713 = vunpack.c.l.b16 %v465
  %v2714 = vunpack.c.l.b16 %v466
  %v2715 = vunpack.c.l.b16 %v467
  %v2716 = vunpack.c.l.b16 %v468
  %v2717 = vunpack.c.l.b16 %v469
  %v2718 = vunpack.c.l.b16 %v470
  %v2719 = vunpack.c.l.b16 %v471
  %v2720 = vunpack.c.l.b16 %v472
  %v2721 = vunpack.c.l.b16 %v473
  %v2722 = vunpack.c.l.b16 %v474
  %v2723 = vunpack.c.l.b16 %v475
  %v2724 = vunpack.c.l.b16 %v476
  %v2725 = vunpack.c.l.b16 %v477
  %v2726 = vunpack.c.l.b16 %v478
  %v2727 = vunpack.c.l.b16 %v479
  %v2728 = vunpack.c.l.b16 %v480
  %v2729 = vunpack.c.l.b16 %v481
  %v2730 = vunpack.c.l.b16 %v482
  %v2731 = vunpack.c.l.b16 %v483
  %v2732 = vunpack.c.l.b16 %v484
  %v2733 = vunpack.c.l.b16 %v485
  %v2734 = vunpack.c.l.b16 %v486
  %v2735 = vunpack.c.l.b16 %v487
  %v2736 = vunpack.c.l.b16 %v488
  %v2737 = vunpack.c.l.b16 %v489
  %v2738 = vunpack.c.l.b16 %v490
  %v2739 = vunpack.c.l.b16 %v491
  %v2740 = vunpack.c.l.b16 %v492
  %v2741 = vunpack.c.l.b16 %v493
  %v2742 = vunpack.c.l.b16 %v494
  %v2743 = vunpack.c.l.b16 %v495
  %v2744 = vunpack.c.l.b16 %v496
  %v2745 = vunpack.c.l.b16 %v497
  %v2746 = vunpack.c.l.b16 %v498
  %v2747 = vunpack.c.l.b16 %v499
  %v2748 = vunpack.c.l.b16 %v500
  %v2749 = vunpack.c.l.b16 %v501
  %v2750 = vunpack.c.l.b16 %v502
  %v2751 = vunpack.c.l.b16 %v503
  %v2752 = vunpack.c.l.b16 %v504
  %v2753 = vunpack.c.l.b16 %v505
  %v2754 = vunpack.c.l.b16 %v506
  %v2755 = vunpack.c.l.b16 %v507
  %v2756 = vunpack.c.l.b16 %v508
  %v2757 = vunpack.c.l.b16 %v509
  %v2758 = vunpack.c.l.b16 %v510
  %v2759 = vunpack.c.l.b16 %v511
  %v2760 = vunpack.c.l.b16 %v512
  %v2761 = vunpack.c.l.b16 %v513
  %v2762 = vunpack.c.l.b16 %v514
  %v2763 = vunpack.c.l.b16 %v515
  %v2764 = vunpack.c.l.b16 %v516
  %v2765 = vunpack.c.l.b16 %v517
  %v2766 = vunpack.c.l.b16 %v518
  %v2767 = vunpack.c.l.b16 %v519
  %v2768 = vunpack.c.l.b16 %v520
  %v2769 = vunpack.c.l.b16 %v521
  %v2770 = vunpack.c.l.b16 %v522
  %v2771 = vunpack.c.l.b16 %v523
  %v2772 = vunpack.c.l.b16 %v524
  %v2773 = vunpack.c.l.b16 %v525
  %v2774 = vunpack.c.l.b16 %v526
  %v2775 = vunpack.c.l.b16 %v527
  %v2776 = vunpack.c.l.b16 %v528
  %v2777 = vunpack.c.l.b16 %v529
  %v2778 = vunpack.c.l.b16 %v530
  %v2779 = vunpack.c.l.b16 %v531
  %v2780 = vunpack.c.l.b16 %v532
  %v2781 = vunpack.c.l.b16 %v533
  %v2782 = vunpack.c.l.b16 %v534
  %v2783 = vunpack.c.l.b16 %v535
  %v2784 = vunpack.c.l.b16 %v536
  %v2785 = vunpack.c.l.b16 %v537
  %v2786 = vunpack.c.l.b16 %v538
  %v2787 = vunpack.c.l.b16 %v539
  %v2788 = vunpack.c.l.b16 %v540
  %v2789 = vunpack.c.l.b16 %v541
  %v2790 = vunpack.c.l.b16 %v542
  %v2791 = vunpack.c.l.b16 %v543
  %v2792 = vunpack.c.l.b16 %v544
  %v2793 = vunpack.c.l.b16 %v545
  %v2794 = vunpack.c.l.b16 %v546
  %v2795 = vunpack.c.l.b16 %v547
  %v2796 = vunpack.c.l.b16 %v548
  %v2797 = vunpack.c.l.b16 %v549
  %v2798 = vunpack.c.l.b16 %v550
  %v2799 = vunpack.c.l.b16 %v551
  %v2800 = vunpack.c.l.b16 %v552
  %v2801 = vunpack.c.l.b16 %v553
  %v2802 = vunpack.c.l.b16 %v554
  %v2803 = vunpack.c.l.b16 %v555
  %v2804 = vunpack.c.l.b16 %v556
  %v2805 = vunpack.c.l.b16 %v557
  %v2806 = vunpack.c.l.b16 %v558
  %v2807 = vunpack.c.l.b16 %v559
  %v2808 = vunpack.c.l.b16 %v560
  %v2809 = vunpack.c.l.b16 %v561
  %v2810 = vunpack.c.l.b16 %v562
  %v2811 = vunpack.c.l.b16 %v563
  %v2812 = vunpack.c.l.b16 %v564
  %v2813 = vunpack.c.l.b16 %v565
  %v2814 = vunpack.c.l.b16 %v566
  %v2815 = vunpack.c.l.b16 %v567
  %v2816 = vunpack.c.l.b16 %v568
  %v2817 = vunpack.c.l.b16 %v569
  %v2818 = vunpack.c.l.b16 %v570
  %v2819 = vunpack.c.l.b16 %v571
  %v2820 = vunpack.c.l.b16 %v572
  %v2821 = vunpack.c.l.b16 %v573
  %v2822 = vunpack.c.l.b16 %v574
  %v2823 = vunpack.c.l.b16 %v575
  %v2824 = vunpack.c.l.b16 %v576
  %v2825 = vunpack.c.l.b16 %v577
  %v2826 = vunpack.c.l.b16 %v578
  %v2827 = vunpack.c.l.b16 %v579
  %v2828 = vunpack.c.l.b16 %v580
  %v2829 = vunpack.c.l.b16 %v581
  %v2830 = vunpack.c.l.b16 %v582
  %v2831 = vunpack.c.l.b16 %v583
  %v2832 = vunpack.c.l.b16 %v584
  %v2833 = vunpack.c.l.b16 %v585
  %v2834 = vunpack.c.l.b16 %v586
  %v2835 = vunpack.c.l.b16 %v587
  %v2836 = vunpack.c.l.b16 %v588
  %v2837 = vunpack.c.l.b16 %v589
  %v2838 = vunpack.c.l.b16 %v590
  %v2839 = vunpack.c.l.b16 %v591
  %v2840 = vunpack.c.l.b16 %v592
  %v2841 = vunpack.c.l.b16 %v593
  %v2842 = vunpack.c.l.b16 %v594
  %v2843 = vunpack.c.l.b16 %v595
  %v2844 = vunpack.c.l.b16 %v596
  %v2845 = vunpack.c.l.b16 %v597
  %v2846 = vunpack.c.l.b16 %v598
  %v2847 = vunpack.c.l.b16 %v599
  %v2848 = vunpack.c.l.b16 %v600
  %v2849 = vunpack.c.l.b16 %v601
  %v2850 = vunpack.c.l.b16 %v602
  %v2851 = vunpack.c.l.b16 %v603
  %v2852 = vunpack.c.l.b16 %v604
  %v2853 = vunpack.c.l.b16 %v605
  %v2854 = vunpack.c.l.b16 %v606
  %v2855 = vunpack.c.l.b16 %v607
  %v2856 = vunpack.c.l.b16 %v608
  %v2857 = vunpack.c.l.b16 %v609
  %v2858 = vunpack.c.l.b16 %v610
  %v2859 = vunpack.c.l.b16 %v611
  %v2860 = vunpack.c.l.b16 %v612
  %v2861 = vunpack.c.l.b16 %v613
  %v2862 = vunpack.c.l.b16 %v614
  %v2863 = vunpack.c.l.b16 %v615
  %v2864 = vunpack.c.l.b16 %v616
  %v2865 = vunpack.c.l.b16 %v617
  %v2866 = vunpack.c.l.b16 %v618
  %v2867 = vunpack.c.l.b16 %v619
  %v2868 = vunpack.c.l.b16 %v620
  %v2869 = vunpack.c.l.b16 %v621
  %v2870 = vunpack.c.l.b16 %v622
  %v2871 = vunpack.c.l.b16 %v623
  %v2872 = vunpack.c.l.b16 %v624
  %v2873 = vunpack.c.l.b16 %v625
  %v2874 = vunpack.c.l.b16 %v626
  %v2875 = vunpack.c.l.b16 %v627
  %v2876 = vunpack.c.l.b16 %v628
  %v2877 = vunpack.c.l.b16 %v629
  %v2878 = vunpack.c.l.b16 %v630
  %v2879 = vunpack.c.l.b16 %v631
  %v2880 = vunpack.c.l.b16 %v632
  %v2881 = vunpack.c.l.b16 %v633
  %v2882 = vunpack.c.l.b16 %v634
  %v2883 = vunpack.c.l.b16 %v635
  %v2884 = vunpack.c.l.b16 %v636
  %v2885 = vunpack.c.l.b16 %v637
  %v2886 = vunpack.c.l.b16 %v638
  %v2887 = vunpack.c.l.b16 %v639
  %v2888 = vunpack.c.l.b16 %v640
  %v2889 = vunpack.c.l.b16 %v641
  %v2890 = vunpack.c.l.b16 %v642
  %v2891 = vunpack.c.l.b16 %v643
  %v2892 = vunpack.c.l.b16 %v644
  %v2893 = vunpack.c.l.b16 %v645
  %v2894 = vunpack.c.l.b16 %v646
  %v2895 = vunpack.c.l.b16 %v647
  %v2896 = vunpack.c.l.b16 %v648
  %v2897 = vunpack.c.l.b16 %v649
  %v2898 = vunpack.c.l.b16 %v650
  %v2899 = vunpack.c.l.b16 %v651
  %v2900 = vunpack.c.l.b16 %v652
  %v2901 = vunpack.c.l.b16 %v653
  %v2902 = vunpack.c.l.b16 %v654
  %v2903 = vunpack.c.l.b16 %v655
  %v2904 = vunpack.c.l.b16 %v656
  %v2905 = vunpack.c.l.b16 %v657
  %v2906 = vunpack.c.l.b16 %v658
  %v2907 = vunpack.c.l.b16 %v659
  %v2908 = vunpack.c.l.b16 %v660
  %v2909 = vunpack.c.l.b16 %v661
  %v2910 = vunpack.c.l.b16 %v662
  %v2911 = vunpack.c.l.b16 %v663
  %v2912 = vunpack.c.l.b16 %v664
  %v2913 = vunpack.c.l.b16 %v665
  %v2914 = vunpack.c.l.b16 %v666
  %v2915 = vunpack.c.l.b16 %v667
  %v2916 = vunpack.c.l.b16 %v668
  %v2917 = vunpack.c.l.b16 %v669
  %v2918 = vunpack.c.l.b16 %v670
  %v2919 = vunpack.c.l.b16 %v671
  %v2920 = vunpack.c.l.b16 %v672
  %v2921 = vunpack.c.l.b16 %v673
  %v2922 = vunpack.c.l.b16 %v674
  %v2923 = vunpack.c.l.b16 %v675
  %v2924 = vunpack.c.l.b16 %v676
  %v2925 = vunpack.c.l.b16 %v677
  %v2926 = vunpack.c.l.b16 %v678
  %v2927 = vunpack.c.l.b16 %v679
  %v2928 = vunpack.c.l.b16 %v680
  %v2929 = vunpack.c.l.b16 %v681
  %v2930 = vunpack.c.l.b16 %v682
  %v2931 = vunpack.c.l.b16 %v683
  %v2932 = vunpack.c.l.b16 %v684
  %v2933 = vunpack.c.l.b16 %v685
  %v2934 = vunpack.c.l.b16 %v686
  %v2935 = vunpack.c.l.b16 %v687
  %v2936 = vunpack.c.l.b16 %v688
  %v2937 = vunpack.c.l.b16 %v689
  %v2938 = vunpack.c.l.b16 %v690
  %v2939 = vunpack.c.l.b16 %v691
  %v2940 = vunpack.c.l.b16 %v692
  %v2941 = vunpack.c.l.b16 %v693
  %v2942 = vunpack.c.l.b16 %v694
  %v2943 = vunpack.c.l.b16 %v695
  %v2944 = vunpack.c.l.b16 %v696
  %v2945 = vunpack.c.l.b16 %v697
  %v2946 = vunpack.c.l.b16 %v698
  %v2947 = vunpack.c.l.b16 %v699
  %v2948 = vunpack.c.l.b16 %v700
  %v2949 = vunpack.c.l.b16 %v701
  %v2950 = vunpack.c.l.b16 %v702
  %v2951 = vunpack.c.l.b16 %v703
  %v2952 = vunpack.c.l.b16 %v704
  %v2953 = vunpack.c.l.b16 %v705
  %v2954 = vunpack.c.l.b16 %v706
  %v2955 = vunpack.c.l.b16 %v707
  %v2956 = vunpack.c.l.b16 %v708
  %v2957 = vunpack.c.l.b16 %v709
  %v2958 = vunpack.c.l.b16 %v710
  %v2959 = vunpack.c.l.b16 %v711
  %v2960 = vunpack.c.l.b16 %v712
  %v2961 = vunpack.c.l.b16 %v713
  %v2962 = vunpack.c.l.b16 %v714
  %v2963 = vunpack.c.l.b16 %v715
  %v2964 = vunpack.c.l.b16 %v716
  %v2965 = vunpack.c.l.b16 %v717
  %v2966 = vunpack.c.l.b16 %v718
  %v2967 = vunpack.c.l.b16 %v719
  %v2968 = vunpack.c.l.b16 %v720
  %v2969 = vunpack.c.l.b16 %v721
  %v2970 = vunpack.c.l.b16 %v722
  %v2971 = vunpack.c.l.b16 %v723
  %v2972 = vunpack.c.l.b16 %v724
  %v2973 = vunpack.c.l.b16 %v725
  %v2974 = vunpack.c.l.b16 %v726
  %v2975 = vunpack.c.l.b16 %v727
  %v2976 = vunpack.c.l.b16 %v728
  %v2977 = vunpack.c.l.b16 %v729
  %v2978 = vunpack.c.l.b16 %v730
  %v2979 = vunpack.c.l.b16 %v731
  %v2980 = vunpack.c.l.b16 %v732
  %v2981 = vunpack.c.l.b16 %v733
  %v2982 = vunpack.c.l.b16 %v734
  %v2983 = vunpack.c.l.b16 %v735
  %v2984 = vunpack.c.l.b16 %v736
  %v2985 = vunpack.c.l.b16 %v737
  %v2986 = vunpack.c.l.b16 %v738
  %v2987 = vunpack.c.l.b16 %v739
  %v2988 = vunpack.c.l.b16 %v740
  %v2989 = vunpack.c.l.b16 %v741
  %v2990 = vunpack.c.l.b16 %v742
  %v2991 = vunpack.c.l.b16 %v743
  %v2992 = vunpack.c.l.b16 %v744
  %v2993 = vunpack.c.l.b16 %v745
  %v2994 = vunpack.c.l.b16 %v746
  %v2995 = vunpack.c.l.b16 %v747
  %v2996 = vunpack.c.l.b16 %v748
  %v2997 = vunpack.c.l.b16 %v749
  %v2998 = vunpack.c.l.b16 %v750
  %v2999 = vunpack.c.l.b16 %v751
  %v3000 = vunpack.c.l.b16 %v752
  %v3001 = vunpack.c.l.b16 %v753
  %v3002 = vunpack.c.l.b16 %v754
  %v3003 = vunpack.c.l.b16 %v755
  %v3004 = vunpack.c.l.b16 %v756
  %v3005 = vunpack.c.l.b16 %v757
  %v3006 = vunpack.c.l.b16 %v758
  %v3007 = vunpack.c.l.b16 %v759
  %v3008 = vunpack.c.l.b16 %v760
  %v3009 = vunpack.c.l.b16 %v761
  %v3010 = vunpack.c.l.b16 %v762
  %v3011 = vunpack.c.l.b16 %v763
  %v3012 = vunpack.c.l.b16 %v764
  %v3013 = vunpack.c.l.b16 %v765
  %v3014 = vunpack.c.l.b16 %v766
  %v3015 = vunpack.c.l.b16 %v767
  %v3016 = vunpack.c.l.b16 %v768
  %v3017 = vunpack.c.l.b16 %v769
  %v3018 = vunpack.c.l.b16 %v770
  %v3019 = vunpack.c.l.b16 %v771
  %v3020 = vunpack.c.l.b16 %v772
  %v3021 = vunpack.c.l.b16 %v773
  %v3022 = vunpack.c.l.b16 %v774
  %v3023 = vunpack.c.l.b16 %v775
  %v3024 = vunpack.c.l.b16 %v776
  %v3025 = vunpack.c.l.b16 %v777
  %v3026 = vunpack.c.l.b16 %v778
  %v3027 = vunpack.c.l.b16 %v779
  %v3028 = vunpack.c.l.b16 %v780
  %v3029 = vunpack.c.l.b16 %v781
  %v3030 = vunpack.c.l.b16 %v782
  %v3031 = vunpack.c.l.b16 %v783
  %v3032 = vunpack.c.l.b16 %v784
  %v3033 = vunpack.c.l.b16 %v785
  %v3034 = vunpack.c.l.b16 %v786
  %v3035 = vunpack.c.l.b16 %v787
  %v3036 = vunpack.c.l.b16 %v788
  %v3037 = vunpack.c.l.b16 %v789
  %v3038 = vunpack.c.l.b16 %v790
  %v3039 = vunpack.c.l.b16 %v791
  %v3040 = vunpack.c.l.b16 %v792
  %v3041 = vunpack.c.l.b16 %v793
  %v3042 = vunpack.c.l.b16 %v794
  %v3043 = vunpack.c.l.b16 %v795
  %v3044 = vunpack.c.l.b16 %v796
  %v3045 = vunpack.c.l.b16 %v797
  %v3046 = vunpack.c.l.b16 %v798
  %v3047 = vunpack.c.l.b16 %v799
  %v3048 = vunpack.c.l.b16 %v800
  %v3049 = vunpack.c.l.b16 %v801
  %v3050 = vunpack.c.l.b16 %v802
  %v3051 = vunpack.c.l.b16 %v803
  %v3052 = vunpack.c.l.b16 %v804
  %v3053 = vunpack.c.l.b16 %v805
  %v3054 = vunpack.c.l.b16 %v806
  %v3055 = vunpack.c.l.b16 %v807
  %v3056 = vunpack.c.l.b16 %v808
  %v3057 = vunpack.c.l.b16 %v809
  %v3058 = vunpack.c.l.b16 %v810
  %v3059 = vunpack.c.l.b16 %v811
  %v3060 = vunpack.c.l.b16 %v812
  %v3061 = vunpack.c.l.b16 %v813
  %v3062 = vunpack.c.l.b16 %v814
  %v3063 = vunpack.c.l.b16 %v815
  %v3064 = vunpack.c.l.b16 %v816
  %v3065 = vunpack.c.l.b16 %v817
  %v3066 = vunpack.c.l.b16 %v818
  %v3067 = vunpack.c.l.b16 %v819
  %v3068 = vunpack.c.l.b16 %v820
  %v3069 = vunpack.c.l.b16 %v821
  %v3070 = vunpack.c.l.b16 %v822
  %v3071 = vunpack.c.l.b16 %v823
  %v3072 = vunpack.c.l.b16 %v824
  %v3073 = vunpack.c.l.b16 %v825
  %v3074 = vunpack.c.l.b16 %v826
  %v3075 = vunpack.c.l.b16 %v827
  %v3076 = vunpack.c.l.b16 %v828
  %v3077 = vunpack.c.l.b16 %v829
  %v3078 = vunpack.c.l.b16 %v830
  %v3079 = vunpack.c.l.b16 %v831
  %v3080 = vunpack.c.l.b16 %v832
  %v3081 = vunpack.c.l.b16 %v833
  %v3082 = vunpack.c.l.b16 %v834
  %v3083 = vunpack.c.l.b16 %v835
  %v3084 = vunpack.c.l.b16 %v836
  %v3085 = vunpack.c.l.b16 %v837
  %v3086 = vunpack.c.l.b16 %v838
  %v3087 = vunpack.c.l.b16 %v839
  %v3088 = vunpack.c.l.b16 %v840
  %v3089 = vunpack.c.l.b16 %v841
  %v3090 = vunpack.c.l.b16 %v842
  %v3091 = vunpack.c.l.b16 %v843
  %v3092 = vunpack.c.l.b16 %v844
  %v3093 = vunpack.c.l.b16 %v845
  %v3094 = vunpack.c.l.b16 %v846
  %v3095 = vunpack.c.l.b16 %v847
  %v3096 = vunpack.c.l.b16 %v848
  %v3097 = vunpack.c.l.b16 %v849
  %v3098 = vunpack.c.l.b16 %v850
  %v3099 = vunpack.c.l.b16 %v851
  %v3100 = vunpack.c.l.b16 %v852
  %v3101 = vunpack.c.l.b16 %v853
  %v3102 = vunpack.c.l.b16 %v854
  %v3103 = vunpack.c.l.b16 %v855
  %v3104 = vunpack.c.l.b16 %v856
  %v3105 = vunpack.c.l.b16 %v857
  %v3106 = vunpack.c.l.b16 %v858
  %v3107 = vunpack.c.l.b16 %v859
  %v3108 = vunpack.c.l.b16 %v860
  %v3109 = vunpack.c.l.b16 %v861
  %v3110 = vunpack.c.l.b16 %v862
  %v3111 = vunpack.c.l.b16 %v863
  %v3112 = vunpack.c.l.b16 %v864
  %v3113 = vunpack.c.l.b16 %v865
  %v3114 = vunpack.c.l.b16 %v866
  %v3115 = vunpack.c.l.b16 %v867
  %v3116 = vunpack.c.l.b16 %v868
  %v3117 = vunpack.c.l.b16 %v869
  %v3118 = vunpack.c.l.b16 %v870
  %v3119 = vunpack.c.l.b16 %v871
  %v3120 = vunpack.c.l.b16 %v872
  %v3121 = vunpack.c.l.b16 %v873
  %v3122 = vunpack.c.l.b16 %v874
  %v3123 = vunpack.c.l.b16 %v875
  %v3124 = vunpack.c.l.b16 %v876
  %v3125 = vunpack.c.l.b16 %v877
  %v3126 = vunpack.c.l.b16 %v878
  %v3127 = vunpack.c.l.b16 %v879
  %v3128 = vunpack.c.l.b16 %v880
  %v3129 = vunpack.c.l.b16 %v881
  %v3130 = vunpack.c.l.b16 %v882
  %v3131 = vunpack.c.l.b16 %v883
  %v3132 = vunpack.c.l.b16 %v884
  %v3133 = vunpack.c.l.b16 %v885
  %v3134 = vunpack.c.l.b16 %v886
  %v3135 = vunpack.c.l.b16 %v887
  %v3136 = vunpack.c.l.b16 %v888
  %v3137 = vunpack.c.l.b16 %v889
  %v3138 = vunpack.c.l.b16 %v890
  %v3139 = vunpack.c.l.b16 %v891
  %v3140 = vunpack.c.l.b16 %v892
  %v3141 = vunpack.c.l.b16 %v893
  %v3142 = vunpack.c.l.b16 %v894
  %v3143 = vunpack.c.l.b16 %v895
  %v3144 = vunpack.c.l.b16 %v896
  %v3145 = vunpack.c.l.b16 %v897
  %v3146 = vunpack.c.l.b16 %v898
  %v3147 = vunpack.c.l.b16 %v899
  %v3148 = vunpack.c.l.b16 %v900
  %v3149 = vunpack.c.l.b16 %v901
  %v3150 = vunpack.c.l.b16 %v902
  %v3151 = vunpack.c.l.b16 %v903
  %v3152 = vunpack.c.l.b16 %v904
  %v3153 = vunpack.c.l.b16 %v905
  %v3154 = vunpack.c.l.b16 %v906
  %v3155 = vunpack.c.l.b16 %v907
  %v3156 = vunpack.c.l.b16 %v908
  %v3157 = vunpack.c.l.b16 %v909
  %v3158 = vunpack.c.l.b16 %v910
  %v3159 = vunpack.c.l.b16 %v911
  %v3160 = vunpack.c.l.b16 %v912
  %v3161 = vunpack.c.l.b16 %v913
  %v3162 = vunpack.c.l.b16 %v914
  %v3163 = vunpack.c.l.b16 %v915
  %v3164 = vunpack.c.l.b16 %v916
  %v3165 = vunpack.c.l.b16 %v917
  %v3166 = vunpack.c.l.b16 %v918
  %v3167 = vunpack.c.l.b16 %v919
  %v3168 = vunpack.c.l.b16 %v920
  %v3169 = vunpack.c.l.b16 %v921
  %v3170 = vunpack.c.l.b16 %v922
  %v3171 = vunpack.c.l.b16 %v923
  %v3172 = vunpack.c.l.b16 %v924
  %v3173 = vunpack.c.l.b16 %v925
  %v3174 = vunpack.c.l.b16 %v926
  %v3175 = vunpack.c.l.b16 %v927
  %v3176 = vunpack.c.l.b16 %v928
  %v3177 = vunpack.c.l.b16 %v929
  %v3178 = vunpack.c.l.b16 %v930
  %v3179 = vunpack.c.l.b16 %v931
  %v3180 = vunpack.c.l.b16 %v932
  %v3181 = vunpack.c.l.b16 %v933
  %v3182 = vunpack.c.l.b16 %v934
  %v3183 = vunpack.c.l.b16 %v935
  %v3184 = vunpack.c.l.b16 %v936
  %v3185 = vunpack.c.l.b16 %v937
  %v3186 = vunpack.c.l.b16 %v938
  %v3187 = vunpack.c.l.b16 %v939
  %v3188 = vunpack.c.l.b16 %v940
  %v3189 = vunpack.c.l.b16 %v941
  %v3190 = vunpack.c.l.b16 %v942
  %v3191 = vunpack.c.l.b16 %v943
  %v3192 = vunpack.c.l.b16 %v944
  %v3193 = vunpack.c.l.b16 %v945
  %v3194 = vunpack.c.l.b16 %v946
  %v3195 = vunpack.c.l.b16 %v947
  %v3196 = vunpack.c.l.b16 %v948
  %v3197 = vunpack.c.l.b16 %v949
  %v3198 = vunpack.c.l.b16 %v950
  %v3199 = vunpack.c.l.b16 %v951
  %v3200 = vunpack.c.l.b16 %v952
  %v3201 = vunpack.c.l.b16 %v953
  %v3202 = vunpack.c.l.b16 %v954
  %v3203 = vunpack.c.l.b16 %v955
  %v3204 = vunpack.c.l.b16 %v956
  %v3205 = vunpack.c.l.b16 %v957
  %v3206 = vunpack.c.l.b16 %v958
  %v3207 = vunpack.c.l.b16 %v959
  %v3208 = vunpack.c.l.b16 %v960
  %v3209 = vunpack.c.l.b16 %v961
  %v3210 = vunpack.c.l.b16 %v962
  %v3211 = vunpack.c.l.b16 %v963
  %v3212 = vunpack.c.l.b16 %v964
  %v3213 = vunpack.c.l.b16 %v965
  %v3214 = vunpack.c.l.b16 %v966
  %v3215 = vunpack.c.l.b16 %v967
  %v3216 = vunpack.c.l.b16 %v968
  %v3217 = vunpack.c.l.b16 %v969
  %v3218 = vunpack.c.l.b16 %v970
  %v3219 = vunpack.c.l.b16 %v971
  %v3220 = vunpack.c.l.b16 %v972
  %v3221 = vunpack.c.l.b16 %v973
  %v3222 = vunpack.c.l.b16 %v974
  %v3223 = vunpack.c.l.b16 %v975
  %v3224 = vunpack.c.l.b16 %v976
  %v3225 = vunpack.c.l.b16 %v977
  %v3226 = vunpack.c.l.b16 %v978
  %v3227 = vunpack.c.l.b16 %v979
  %v3228 = vunpack.c.l.b16 %v980
  %v3229 = vunpack.c.l.b16 %v981
  %v3230 = vunpack.c.l.b16 %v982
  %v3231 = vunpack.c.l.b16 %v983
  %v3232 = vunpack.c.l.b16 %v984
  %v3233 = vunpack.c.l.b16 %v985
  %v3234 = vunpack.c.l.b16 %v986
  %v3235 = vunpack.c.l.b16 %v987
  %v3236 = vunpack.c.l.b16 %v988
  %v3237 = vunpack.c.l.b16 %v989
  %v3238 = vunpack.c.l.b16 %v990
  %v3239 = vunpack.c.l.b16 %v991
  %v3240 = vunpack.c.l.b16 %v992
  %v3241 = vunpack.c.l.b16 %v993
  %v3242 = vunpack.c.l.b16 %v994
  %v3243 = vunpack.c.l.b16 %v995
  %v3244 = vunpack.c.l.b16 %v996
  %v3245 = vunpack.c.l.b16 %v997
  %v3246 = vunpack.c.l.b16 %v998
  %v3247 = vunpack.c.l.b16 %v999
  %v3248 = vunpack.c.l.b16 %v1000
  %v3249 = vunpack.c.l.b16 %v1001
  %v3250 = vunpack.c.l.b16 %v1002
  %v3251 = vunpack.c.l.b16 %v1003
  %v3252 = vunpack.c.l.b16 %v1004
  %v3253 = vunpack.c.l.b16 %v1005
  %v3254 = vunpack.c.l.b16 %v1006
  %v3255 = vunpack.c.l.b16 %v1007
  %v3256 = vunpack.c.l.b16 %v1008
  %v3257 = vunpack.c.l.b16 %v1009
  %v3258 = vunpack.c.l.b16 %v1010
  %v3259 = vunpack.c.l.b16 %v1011
  %v3260 = vunpack.c.l.b16 %v1012
  %v3261 = vunpack.c.l.b16 %v1013
  %v3262 = vunpack.c.l.b16 %v1014
  %v3263 = vunpack.c.l.b16 %v1015
  %v3264 = vunpack.c.l.b16 %v1016
  %v3265 = vunpack.c.l.b16 %v1017
  %v3266 = vunpack.c.l.b16 %v1018
  %v3267 = vunpack.c.l.b16 %v1019
  %v3268 = vunpack.c.l.b16 %v1020
  %v3269 = vunpack.c.l.b16 %v1021
  %v3270 = vunpack.c.l.b16 %v1022
  %v3271 = vunpack.c.l.b16 %v1023
  %v3272 = vunpack.c.l.b16 %v1024
  %v3273 = vunpack.c.l.b16 %v1025
  %v3274 = vunpack.c.l.b16 %v1026
  %v3275 = vunpack.c.l.b16 %v1027
  %v3276 = vunpack.c.l.b16 %v1028
  %v3277 = vunpack.c.l.b16 %v1029
  %v3278 = vunpack.c.l.b16 %v1030
  %v3279 = vunpack.c.l.b16 %v1031
  %v3280 = vunpack.c.l.b16 %v1032
  %v3281 = vunpack.c.l.b16 %v1033
  %v3282 = vunpack.c.l.b16 %v1034
  %v3283 = vunpack.c.l.b16 %v1035
  %v3284 = vunpack.c.l.b16 %v1036
  %v3285 = vunpack.c.l.b16 %v1037
  %v3286 = vunpack.c.l.b16 %v1038
  %v3287 = vunpack.c.l.b16 %v1039
  %v3288 = vunpack.c.l.b16 %v1040
  %v3289 = vunpack.c.l.b16 %v1041
  %v3290 = vunpack.c.l.b16 %v1042
  %v3291 = vunpack.c.l.b16 %v1043
  %v3292 = vunpack.c.l.b16 %v1044
  %v3293 = vunpack.c.l.b16 %v1045
  %v3294 = vunpack.c.l.b16 %v1046
  %v3295 = vunpack.c.l.b16 %v1047
  %v3296 = vunpack.c.l.b16 %v1048
  %v3297 = vunpack.c.l.b16 %v1049
  %v3298 = vunpack.c.l.b16 %v1050
  %v3299 = vunpack.c.l.b16 %v1051
  %v3300 = vunpack.c.l.b16 %v1052
  %v3301 = vunpack.c.l.b16 %v1053
  %v3302 = vunpack.c.l.b16 %v1054
  %v3303 = vunpack.c.l.b16 %v1055
  %v3304 = vunpack.c.l.b16 %v1056
  %v3305 = vpack.c.b16 %v2338, %v2337
  %v3306 = vpack.c.b16 %v2340, %v2339
  %v3307 = vpack.c.b16 %v2342, %v2341
  %v3308 = vpack.c.b16 %v2344, %v2343
  %v3309 = vpack.c.b16 %v2346, %v2345
  %v3310 = vpack.c.b16 %v2348, %v2347
  %v3311 = vpack.c.b16 %v2350, %v2349
  %v3312 = vpack.c.b16 %v2352, %v2351
  %v3313 = vpack.c.b16 %v2354, %v2353
  %v3314 = vpack.c.b16 %v2356, %v2355
  %v3315 = vpack.c.b16 %v2358, %v2357
  %v3316 = vpack.c.b16 %v2360, %v2359
  %v3317 = vpack.c.b16 %v2362, %v2361
  %v3318 = vpack.c.b16 %v2364, %v2363
  %v3319 = vpack.c.b16 %v2366, %v2365
  %v3320 = vpack.c.b16 %v2368, %v2367
  %v3321 = vpack.c.b16 %v2370, %v2369
  %v3322 = vpack.c.b16 %v2372, %v2371
  %v3323 = vpack.c.b16 %v2374, %v2373
  %v3324 = vpack.c.b16 %v2376, %v2375
  %v3325 = vpack.c.b16 %v2378, %v2377
  %v3326 = vpack.c.b16 %v2380, %v2379
  %v3327 = vpack.c.b16 %v2382, %v2381
  %v3328 = vpack.c.b16 %v2384, %v2383
  %v3329 = vpack.c.b16 %v2386, %v2385
  %v3330 = vpack.c.b16 %v2388, %v2387
  %v3331 = vpack.c.b16 %v2390, %v2389
  %v3332 = vpack.c.b16 %v2392, %v2391
  %v3333 = vpack.c.b16 %v2394, %v2393
  %v3334 = vpack.c.b16 %v2396, %v2395
  %v3335 = vpack.c.b16 %v2398, %v2397
  %v3336 = vpack.c.b16 %v2400, %v2399
  %v3337 = vpack.c.b16 %v2402, %v2401
  %v3338 = vpack.c.b16 %v2404, %v2403
  %v3339 = vpack.c.b16 %v2406, %v2405
  %v3340 = vpack.c.b16 %v2408, %v2407
  %v3341 = vpack.c.b16 %v2410, %v2409
  %v3342 = vpack.c.b16 %v2412, %v2411
  %v3343 = vpack.c.b16 %v2414, %v2413
  %v3344 = vpack.c.b16 %v2416, %v2415
  %v3345 = vpack.c.b16 %v2418, %v2417
  %v3346 = vpack.c.b16 %v2420, %v2419
  %v3347 = vpack.c.b16 %v2422, %v2421
  %v3348 = vpack.c.b16 %v2424, %v2423
  %v3349 = vpack.c.b16 %v2426, %v2425
  %v3350 = vpack.c.b16 %v2428, %v2427
  %v3351 = vpack.c.b16 %v2430, %v2429
  %v3352 = vpack.c.b16 %v2432, %v2431
  %v3353 = vpack.c.b16 %v2434, %v2433
  %v3354 = vpack.c.b16 %v2436, %v2435
  %v3355 = vpack.c.b16 %v2438, %v2437
  %v3356 = vpack.c.b16 %v2440, %v2439
  %v3357 = vpack.c.b16 %v2442, %v2441
  %v3358 = vpack.c.b16 %v2444, %v2443
  %v3359 = vpack.c.b16 %v2446, %v2445
  %v3360 = vpack.c.b16 %v2448, %v2447
  %v3361 = vpack.c.b16 %v2450, %v2449
  %v3362 = vpack.c.b16 %v2452, %v2451
  %v3363 = vpack.c.b16 %v2454, %v2453
  %v3364 = vpack.c.b16 %v2456, %v2455
  %v3365 = vpack.c.b16 %v2458, %v2457
  %v3366 = vpack.c.b16 %v2460, %v2459
  %v3367 = vpack.c.b16 %v2462, %v2461
  %v3368 = vpack.c.b16 %v2464, %v2463
  %v3369 = vpack.c.b16 %v2466, %v2465
  %v3370 = vpack.c.b16 %v2468, %v2467
  %v3371 = vpack.c.b16 %v2470, %v2469
  %v3372 = vpack.c.b16 %v2472, %v2471
  %v3373 = vpack.c.b16 %v2474, %v2473
  %v3374 = vpack.c.b16 %v2476, %v2475
  %v3375 = vpack.c.b16 %v2478, %v2477
  %v3376 = vpack.c.b16 %v2480, %v2479
  %v3377 = vpack.c.b16 %v2482, %v2481
  %v3378 = vpack.c.b16 %v2484, %v2483
  %v3379 = vpack.c.b16 %v2486, %v2485
  %v3380 = vpack.c.b16 %v2488, %v2487
  %v3381 = vpack.c.b16 %v2490, %v2489
  %v3382 = vpack.c.b16 %v2492, %v2491
  %v3383 = vpack.c.b16 %v2494, %v2493
  %v3384 = vpack.c.b16 %v2496, %v2495
  %v3385 = vpack.c.b16 %v2498, %v2497
  %v3386 = vpack.c.b16 %v2500, %v2499
  %v3387 = vpack.c.b16 %v2502, %v2501
  %v3388 = vpack.c.b16 %v2504, %v2503
  %v3389 = vpack.c.b16 %v2506, %v2505
  %v3390 = vpack.c.b16 %v2508, %v2507
  %v3391 = vpack.c.b16 %v2510, %v2509
  %v3392 = vpack.c.b16 %v2512, %v2511
  %v3393 = vpack.c.b16 %v2514, %v2513
  %v3394 = vpack.c.b16 %v2516, %v2515
  %v3395 = vpack.c.b16 %v2518, %v2517
  %v3396 = vpack.c.b16 %v2520, %v2519
  %v3397 = vpack.c.b16 %v2522, %v2521
  %v3398 = vpack.c.b16 %v2524, %v2523
  %v3399 = vpack.c.b16 %v2526, %v2525
  %v3400 = vpack.c.b16 %v2528, %v2527
  %v3401 = vpack.c.b16 %v2530, %v2529
  %v3402 = vpack.c.b16 %v2532, %v2531
  %v3403 = vpack.c.b16 %v2534, %v2533
  %v3404 = vpack.c.b16 %v2536, %v2535
  %v3405 = vpack.c.b16 %v2538, %v2537
  %v3406 = vpack.c.b16 %v2540, %v2539
  %v3407 = vpack.c.b16 %v2542, %v2541
  %v3408 = vpack.c.b16 %v2544, %v2543
  %v3409 = vpack.c.b16 %v2546, %v2545
  %v3410 = vpack.c.b16 %v2548, %v2547
  %v3411 = vpack.c.b16 %v2550, %v2549
  %v3412 = vpack.c.b16 %v2552, %v2551
  %v3413 = vpack.c.b16 %v2554, %v2553
  %v3414 = vpack.c.b16 %v2556, %v2555
  %v3415 = vpack.c.b16 %v2558, %v2557
  %v3416 = vpack.c.b16 %v2560, %v2559
  %v3417 = vpack.c.b16 %v2562, %v2561
  %v3418 = vpack.c.b16 %v2564, %v2563
  %v3419 = vpack.c.b16 %v2566, %v2565
  %v3420 = vpack.c.b16 %v2568, %v2567
  %v3421 = vpack.c.b16 %v2570, %v2569
  %v3422 = vpack.c.b16 %v2572, %v2571
  %v3423 = vpack.c.b16 %v2574, %v2573
  %v3424 = vpack.c.b16 %v2576, %v2575
  %v3425 = vpack.c.b16 %v2578, %v2577
  %v3426 = vpack.c.b16 %v2580, %v2579
  %v3427 = vpack.c.b16 %v2582, %v2581
  %v3428 = vpack.c.b16 %v2584, %v2583
  %v3429 = vpack.c.b16 %v2586, %v2585
  %v3430 = vpack.c.b16 %v2588, %v2587
  %v3431 = vpack.c.b16 %v2590, %v2589
  %v3432 = vpack.c.b16 %v2592, %v2591
  %v3433 = vpack.c.b16 %v2594, %v2593
  %v3434 = vpack.c.b16 %v2596, %v2595
  %v3435 = vpack.c.b16 %v2598, %v2597
  %v3436 = vpack.c.b16 %v2600, %v2599
  %v3437 = vpack.c.b16 %v2602, %v2601
  %v3438 = vpack.c.b16 %v2604, %v2603
  %v3439 = vpack.c.b16 %v2606, %v2605
  %v3440 = vpack.c.b16 %v2608, %v2607
  %v3441 = vpack.c.b16 %v2610, %v2609
  %v3442 = vpack.c.b16 %v2612, %v2611
  %v3443 = vpack.c.b16 %v2614, %v2613
  %v3444 = vpack.c.b16 %v2616, %v2615
  %v3445 = vpack.c.b16 %v2618, %v2617
  %v3446 = vpack.c.b16 %v2620, %v2619
  %v3447 = vpack.c.b16 %v2622, %v2621
  %v3448 = vpack.c.b16 %v2624, %v2623
  %v3449 = vpack.c.b16 %v2626, %v2625
  %v3450 = vpack.c.b16 %v2628, %v2627
  %v3451 = vpack.c.b16 %v2630, %v2629
  %v3452 = vpack.c.b16 %v2632, %v2631
  %v3453 = vpack.c.b16 %v2634, %v2633
  %v3454 = vpack.c.b16 %v2636, %v2635
  %v3455 = vpack.c.b16 %v2638, %v2637
  %v3456 = vpack.c.b16 %v2640, %v2639
  %v3457 = vpack.c.b16 %v2642, %v2641
  %v3458 = vpack.c.b16 %v2644, %v2643
  %v3459 = vpack.c.b16 %v2646, %v2645
  %v3460 = vpack.c.b16 %v2648, %v2647
  %v3461 = vpack.c.b16 %v2650, %v2649
  %v3462 = vpack.c.b16 %v2652, %v2651
  %v3463 = vpack.c.b16 %v2654, %v2653
  %v3464 = vpack.c.b16 %v2656, %v2655
  %v3465 = vpack.c.b16 %v2658, %v2657
  %v3466 = vpack.c.b16 %v2660, %v2659
  %v3467 = vpack.c.b16 %v2662, %v2661
  %v3468 = vpack.c.b16 %v2664, %v2663
  %v3469 = vpack.c.b16 %v2666, %v2665
  %v3470 = vpack.c.b16 %v2668, %v2667
  %v3471 = vpack.c.b16 %v2670, %v2669
  %v3472 = vpack.c.b16 %v2672, %v2671
  %v3473 = vpack.c.b16 %v2674, %v2673
  %v3474 = vpack.c.b16 %v2676, %v2675
  %v3475 = vpack.c.b16 %v2678, %v2677
  %v3476 = vpack.c.b16 %v2680, %v2679
  %v3477 = vpack.c.b16 %v2682, %v2681
  %v3478 = vpack.c.b16 %v2684, %v2683
  %v3479 = vpack.c.b16 %v2686, %v2685
  %v3480 = vpack.c.b16 %v2688, %v2687
  %v3481 = vpack.c.b16 %v2690, %v2689
  %v3482 = vpack.c.b16 %v2692, %v2691
  %v3483 = vpack.c.b16 %v2694, %v2693
  %v3484 = vpack.c.b16 %v2696, %v2695
  %v3485 = vpack.c.b16 %v2698, %v2697
  %v3486 = vpack.c.b16 %v2700, %v2699
  %v3487 = vpack.c.b16 %v2702, %v2701
  %v3488 = vpack.c.b16 %v2704, %v2703
  %v3489 = vpack.c.b16 %v2706, %v2705
  %v3490 = vpack.c.b16 %v2708, %v2707
  %v3491 = vpack.c.b16 %v2710, %v2709
  %v3492 = vpack.c.b16 %v2712, %v2711
  %v3493 = vpack.c.b16 %v2714, %v2713
  %v3494 = vpack.c.b16 %v2716, %v2715
  %v3495 = vpack.c.b16 %v2718, %v2717
  %v3496 = vpack.c.b16 %v2720, %v2719
  %v3497 = vpack.c.b16 %v2722, %v2721
  %v3498 = vpack.c.b16 %v2724, %v2723
  %v3499 = vpack.c.b16 %v2726, %v2725
  %v3500 = vpack.c.b16 %v2728, %v2727
  %v3501 = vpack.c.b16 %v2730, %v2729
  %v3502 = vpack.c.b16 %v2732, %v2731
  %v3503 = vpack.c.b16 %v2734, %v2733
  %v3504 = vpack.c.b16 %v2736, %v2735
  %v3505 = vpack.c.b16 %v2738, %v2737
  %v3506 = vpack.c.b16 %v2740, %v2739
  %v3507 = vpack.c.b16 %v2742, %v2741
  %v3508 = vpack.c.b16 %v2744, %v2743
  %v3509 = vpack.c.b16 %v2746, %v2745
  %v3510 = vpack.c.b16 %v2748, %v2747
  %v3511 = vpack.c.b16 %v2750, %v2749
  %v3512 = vpack.c.b16 %v2752, %v2751
  %v3513 = vpack.c.b16 %v2754, %v2753
  %v3514 = vpack.c.b16 %v2756, %v2755
  %v3515 = vpack.c.b16 %v2758, %v2757
  %v3516 = vpack.c.b16 %v2760, %v2759
  %v3517 = vpack.c.b16 %v2762, %v2761
  %v3518 = vpack.c.b16 %v2764, %v2763
  %v3519 = vpack.c.b16 %v2766, %v2765
  %v3520 = vpack.c.b16 %v2768, %v2767
  %v3521 = vpack.c.b16 %v2770, %v2769
  %v3522 = vpack.c.b16 %v2772, %v2771
  %v3523 = vpack.c.b16 %v2774, %v2773
  %v3524 = vpack.c.b16 %v2776, %v2775
  %v3525 = vpack.c.b16 %v2778, %v2777
  %v3526 = vpack.c.b16 %v2780, %v2779
  %v3527 = vpack.c.b16 %v2782, %v2781
  %v3528 = vpack.c.b16 %v2784, %v2783
  %v3529 = vpack.c.b16 %v2786, %v2785
  %v3530 = vpack.c.b16 %v2788, %v2787
  %v3531 = vpack.c.b16 %v2790, %v2789
  %v3532 = vpack.c.b16 %v2792, %v2791
  %v3533 = vpack.c.b16 %v2794, %v2793
  %v3534 = vpack.c.b16 %v2796, %v2795
  %v3535 = vpack.c.b16 %v2798, %v2797
  %v3536 = vpack.c.b16 %v2800, %v2799
  %v3537 = vpack.c.b16 %v2802, %v2801
  %v3538 = vpack.c.b16 %v2804, %v2803
  %v3539 = vpack.c.b16 %v2806, %v2805
  %v3540 = vpack.c.b16 %v2808, %v2807
  %v3541 = vpack.c.b16 %v2810, %v2809
  %v3542 = vpack.c.b16 %v2812, %v2811
  %v3543 = vpack.c.b16 %v2814, %v2813
  %v3544 = vpack.c.b16 %v2816, %v2815
  %v3545 = vpack.c.b16 %v2818, %v2817
  %v3546 = vpack.c.b16 %v2820, %v2819
  %v3547 = vpack.c.b16 %v2822, %v2821
  %v3548 = vpack.c.b16 %v2824, %v2823
  %v3549 = vpack.c.b16 %v2826, %v2825
  %v3550 = vpack.c.b16 %v2828, %v2827
  %v3551 = vpack.c.b16 %v2830, %v2829
  %v3552 = vpack.c.b16 %v2832, %v2831
  %v3553 = vpack.c.b16 %v2834, %v2833
  %v3554 = vpack.c.b16 %v2836, %v2835
  %v3555 = vpack.c.b16 %v2838, %v2837
  %v3556 = vpack.c.b16 %v2840, %v2839
  %v3557 = vpack.c.b16 %v2842, %v2841
  %v3558 = vpack.c.b16 %v2844, %v2843
  %v3559 = vpack.c.b16 %v2846, %v2845
  %v3560 = vpack.c.b16 %v2848, %v2847
  %v3561 = vpack.c.b16 %v2850, %v2849
  %v3562 = vpack.c.b16 %v2852, %v2851
  %v3563 = vpack.c.b16 %v2854, %v2853
  %v3564 = vpack.c.b16 %v2856, %v2855
  %v3565 = vpack.c.b16 %v2858, %v2857
  %v3566 = vpack.c.b16 %v2860, %v2859
  %v3567 = vpack.c.b16 %v2862, %v2861
  %v3568 = vpack.c.b16 %v2864, %v2863
  %v3569 = vpack.c.b16 %v2866, %v2865
  %v3570 = vpack.c.b16 %v2868, %v2867
  %v3571 = vpack.c.b16 %v2870, %v2869
  %v3572 = vpack.c.b16 %v2872, %v2871
  %v3573 = vpack.c.b16 %v2874, %v2873
  %v3574 = vpack.c.b16 %v2876, %v2875
  %v3575 = vpack.c.b16 %v2878, %v2877
  %v3576 = vpack.c.b16 %v2880, %v2879
  %v3577 = vpack.c.b16 %v2882, %v2881
  %v3578 = vpack.c.b16 %v2884, %v2883
  %v3579 = vpack.c.b16 %v2886, %v2885
  %v3580 = vpack.c.b16 %v2888, %v2887
  %v3581 = vpack.c.b16 %v2890, %v2889
  %v3582 = vpack.c.b16 %v2892, %v2891
  %v3583 = vpack.c.b16 %v2894, %v2893
  %v3584 = vpack.c.b16 %v2896, %v2895
  %v3585 = vpack.c.b16 %v2898, %v2897
  %v3586 = vpack.c.b16 %v2900, %v2899
  %v3587 = vpack.c.b16 %v2902, %v2901
  %v3588 = vpack.c.b16 %v2904, %v2903
  %v3589 = vpack.c.b16 %v2906, %v2905
  %v3590 = vpack.c.b16 %v2908, %v2907
  %v3591 = vpack.c.b16 %v2910, %v2909
  %v3592 = vpack.c.b16 %v2912, %v2911
  %v3593 = vpack.c.b16 %v2914, %v2913
  %v3594 = vpack.c.b16 %v2916, %v2915
  %v3595 = vpack.c.b16 %v2918, %v2917
  %v3596 = vpack.c.b16 %v2920, %v2919
  %v3597 = vpack.c.b16 %v2922, %v2921
  %v3598 = vpack.c.b16 %v2924, %v2923
  %v3599 = vpack.c.b16 %v2926, %v2925
  %v3600 = vpack.c.b16 %v2928, %v2927
  %v3601 = vpack.c.b16 %v2930, %v2929
  %v3602 = vpack.c.b16 %v2932, %v2931
  %v3603 = vpack.c.b16 %v2934, %v2933
  %v3604 = vpack.c.b16 %v2936, %v2935
  %v3605 = vpack.c.b16 %v2938, %v2937
  %v3606 = vpack.c.b16 %v2940, %v2939
  %v3607 = vpack.c.b16 %v2942, %v2941
  %v3608 = vpack.c.b16 %v2944, %v2943
  %v3609 = vpack.c.b16 %v2946, %v2945
  %v3610 = vpack.c.b16 %v2948, %v2947
  %v3611 = vpack.c.b16 %v2950, %v2949
  %v3612 = vpack.c.b16 %v2952, %v2951
  %v3613 = vpack.c.b16 %v2954, %v2953
  %v3614 = vpack.c.b16 %v2956, %v2955
  %v3615 = vpack.c.b16 %v2958, %v2957
  %v3616 = vpack.c.b16 %v2960, %v2959
  %v3617 = vpack.c.b16 %v2962, %v2961
  %v3618 = vpack.c.b16 %v2964, %v2963
  %v3619 = vpack.c.b16 %v2966, %v2965
  %v3620 = vpack.c.b16 %v2968, %v2967
  %v3621 = vpack.c.b16 %v2970, %v2969
  %v3622 = vpack.c.b16 %v2972, %v2971
  %v3623 = vpack.c.b16 %v2974, %v2973
  %v3624 = vpack.c.b16 %v2976, %v2975
  %v3625 = vpack.c.b16 %v2978, %v2977
  %v3626 = vpack.c.b16 %v2980, %v2979
  %v3627 = vpack.c.b16 %v2982, %v2981
  %v3628 = vpack.c.b16 %v2984, %v2983
  %v3629 = vpack.c.b16 %v2986, %v2985
  %v3630 = vpack.c.b16 %v2988, %v2987
  %v3631 = vpack.c.b16 %v2990, %v2989
  %v3632 = vpack.c.b16 %v2992, %v2991
  %v3633 = vpack.c.b16 %v2994, %v2993
  %v3634 = vpack.c.b16 %v2996, %v2995
  %v3635 = vpack.c.b16 %v2998, %v2997
  %v3636 = vpack.c.b16 %v3000, %v2999
  %v3637 = vpack.c.b16 %v3002, %v3001
  %v3638 = vpack.c.b16 %v3004, %v3003
  %v3639 = vpack.c.b16 %v3006, %v3005
  %v3640 = vpack.c.b16 %v3008, %v3007
  %v3641 = vpack.c.b16 %v3010, %v3009
  %v3642 = vpack.c.b16 %v3012, %v3011
  %v3643 = vpack.c.b16 %v3014, %v3013
  %v3644 = vpack.c.b16 %v3016, %v3015
  %v3645 = vpack.c.b16 %v3018, %v3017
  %v3646 = vpack.c.b16 %v3020, %v3019
  %v3647 = vpack.c.b16 %v3022, %v3021
  %v3648 = vpack.c.b16 %v3024, %v3023
  %v3649 = vpack.c.b16 %v3026, %v3025
  %v3650 = vpack.c.b16 %v3028, %v3027
  %v3651 = vpack.c.b16 %v3030, %v3029
  %v3652 = vpack.c.b16 %v3032, %v3031
  %v3653 = vpack.c.b16 %v3034, %v3033
  %v3654 = vpack.c.b16 %v3036, %v3035
  %v3655 = vpack.c.b16 %v3038, %v3037
  %v3656 = vpack.c.b16 %v3040, %v3039
  %v3657 = vpack.c.b16 %v3042, %v3041
  %v3658 = vpack.c.b16 %v3044, %v3043
  %v3659 = vpack.c.b16 %v3046, %v3045
  %v3660 = vpack.c.b16 %v3048, %v3047
  %v3661 = vpack.c.b16 %v3050, %v3049
  %v3662 = vpack.c.b16 %v3052, %v3051
  %v3663 = vpack.c.b16 %v3054, %v3053
  %v3664 = vpack.c.b16 %v3056, %v3055
  %v3665 = vpack.c.b16 %v3058, %v3057
  %v3666 = vpack.c.b16 %v3060, %v3059
  %v3667 = vpack.c.b16 %v3062, %v3061
  %v3668 = vpack.c.b16 %v3064, %v3063
  %v3669 = vpack.c.b16 %v3066, %v3065
  %v3670 = vpack.c.b16 %v3068, %v3067
  %v3671 = vpack.c.b16 %v3070, %v3069
  %v3672 = vpack.c.b16 %v3072, %v3071
  %v3673 = vpack.c.b16 %v3074, %v3073
  %v3674 = vpack.c.b16 %v3076, %v3075
  %v3675 = vpack.c.b16 %v3078, %v3077
  %v3676 = vpack.c.b16 %v3080, %v3079
  %v3677 = vpack.c.b16 %v3082, %v3081
  %v3678 = vpack.c.b16 %v3084, %v3083
  %v3679 = vpack.c.b16 %v3086, %v3085
  %v3680 = vpack.c.b16 %v3088, %v3087
  %v3681 = vpack.c.b16 %v3090, %v3089
  %v3682 = vpack.c.b16 %v3092, %v3091
  %v3683 = vpack.c.b16 %v3094, %v3093
  %v3684 = vpack.c.b16 %v3096, %v3095
  %v3685 = vpack.c.b16 %v3098, %v3097
  %v3686 = vpack.c.b16 %v3100, %v3099
  %v3687 = vpack.c.b16 %v3102, %v3101
  %v3688 = vpack.c.b16 %v3104, %v3103
  %v3689 = vpack.c.b16 %v3106, %v3105
  %v3690 = vpack.c.b16 %v3108, %v3107
  %v3691 = vpack.c.b16 %v3110, %v3109
  %v3692 = vpack.c.b16 %v3112, %v3111
  %v3693 = vpack.c.b16 %v3114, %v3113
  %v3694 = vpack.c.b16 %v3116, %v3115
  %v3695 = vpack.c.b16 %v3118, %v3117
  %v3696 = vpack.c.b16 %v3120, %v3119
  %v3697 = vpack.c.b16 %v3122, %v3121
  %v3698 = vpack.c.b16 %v3124, %v3123
  %v3699 = vpack.c.b16 %v3126, %v3125
  %v3700 = vpack.c.b16 %v3128, %v3127
  %v3701 = vpack.c.b16 %v3130, %v3129
  %v3702 = vpack.c.b16 %v3132, %v3131
  %v3703 = vpack.c.b16 %v3134, %v3133
  %v3704 = vpack.c.b16 %v3136, %v3135
  %v3705 = vpack.c.b16 %v3138, %v3137
  %v3706 = vpack.c.b16 %v3140, %v3139
  %v3707 = vpack.c.b16 %v3142, %v3141
  %v3708 = vpack.c.b16 %v3144, %v3143
  %v3709 = vpack.c.b16 %v3146, %v3145
  %v3710 = vpack.c.b16 %v3148, %v3147
  %v3711 = vpack.c.b16 %v3150, %v3149
  %v3712 = vpack.c.b16 %v3152, %v3151
  %v3713 = vpack.c.b16 %v3154, %v3153
  %v3714 = vpack.c.b16 %v3156, %v3155
  %v3715 = vpack.c.b16 %v3158, %v3157
  %v3716 = vpack.c.b16 %v3160, %v3159
  %v3717 = vpack.c.b16 %v3162, %v3161
  %v3718 = vpack.c.b16 %v3164, %v3163
  %v3719 = vpack.c.b16 %v3166, %v3165
  %v3720 = vpack.c.b16 %v3168, %v3167
  %v3721 = vpack.c.b16 %v3170, %v3169
  %v3722 = vpack.c.b16 %v3172, %v3171
  %v3723 = vpack.c.b16 %v3174, %v3173
  %v3724 = vpack.c.b16 %v3176, %v3175
  %v3725 = vpack.c.b16 %v3178, %v3177
  %v3726 = vpack.c.b16 %v3180, %v3179
  %v3727 = vpack.c.b16 %v3182, %v3181
  %v3728 = vpack.c.b16 %v3184, %v3183
  %v3729 = vpack.c.b16 %v3186, %v3185
  %v3730 = vpack.c.b16 %v3188, %v3187
  %v3731 = vpack.c.b16 %v3190, %v3189
  %v3732 = vpack.c.b16 %v3192, %v3191
  %v3733 = vpack.c.b16 %v3194, %v3193
  %v3734 = vpack.c.b16 %v3196, %v3195
  %v3735 = vpack.c.b16 %v3198, %v3197
  %v3736 = vpack.c.b16 %v3200, %v3199
  %v3737 = vpack.c.b16 %v3202, %v3201
  %v3738 = vpack.c.b16 %v3204, %v3203
  %v3739 = vpack.c.b16 %v3206, %v3205
  %v3740 = vpack.c.b16 %v3208, %v3207
  %v3741 = vpack.c.b16 %v3210, %v3209
  %v3742 = vpack.c.b16 %v3212, %v3211
  %v3743 = vpack.c.b16 %v3214, %v3213
  %v3744 = vpack.c.b16 %v3216, %v3215
  %v3745 = vpack.c.b16 %v3218, %v3217
  %v3746 = vpack.c.b16 %v3220, %v3219
  %v3747 = vpack.c.b16 %v3222, %v3221
  %v3748 = vpack.c.b16 %v3224, %v3223
  %v3749 = vpack.c.b16 %v3226, %v3225
  %v3750 = vpack.c.b16 %v3228, %v3227
  %v3751 = vpack.c.b16 %v3230, %v3229
  %v3752 = vpack.c.b16 %v3232, %v3231
  %v3753 = vpack.c.b16 %v3234, %v3233
  %v3754 = vpack.c.b16 %v3236, %v3235
  %v3755 = vpack.c.b16 %v3238, %v3237
  %v3756 = vpack.c.b16 %v3240, %v3239
  %v3757 = vpack.c.b16 %v3242, %v3241
  %v3758 = vpack.c.b16 %v3244, %v3243
  %v3759 = vpack.c.b16 %v3246, %v3245
  %v3760 = vpack.c.b16 %v3248, %v3247
  %v3761 = vpack.c.b16 %v3250, %v3249
  %v3762 = vpack.c.b16 %v3252, %v3251
  %v3763 = vpack.c.b16 %v3254, %v3253
  %v3764 = vpack.c.b16 %v3256, %v3255
  %v3765 = vpack.c.b16 %v3258, %v3257
  %v3766 = vpack.c.b16 %v3260, %v3259
  %v3767 = vpack.c.b16 %v3262, %v3261
  %v3768 = vpack.c.b16 %v3264, %v3263
  %v3769 = vpack.c.b16 %v3266, %v3265
  %v3770 = vpack.c.b16 %v3268, %v3267
  %v3771 = vpack.c.b16 %v3270, %v3269
  %v3772 = vpack.c.b16 %v3272, %v3271
  %v3773 = vpack.c.b16 %v3274, %v3273
  %v3774 = vpack.c.b16 %v3276, %v3275
  %v3775 = vpack.c.b16 %v3278, %v3277
  %v3776 = vpack.c.b16 %v3280, %v3279
  %v3777 = vpack.c.b16 %v3282, %v3281
  %v3778 = vpack.c.b16 %v3284, %v3283
  %v3779 = vpack.c.b16 %v3286, %v3285
  %v3780 = vpack.c.b16 %v3288, %v3287
  %v3781 = vpack.c.b16 %v3290, %v3289
  %v3782 = vpack.c.b16 %v3292, %v3291
  %v3783 = vpack.c.b16 %v3294, %v3293
  %v3784 = vpack.c.b16 %v3296, %v3295
  %v3785 = vpack.c.b16 %v3298, %v3297
  %v3786 = vpack.c.b16 %v3300, %v3299
  %v3787 = vpack.c.b16 %v3302, %v3301
  %v3788 = vpack.c.b16 %v3304, %v3303
  %vm4273 = vcmask 523264
  %v4275 = vsel %vm4273, %v1308, 0
  %4277 = vmatprep.subr.bf16.mxu0 0
  %4278 = vmatpush1.bf16.msra.mxu0 %v3305
  %4279 = vmatprep.subr.bf16.mxu0 0
  %4280 = vmatpush1.bf16.msra.mxu0 %v3306
  %4281 = vmatprep.subr.bf16.mxu0 0
  %4282 = vmatpush1.bf16.msra.mxu0 %v3307
  %4283 = vmatprep.subr.bf16.mxu0 0
  %4284 = vmatpush1.bf16.msra.mxu0 %v3308
  %4285 = vmatprep.subr.bf16.mxu0 0
  %4286 = vmatpush1.bf16.msra.mxu0 %v3309
  %4287 = vmatprep.subr.bf16.mxu0 0
  %4288 = vmatpush1.bf16.msra.mxu0 %v3310
  %4289 = vmatprep.subr.bf16.mxu0 0
  %4290 = vmatpush1.bf16.msra.mxu0 %v3311
  %4291 = vmatprep.subr.bf16.mxu0 0
  %4292 = vmatpush1.bf16.msra.mxu0 %v3312
  %4293 = vmatprep.subr.bf16.mxu0 0
  %4294 = vmatpush1.bf16.msra.mxu0 %v3313
  %4295 = vmatprep.subr.bf16.mxu0 0
  %4296 = vmatpush1.bf16.msra.mxu0 %v3314
  %4297 = vmatprep.subr.bf16.mxu0 0
  %4298 = vmatpush1.bf16.msra.mxu0 %v3315
  %4299 = vmatprep.subr.bf16.mxu0 0
  %4300 = vmatpush1.bf16.msra.mxu0 %v3316
  %4301 = vmatprep.subr.bf16.mxu0 0
  %4302 = vmatpush1.bf16.msra.mxu0 %v3317
  %4303 = vmatprep.subr.bf16.mxu0 0
  %4304 = vmatpush1.bf16.msra.mxu0 %v3318
  %4305 = vmatprep.subr.bf16.mxu0 0
  %4306 = vmatpush1.bf16.msra.mxu0 %v3319
  %4307 = vmatprep.subr.bf16.mxu0 0
  %4308 = vmatpush1.bf16.msra.mxu0 %v3320
  %4309 = vmatprep.mubr.bf16.mxu0 %v1249
  %4310 = vmatmul.mubr.bf16.gmra.mrb[0].mxu0 %v1248
  %v4311 = vpop.f32.mrb[0].mxu0
  %v4312 = vadd.f32 %v1062, %v4311
  %v4313 = vpop.f32.mrb[0].mxu0
  %v4314 = vpop.f32.mrb[0].mxu0
  %v4315 = vadd.f32 %v1062, %v4314
  %v4316 = vpop.f32.mrb[0].mxu0
  %4317 = vdwg.mxu0
  %4318 = vmatprep.subr.bf16.mxu0 0
  %4319 = vmatpush1.bf16.msra.mxu0 %v3321
  %4320 = vmatprep.subr.bf16.mxu0 0
  %4321 = vmatpush1.bf16.msra.mxu0 %v3322
  %4322 = vmatprep.subr.bf16.mxu0 0
  %4323 = vmatpush1.bf16.msra.mxu0 %v3323
  %4324 = vmatprep.subr.bf16.mxu0 0
  %4325 = vmatpush1.bf16.msra.mxu0 %v3324
  %4326 = vmatprep.subr.bf16.mxu0 0
  %4327 = vmatpush1.bf16.msra.mxu0 %v3325
  %4328 = vmatprep.subr.bf16.mxu0 0
  %4329 = vmatpush1.bf16.msra.mxu0 %v3326
  %4330 = vmatprep.subr.bf16.mxu0 0
  %4331 = vmatpush1.bf16.msra.mxu0 %v3327
  %4332 = vmatprep.subr.bf16.mxu0 0
  %4333 = vmatpush1.bf16.msra.mxu0 %v3328
  %4334 = vmatprep.subr.bf16.mxu0 0
  %4335 = vmatpush1.bf16.msra.mxu0 %v3329
  %4336 = vmatprep.subr.bf16.mxu0 0
  %4337 = vmatpush1.bf16.msra.mxu0 %v3330
  %4338 = vmatprep.subr.bf16.mxu0 0
  %4339 = vmatpush1.bf16.msra.mxu0 %v3331
  %4340 = vmatprep.subr.bf16.mxu0 0
  %4341 = vmatpush1.bf16.msra.mxu0 %v3332
  %4342 = vmatprep.subr.bf16.mxu0 0
  %4343 = vmatpush1.bf16.msra.mxu0 %v3333
  %4344 = vmatprep.subr.bf16.mxu0 0
  %4345 = vmatpush1.bf16.msra.mxu0 %v3334
  %4346 = vmatprep.subr.bf16.mxu0 0
  %4347 = vmatpush1.bf16.msra.mxu0 %v3335
  %4348 = vmatprep.subr.bf16.mxu0 0
  %4349 = vmatpush1.bf16.msra.mxu0 %v3336
  %4350 = vmatprep.mubr.bf16.mxu0 %v1251
  %4351 = vmatmul.mubr.bf16.gmra.mrb[0].mxu0 %v1250
  %v4352 = vpop.f32.mrb[0].mxu0
  %v4353 = vadd.f32 %v4312, %v4352
  %v4354 = vpop.f32.mrb[0].mxu0
  %v4355 = vpop.f32.mrb[0].mxu0
  %v4356 = vadd.f32 %v4315, %v4355
  %v4357 = vpop.f32.mrb[0].mxu0
  %4358 = vdwg.mxu0
  %4359 = vmatprep.subr.bf16.mxu0 0
  %4360 = vmatpush1.bf16.msra.mxu0 %v3337
  %4361 = vmatprep.subr.bf16.mxu0 0
  %4362 = vmatpush1.bf16.msra.mxu0 %v3338
  %4363 = vmatprep.subr.bf16.mxu0 0
  %4364 = vmatpush1.bf16.msra.mxu0 %v3339
  %4365 = vmatprep.subr.bf16.mxu0 0
  %4366 = vmatpush1.bf16.msra.mxu0 %v3340
  %4367 = vmatprep.subr.bf16.mxu0 0
  %4368 = vmatpush1.bf16.msra.mxu0 %v3341
  %4369 = vmatprep.subr.bf16.mxu0 0
  %4370 = vmatpush1.bf16.msra.mxu0 %v3342
  %4371 = vmatprep.subr.bf16.mxu0 0
  %4372 = vmatpush1.bf16.msra.mxu0 %v3343
  %4373 = vmatprep.subr.bf16.mxu0 0
  %4374 = vmatpush1.bf16.msra.mxu0 %v3344
  %4375 = vmatprep.subr.bf16.mxu0 0
  %4376 = vmatpush1.bf16.msra.mxu0 %v3345
  %4377 = vmatprep.subr.bf16.mxu0 0
  %4378 = vmatpush1.bf16.msra.mxu0 %v3346
  %4379 = vmatprep.subr.bf16.mxu0 0
  %4380 = vmatpush1.bf16.msra.mxu0 %v3347
  %4381 = vmatprep.subr.bf16.mxu0 0
  %4382 = vmatpush1.bf16.msra.mxu0 %v3348
  %4383 = vmatprep.subr.bf16.mxu0 0
  %4384 = vmatpush1.bf16.msra.mxu0 %v3349
  %4385 = vmatprep.subr.bf16.mxu0 0
  %4386 = vmatpush1.bf16.msra.mxu0 %v3350
  %4387 = vmatprep.subr.bf16.mxu0 0
  %4388 = vmatpush1.bf16.msra.mxu0 %v3351
  %4389 = vmatprep.subr.bf16.mxu0 0
  %4390 = vmatpush1.bf16.msra.mxu0 %v3352
  %4391 = vmatprep.mubr.bf16.mxu0 %v1253
  %4392 = vmatmul.mubr.bf16.gmra.mrb[0].mxu0 %v1252
  %v4393 = vpop.f32.mrb[0].mxu0
  %v4394 = vadd.f32 %v4353, %v4393
  %v4395 = vpop.f32.mrb[0].mxu0
  %v4396 = vpop.f32.mrb[0].mxu0
  %v4397 = vadd.f32 %v4356, %v4396
  %v4398 = vpop.f32.mrb[0].mxu0
  %4399 = vdwg.mxu0
  %4400 = vmatprep.subr.bf16.mxu0 0
  %4401 = vmatpush1.bf16.msra.mxu0 %v3353
  %4402 = vmatprep.subr.bf16.mxu0 0
  %4403 = vmatpush1.bf16.msra.mxu0 %v3354
  %4404 = vmatprep.subr.bf16.mxu0 0
  %4405 = vmatpush1.bf16.msra.mxu0 %v3355
  %4406 = vmatprep.subr.bf16.mxu0 0
  %4407 = vmatpush1.bf16.msra.mxu0 %v3356
  %4408 = vmatprep.subr.bf16.mxu0 0
  %4409 = vmatpush1.bf16.msra.mxu0 %v3357
  %4410 = vmatprep.subr.bf16.mxu0 0
  %4411 = vmatpush1.bf16.msra.mxu0 %v3358
  %4412 = vmatprep.subr.bf16.mxu0 0
  %4413 = vmatpush1.bf16.msra.mxu0 %v3359
  %4414 = vmatprep.subr.bf16.mxu0 0
  %4415 = vmatpush1.bf16.msra.mxu0 %v3360
  %4416 = vmatprep.subr.bf16.mxu0 0
  %4417 = vmatpush1.bf16.msra.mxu0 %v3361
  %4418 = vmatprep.subr.bf16.mxu0 0
  %4419 = vmatpush1.bf16.msra.mxu0 %v3362
  %4420 = vmatprep.subr.bf16.mxu0 0
  %4421 = vmatpush1.bf16.msra.mxu0 %v3363
  %4422 = vmatprep.subr.bf16.mxu0 0
  %4423 = vmatpush1.bf16.msra.mxu0 %v3364
  %4424 = vmatprep.subr.bf16.mxu0 0
  %4425 = vmatpush1.bf16.msra.mxu0 %v3365
  %4426 = vmatprep.subr.bf16.mxu0 0
  %4427 = vmatpush1.bf16.msra.mxu0 %v3366
  %4428 = vmatprep.subr.bf16.mxu0 0
  %4429 = vmatpush1.bf16.msra.mxu0 %v3367
  %4430 = vmatprep.subr.bf16.mxu0 0
  %4431 = vmatpush1.bf16.msra.mxu0 %v3368
  %4432 = vmatprep.mubr.bf16.mxu0 %v1255
  %4433 = vmatmul.mubr.bf16.gmra.mrb[0].mxu0 %v1254
  %v4434 = vpop.f32.mrb[0].mxu0
  %v4435 = vadd.f32 %v4394, %v4434
  %v4436 = vpop.f32.mrb[0].mxu0
  %v4437 = vpop.f32.mrb[0].mxu0
  %v4438 = vadd.f32 %v4397, %v4437
  %v4439 = vpop.f32.mrb[0].mxu0
  %4440 = vdwg.mxu0
  %4441 = vmatprep.subr.bf16.mxu0 0
  %4442 = vmatpush1.bf16.msra.mxu0 %v3369
  %4443 = vmatprep.subr.bf16.mxu0 0
  %4444 = vmatpush1.bf16.msra.mxu0 %v3370
  %4445 = vmatprep.subr.bf16.mxu0 0
  %4446 = vmatpush1.bf16.msra.mxu0 %v3371
  %4447 = vmatprep.subr.bf16.mxu0 0
  %4448 = vmatpush1.bf16.msra.mxu0 %v3372
  %4449 = vmatprep.subr.bf16.mxu0 0
  %4450 = vmatpush1.bf16.msra.mxu0 %v3373
  %4451 = vmatprep.subr.bf16.mxu0 0
  %4452 = vmatpush1.bf16.msra.mxu0 %v3374
  %4453 = vmatprep.subr.bf16.mxu0 0
  %4454 = vmatpush1.bf16.msra.mxu0 %v3375
  %4455 = vmatprep.subr.bf16.mxu0 0
  %4456 = vmatpush1.bf16.msra.mxu0 %v3376
  %4457 = vmatprep.subr.bf16.mxu0 0
  %4458 = vmatpush1.bf16.msra.mxu0 %v3377
  %4459 = vmatprep.subr.bf16.mxu0 0
  %4460 = vmatpush1.bf16.msra.mxu0 %v3378
  %4461 = vmatprep.subr.bf16.mxu0 0
  %4462 = vmatpush1.bf16.msra.mxu0 %v3379
  %4463 = vmatprep.subr.bf16.mxu0 0
  %4464 = vmatpush1.bf16.msra.mxu0 %v3380
  %4465 = vmatprep.subr.bf16.mxu0 0
  %4466 = vmatpush1.bf16.msra.mxu0 %v3381
  %4467 = vmatprep.subr.bf16.mxu0 0
  %4468 = vmatpush1.bf16.msra.mxu0 %v3382
  %4469 = vmatprep.subr.bf16.mxu0 0
  %4470 = vmatpush1.bf16.msra.mxu0 %v3383
  %4471 = vmatprep.subr.bf16.mxu0 0
  %4472 = vmatpush1.bf16.msra.mxu0 %v3384
  %4473 = vmatprep.mubr.bf16.mxu0 %v1257
  %4474 = vmatmul.mubr.bf16.gmra.mrb[0].mxu0 %v1256
  %v4475 = vpop.f32.mrb[0].mxu0
  %v4476 = vadd.f32 %v4435, %v4475
  %v4477 = vpop.f32.mrb[0].mxu0
  %v4478 = vpop.f32.mrb[0].mxu0
  %v4479 = vadd.f32 %v4438, %v4478
  %v4480 = vpop.f32.mrb[0].mxu0
  %4481 = vdwg.mxu0
  %4482 = vmatprep.subr.bf16.mxu0 0
  %4483 = vmatpush1.bf16.msra.mxu0 %v3385
  %4484 = vmatprep.subr.bf16.mxu0 0
  %4485 = vmatpush1.bf16.msra.mxu0 %v3386
  %4486 = vmatprep.subr.bf16.mxu0 0
  %4487 = vmatpush1.bf16.msra.mxu0 %v3387
  %4488 = vmatprep.subr.bf16.mxu0 0
  %4489 = vmatpush1.bf16.msra.mxu0 %v3388
  %4490 = vmatprep.subr.bf16.mxu0 0
  %4491 = vmatpush1.bf16.msra.mxu0 %v3389
  %4492 = vmatprep.subr.bf16.mxu0 0
  %4493 = vmatpush1.bf16.msra.mxu0 %v3390
  %4494 = vmatprep.subr.bf16.mxu0 0
  %4495 = vmatpush1.bf16.msra.mxu0 %v3391
  %4496 = vmatprep.subr.bf16.mxu0 0
  %4497 = vmatpush1.bf16.msra.mxu0 %v3392
  %4498 = vmatprep.subr.bf16.mxu0 0
  %4499 = vmatpush1.bf16.msra.mxu0 %v3393
  %4500 = vmatprep.subr.bf16.mxu0 0
  %4501 = vmatpush1.bf16.msra.mxu0 %v3394
  %4502 = vmatprep.subr.bf16.mxu0 0
  %4503 = vmatpush1.bf16.msra.mxu0 %v3395
  %4504 = vmatprep.subr.bf16.mxu0 0
  %4505 = vmatpush1.bf16.msra.mxu0 %v3396
  %4506 = vmatprep.subr.bf16.mxu0 0
  %4507 = vmatpush1.bf16.msra.mxu0 %v3397
  %4508 = vmatprep.subr.bf16.mxu0 0
  %4509 = vmatpush1.bf16.msra.mxu0 %v3398
  %4510 = vmatprep.subr.bf16.mxu0 0
  %4511 = vmatpush1.bf16.msra.mxu0 %v3399
  %4512 = vmatprep.subr.bf16.mxu0 0
  %4513 = vmatpush1.bf16.msra.mxu0 %v3400
  %4514 = vmatprep.mubr.bf16.mxu0 %v1259
  %4515 = vmatmul.mubr.bf16.gmra.mrb[0].mxu0 %v1258
  %v4516 = vpop.f32.mrb[0].mxu0
  %v4517 = vadd.f32 %v4476, %v4516
  %v4518 = vpop.f32.mrb[0].mxu0
  %v4519 = vpop.f32.mrb[0].mxu0
  %v4520 = vadd.f32 %v4479, %v4519
  %v4521 = vpop.f32.mrb[0].mxu0
  %4522 = vdwg.mxu0
  %4523 = vmatprep.subr.bf16.mxu0 0
  %4524 = vmatpush1.bf16.msra.mxu0 %v3401
  %4525 = vmatprep.subr.bf16.mxu0 0
  %4526 = vmatpush1.bf16.msra.mxu0 %v3402
  %4527 = vmatprep.subr.bf16.mxu0 0
  %4528 = vmatpush1.bf16.msra.mxu0 %v3403
  %4529 = vmatprep.subr.bf16.mxu0 0
  %4530 = vmatpush1.bf16.msra.mxu0 %v3404
  %4531 = vmatprep.subr.bf16.mxu0 0
  %4532 = vmatpush1.bf16.msra.mxu0 %v3405
  %4533 = vmatprep.subr.bf16.mxu0 0
  %4534 = vmatpush1.bf16.msra.mxu0 %v3406
  %4535 = vmatprep.subr.bf16.mxu0 0
  %4536 = vmatpush1.bf16.msra.mxu0 %v3407
  %4537 = vmatprep.subr.bf16.mxu0 0
  %4538 = vmatpush1.bf16.msra.mxu0 %v3408
  %4539 = vmatprep.subr.bf16.mxu0 0
  %4540 = vmatpush1.bf16.msra.mxu0 %v3409
  %4541 = vmatprep.subr.bf16.mxu0 0
  %4542 = vmatpush1.bf16.msra.mxu0 %v3410
  %4543 = vmatprep.subr.bf16.mxu0 0
  %4544 = vmatpush1.bf16.msra.mxu0 %v3411
  %4545 = vmatprep.subr.bf16.mxu0 0
  %4546 = vmatpush1.bf16.msra.mxu0 %v3412
  %4547 = vmatprep.subr.bf16.mxu0 0
  %4548 = vmatpush1.bf16.msra.mxu0 %v3413
  %4549 = vmatprep.subr.bf16.mxu0 0
  %4550 = vmatpush1.bf16.msra.mxu0 %v3414
  %4551 = vmatprep.subr.bf16.mxu0 0
  %4552 = vmatpush1.bf16.msra.mxu0 %v3415
  %4553 = vmatprep.subr.bf16.mxu0 0
  %4554 = vmatpush1.bf16.msra.mxu0 %v3416
  %4555 = vmatprep.mubr.bf16.mxu0 %v1261
  %4556 = vmatmul.mubr.bf16.gmra.mrb[0].mxu0 %v1260
  %v4557 = vpop.f32.mrb[0].mxu0
  %v4558 = vadd.f32 %v4517, %v4557
  %v4559 = vpop.f32.mrb[0].mxu0
  %v4560 = vpop.f32.mrb[0].mxu0
  %v4561 = vadd.f32 %v4520, %v4560
  %v4562 = vpop.f32.mrb[0].mxu0
  %4563 = vdwg.mxu0
  %4564 = vmatprep.subr.bf16.mxu0 0
  %4565 = vmatpush1.bf16.msra.mxu0 %v3417
  %4566 = vmatprep.subr.bf16.mxu0 0
  %4567 = vmatpush1.bf16.msra.mxu0 %v3418
  %4568 = vmatprep.subr.bf16.mxu0 0
  %4569 = vmatpush1.bf16.msra.mxu0 %v3419
  %4570 = vmatprep.subr.bf16.mxu0 0
  %4571 = vmatpush1.bf16.msra.mxu0 %v3420
  %4572 = vmatprep.subr.bf16.mxu0 0
  %4573 = vmatpush1.bf16.msra.mxu0 %v3421
  %4574 = vmatprep.subr.bf16.mxu0 0
  %4575 = vmatpush1.bf16.msra.mxu0 %v3422
  %4576 = vmatprep.subr.bf16.mxu0 0
  %4577 = vmatpush1.bf16.msra.mxu0 %v3423
  %4578 = vmatprep.subr.bf16.mxu0 0
  %4579 = vmatpush1.bf16.msra.mxu0 %v3424
  %4580 = vmatprep.subr.bf16.mxu0 0
  %4581 = vmatpush1.bf16.msra.mxu0 %v3425
  %4582 = vmatprep.subr.bf16.mxu0 0
  %4583 = vmatpush1.bf16.msra.mxu0 %v3426
  %4584 = vmatprep.subr.bf16.mxu0 0
  %4585 = vmatpush1.bf16.msra.mxu0 %v3427
  %4586 = vmatprep.subr.bf16.mxu0 0
  %4587 = vmatpush1.bf16.msra.mxu0 %v3428
  %4588 = vmatprep.subr.bf16.mxu0 0
  %4589 = vmatpush1.bf16.msra.mxu0 %v3429
  %4590 = vmatprep.subr.bf16.mxu0 0
  %4591 = vmatpush1.bf16.msra.mxu0 %v3430
  %4592 = vmatprep.subr.bf16.mxu0 0
  %4593 = vmatpush1.bf16.msra.mxu0 %v3431
  %4594 = vmatprep.subr.bf16.mxu0 0
  %4595 = vmatpush1.bf16.msra.mxu0 %v3432
  %4596 = vmatprep.mubr.bf16.mxu0 %v1263
  %4597 = vmatmul.mubr.bf16.gmra.mrb[0].mxu0 %v1262
  %v4598 = vpop.f32.mrb[0].mxu0
  %v4599 = vadd.f32 %v4558, %v4598
  %v4600 = vpop.f32.mrb[0].mxu0
  %v4601 = vpop.f32.mrb[0].mxu0
  %v4602 = vadd.f32 %v4561, %v4601
  %v4603 = vpop.f32.mrb[0].mxu0
  %4604 = vdwg.mxu0
  %4605 = vmatprep.subr.bf16.mxu0 0
  %4606 = vmatpush1.bf16.msra.mxu0 %v3433
  %4607 = vmatprep.subr.bf16.mxu0 0
  %4608 = vmatpush1.bf16.msra.mxu0 %v3434
  %4609 = vmatprep.subr.bf16.mxu0 0
  %4610 = vmatpush1.bf16.msra.mxu0 %v3435
  %4611 = vmatprep.subr.bf16.mxu0 0
  %4612 = vmatpush1.bf16.msra.mxu0 %v3436
  %4613 = vmatprep.subr.bf16.mxu0 0
  %4614 = vmatpush1.bf16.msra.mxu0 %v3437
  %4615 = vmatprep.subr.bf16.mxu0 0
  %4616 = vmatpush1.bf16.msra.mxu0 %v3438
  %4617 = vmatprep.subr.bf16.mxu0 0
  %4618 = vmatpush1.bf16.msra.mxu0 %v3439
  %4619 = vmatprep.subr.bf16.mxu0 0
  %4620 = vmatpush1.bf16.msra.mxu0 %v3440
  %4621 = vmatprep.subr.bf16.mxu0 0
  %4622 = vmatpush1.bf16.msra.mxu0 %v3441
  %4623 = vmatprep.subr.bf16.mxu0 0
  %4624 = vmatpush1.bf16.msra.mxu0 %v3442
  %4625 = vmatprep.subr.bf16.mxu0 0
  %4626 = vmatpush1.bf16.msra.mxu0 %v3443
  %4627 = vmatprep.subr.bf16.mxu0 0
  %4628 = vmatpush1.bf16.msra.mxu0 %v3444
  %4629 = vmatprep.subr.bf16.mxu0 0
  %4630 = vmatpush1.bf16.msra.mxu0 %v3445
  %4631 = vmatprep.subr.bf16.mxu0 0
  %4632 = vmatpush1.bf16.msra.mxu0 %v3446
  %4633 = vmatprep.subr.bf16.mxu0 0
  %4634 = vmatpush1.bf16.msra.mxu0 %v3447
  %4635 = vmatprep.subr.bf16.mxu0 0
  %4636 = vmatpush1.bf16.msra.mxu0 %v3448
  %4637 = vmatprep.mubr.bf16.mxu0 %v1265
  %4638 = vmatmul.mubr.bf16.gmra.mrb[0].mxu0 %v1264
  %v4639 = vpop.f32.mrb[0].mxu0
  %v4640 = vadd.f32 %v4599, %v4639
  %v4641 = vpop.f32.mrb[0].mxu0
  %v4642 = vpop.f32.mrb[0].mxu0
  %v4643 = vadd.f32 %v4602, %v4642
  %v4644 = vpop.f32.mrb[0].mxu0
  %4645 = vdwg.mxu0
  %4646 = vmatprep.subr.bf16.mxu0 0
  %4647 = vmatpush1.bf16.msra.mxu0 %v3449
  %4648 = vmatprep.subr.bf16.mxu0 0
  %4649 = vmatpush1.bf16.msra.mxu0 %v3450
  %4650 = vmatprep.subr.bf16.mxu0 0
  %4651 = vmatpush1.bf16.msra.mxu0 %v3451
  %4652 = vmatprep.subr.bf16.mxu0 0
  %4653 = vmatpush1.bf16.msra.mxu0 %v3452
  %4654 = vmatprep.subr.bf16.mxu0 0
  %4655 = vmatpush1.bf16.msra.mxu0 %v3453
  %4656 = vmatprep.subr.bf16.mxu0 0
  %4657 = vmatpush1.bf16.msra.mxu0 %v3454
  %4658 = vmatprep.subr.bf16.mxu0 0
  %4659 = vmatpush1.bf16.msra.mxu0 %v3455
  %4660 = vmatprep.subr.bf16.mxu0 0
  %4661 = vmatpush1.bf16.msra.mxu0 %v3456
  %4662 = vmatprep.subr.bf16.mxu0 0
  %4663 = vmatpush1.bf16.msra.mxu0 %v3457
  %4664 = vmatprep.subr.bf16.mxu0 0
  %4665 = vmatpush1.bf16.msra.mxu0 %v3458
  %4666 = vmatprep.subr.bf16.mxu0 0
  %4667 = vmatpush1.bf16.msra.mxu0 %v3459
  %4668 = vmatprep.subr.bf16.mxu0 0
  %4669 = vmatpush1.bf16.msra.mxu0 %v3460
  %4670 = vmatprep.subr.bf16.mxu0 0
  %4671 = vmatpush1.bf16.msra.mxu0 %v3461
  %4672 = vmatprep.subr.bf16.mxu0 0
  %4673 = vmatpush1.bf16.msra.mxu0 %v3462
  %4674 = vmatprep.subr.bf16.mxu0 0
  %4675 = vmatpush1.bf16.msra.mxu0 %v3463
  %4676 = vmatprep.subr.bf16.mxu0 0
  %4677 = vmatpush1.bf16.msra.mxu0 %v3464
  %4678 = vmatprep.mubr.bf16.mxu0 %v1267
  %4679 = vmatmul.mubr.bf16.gmra.mrb[0].mxu0 %v1266
  %v4680 = vpop.f32.mrb[0].mxu0
  %v4681 = vadd.f32 %v4640, %v4680
  %v4682 = vpop.f32.mrb[0].mxu0
  %v4683 = vpop.f32.mrb[0].mxu0
  %v4684 = vadd.f32 %v4643, %v4683
  %v4685 = vpop.f32.mrb[0].mxu0
  %4686 = vdwg.mxu0
  %4687 = vmatprep.subr.bf16.mxu0 0
  %4688 = vmatpush1.bf16.msra.mxu0 %v3465
  %4689 = vmatprep.subr.bf16.mxu0 0
  %4690 = vmatpush1.bf16.msra.mxu0 %v3466
  %4691 = vmatprep.subr.bf16.mxu0 0
  %4692 = vmatpush1.bf16.msra.mxu0 %v3467
  %4693 = vmatprep.subr.bf16.mxu0 0
  %4694 = vmatpush1.bf16.msra.mxu0 %v3468
  %4695 = vmatprep.subr.bf16.mxu0 0
  %4696 = vmatpush1.bf16.msra.mxu0 %v3469
  %4697 = vmatprep.subr.bf16.mxu0 0
  %4698 = vmatpush1.bf16.msra.mxu0 %v3470
  %4699 = vmatprep.subr.bf16.mxu0 0
  %4700 = vmatpush1.bf16.msra.mxu0 %v3471
  %4701 = vmatprep.subr.bf16.mxu0 0
  %4702 = vmatpush1.bf16.msra.mxu0 %v3472
  %4703 = vmatprep.subr.bf16.mxu0 0
  %4704 = vmatpush1.bf16.msra.mxu0 %v3473
  %4705 = vmatprep.subr.bf16.mxu0 0
  %4706 = vmatpush1.bf16.msra.mxu0 %v3474
  %4707 = vmatprep.subr.bf16.mxu0 0
  %4708 = vmatpush1.bf16.msra.mxu0 %v3475
  %4709 = vmatprep.subr.bf16.mxu0 0
  %4710 = vmatpush1.bf16.msra.mxu0 %v3476
  %4711 = vmatprep.subr.bf16.mxu0 0
  %4712 = vmatpush1.bf16.msra.mxu0 %v3477
  %4713 = vmatprep.subr.bf16.mxu0 0
  %4714 = vmatpush1.bf16.msra.mxu0 %v3478
  %4715 = vmatprep.subr.bf16.mxu0 0
  %4716 = vmatpush1.bf16.msra.mxu0 %v3479
  %4717 = vmatprep.subr.bf16.mxu0 0
  %4718 = vmatpush1.bf16.msra.mxu0 %v3480
  %4719 = vmatprep.mubr.bf16.mxu0 %v1269
  %4720 = vmatmul.mubr.bf16.gmra.mrb[0].mxu0 %v1268
  %v4721 = vpop.f32.mrb[0].mxu0
  %v4722 = vadd.f32 %v4681, %v4721
  %v4723 = vpop.f32.mrb[0].mxu0
  %v4724 = vpop.f32.mrb[0].mxu0
  %v4725 = vadd.f32 %v4684, %v4724
  %v4726 = vpop.f32.mrb[0].mxu0
  %4727 = vdwg.mxu0
  %4728 = vmatprep.subr.bf16.mxu0 0
  %4729 = vmatpush1.bf16.msra.mxu0 %v3481
  %4730 = vmatprep.subr.bf16.mxu0 0
  %4731 = vmatpush1.bf16.msra.mxu0 %v3482
  %4732 = vmatprep.subr.bf16.mxu0 0
  %4733 = vmatpush1.bf16.msra.mxu0 %v3483
  %4734 = vmatprep.subr.bf16.mxu0 0
  %4735 = vmatpush1.bf16.msra.mxu0 %v3484
  %4736 = vmatprep.subr.bf16.mxu0 0
  %4737 = vmatpush1.bf16.msra.mxu0 %v3485
  %4738 = vmatprep.subr.bf16.mxu0 0
  %4739 = vmatpush1.bf16.msra.mxu0 %v3486
  %4740 = vmatprep.subr.bf16.mxu0 0
  %4741 = vmatpush1.bf16.msra.mxu0 %v3487
  %4742 = vmatprep.subr.bf16.mxu0 0
  %4743 = vmatpush1.bf16.msra.mxu0 %v3488
  %4744 = vmatprep.subr.bf16.mxu0 0
  %4745 = vmatpush1.bf16.msra.mxu0 %v3489
  %4746 = vmatprep.subr.bf16.mxu0 0
  %4747 = vmatpush1.bf16.msra.mxu0 %v3490
  %4748 = vmatprep.subr.bf16.mxu0 0
  %4749 = vmatpush1.bf16.msra.mxu0 %v3491
  %4750 = vmatprep.subr.bf16.mxu0 0
  %4751 = vmatpush1.bf16.msra.mxu0 %v3492
  %4752 = vmatprep.subr.bf16.mxu0 0
  %4753 = vmatpush1.bf16.msra.mxu0 %v3493
  %4754 = vmatprep.subr.bf16.mxu0 0
  %4755 = vmatpush1.bf16.msra.mxu0 %v3494
  %4756 = vmatprep.subr.bf16.mxu0 0
  %4757 = vmatpush1.bf16.msra.mxu0 %v3495
  %4758 = vmatprep.subr.bf16.mxu0 0
  %4759 = vmatpush1.bf16.msra.mxu0 %v3496
  %4760 = vmatprep.mubr.bf16.mxu0 %v1271
  %4761 = vmatmul.mubr.bf16.gmra.mrb[0].mxu0 %v1270
  %v4762 = vpop.f32.mrb[0].mxu0
  %v4763 = vadd.f32 %v4722, %v4762
  %v4764 = vpop.f32.mrb[0].mxu0
  %v4765 = vpop.f32.mrb[0].mxu0
  %v4766 = vadd.f32 %v4725, %v4765
  %v4767 = vpop.f32.mrb[0].mxu0
  %4768 = vdwg.mxu0
  %4769 = vmatprep.subr.bf16.mxu0 0
  %4770 = vmatpush1.bf16.msra.mxu0 %v3497
  %4771 = vmatprep.subr.bf16.mxu0 0
  %4772 = vmatpush1.bf16.msra.mxu0 %v3498
  %4773 = vmatprep.subr.bf16.mxu0 0
  %4774 = vmatpush1.bf16.msra.mxu0 %v3499
  %4775 = vmatprep.subr.bf16.mxu0 0
  %4776 = vmatpush1.bf16.msra.mxu0 %v3500
  %4777 = vmatprep.subr.bf16.mxu0 0
  %4778 = vmatpush1.bf16.msra.mxu0 %v3501
  %4779 = vmatprep.subr.bf16.mxu0 0
  %4780 = vmatpush1.bf16.msra.mxu0 %v3502
  %4781 = vmatprep.subr.bf16.mxu0 0
  %4782 = vmatpush1.bf16.msra.mxu0 %v3503
  %4783 = vmatprep.subr.bf16.mxu0 0
  %4784 = vmatpush1.bf16.msra.mxu0 %v3504
  %4785 = vmatprep.subr.bf16.mxu0 0
  %4786 = vmatpush1.bf16.msra.mxu0 %v3505
  %4787 = vmatprep.subr.bf16.mxu0 0
  %4788 = vmatpush1.bf16.msra.mxu0 %v3506
  %4789 = vmatprep.subr.bf16.mxu0 0
  %4790 = vmatpush1.bf16.msra.mxu0 %v3507
  %4791 = vmatprep.subr.bf16.mxu0 0
  %4792 = vmatpush1.bf16.msra.mxu0 %v3508
  %4793 = vmatprep.subr.bf16.mxu0 0
  %4794 = vmatpush1.bf16.msra.mxu0 %v3509
  %4795 = vmatprep.subr.bf16.mxu0 0
  %4796 = vmatpush1.bf16.msra.mxu0 %v3510
  %4797 = vmatprep.subr.bf16.mxu0 0
  %4798 = vmatpush1.bf16.msra.mxu0 %v3511
  %4799 = vmatprep.subr.bf16.mxu0 0
  %4800 = vmatpush1.bf16.msra.mxu0 %v3512
  %4801 = vmatprep.mubr.bf16.mxu0 %v1273
  %4802 = vmatmul.mubr.bf16.gmra.mrb[0].mxu0 %v1272
  %v4803 = vpop.f32.mrb[0].mxu0
  %v4804 = vadd.f32 %v4763, %v4803
  %v4805 = vpop.f32.mrb[0].mxu0
  %v4806 = vpop.f32.mrb[0].mxu0
  %v4807 = vadd.f32 %v4766, %v4806
  %v4808 = vpop.f32.mrb[0].mxu0
  %4809 = vdwg.mxu0
  %4810 = vmatprep.subr.bf16.mxu0 0
  %4811 = vmatpush1.bf16.msra.mxu0 %v3513
  %4812 = vmatprep.subr.bf16.mxu0 0
  %4813 = vmatpush1.bf16.msra.mxu0 %v3514
  %4814 = vmatprep.subr.bf16.mxu0 0
  %4815 = vmatpush1.bf16.msra.mxu0 %v3515
  %4816 = vmatprep.subr.bf16.mxu0 0
  %4817 = vmatpush1.bf16.msra.mxu0 %v3516
  %4818 = vmatprep.subr.bf16.mxu0 0
  %4819 = vmatpush1.bf16.msra.mxu0 %v3517
  %4820 = vmatprep.subr.bf16.mxu0 0
  %4821 = vmatpush1.bf16.msra.mxu0 %v3518
  %4822 = vmatprep.subr.bf16.mxu0 0
  %4823 = vmatpush1.bf16.msra.mxu0 %v3519
  %4824 = vmatprep.subr.bf16.mxu0 0
  %4825 = vmatpush1.bf16.msra.mxu0 %v3520
  %4826 = vmatprep.subr.bf16.mxu0 0
  %4827 = vmatpush1.bf16.msra.mxu0 %v3521
  %4828 = vmatprep.subr.bf16.mxu0 0
  %4829 = vmatpush1.bf16.msra.mxu0 %v3522
  %4830 = vmatprep.subr.bf16.mxu0 0
  %4831 = vmatpush1.bf16.msra.mxu0 %v3523
  %4832 = vmatprep.subr.bf16.mxu0 0
  %4833 = vmatpush1.bf16.msra.mxu0 %v3524
  %4834 = vmatprep.subr.bf16.mxu0 0
  %4835 = vmatpush1.bf16.msra.mxu0 %v3525
  %4836 = vmatprep.subr.bf16.mxu0 0
  %4837 = vmatpush1.bf16.msra.mxu0 %v3526
  %4838 = vmatprep.subr.bf16.mxu0 0
  %4839 = vmatpush1.bf16.msra.mxu0 %v3527
  %4840 = vmatprep.subr.bf16.mxu0 0
  %4841 = vmatpush1.bf16.msra.mxu0 %v3528
  %4842 = vmatprep.mubr.bf16.mxu0 %v1275
  %4843 = vmatmul.mubr.bf16.gmra.mrb[0].mxu0 %v1274
  %v4844 = vpop.f32.mrb[0].mxu0
  %v4845 = vadd.f32 %v4804, %v4844
  %v4846 = vpop.f32.mrb[0].mxu0
  %v4847 = vpop.f32.mrb[0].mxu0
  %v4848 = vadd.f32 %v4807, %v4847
  %v4849 = vpop.f32.mrb[0].mxu0
  %4850 = vdwg.mxu0
  %4851 = vmatprep.subr.bf16.mxu0 0
  %4852 = vmatpush1.bf16.msra.mxu0 %v3529
  %4853 = vmatprep.subr.bf16.mxu0 0
  %4854 = vmatpush1.bf16.msra.mxu0 %v3530
  %4855 = vmatprep.subr.bf16.mxu0 0
  %4856 = vmatpush1.bf16.msra.mxu0 %v3531
  %4857 = vmatprep.subr.bf16.mxu0 0
  %4858 = vmatpush1.bf16.msra.mxu0 %v3532
  %4859 = vmatprep.subr.bf16.mxu0 0
  %4860 = vmatpush1.bf16.msra.mxu0 %v3533
  %4861 = vmatprep.subr.bf16.mxu0 0
  %4862 = vmatpush1.bf16.msra.mxu0 %v3534
  %4863 = vmatprep.subr.bf16.mxu0 0
  %4864 = vmatpush1.bf16.msra.mxu0 %v3535
  %4865 = vmatprep.subr.bf16.mxu0 0
  %4866 = vmatpush1.bf16.msra.mxu0 %v3536
  %4867 = vmatprep.subr.bf16.mxu0 0
  %4868 = vmatpush1.bf16.msra.mxu0 %v3537
  %4869 = vmatprep.subr.bf16.mxu0 0
  %4870 = vmatpush1.bf16.msra.mxu0 %v3538
  %4871 = vmatprep.subr.bf16.mxu0 0
  %4872 = vmatpush1.bf16.msra.mxu0 %v3539
  %4873 = vmatprep.subr.bf16.mxu0 0
  %4874 = vmatpush1.bf16.msra.mxu0 %v3540
  %4875 = vmatprep.subr.bf16.mxu0 0
  %4876 = vmatpush1.bf16.msra.mxu0 %v3541
  %4877 = vmatprep.subr.bf16.mxu0 0
  %4878 = vmatpush1.bf16.msra.mxu0 %v3542
  %4879 = vmatprep.subr.bf16.mxu0 0
  %4880 = vmatpush1.bf16.msra.mxu0 %v3543
  %4881 = vmatprep.subr.bf16.mxu0 0
  %4882 = vmatpush1.bf16.msra.mxu0 %v3544
  %4883 = vmatprep.mubr.bf16.mxu0 %v1277
  %4884 = vmatmul.mubr.bf16.gmra.mrb[0].mxu0 %v1276
  %v4885 = vpop.f32.mrb[0].mxu0
  %v4886 = vadd.f32 %v4845, %v4885
  %v4887 = vpop.f32.mrb[0].mxu0
  %v4888 = vpop.f32.mrb[0].mxu0
  %v4889 = vadd.f32 %v4848, %v4888
  %v4890 = vpop.f32.mrb[0].mxu0
  %4891 = vdwg.mxu0
  %4892 = vmatprep.subr.bf16.mxu0 0
  %4893 = vmatpush1.bf16.msra.mxu0 %v3545
  %4894 = vmatprep.subr.bf16.mxu0 0
  %4895 = vmatpush1.bf16.msra.mxu0 %v3546
  %4896 = vmatprep.subr.bf16.mxu0 0
  %4897 = vmatpush1.bf16.msra.mxu0 %v3547
  %4898 = vmatprep.subr.bf16.mxu0 0
  %4899 = vmatpush1.bf16.msra.mxu0 %v3548
  %4900 = vmatprep.subr.bf16.mxu0 0
  %4901 = vmatpush1.bf16.msra.mxu0 %v3549
  %4902 = vmatprep.subr.bf16.mxu0 0
  %4903 = vmatpush1.bf16.msra.mxu0 %v3550
  %4904 = vmatprep.subr.bf16.mxu0 0
  %4905 = vmatpush1.bf16.msra.mxu0 %v3551
  %4906 = vmatprep.subr.bf16.mxu0 0
  %4907 = vmatpush1.bf16.msra.mxu0 %v3552
  %4908 = vmatprep.subr.bf16.mxu0 0
  %4909 = vmatpush1.bf16.msra.mxu0 %v3553
  %4910 = vmatprep.subr.bf16.mxu0 0
  %4911 = vmatpush1.bf16.msra.mxu0 %v3554
  %4912 = vmatprep.subr.bf16.mxu0 0
  %4913 = vmatpush1.bf16.msra.mxu0 %v3555
  %4914 = vmatprep.subr.bf16.mxu0 0
  %4915 = vmatpush1.bf16.msra.mxu0 %v3556
  %4916 = vmatprep.subr.bf16.mxu0 0
  %4917 = vmatpush1.bf16.msra.mxu0 %v3557
  %4918 = vmatprep.subr.bf16.mxu0 0
  %4919 = vmatpush1.bf16.msra.mxu0 %v3558
  %4920 = vmatprep.subr.bf16.mxu0 0
  %4921 = vmatpush1.bf16.msra.mxu0 %v3559
  %4922 = vmatprep.subr.bf16.mxu0 0
  %4923 = vmatpush1.bf16.msra.mxu0 %v3560
  %4924 = vmatprep.mubr.bf16.mxu0 %v1279
  %4925 = vmatmul.mubr.bf16.gmra.mrb[0].mxu0 %v1278
  %v4926 = vpop.f32.mrb[0].mxu0
  %v4927 = vadd.f32 %v4886, %v4926
  %v4928 = vpop.f32.mrb[0].mxu0
  %v4929 = vpop.f32.mrb[0].mxu0
  %v4930 = vadd.f32 %v4889, %v4929
  %v4931 = vpop.f32.mrb[0].mxu0
  %4932 = vdwg.mxu0
  %4933 = vmatprep.subr.bf16.mxu0 0
  %4934 = vmatpush1.bf16.msra.mxu0 %v3561
  %4935 = vmatprep.subr.bf16.mxu0 0
  %4936 = vmatpush1.bf16.msra.mxu0 %v3562
  %4937 = vmatprep.subr.bf16.mxu0 0
  %4938 = vmatpush1.bf16.msra.mxu0 %v3563
  %4939 = vmatprep.subr.bf16.mxu0 0
  %4940 = vmatpush1.bf16.msra.mxu0 %v3564
  %4941 = vmatprep.subr.bf16.mxu0 0
  %4942 = vmatpush1.bf16.msra.mxu0 %v3565
  %4943 = vmatprep.subr.bf16.mxu0 0
  %4944 = vmatpush1.bf16.msra.mxu0 %v3566
  %4945 = vmatprep.subr.bf16.mxu0 0
  %4946 = vmatpush1.bf16.msra.mxu0 %v3567
  %4947 = vmatprep.subr.bf16.mxu0 0
  %4948 = vmatpush1.bf16.msra.mxu0 %v3568
  %4949 = vmatprep.subr.bf16.mxu0 0
  %4950 = vmatpush1.bf16.msra.mxu0 %v3569
  %4951 = vmatprep.subr.bf16.mxu0 0
  %4952 = vmatpush1.bf16.msra.mxu0 %v3570
  %4953 = vmatprep.subr.bf16.mxu0 0
  %4954 = vmatpush1.bf16.msra.mxu0 %v3571
  %4955 = vmatprep.subr.bf16.mxu0 0
  %4956 = vmatpush1.bf16.msra.mxu0 %v3572
  %4957 = vmatprep.subr.bf16.mxu0 0
  %4958 = vmatpush1.bf16.msra.mxu0 %v3573
  %4959 = vmatprep.subr.bf16.mxu0 0
  %4960 = vmatpush1.bf16.msra.mxu0 %v3574
  %4961 = vmatprep.subr.bf16.mxu0 0
  %4962 = vmatpush1.bf16.msra.mxu0 %v3575
  %4963 = vmatprep.subr.bf16.mxu0 0
  %4964 = vmatpush1.bf16.msra.mxu0 %v3576
  %4965 = vmatprep.mubr.bf16.mxu0 %v1281
  %4966 = vmatmul.mubr.bf16.gmra.mrb[0].mxu0 %v1280
  %v4967 = vpop.f32.mrb[0].mxu0
  %v4968 = vadd.f32 %v4927, %v4967
  %v4969 = vpop.f32.mrb[0].mxu0
  %v4970 = vpop.f32.mrb[0].mxu0
  %v4971 = vadd.f32 %v4930, %v4970
  %v4972 = vpop.f32.mrb[0].mxu0
  %4973 = vdwg.mxu0
  %4974 = vmatprep.subr.bf16.mxu0 0
  %4975 = vmatpush1.bf16.msra.mxu0 %v3577
  %4976 = vmatprep.subr.bf16.mxu0 0
  %4977 = vmatpush1.bf16.msra.mxu0 %v3578
  %4978 = vmatprep.subr.bf16.mxu0 0
  %4979 = vmatpush1.bf16.msra.mxu0 %v3579
  %4980 = vmatprep.subr.bf16.mxu0 0
  %4981 = vmatpush1.bf16.msra.mxu0 %v3580
  %4982 = vmatprep.subr.bf16.mxu0 0
  %4983 = vmatpush1.bf16.msra.mxu0 %v3581
  %4984 = vmatprep.subr.bf16.mxu0 0
  %4985 = vmatpush1.bf16.msra.mxu0 %v3582
  %4986 = vmatprep.subr.bf16.mxu0 0
  %4987 = vmatpush1.bf16.msra.mxu0 %v3583
  %4988 = vmatprep.subr.bf16.mxu0 0
  %4989 = vmatpush1.bf16.msra.mxu0 %v3584
  %4990 = vmatprep.subr.bf16.mxu0 0
  %4991 = vmatpush1.bf16.msra.mxu0 %v3585
  %4992 = vmatprep.subr.bf16.mxu0 0
  %4993 = vmatpush1.bf16.msra.mxu0 %v3586
  %4994 = vmatprep.subr.bf16.mxu0 0
  %4995 = vmatpush1.bf16.msra.mxu0 %v3587
  %4996 = vmatprep.subr.bf16.mxu0 0
  %4997 = vmatpush1.bf16.msra.mxu0 %v3588
  %4998 = vmatprep.subr.bf16.mxu0 0
  %4999 = vmatpush1.bf16.msra.mxu0 %v3589
  %5000 = vmatprep.subr.bf16.mxu0 0
  %5001 = vmatpush1.bf16.msra.mxu0 %v3590
  %5002 = vmatprep.subr.bf16.mxu0 0
  %5003 = vmatpush1.bf16.msra.mxu0 %v3591
  %5004 = vmatprep.subr.bf16.mxu0 0
  %5005 = vmatpush1.bf16.msra.mxu0 %v3592
  %5006 = vmatprep.mubr.bf16.mxu0 %v1283
  %5007 = vmatmul.mubr.bf16.gmra.mrb[0].mxu0 %v1282
  %v5008 = vpop.f32.mrb[0].mxu0
  %v5009 = vadd.f32 %v4968, %v5008
  %v5010 = vpop.f32.mrb[0].mxu0
  %v5011 = vpop.f32.mrb[0].mxu0
  %v5012 = vadd.f32 %v4971, %v5011
  %v5013 = vpop.f32.mrb[0].mxu0
  %5014 = vdwg.mxu0
  %5015 = vmatprep.subr.bf16.mxu0 0
  %5016 = vmatpush1.bf16.msra.mxu0 %v3593
  %5017 = vmatprep.subr.bf16.mxu0 0
  %5018 = vmatpush1.bf16.msra.mxu0 %v3594
  %5019 = vmatprep.subr.bf16.mxu0 0
  %5020 = vmatpush1.bf16.msra.mxu0 %v3595
  %5021 = vmatprep.subr.bf16.mxu0 0
  %5022 = vmatpush1.bf16.msra.mxu0 %v3596
  %5023 = vmatprep.subr.bf16.mxu0 0
  %5024 = vmatpush1.bf16.msra.mxu0 %v3597
  %5025 = vmatprep.subr.bf16.mxu0 0
  %5026 = vmatpush1.bf16.msra.mxu0 %v3598
  %5027 = vmatprep.subr.bf16.mxu0 0
  %5028 = vmatpush1.bf16.msra.mxu0 %v3599
  %5029 = vmatprep.subr.bf16.mxu0 0
  %5030 = vmatpush1.bf16.msra.mxu0 %v3600
  %5031 = vmatprep.subr.bf16.mxu0 0
  %5032 = vmatpush1.bf16.msra.mxu0 %v3601
  %5033 = vmatprep.subr.bf16.mxu0 0
  %5034 = vmatpush1.bf16.msra.mxu0 %v3602
  %5035 = vmatprep.subr.bf16.mxu0 0
  %5036 = vmatpush1.bf16.msra.mxu0 %v3603
  %5037 = vmatprep.subr.bf16.mxu0 0
  %5038 = vmatpush1.bf16.msra.mxu0 %v3604
  %5039 = vmatprep.subr.bf16.mxu0 0
  %5040 = vmatpush1.bf16.msra.mxu0 %v3605
  %5041 = vmatprep.subr.bf16.mxu0 0
  %5042 = vmatpush1.bf16.msra.mxu0 %v3606
  %5043 = vmatprep.subr.bf16.mxu0 0
  %5044 = vmatpush1.bf16.msra.mxu0 %v3607
  %5045 = vmatprep.subr.bf16.mxu0 0
  %5046 = vmatpush1.bf16.msra.mxu0 %v3608
  %5047 = vmatprep.mubr.bf16.mxu0 %v1285
  %5048 = vmatmul.mubr.bf16.gmra.mrb[0].mxu0 %v1284
  %v5049 = vpop.f32.mrb[0].mxu0
  %v5050 = vadd.f32 %v5009, %v5049
  %v5051 = vpop.f32.mrb[0].mxu0
  %v5052 = vpop.f32.mrb[0].mxu0
  %v5053 = vadd.f32 %v5012, %v5052
  %v5054 = vpop.f32.mrb[0].mxu0
  %5055 = vdwg.mxu0
  %5056 = vmatprep.subr.bf16.mxu0 0
  %5057 = vmatpush1.bf16.msra.mxu0 %v3609
  %5058 = vmatprep.subr.bf16.mxu0 0
  %5059 = vmatpush1.bf16.msra.mxu0 %v3610
  %5060 = vmatprep.subr.bf16.mxu0 0
  %5061 = vmatpush1.bf16.msra.mxu0 %v3611
  %5062 = vmatprep.subr.bf16.mxu0 0
  %5063 = vmatpush1.bf16.msra.mxu0 %v3612
  %5064 = vmatprep.subr.bf16.mxu0 0
  %5065 = vmatpush1.bf16.msra.mxu0 %v3613
  %5066 = vmatprep.subr.bf16.mxu0 0
  %5067 = vmatpush1.bf16.msra.mxu0 %v3614
  %5068 = vmatprep.subr.bf16.mxu0 0
  %5069 = vmatpush1.bf16.msra.mxu0 %v3615
  %5070 = vmatprep.subr.bf16.mxu0 0
  %5071 = vmatpush1.bf16.msra.mxu0 %v3616
  %5072 = vmatprep.subr.bf16.mxu0 0
  %5073 = vmatpush1.bf16.msra.mxu0 %v3617
  %5074 = vmatprep.subr.bf16.mxu0 0
  %5075 = vmatpush1.bf16.msra.mxu0 %v3618
  %5076 = vmatprep.subr.bf16.mxu0 0
  %5077 = vmatpush1.bf16.msra.mxu0 %v3619
  %5078 = vmatprep.subr.bf16.mxu0 0
  %5079 = vmatpush1.bf16.msra.mxu0 %v3620
  %5080 = vmatprep.subr.bf16.mxu0 0
  %5081 = vmatpush1.bf16.msra.mxu0 %v3621
  %5082 = vmatprep.subr.bf16.mxu0 0
  %5083 = vmatpush1.bf16.msra.mxu0 %v3622
  %5084 = vmatprep.subr.bf16.mxu0 0
  %5085 = vmatpush1.bf16.msra.mxu0 %v3623
  %5086 = vmatprep.subr.bf16.mxu0 0
  %5087 = vmatpush1.bf16.msra.mxu0 %v3624
  %5088 = vmatprep.mubr.bf16.mxu0 %v1287
  %5089 = vmatmul.mubr.bf16.gmra.mrb[0].mxu0 %v1286
  %v5090 = vpop.f32.mrb[0].mxu0
  %v5091 = vadd.f32 %v5050, %v5090
  %v5092 = vpop.f32.mrb[0].mxu0
  %v5093 = vpop.f32.mrb[0].mxu0
  %v5094 = vadd.f32 %v5053, %v5093
  %v5095 = vpop.f32.mrb[0].mxu0
  %5096 = vdwg.mxu0
  %5097 = vmatprep.subr.bf16.mxu0 0
  %5098 = vmatpush1.bf16.msra.mxu0 %v3625
  %5099 = vmatprep.subr.bf16.mxu0 0
  %5100 = vmatpush1.bf16.msra.mxu0 %v3626
  %5101 = vmatprep.subr.bf16.mxu0 0
  %5102 = vmatpush1.bf16.msra.mxu0 %v3627
  %5103 = vmatprep.subr.bf16.mxu0 0
  %5104 = vmatpush1.bf16.msra.mxu0 %v3628
  %5105 = vmatprep.subr.bf16.mxu0 0
  %5106 = vmatpush1.bf16.msra.mxu0 %v3629
  %5107 = vmatprep.subr.bf16.mxu0 0
  %5108 = vmatpush1.bf16.msra.mxu0 %v3630
  %5109 = vmatprep.subr.bf16.mxu0 0
  %5110 = vmatpush1.bf16.msra.mxu0 %v3631
  %5111 = vmatprep.subr.bf16.mxu0 0
  %5112 = vmatpush1.bf16.msra.mxu0 %v3632
  %5113 = vmatprep.subr.bf16.mxu0 0
  %5114 = vmatpush1.bf16.msra.mxu0 %v3633
  %5115 = vmatprep.subr.bf16.mxu0 0
  %5116 = vmatpush1.bf16.msra.mxu0 %v3634
  %5117 = vmatprep.subr.bf16.mxu0 0
  %5118 = vmatpush1.bf16.msra.mxu0 %v3635
  %5119 = vmatprep.subr.bf16.mxu0 0
  %5120 = vmatpush1.bf16.msra.mxu0 %v3636
  %5121 = vmatprep.subr.bf16.mxu0 0
  %5122 = vmatpush1.bf16.msra.mxu0 %v3637
  %5123 = vmatprep.subr.bf16.mxu0 0
  %5124 = vmatpush1.bf16.msra.mxu0 %v3638
  %5125 = vmatprep.subr.bf16.mxu0 0
  %5126 = vmatpush1.bf16.msra.mxu0 %v3639
  %5127 = vmatprep.subr.bf16.mxu0 0
  %5128 = vmatpush1.bf16.msra.mxu0 %v3640
  %5129 = vmatprep.mubr.bf16.mxu0 %v1289
  %5130 = vmatmul.mubr.bf16.gmra.mrb[0].mxu0 %v1288
  %v5131 = vpop.f32.mrb[0].mxu0
  %v5132 = vadd.f32 %v5091, %v5131
  %v5133 = vpop.f32.mrb[0].mxu0
  %v5134 = vpop.f32.mrb[0].mxu0
  %v5135 = vadd.f32 %v5094, %v5134
  %v5136 = vpop.f32.mrb[0].mxu0
  %5137 = vdwg.mxu0
  %5138 = vmatprep.subr.bf16.mxu0 0
  %5139 = vmatpush1.bf16.msra.mxu0 %v3641
  %5140 = vmatprep.subr.bf16.mxu0 0
  %5141 = vmatpush1.bf16.msra.mxu0 %v3642
  %5142 = vmatprep.subr.bf16.mxu0 0
  %5143 = vmatpush1.bf16.msra.mxu0 %v3643
  %5144 = vmatprep.subr.bf16.mxu0 0
  %5145 = vmatpush1.bf16.msra.mxu0 %v3644
  %5146 = vmatprep.subr.bf16.mxu0 0
  %5147 = vmatpush1.bf16.msra.mxu0 %v3645
  %5148 = vmatprep.subr.bf16.mxu0 0
  %5149 = vmatpush1.bf16.msra.mxu0 %v3646
  %5150 = vmatprep.subr.bf16.mxu0 0
  %5151 = vmatpush1.bf16.msra.mxu0 %v3647
  %5152 = vmatprep.subr.bf16.mxu0 0
  %5153 = vmatpush1.bf16.msra.mxu0 %v3648
  %5154 = vmatprep.subr.bf16.mxu0 0
  %5155 = vmatpush1.bf16.msra.mxu0 %v3649
  %5156 = vmatprep.subr.bf16.mxu0 0
  %5157 = vmatpush1.bf16.msra.mxu0 %v3650
  %5158 = vmatprep.subr.bf16.mxu0 0
  %5159 = vmatpush1.bf16.msra.mxu0 %v3651
  %5160 = vmatprep.subr.bf16.mxu0 0
  %5161 = vmatpush1.bf16.msra.mxu0 %v3652
  %5162 = vmatprep.subr.bf16.mxu0 0
  %5163 = vmatpush1.bf16.msra.mxu0 %v3653
  %5164 = vmatprep.subr.bf16.mxu0 0
  %5165 = vmatpush1.bf16.msra.mxu0 %v3654
  %5166 = vmatprep.subr.bf16.mxu0 0
  %5167 = vmatpush1.bf16.msra.mxu0 %v3655
  %5168 = vmatprep.subr.bf16.mxu0 0
  %5169 = vmatpush1.bf16.msra.mxu0 %v3656
  %5170 = vmatprep.mubr.bf16.mxu0 %v1291
  %5171 = vmatmul.mubr.bf16.gmra.mrb[0].mxu0 %v1290
  %v5172 = vpop.f32.mrb[0].mxu0
  %v5173 = vadd.f32 %v5132, %v5172
  %v5174 = vpop.f32.mrb[0].mxu0
  %v5175 = vpop.f32.mrb[0].mxu0
  %v5176 = vadd.f32 %v5135, %v5175
  %v5177 = vpop.f32.mrb[0].mxu0
  %5178 = vdwg.mxu0
  %5179 = vmatprep.subr.bf16.mxu0 0
  %5180 = vmatpush1.bf16.msra.mxu0 %v3657
  %5181 = vmatprep.subr.bf16.mxu0 0
  %5182 = vmatpush1.bf16.msra.mxu0 %v3658
  %5183 = vmatprep.subr.bf16.mxu0 0
  %5184 = vmatpush1.bf16.msra.mxu0 %v3659
  %5185 = vmatprep.subr.bf16.mxu0 0
  %5186 = vmatpush1.bf16.msra.mxu0 %v3660
  %5187 = vmatprep.subr.bf16.mxu0 0
  %5188 = vmatpush1.bf16.msra.mxu0 %v3661
  %5189 = vmatprep.subr.bf16.mxu0 0
  %5190 = vmatpush1.bf16.msra.mxu0 %v3662
  %5191 = vmatprep.subr.bf16.mxu0 0
  %5192 = vmatpush1.bf16.msra.mxu0 %v3663
  %5193 = vmatprep.subr.bf16.mxu0 0
  %5194 = vmatpush1.bf16.msra.mxu0 %v3664
  %5195 = vmatprep.subr.bf16.mxu0 0
  %5196 = vmatpush1.bf16.msra.mxu0 %v3665
  %5197 = vmatprep.subr.bf16.mxu0 0
  %5198 = vmatpush1.bf16.msra.mxu0 %v3666
  %5199 = vmatprep.subr.bf16.mxu0 0
  %5200 = vmatpush1.bf16.msra.mxu0 %v3667
  %5201 = vmatprep.subr.bf16.mxu0 0
  %5202 = vmatpush1.bf16.msra.mxu0 %v3668
  %5203 = vmatprep.subr.bf16.mxu0 0
  %5204 = vmatpush1.bf16.msra.mxu0 %v3669
  %5205 = vmatprep.subr.bf16.mxu0 0
  %5206 = vmatpush1.bf16.msra.mxu0 %v3670
  %5207 = vmatprep.subr.bf16.mxu0 0
  %5208 = vmatpush1.bf16.msra.mxu0 %v3671
  %5209 = vmatprep.subr.bf16.mxu0 0
  %5210 = vmatpush1.bf16.msra.mxu0 %v3672
  %5211 = vmatprep.mubr.bf16.mxu0 %v1293
  %5212 = vmatmul.mubr.bf16.gmra.mrb[0].mxu0 %v1292
  %v5213 = vpop.f32.mrb[0].mxu0
  %v5214 = vadd.f32 %v5173, %v5213
  %v5215 = vpop.f32.mrb[0].mxu0
  %v5216 = vpop.f32.mrb[0].mxu0
  %v5217 = vadd.f32 %v5176, %v5216
  %v5218 = vpop.f32.mrb[0].mxu0
  %5219 = vdwg.mxu0
  %5220 = vmatprep.subr.bf16.mxu0 0
  %5221 = vmatpush1.bf16.msra.mxu0 %v3673
  %5222 = vmatprep.subr.bf16.mxu0 0
  %5223 = vmatpush1.bf16.msra.mxu0 %v3674
  %5224 = vmatprep.subr.bf16.mxu0 0
  %5225 = vmatpush1.bf16.msra.mxu0 %v3675
  %5226 = vmatprep.subr.bf16.mxu0 0
  %5227 = vmatpush1.bf16.msra.mxu0 %v3676
  %5228 = vmatprep.subr.bf16.mxu0 0
  %5229 = vmatpush1.bf16.msra.mxu0 %v3677
  %5230 = vmatprep.subr.bf16.mxu0 0
  %5231 = vmatpush1.bf16.msra.mxu0 %v3678
  %5232 = vmatprep.subr.bf16.mxu0 0
  %5233 = vmatpush1.bf16.msra.mxu0 %v3679
  %5234 = vmatprep.subr.bf16.mxu0 0
  %5235 = vmatpush1.bf16.msra.mxu0 %v3680
  %5236 = vmatprep.subr.bf16.mxu0 0
  %5237 = vmatpush1.bf16.msra.mxu0 %v3681
  %5238 = vmatprep.subr.bf16.mxu0 0
  %5239 = vmatpush1.bf16.msra.mxu0 %v3682
  %5240 = vmatprep.subr.bf16.mxu0 0
  %5241 = vmatpush1.bf16.msra.mxu0 %v3683
  %5242 = vmatprep.subr.bf16.mxu0 0
  %5243 = vmatpush1.bf16.msra.mxu0 %v3684
  %5244 = vmatprep.subr.bf16.mxu0 0
  %5245 = vmatpush1.bf16.msra.mxu0 %v3685
  %5246 = vmatprep.subr.bf16.mxu0 0
  %5247 = vmatpush1.bf16.msra.mxu0 %v3686
  %5248 = vmatprep.subr.bf16.mxu0 0
  %5249 = vmatpush1.bf16.msra.mxu0 %v3687
  %5250 = vmatprep.subr.bf16.mxu0 0
  %5251 = vmatpush1.bf16.msra.mxu0 %v3688
  %5252 = vmatprep.mubr.bf16.mxu0 %v1295
  %5253 = vmatmul.mubr.bf16.gmra.mrb[0].mxu0 %v1294
  %v5254 = vpop.f32.mrb[0].mxu0
  %v5255 = vadd.f32 %v5214, %v5254
  %v5256 = vpop.f32.mrb[0].mxu0
  %v5257 = vpop.f32.mrb[0].mxu0
  %v5258 = vadd.f32 %v5217, %v5257
  %v5259 = vpop.f32.mrb[0].mxu0
  %5260 = vdwg.mxu0
  %5261 = vmatprep.subr.bf16.mxu0 0
  %5262 = vmatpush1.bf16.msra.mxu0 %v3689
  %5263 = vmatprep.subr.bf16.mxu0 0
  %5264 = vmatpush1.bf16.msra.mxu0 %v3690
  %5265 = vmatprep.subr.bf16.mxu0 0
  %5266 = vmatpush1.bf16.msra.mxu0 %v3691
  %5267 = vmatprep.subr.bf16.mxu0 0
  %5268 = vmatpush1.bf16.msra.mxu0 %v3692
  %5269 = vmatprep.subr.bf16.mxu0 0
  %5270 = vmatpush1.bf16.msra.mxu0 %v3693
  %5271 = vmatprep.subr.bf16.mxu0 0
  %5272 = vmatpush1.bf16.msra.mxu0 %v3694
  %5273 = vmatprep.subr.bf16.mxu0 0
  %5274 = vmatpush1.bf16.msra.mxu0 %v3695
  %5275 = vmatprep.subr.bf16.mxu0 0
  %5276 = vmatpush1.bf16.msra.mxu0 %v3696
  %5277 = vmatprep.subr.bf16.mxu0 0
  %5278 = vmatpush1.bf16.msra.mxu0 %v3697
  %5279 = vmatprep.subr.bf16.mxu0 0
  %5280 = vmatpush1.bf16.msra.mxu0 %v3698
  %5281 = vmatprep.subr.bf16.mxu0 0
  %5282 = vmatpush1.bf16.msra.mxu0 %v3699
  %5283 = vmatprep.subr.bf16.mxu0 0
  %5284 = vmatpush1.bf16.msra.mxu0 %v3700
  %5285 = vmatprep.subr.bf16.mxu0 0
  %5286 = vmatpush1.bf16.msra.mxu0 %v3701
  %5287 = vmatprep.subr.bf16.mxu0 0
  %5288 = vmatpush1.bf16.msra.mxu0 %v3702
  %5289 = vmatprep.subr.bf16.mxu0 0
  %5290 = vmatpush1.bf16.msra.mxu0 %v3703
  %5291 = vmatprep.subr.bf16.mxu0 0
  %5292 = vmatpush1.bf16.msra.mxu0 %v3704
  %5293 = vmatprep.mubr.bf16.mxu0 %v1297
  %5294 = vmatmul.mubr.bf16.gmra.mrb[0].mxu0 %v1296
  %v5295 = vpop.f32.mrb[0].mxu0
  %v5296 = vadd.f32 %v5255, %v5295
  %v5297 = vpop.f32.mrb[0].mxu0
  %v5298 = vpop.f32.mrb[0].mxu0
  %v5299 = vadd.f32 %v5258, %v5298
  %v5300 = vpop.f32.mrb[0].mxu0
  %5301 = vdwg.mxu0
  %5302 = vmatprep.subr.bf16.mxu0 0
  %5303 = vmatpush1.bf16.msra.mxu0 %v3705
  %5304 = vmatprep.subr.bf16.mxu0 0
  %5305 = vmatpush1.bf16.msra.mxu0 %v3706
  %5306 = vmatprep.subr.bf16.mxu0 0
  %5307 = vmatpush1.bf16.msra.mxu0 %v3707
  %5308 = vmatprep.subr.bf16.mxu0 0
  %5309 = vmatpush1.bf16.msra.mxu0 %v3708
  %5310 = vmatprep.subr.bf16.mxu0 0
  %5311 = vmatpush1.bf16.msra.mxu0 %v3709
  %5312 = vmatprep.subr.bf16.mxu0 0
  %5313 = vmatpush1.bf16.msra.mxu0 %v3710
  %5314 = vmatprep.subr.bf16.mxu0 0
  %5315 = vmatpush1.bf16.msra.mxu0 %v3711
  %5316 = vmatprep.subr.bf16.mxu0 0
  %5317 = vmatpush1.bf16.msra.mxu0 %v3712
  %5318 = vmatprep.subr.bf16.mxu0 0
  %5319 = vmatpush1.bf16.msra.mxu0 %v3713
  %5320 = vmatprep.subr.bf16.mxu0 0
  %5321 = vmatpush1.bf16.msra.mxu0 %v3714
  %5322 = vmatprep.subr.bf16.mxu0 0
  %5323 = vmatpush1.bf16.msra.mxu0 %v3715
  %5324 = vmatprep.subr.bf16.mxu0 0
  %5325 = vmatpush1.bf16.msra.mxu0 %v3716
  %5326 = vmatprep.subr.bf16.mxu0 0
  %5327 = vmatpush1.bf16.msra.mxu0 %v3717
  %5328 = vmatprep.subr.bf16.mxu0 0
  %5329 = vmatpush1.bf16.msra.mxu0 %v3718
  %5330 = vmatprep.subr.bf16.mxu0 0
  %5331 = vmatpush1.bf16.msra.mxu0 %v3719
  %5332 = vmatprep.subr.bf16.mxu0 0
  %5333 = vmatpush1.bf16.msra.mxu0 %v3720
  %5334 = vmatprep.mubr.bf16.mxu0 %v1299
  %5335 = vmatmul.mubr.bf16.gmra.mrb[0].mxu0 %v1298
  %v5336 = vpop.f32.mrb[0].mxu0
  %v5337 = vadd.f32 %v5296, %v5336
  %v5338 = vpop.f32.mrb[0].mxu0
  %v5339 = vpop.f32.mrb[0].mxu0
  %v5340 = vadd.f32 %v5299, %v5339
  %v5341 = vpop.f32.mrb[0].mxu0
  %5342 = vdwg.mxu0
  %5343 = vmatprep.subr.bf16.mxu0 0
  %5344 = vmatpush1.bf16.msra.mxu0 %v3721
  %5345 = vmatprep.subr.bf16.mxu0 0
  %5346 = vmatpush1.bf16.msra.mxu0 %v3722
  %5347 = vmatprep.subr.bf16.mxu0 0
  %5348 = vmatpush1.bf16.msra.mxu0 %v3723
  %5349 = vmatprep.subr.bf16.mxu0 0
  %5350 = vmatpush1.bf16.msra.mxu0 %v3724
  %5351 = vmatprep.subr.bf16.mxu0 0
  %5352 = vmatpush1.bf16.msra.mxu0 %v3725
  %5353 = vmatprep.subr.bf16.mxu0 0
  %5354 = vmatpush1.bf16.msra.mxu0 %v3726
  %5355 = vmatprep.subr.bf16.mxu0 0
  %5356 = vmatpush1.bf16.msra.mxu0 %v3727
  %5357 = vmatprep.subr.bf16.mxu0 0
  %5358 = vmatpush1.bf16.msra.mxu0 %v3728
  %5359 = vmatprep.subr.bf16.mxu0 0
  %5360 = vmatpush1.bf16.msra.mxu0 %v3729
  %5361 = vmatprep.subr.bf16.mxu0 0
  %5362 = vmatpush1.bf16.msra.mxu0 %v3730
  %5363 = vmatprep.subr.bf16.mxu0 0
  %5364 = vmatpush1.bf16.msra.mxu0 %v3731
  %5365 = vmatprep.subr.bf16.mxu0 0
  %5366 = vmatpush1.bf16.msra.mxu0 %v3732
  %5367 = vmatprep.subr.bf16.mxu0 0
  %5368 = vmatpush1.bf16.msra.mxu0 %v3733
  %5369 = vmatprep.subr.bf16.mxu0 0
  %5370 = vmatpush1.bf16.msra.mxu0 %v3734
  %5371 = vmatprep.subr.bf16.mxu0 0
  %5372 = vmatpush1.bf16.msra.mxu0 %v3735
  %5373 = vmatprep.subr.bf16.mxu0 0
  %5374 = vmatpush1.bf16.msra.mxu0 %v3736
  %5375 = vmatprep.mubr.bf16.mxu0 %v1301
  %5376 = vmatmul.mubr.bf16.gmra.mrb[0].mxu0 %v1300
  %v5377 = vpop.f32.mrb[0].mxu0
  %v5378 = vadd.f32 %v5337, %v5377
  %v5379 = vpop.f32.mrb[0].mxu0
  %v5380 = vpop.f32.mrb[0].mxu0
  %v5381 = vadd.f32 %v5340, %v5380
  %v5382 = vpop.f32.mrb[0].mxu0
  %5383 = vdwg.mxu0
  %5384 = vmatprep.subr.bf16.mxu0 0
  %5385 = vmatpush1.bf16.msra.mxu0 %v3737
  %5386 = vmatprep.subr.bf16.mxu0 0
  %5387 = vmatpush1.bf16.msra.mxu0 %v3738
  %5388 = vmatprep.subr.bf16.mxu0 0
  %5389 = vmatpush1.bf16.msra.mxu0 %v3739
  %5390 = vmatprep.subr.bf16.mxu0 0
  %5391 = vmatpush1.bf16.msra.mxu0 %v3740
  %5392 = vmatprep.subr.bf16.mxu0 0
  %5393 = vmatpush1.bf16.msra.mxu0 %v3741
  %5394 = vmatprep.subr.bf16.mxu0 0
  %5395 = vmatpush1.bf16.msra.mxu0 %v3742
  %5396 = vmatprep.subr.bf16.mxu0 0
  %5397 = vmatpush1.bf16.msra.mxu0 %v3743
  %5398 = vmatprep.subr.bf16.mxu0 0
  %5399 = vmatpush1.bf16.msra.mxu0 %v3744
  %5400 = vmatprep.subr.bf16.mxu0 0
  %5401 = vmatpush1.bf16.msra.mxu0 %v3745
  %5402 = vmatprep.subr.bf16.mxu0 0
  %5403 = vmatpush1.bf16.msra.mxu0 %v3746
  %5404 = vmatprep.subr.bf16.mxu0 0
  %5405 = vmatpush1.bf16.msra.mxu0 %v3747
  %5406 = vmatprep.subr.bf16.mxu0 0
  %5407 = vmatpush1.bf16.msra.mxu0 %v3748
  %5408 = vmatprep.subr.bf16.mxu0 0
  %5409 = vmatpush1.bf16.msra.mxu0 %v3749
  %5410 = vmatprep.subr.bf16.mxu0 0
  %5411 = vmatpush1.bf16.msra.mxu0 %v3750
  %5412 = vmatprep.subr.bf16.mxu0 0
  %5413 = vmatpush1.bf16.msra.mxu0 %v3751
  %5414 = vmatprep.subr.bf16.mxu0 0
  %5415 = vmatpush1.bf16.msra.mxu0 %v3752
  %5416 = vmatprep.mubr.bf16.mxu0 %v1303
  %5417 = vmatmul.mubr.bf16.gmra.mrb[0].mxu0 %v1302
  %v5418 = vpop.f32.mrb[0].mxu0
  %v5419 = vadd.f32 %v5378, %v5418
  %v5420 = vpop.f32.mrb[0].mxu0
  %v5421 = vpop.f32.mrb[0].mxu0
  %v5422 = vadd.f32 %v5381, %v5421
  %v5423 = vpop.f32.mrb[0].mxu0
  %5424 = vdwg.mxu0
  %5425 = vmatprep.subr.bf16.mxu0 0
  %5426 = vmatpush1.bf16.msra.mxu0 %v3753
  %5427 = vmatprep.subr.bf16.mxu0 0
  %5428 = vmatpush1.bf16.msra.mxu0 %v3754
  %5429 = vmatprep.subr.bf16.mxu0 0
  %5430 = vmatpush1.bf16.msra.mxu0 %v3755
  %5431 = vmatprep.subr.bf16.mxu0 0
  %5432 = vmatpush1.bf16.msra.mxu0 %v3756
  %5433 = vmatprep.subr.bf16.mxu0 0
  %5434 = vmatpush1.bf16.msra.mxu0 %v3757
  %5435 = vmatprep.subr.bf16.mxu0 0
  %5436 = vmatpush1.bf16.msra.mxu0 %v3758
  %5437 = vmatprep.subr.bf16.mxu0 0
  %5438 = vmatpush1.bf16.msra.mxu0 %v3759
  %5439 = vmatprep.subr.bf16.mxu0 0
  %5440 = vmatpush1.bf16.msra.mxu0 %v3760
  %5441 = vmatprep.subr.bf16.mxu0 0
  %5442 = vmatpush1.bf16.msra.mxu0 %v3761
  %5443 = vmatprep.subr.bf16.mxu0 0
  %5444 = vmatpush1.bf16.msra.mxu0 %v3762
  %5445 = vmatprep.subr.bf16.mxu0 0
  %5446 = vmatpush1.bf16.msra.mxu0 %v3763
  %5447 = vmatprep.subr.bf16.mxu0 0
  %5448 = vmatpush1.bf16.msra.mxu0 %v3764
  %5449 = vmatprep.subr.bf16.mxu0 0
  %5450 = vmatpush1.bf16.msra.mxu0 %v3765
  %5451 = vmatprep.subr.bf16.mxu0 0
  %5452 = vmatpush1.bf16.msra.mxu0 %v3766
  %5453 = vmatprep.subr.bf16.mxu0 0
  %5454 = vmatpush1.bf16.msra.mxu0 %v3767
  %5455 = vmatprep.subr.bf16.mxu0 0
  %5456 = vmatpush1.bf16.msra.mxu0 %v3768
  %5457 = vmatprep.mubr.bf16.mxu0 %v1305
  %5458 = vmatmul.mubr.bf16.gmra.mrb[0].mxu0 %v1304
  %v5459 = vpop.f32.mrb[0].mxu0
  %v5460 = vadd.f32 %v5419, %v5459
  %v5461 = vpop.f32.mrb[0].mxu0
  %v5462 = vpop.f32.mrb[0].mxu0
  %v5463 = vadd.f32 %v5422, %v5462
  %v5464 = vpop.f32.mrb[0].mxu0
  %5465 = vdwg.mxu0
  %5466 = vmatprep.subr.bf16.mxu0 0
  %5467 = vmatpush1.bf16.msra.mxu0 %v3769
  %5468 = vmatprep.subr.bf16.mxu0 0
  %5469 = vmatpush1.bf16.msra.mxu0 %v3770
  %5470 = vmatprep.subr.bf16.mxu0 0
  %5471 = vmatpush1.bf16.msra.mxu0 %v3771
  %5472 = vmatprep.subr.bf16.mxu0 0
  %5473 = vmatpush1.bf16.msra.mxu0 %v3772
  %5474 = vmatprep.subr.bf16.mxu0 0
  %5475 = vmatpush1.bf16.msra.mxu0 %v3773
  %5476 = vmatprep.subr.bf16.mxu0 0
  %5477 = vmatpush1.bf16.msra.mxu0 %v3774
  %5478 = vmatprep.subr.bf16.mxu0 0
  %5479 = vmatpush1.bf16.msra.mxu0 %v3775
  %5480 = vmatprep.subr.bf16.mxu0 0
  %5481 = vmatpush1.bf16.msra.mxu0 %v3776
  %5482 = vmatprep.subr.bf16.mxu0 0
  %5483 = vmatpush1.bf16.msra.mxu0 %v3777
  %5484 = vmatprep.subr.bf16.mxu0 0
  %5485 = vmatpush1.bf16.msra.mxu0 %v3778
  %5486 = vmatprep.subr.bf16.mxu0 0
  %5487 = vmatpush1.bf16.msra.mxu0 %v3779
  %5488 = vmatprep.subr.bf16.mxu0 0
  %5489 = vmatpush1.bf16.msra.mxu0 %v3780
  %5490 = vmatprep.subr.bf16.mxu0 0
  %5491 = vmatpush1.bf16.msra.mxu0 %v3781
  %5492 = vmatprep.subr.bf16.mxu0 0
  %5493 = vmatpush1.bf16.msra.mxu0 %v3782
  %5494 = vmatprep.subr.bf16.mxu0 0
  %5495 = vmatpush1.bf16.msra.mxu0 %v3783
  %5496 = vmatprep.subr.bf16.mxu0 0
  %5497 = vmatpush1.bf16.msra.mxu0 %v3784
  %5498 = vmatprep.mubr.bf16.mxu0 %v1307
  %5499 = vmatmul.mubr.bf16.gmra.mrb[0].mxu0 %v1306
  %v5500 = vpop.f32.mrb[0].mxu0
  %v5501 = vadd.f32 %v5460, %v5500
  %v5502 = vpop.f32.mrb[0].mxu0
  %v5503 = vpop.f32.mrb[0].mxu0
  %v5504 = vadd.f32 %v5463, %v5503
  %v5505 = vpop.f32.mrb[0].mxu0
  %5506 = vdwg.mxu0
  %5507 = vmatprep.subr.bf16.mxu0 0
  %5508 = vmatpush1.bf16.msra.mxu0 %v3785
  %5509 = vmatprep.subr.bf16.mxu0 0
  %5510 = vmatpush1.bf16.msra.mxu0 %v3786
  %5511 = vmatprep.subr.bf16.mxu0 0
  %5512 = vmatpush1.bf16.msra.mxu0 %v3787
  %5513 = vmatprep.subr.bf16.mxu0 0
  %5514 = vmatpush1.bf16.msra.mxu0 %v3788
  %5515 = vmatprep.subr.bf16.mxu0 0
  %5516 = vmatpush1.bf16.msra.mxu0 0
  %5517 = vmatprep.subr.bf16.mxu0 0
  %5518 = vmatpush1.bf16.msra.mxu0 0
  %5519 = vmatprep.subr.bf16.mxu0 0
  %5520 = vmatpush1.bf16.msra.mxu0 0
  %5521 = vmatprep.subr.bf16.mxu0 0
  %5522 = vmatpush1.bf16.msra.mxu0 0
  %5523 = vmatprep.subr.bf16.mxu0 0
  %5524 = vmatpush1.bf16.msra.mxu0 0
  %5525 = vmatprep.subr.bf16.mxu0 0
  %5526 = vmatpush1.bf16.msra.mxu0 0
  %5527 = vmatprep.subr.bf16.mxu0 0
  %5528 = vmatpush1.bf16.msra.mxu0 0
  %5529 = vmatprep.subr.bf16.mxu0 0
  %5530 = vmatpush1.bf16.msra.mxu0 0
  %5531 = vmatprep.subr.bf16.mxu0 0
  %5532 = vmatpush1.bf16.msra.mxu0 0
  %5533 = vmatprep.subr.bf16.mxu0 0
  %5534 = vmatpush1.bf16.msra.mxu0 0
  %5535 = vmatprep.subr.bf16.mxu0 0
  %5536 = vmatpush1.bf16.msra.mxu0 0
  %5537 = vmatprep.subr.bf16.mxu0 0
  %5538 = vmatpush1.bf16.msra.mxu0 0
  %5539 = vmatprep.mubr.bf16.mxu0 0
  %5540 = vmatmul.mubr.bf16.gmra.mrb[0].mxu0 %v4275
  %v5541 = vpop.f32.mrb[0].mxu0
  %v5542 = vadd.f32 %v5501, %v5541
  %v5543 = vpop.f32.mrb[0].mxu0
  %v5544 = vpop.f32.mrb[0].mxu0
  %v5545 = vadd.f32 %v5504, %v5544
  %v5546 = vpop.f32.mrb[0].mxu0
  %5547 = vdwg.mxu0
  %v5548 = vmax.f32 %v5542, 0.0
  %v5549 = vmax.f32 %v5545, 0.0
  %v5550 = vpack.c.bf16 %v5549, %v5548
  %v5551 = vld [vmem:[%s3] sm:$0xf]
  %v5552 = vld [vmem:[%s3 + $0x4] sm:$0xf]
  %v5553 = vld [vmem:[%s3 + $0x8] sm:$0xf]
  %v5554 = vld [vmem:[%s3 + $0xc] sm:$0xf]
  %v5555 = vld [vmem:[%s3 + $0x10] sm:$0xf]
  %v5556 = vld [vmem:[%s3 + $0x14] sm:$0xf]
  %v5557 = vld [vmem:[%s3 + $0x18] sm:$0xf]
  %v5558 = vld [vmem:[%s3 + $0x1c] sm:$0xf]
  %v5559 = vld [vmem:[%s3 + $0x20] sm:$0xf]
  %v5560 = vld [vmem:[%s3 + $0x24] sm:$0xf]
  %v5561 = vld [vmem:[%s3 + $0x28] sm:$0xf]
  %v5562 = vld [vmem:[%s3 + $0x2c] sm:$0xf]
  %v5563 = vld [vmem:[%s3 + $0x30] sm:$0xf]
  %v5564 = vld [vmem:[%s3 + $0x34] sm:$0xf]
  %v5565 = vld [vmem:[%s3 + $0x38] sm:$0xf]
  %v5566 = vld [vmem:[%s3 + $0x3c] sm:$0xf]
  %v5567 = vld [vmem:[%s4] sm:$0x1]
  %v5569 = vlaneseq
  %v5570 = vshrl.u32 %v5569, 7
  %v5571 = vsub.s32 0, %v5570
  %v5572 = vrot.slane %v5567, %v5571
  %v5590 = vunpack.c.l.b16 %v5551
  %v5591 = vunpack.c.l.b16 %v5552
  %v5592 = vunpack.c.l.b16 %v5553
  %v5593 = vunpack.c.l.b16 %v5554
  %v5594 = vunpack.c.l.b16 %v5555
  %v5595 = vunpack.c.l.b16 %v5556
  %v5596 = vunpack.c.l.b16 %v5557
  %v5597 = vunpack.c.l.b16 %v5558
  %v5598 = vunpack.c.l.b16 %v5559
  %v5599 = vunpack.c.l.b16 %v5560
  %v5600 = vunpack.c.l.b16 %v5561
  %v5601 = vunpack.c.l.b16 %v5562
  %v5602 = vunpack.c.l.b16 %v5563
  %v5603 = vunpack.c.l.b16 %v5564
  %v5604 = vunpack.c.l.b16 %v5565
  %v5605 = vunpack.c.l.b16 %v5566
  %v5606 = vpack.c.b16 %v5591, %v5590
  %v5607 = vpack.c.b16 %v5593, %v5592
  %v5608 = vpack.c.b16 %v5595, %v5594
  %v5609 = vpack.c.b16 %v5597, %v5596
  %v5610 = vpack.c.b16 %v5599, %v5598
  %v5611 = vpack.c.b16 %v5601, %v5600
  %v5612 = vpack.c.b16 %v5603, %v5602
  %v5613 = vpack.c.b16 %v5605, %v5604
  %5622 = vmatprep.subr.bf16.mxu0 0
  %5623 = vmatpush1.bf16.msra.mxu0 %v5606
  %5624 = vmatprep.subr.bf16.mxu0 0
  %5625 = vmatpush1.bf16.msra.mxu0 %v5607
  %5626 = vmatprep.subr.bf16.mxu0 0
  %5627 = vmatpush1.bf16.msra.mxu0 %v5608
  %5628 = vmatprep.subr.bf16.mxu0 0
  %5629 = vmatpush1.bf16.msra.mxu0 %v5609
  %5630 = vmatprep.subr.bf16.mxu0 0
  %5631 = vmatpush1.bf16.msra.mxu0 %v5610
  %5632 = vmatprep.subr.bf16.mxu0 0
  %5633 = vmatpush1.bf16.msra.mxu0 %v5611
  %5634 = vmatprep.subr.bf16.mxu0 0
  %5635 = vmatpush1.bf16.msra.mxu0 %v5612
  %5636 = vmatprep.subr.bf16.mxu0 0
  %5637 = vmatpush1.bf16.msra.mxu0 %v5613
  %5638 = vmatprep.subr.bf16.mxu0 0
  %5639 = vmatpush1.bf16.msra.mxu0 0
  %5640 = vmatprep.subr.bf16.mxu0 0
  %5641 = vmatpush1.bf16.msra.mxu0 0
  %5642 = vmatprep.subr.bf16.mxu0 0
  %5643 = vmatpush1.bf16.msra.mxu0 0
  %5644 = vmatprep.subr.bf16.mxu0 0
  %5645 = vmatpush1.bf16.msra.mxu0 0
  %5646 = vmatprep.subr.bf16.mxu0 0
  %5647 = vmatpush1.bf16.msra.mxu0 0
  %5648 = vmatprep.subr.bf16.mxu0 0
  %5649 = vmatpush1.bf16.msra.mxu0 0
  %5650 = vmatprep.subr.bf16.mxu0 0
  %5651 = vmatpush1.bf16.msra.mxu0 0
  %5652 = vmatprep.subr.bf16.mxu0 0
  %5653 = vmatpush1.bf16.msra.mxu0 0
  %5654 = vmatprep.mubr.bf16.mxu0 0
  %5655 = vmatmul.mubr.bf16.gmra.mrb[0].mxu0 %v5550
  %v5656 = vpop.f32.mrb[0].mxu0
  %v5657 = vadd.f32 %v5572, %v5656
  %v5658 = vpop.f32.mrb[0].mxu0
  %v5659 = vpop.f32.mrb[0].mxu0
  %v5660 = vadd.f32 %v5572, %v5659
  %v5661 = vpop.f32.mrb[0].mxu0
  %5662 = vdwg.mxu0
  %v5663 = vmax.f32 %v5657, 0.0
  %v5664 = vmax.f32 %v5660, 0.0
  %v5665 = vpack.c.bf16 %v5664, %v5663
  %v5666 = vld [vmem:[%s5] sm:$0xf]
  %v5667 = vld [vmem:[%s5 + $0x4] sm:$0xf]
  %v5668 = vld [vmem:[%s5 + $0x8] sm:$0xf]
  %v5669 = vld [vmem:[%s5 + $0xc] sm:$0xf]
  %v5670 = vld [vmem:[%s5 + $0x10] sm:$0xf]
  %v5671 = vld [vmem:[%s5 + $0x14] sm:$0xf]
  %v5672 = vld [vmem:[%s5 + $0x18] sm:$0xf]
  %v5673 = vld [vmem:[%s5 + $0x1c] sm:$0xf]
  %v5674 = vld [vmem:[%s5 + $0x20] sm:$0xf]
  %v5675 = vld [vmem:[%s5 + $0x24] sm:$0xf]
  %v5676 = vld [vmem:[%s5 + $0x28] sm:$0xf]
  %v5677 = vld [vmem:[%s5 + $0x2c] sm:$0xf]
  %v5678 = vld [vmem:[%s5 + $0x30] sm:$0xf]
  %v5679 = vld [vmem:[%s5 + $0x34] sm:$0xf]
  %v5680 = vld [vmem:[%s5 + $0x38] sm:$0xf]
  %v5681 = vld [vmem:[%s5 + $0x3c] sm:$0xf]
  %v5682 = vld [vmem:[%s6] sm:$0x1]
  %v5684 = vlaneseq
  %v5685 = vshrl.u32 %v5684, 7
  %v5686 = vsub.s32 0, %v5685
  %v5687 = vrot.slane %v5682, %v5686
  %v5705 = vunpack.c.l.b16 %v5666
  %v5706 = vunpack.c.l.b16 %v5667
  %v5707 = vunpack.c.l.b16 %v5668
  %v5708 = vunpack.c.l.b16 %v5669
  %v5709 = vunpack.c.l.b16 %v5670
  %v5710 = vunpack.c.l.b16 %v5671
  %v5711 = vunpack.c.l.b16 %v5672
  %v5712 = vunpack.c.l.b16 %v5673
  %v5713 = vunpack.c.l.b16 %v5674
  %v5714 = vunpack.c.l.b16 %v5675
  %v5715 = vunpack.c.l.b16 %v5676
  %v5716 = vunpack.c.l.b16 %v5677
  %v5717 = vunpack.c.l.b16 %v5678
  %v5718 = vunpack.c.l.b16 %v5679
  %v5719 = vunpack.c.l.b16 %v5680
  %v5720 = vunpack.c.l.b16 %v5681
  %v5721 = vpack.c.b16 %v5706, %v5705
  %v5722 = vpack.c.b16 %v5708, %v5707
  %v5723 = vpack.c.b16 %v5710, %v5709
  %v5724 = vpack.c.b16 %v5712, %v5711
  %v5725 = vpack.c.b16 %v5714, %v5713
  %v5726 = vpack.c.b16 %v5716, %v5715
  %v5727 = vpack.c.b16 %v5718, %v5717
  %v5728 = vpack.c.b16 %v5720, %v5719
  %5737 = vmatprep.subr.bf16.mxu0 0
  %5738 = vmatpush1.bf16.msra.mxu0 %v5721
  %5739 = vmatprep.subr.bf16.mxu0 0
  %5740 = vmatpush1.bf16.msra.mxu0 %v5722
  %5741 = vmatprep.subr.bf16.mxu0 0
  %5742 = vmatpush1.bf16.msra.mxu0 %v5723
  %5743 = vmatprep.subr.bf16.mxu0 0
  %5744 = vmatpush1.bf16.msra.mxu0 %v5724
  %5745 = vmatprep.subr.bf16.mxu0 0
  %5746 = vmatpush1.bf16.msra.mxu0 %v5725
  %5747 = vmatprep.subr.bf16.mxu0 0
  %5748 = vmatpush1.bf16.msra.mxu0 %v5726
  %5749 = vmatprep.subr.bf16.mxu0 0
  %5750 = vmatpush1.bf16.msra.mxu0 %v5727
  %5751 = vmatprep.subr.bf16.mxu0 0
  %5752 = vmatpush1.bf16.msra.mxu0 %v5728
  %5753 = vmatprep.subr.bf16.mxu0 0
  %5754 = vmatpush1.bf16.msra.mxu0 0
  %5755 = vmatprep.subr.bf16.mxu0 0
  %5756 = vmatpush1.bf16.msra.mxu0 0
  %5757 = vmatprep.subr.bf16.mxu0 0
  %5758 = vmatpush1.bf16.msra.mxu0 0
  %5759 = vmatprep.subr.bf16.mxu0 0
  %5760 = vmatpush1.bf16.msra.mxu0 0
  %5761 = vmatprep.subr.bf16.mxu0 0
  %5762 = vmatpush1.bf16.msra.mxu0 0
  %5763 = vmatprep.subr.bf16.mxu0 0
  %5764 = vmatpush1.bf16.msra.mxu0 0
  %5765 = vmatprep.subr.bf16.mxu0 0
  %5766 = vmatpush1.bf16.msra.mxu0 0
  %5767 = vmatprep.subr.bf16.mxu0 0
  %5768 = vmatpush1.bf16.msra.mxu0 0
  %5769 = vmatprep.mubr.bf16.mxu0 0
  %5770 = vmatmul.mubr.bf16.gmra.mrb[0].mxu0 %v5665
  %v5771 = vpop.f32.mrb[0].mxu0
  %v5772 = vadd.f32 %v5687, %v5771
  %v5773 = vpop.f32.mrb[0].mxu0
  %v5774 = vpop.f32.mrb[0].mxu0
  %v5775 = vadd.f32 %v5687, %v5774
  %v5776 = vpop.f32.mrb[0].mxu0
  %5777 = vdwg.mxu0
  %5778 = vst [vmem:[%s7] sm:$0xff] %v5772
  %5779 = vst [vmem:[%s7 + $0x8] sm:$0xff] %v5775
  // Predicated region
  $region30: #{cnn_forward.5} parent=0 // pred_check
    _
  $region31: #{cnn_forward.5} parent=0 // pred_check_branch
    %5781 = sbr.rel (0) target = $region33
  $region32: #{cnn_forward.5} parent=0 // pred_region
    _
  $region33: #{cnn_forward.5} parent=0 // pred_fallthru
    _
  // Predicated region
  $region34: #{cnn_forward.5} parent=0 // pred_check
    _
  $region35: #{cnn_forward.5} parent=0 // pred_check_branch
    %5783 = sbr.rel (0) target = $region37
  $region36: #{cnn_forward.5} parent=0 // pred_region
    _
  $region37: #{cnn_forward.5} parent=0 // pred_fallthru
    _

</llo_original>
